<compile_context>
chip_gen: v7x
topology: tpu7x:2x2x1
jax: 0.10.0
libtpu: 0.0.40
codegen_flags: <defaults>
</compile_context>

<pallas_src>
import functools

import jax
import jax.numpy as jnp
from jax.experimental import pallas as pl
from jax.experimental.pallas import tpu as pltpu


_VMEM = pl.BlockSpec(memory_space=pltpu.MemorySpace.VMEM)
_VMEM_LIMIT = 32 * 1024 * 1024   # safe on v7x (64 MiB phys) and v5e/v6e (128 MiB)


def _round_up(x, m):
    return (x + m - 1) // m * m


def _cpad(c):
    # channel padding so every feature map / matmul output is lane-dense (x128)
    return _round_up(max(c, 128), 128)


# ------------------------------- Pallas kernels -------------------------------

def _conv_mm_kernel(*refs, has_residual, apply_relu):
    """Tiled (M,K)@(K,N) conv-as-matmul with folded BN bias, optional fused
    residual add and ReLU. grid = (M/tm, N/tn, K/tk); f32 accumulator lives in
    VMEM scratch; epilogue runs on the last K step."""
    if has_residual:
        x_ref, w_ref, b_ref, r_ref, o_ref, acc_ref = refs
    else:
        x_ref, w_ref, b_ref, o_ref, acc_ref = refs
        r_ref = None
    k = pl.program_id(2)

    @pl.when(k == 0)
    def _():
        acc_ref[...] = jnp.zeros_like(acc_ref)

    acc_ref[...] += jnp.dot(x_ref[...], w_ref[...],
                            preferred_element_type=jnp.float32)

    @pl.when(k == pl.num_programs(2) - 1)
    def _():
        y = acc_ref[...] + b_ref[...]                 # bias in f32
        if r_ref is not None:
            y = y + r_ref[...].astype(jnp.float32)    # fused residual add
        if apply_relu:
            y = jnp.maximum(y, 0.0)
        o_ref[...] = y.astype(o_ref.dtype)


def _maxpool9_kernel(p00_ref, p01_ref, p10_ref, p11_ref, o_ref, *, oh, ow):
    # 3x3 stride-2 max pool as 9 shifted slices of the four stride-2 parity
    # planes of the zero-padded input (pure VPU work, no 9x HBM intermediate).
    m = p11_ref[:, :oh, :ow, :]
    for a in (0, 1):
        for b in (0, 1):
            m = jnp.maximum(m, p00_ref[:, a:a + oh, b:b + ow, :])
    for a in (0, 1):
        m = jnp.maximum(m, p01_ref[:, a:a + oh, :ow, :])
    for b in (0, 1):
        m = jnp.maximum(m, p10_ref[:, :oh, b:b + ow, :])
    o_ref[...] = m


def _gap_kernel(x_ref, o_ref):
    # (N, H*W, C) -> (N, C) global average pool, accumulate in f32.
    o_ref[...] = jnp.mean(x_ref[...].astype(jnp.float32), axis=1)


# ------------------------------ tiled matmul call ------------------------------

def _pick_tk(k_pad):
    for cand in (512, 384, 256, 128):
        if k_pad % cand == 0:
            return cand
    return 128


def _conv_matmul(pm, w, b, residual, apply_relu):
    m_pad, k_pad = pm.shape
    n_pad = w.shape[1]
    tm = min(128, m_pad)
    tn = 256 if n_pad % 256 == 0 else 128   # 256-wide N tiles for the 256-ch layers
    tk = _pick_tk(k_pad)
    grid = (m_pad // tm, n_pad // tn, k_pad // tk)

    in_specs = [
        pl.BlockSpec((tm, tk), lambda i, j, k: (i, k)),
        pl.BlockSpec((tk, tn), lambda i, j, k: (k, j)),
        pl.BlockSpec((1, tn), lambda i, j, k: (0, j)),
    ]
    args = [pm, w, b]
    has_residual = residual is not None
    if has_residual:
        in_specs.append(pl.BlockSpec((tm, tn), lambda i, j, k: (i, j)))
        args.append(residual)

    kernel = functools.partial(_conv_mm_kernel, has_residual=has_residual,
                               apply_relu=apply_relu)
    return pl.pallas_call(
        kernel,
        out_shape=jax.ShapeDtypeStruct((m_pad, n_pad), jnp.bfloat16),
        grid_spec=pltpu.PrefetchScalarGridSpec(
            num_scalar_prefetch=0,
            grid=grid,
            in_specs=in_specs,
            out_specs=pl.BlockSpec((tm, tn), lambda i, j, k: (i, j)),
            scratch_shapes=[pltpu.VMEM((tm, tn), jnp.float32)],
        ),
        compiler_params=pltpu.CompilerParams(
            dimension_semantics=("parallel", "parallel", "arbitrary"),
            vmem_limit_bytes=_VMEM_LIMIT,
        ),
    )(*args)


# --------------------------------- glue ops ------------------------------------

def _im2col(x, kh, kw, stride, pad):
    # (N, H, W, C) -> (M, kh*kw*C) patch matrix (tap-major, channel-minor),
    # emitted in the activation dtype (bf16) to halve HBM traffic.
    n, h, w, c = x.shape
    xp = jnp.pad(x, ((0, 0), (pad, pad), (pad, pad), (0, 0)))
    hp, wp = h + 2 * pad, w + 2 * pad
    oh = (hp - kh) // stride + 1
    ow = (wp - kw) // stride + 1
    taps = []
    for i in range(kh):
        for j in range(kw):
            taps.append(xp[:, i:i + stride * oh:stride, j:j + stride * ow:stride, :])
    patches = jnp.stack(taps, axis=3)            # (n, oh, ow, kh*kw, c)
    return patches.reshape(n * oh * ow, kh * kw * c), (n, oh, ow)


def conv_bn(x, cp, stride, pad, apply_relu, residual=None):
    """conv + folded eval-mode BN (+ optional fused residual add) (+ ReLU)."""
    kh, kw = cp["kh"], cp["kw"]
    if kh == 1 and kw == 1:                      # 1x1 (downsample): no im2col needed
        xs = x[:, ::stride, ::stride, :]
        n, oh, ow, c = xs.shape
        pm = xs.reshape(n * oh * ow, c)
    else:
        pm, (n, oh, ow) = _im2col(x, kh, kw, stride, pad)
    m, k_real = pm.shape
    k_pad, n_pad = cp["w"].shape
    # pad M so block shapes stay (16,128)-friendly for bf16; pad K to the weight's K.
    m_pad = _round_up(m, 128) if m >= 128 else _round_up(m, 16)
    pm = jnp.pad(pm, ((0, m_pad - m), (0, k_pad - k_real)))
    r = None
    if residual is not None:
        r = residual.reshape(m, n_pad)
        if m_pad != m:
            r = jnp.pad(r, ((0, m_pad - m), (0, 0)))
    out = _conv_matmul(pm, cp["w"], cp["b"], r, apply_relu)
    return out[:m].reshape(n, oh, ow, n_pad)


def maxpool_3x3_s2(x):
    # torchvision stem maxpool: kernel 3, stride 2, padding 1.  Input is
    # post-ReLU (>= 0) so zero padding is equivalent to -inf padding here.
    n, h, w, c = x.shape
    oh = (h + 2 - 3) // 2 + 1
    ow = (w + 2 - 3) // 2 + 1
    xp = jnp.pad(x, ((0, 0), (1, 1), (1, 1), (0, 0)))
    p00 = xp[:, 0::2, 0::2, :]
    p01 = xp[:, 0::2, 1::2, :]
    p10 = xp[:, 1::2, 0::2, :]
    p11 = xp[:, 1::2, 1::2, :]
    kernel = functools.partial(_maxpool9_kernel, oh=oh, ow=ow)
    return pl.pallas_call(
        kernel,
        out_shape=jax.ShapeDtypeStruct((n, oh, ow, c), x.dtype),
        in_specs=[_VMEM, _VMEM, _VMEM, _VMEM],
        out_specs=_VMEM,
        compiler_params=pltpu.CompilerParams(vmem_limit_bytes=_VMEM_LIMIT),
    )(p00, p01, p10, p11)


def global_avgpool(x, c_real):
    n, h, w, c = x.shape
    out = pl.pallas_call(
        _gap_kernel,
        out_shape=jax.ShapeDtypeStruct((n, c), jnp.float32),
        in_specs=[_VMEM],
        out_specs=_VMEM,
    )(x.reshape(n, h * w, c))
    return out[:, :c_real]


def basic_block(x, bp, stride):
    identity = x
    if "downsample" in bp:
        identity = conv_bn(x, bp["downsample"], stride, 0, apply_relu=False)
    out = conv_bn(x, bp["conv1"], stride, 1, apply_relu=True)
    # conv2's epilogue fuses BN bias + residual add + final ReLU.
    out = conv_bn(out, bp["conv2"], 1, 1, apply_relu=True, residual=identity)
    return out


def encoder_forward(prep, x_nchw):
    x = jnp.transpose(x_nchw, (0, 2, 3, 1)).astype(jnp.bfloat16)   # NCHW -> NHWC bf16
    x = conv_bn(x, prep["conv1"], stride=2, pad=3, apply_relu=True)
    x = maxpool_3x3_s2(x)
    for bp, s in zip(prep["layer1"], (1, 1)):
        x = basic_block(x, bp, s)
    for bp, s in zip(prep["layer2"], (2, 1)):
        x = basic_block(x, bp, s)
    for bp, s in zip(prep["layer3"], (2, 1)):
        x = basic_block(x, bp, s)
    return global_avgpool(x, 256)   # avgpool + flatten -> (N, 256) f32


# ------------------------------ parameter init ---------------------------------

def _conv_bn_params(key, cout, cin, k):
    w = jax.random.normal(key, (cout, cin, k, k), jnp.float32) * 0.05
    return dict(
        w=w,
        gamma=jnp.ones((cout,), jnp.float32),
        beta=jnp.zeros((cout,), jnp.float32),
        mean=jnp.zeros((cout,), jnp.float32),
        var=jnp.ones((cout,), jnp.float32),
    )


def init_params(key):
    keys = iter(jax.random.split(key, 32))
    params = {"conv1": _conv_bn_params(next(keys), 64, 3, 7)}

    def make_layer(cin, cout, blocks, stride):
        layer = []
        for b in range(blocks):
            p = {
                "conv1": _conv_bn_params(next(keys), cout, cin if b == 0 else cout, 3),
                "conv2": _conv_bn_params(next(keys), cout, cout, 3),
            }
            if b == 0 and (stride != 1 or cin != cout):
                p["downsample"] = _conv_bn_params(next(keys), cout, cin, 1)
            layer.append(p)
        return layer

    params["layer1"] = make_layer(64, 64, 2, 1)
    params["layer2"] = make_layer(64, 128, 2, 2)
    params["layer3"] = make_layer(128, 256, 2, 2)
    return params


def _prep_conv(p, cin_pad, cout_pad):
    # Fold eval-mode BN into (W, b), repack to matmul layout
    # (kh*kw*cin_pad, cout_pad), zero-pad K to a multiple of 128 and Cout to a
    # lane-dense width, cast weights to bf16.  Done ONCE, outside the forward.
    scale = p["gamma"] / jnp.sqrt(p["var"] + 1e-5)
    w = p["w"] * scale[:, None, None, None]
    b = p["beta"] - p["mean"] * scale
    cout, cin, kh, kw = p["w"].shape
    w = jnp.transpose(w, (2, 3, 1, 0))                               # (kh, kw, cin, cout)
    w = jnp.pad(w, ((0, 0), (0, 0), (0, cin_pad - cin), (0, cout_pad - cout)))
    w = w.reshape(kh * kw * cin_pad, cout_pad)
    k_real = kh * kw * cin_pad
    k_pad = _round_up(k_real, 128)
    w = jnp.pad(w, ((0, k_pad - k_real), (0, 0))).astype(jnp.bfloat16)
    b = jnp.pad(b, (0, cout_pad - cout)).reshape(1, cout_pad).astype(jnp.float32)
    return {"w": w, "b": b, "kh": kh, "kw": kw}


def prepare_params(raw):
    prep = {"conv1": _prep_conv(raw["conv1"], cin_pad=3, cout_pad=_cpad(64))}

    def prep_layer(blocks, cin, cout):
        out = []
        for i, bp in enumerate(blocks):
            bcin = cin if i == 0 else cout
            d = {
                "conv1": _prep_conv(bp["conv1"], _cpad(bcin), _cpad(cout)),
                "conv2": _prep_conv(bp["conv2"], _cpad(cout), _cpad(cout)),
            }
            if "downsample" in bp:
                d["downsample"] = _prep_conv(bp["downsample"], _cpad(bcin), _cpad(cout))
            out.append(d)
        return out

    prep["layer1"] = prep_layer(raw["layer1"], 64, 64)
    prep["layer2"] = prep_layer(raw["layer2"], 64, 128)
    prep["layer3"] = prep_layer(raw["layer3"], 128, 256)
    return prep


# ----------------------------------- main ---------------------------------------

if __name__ == "__main__":
    key = jax.random.PRNGKey(0)
    pkey, xkey = jax.random.split(key)
    raw_params = init_params(pkey)
    prep = prepare_params(raw_params)      # BN folding/repack hoisted out of forward
    x = jax.random.normal(xkey, (2, 3, 32, 32), jnp.float32)   # NCHW like PyTorch

    fwd = jax.jit(lambda inp: encoder_forward(prep, inp))
    out = jax.block_until_ready(fwd(x))

    assert out.shape == (2, 256), out.shape
    assert bool(jnp.all(jnp.isfinite(out)))
    print("KERNEL_OK")
</pallas_src>

<mosaic_0001>
module attributes {stable_mosaic.version = 11 : i64} {
  func.func @_conv_mm_kernel(%arg0: i32, %arg1: i32, %arg2: i32, %arg3: memref<128x256xbf16, #tpu.memory_space<vmem>>, %arg4: memref<256x128xbf16, #tpu.memory_space<vmem>>, %arg5: memref<1x128xf32, #tpu.memory_space<vmem>>, %arg6: memref<128x128xbf16, #tpu.memory_space<vmem>>, %arg7: memref<128x128xf32, #tpu.memory_space<vmem>>) attributes {dimension_semantics = [#tpu.dimension_semantics<parallel>, #tpu.dimension_semantics<parallel>, #tpu.dimension_semantics<arbitrary>], iteration_bounds = array<i64: 4, 1, 1>, scalar_prefetch = 0 : i64, scratch_operands = 1 : i64, tpu.core_type = #tpu.core_type<tc>, window_params = [{transform_indices = @transform_0, window_bounds = array<i64: 128, 256>}, {transform_indices = @transform_1, window_bounds = array<i64: 256, 128>}, {transform_indices = @transform_2, window_bounds = array<i64: 1, 128>}, {transform_indices = @transform_3, window_bounds = array<i64: 128, 128>}]} {
    %c0_i32 = arith.constant 0 : i32
    %0 = arith.cmpi eq, %arg2, %c0_i32 : i32
    %1 = arith.extui %0 : i1 to i32
    %c0_i32_0 = arith.constant 0 : i32
    %2 = arith.cmpi ne, %1, %c0_i32_0 : i32
    scf.if %2 {
      %cst_10 = arith.constant 0.000000e+00 : f32
      %12 = vector.broadcast %cst_10 : f32 to vector<128x128xf32>
      %c0_11 = arith.constant 0 : index
      %c0_12 = arith.constant 0 : index
      %13 = vector.load %arg7[%c0_11, %c0_12] : memref<128x128xf32, #tpu.memory_space<vmem>>, vector<128x128xf32>
      tpu.vector_store %arg7[%c0_11, %c0_12], %12 {strides = array<i32>} : memref<128x128xf32, #tpu.memory_space<vmem>>, vector<128x128xf32>,
    } else {
    }
    %c0 = arith.constant 0 : index
    %c0_1 = arith.constant 0 : index
    %3 = vector.load %arg7[%c0, %c0_1] : memref<128x128xf32, #tpu.memory_space<vmem>>, vector<128x128xf32>
    %c0_2 = arith.constant 0 : index
    %c0_3 = arith.constant 0 : index
    %4 = vector.load %arg3[%c0_2, %c0_3] : memref<128x256xbf16, #tpu.memory_space<vmem>>, vector<128x256xbf16>
    %c0_4 = arith.constant 0 : index
    %c0_5 = arith.constant 0 : index
    %5 = vector.load %arg4[%c0_4, %c0_5] : memref<256x128xbf16, #tpu.memory_space<vmem>>, vector<256x128xbf16>
    %cst = arith.constant dense<0.000000e+00> : vector<128x128xf32>
    %6 = tpu.matmul %4, %5, %cst {dimension_numbers = #tpu.dot_dimension_numbers<[1], [0], [0], [1], [0, 0, 1, 1], [], []>} : vector<128x256xbf16>, vector<256x128xbf16>, vector<128x128xf32> -> vector<128x128xf32>
    %7 = arith.addf %3, %6 : vector<128x128xf32>
    %c0_6 = arith.constant 0 : index
    %c0_7 = arith.constant 0 : index
    %8 = vector.load %arg7[%c0_6, %c0_7] : memref<128x128xf32, #tpu.memory_space<vmem>>, vector<128x128xf32>
    tpu.vector_store %arg7[%c0_6, %c0_7], %7 {strides = array<i32>} : memref<128x128xf32, #tpu.memory_space<vmem>>, vector<128x128xf32>,
    %c0_i32_8 = arith.constant 0 : i32
    %9 = arith.cmpi eq, %arg2, %c0_i32_8 : i32
    %10 = arith.extui %9 : i1 to i32
    %c0_i32_9 = arith.constant 0 : i32
    %11 = arith.cmpi ne, %10, %c0_i32_9 : i32
    scf.if %11 {
      %c0_10 = arith.constant 0 : index
      %c0_11 = arith.constant 0 : index
      %12 = vector.load %arg7[%c0_10, %c0_11] : memref<128x128xf32, #tpu.memory_space<vmem>>, vector<128x128xf32>
      %c0_12 = arith.constant 0 : index
      %c0_13 = arith.constant 0 : index
      %13 = vector.load %arg5[%c0_12, %c0_13] : memref<1x128xf32, #tpu.memory_space<vmem>>, vector<1x128xf32>
      %14 = vector.broadcast %13 : vector<1x128xf32> to vector<128x128xf32>
      %15 = arith.addf %12, %14 : vector<128x128xf32>
      %cst_14 = arith.constant 0.000000e+00 : f32
      %16 = vector.broadcast %cst_14 : f32 to vector<128x128xf32>
      %17 = arith.maximumf %15, %16 : vector<128x128xf32>
      %18 = arith.truncf %17 : vector<128x128xf32> to vector<128x128xbf16>
      %c0_15 = arith.constant 0 : index
      %c0_16 = arith.constant 0 : index
      %19 = vector.load %arg6[%c0_15, %c0_16] : memref<128x128xbf16, #tpu.memory_space<vmem>>, vector<128x128xbf16>
      tpu.vector_store %arg6[%c0_15, %c0_16], %18 {strides = array<i32>} : memref<128x128xbf16, #tpu.memory_space<vmem>>, vector<128x128xbf16>,
    } else {
    }
    return
  }
  func.func @transform_0(%arg0: i32, %arg1: i32, %arg2: i32) -> (i32, i32) {
    %c0_i32 = arith.constant 0 : i32
    return %arg0, %arg2 : i32, i32
  }
  func.func @transform_1(%arg0: i32, %arg1: i32, %arg2: i32) -> (i32, i32) {
    %c0_i32 = arith.constant 0 : i32
    return %arg2, %arg1 : i32, i32
  }
  func.func @transform_2(%arg0: i32, %arg1: i32, %arg2: i32) -> (i32, i32) {
    %c0_i32 = arith.constant 0 : i32
    %c0_i32_0 = arith.constant 0 : i32
    return %c0_i32, %arg1 : i32, i32
  }
  func.func @transform_3(%arg0: i32, %arg1: i32, %arg2: i32) -> (i32, i32) {
    %c0_i32 = arith.constant 0 : i32
    return %arg0, %arg1 : i32, i32
  }
}

module attributes {stable_mosaic.version = 11 : i64} {
  func.func @_maxpool9_kernel(%arg0: memref<2x9x9x128xbf16, #tpu.memory_space<vmem>>, %arg1: memref<2x9x9x128xbf16, #tpu.memory_space<vmem>>, %arg2: memref<2x9x9x128xbf16, #tpu.memory_space<vmem>>, %arg3: memref<2x9x9x128xbf16, #tpu.memory_space<vmem>>, %arg4: memref<2x8x8x128xbf16, #tpu.memory_space<vmem>>) attributes {dimension_semantics = [], scalar_prefetch = 0 : i64, scratch_operands = 0 : i64, tpu.core_type = #tpu.core_type<tc>} {
    %c0 = arith.constant 0 : index
    %c0_0 = arith.constant 0 : index
    %c0_1 = arith.constant 0 : index
    %c0_2 = arith.constant 0 : index
    %0 = vector.load %arg3[%c0, %c0_0, %c0_1, %c0_2] : memref<2x9x9x128xbf16, #tpu.memory_space<vmem>>, vector<2x8x8x128xbf16>
    %c0_3 = arith.constant 0 : index
    %c0_4 = arith.constant 0 : index
    %c0_5 = arith.constant 0 : index
    %c0_6 = arith.constant 0 : index
    %1 = vector.load %arg0[%c0_3, %c0_4, %c0_5, %c0_6] : memref<2x9x9x128xbf16, #tpu.memory_space<vmem>>, vector<2x8x8x128xbf16>
    %2 = arith.maximumf %0, %1 : vector<2x8x8x128xbf16>
    %c0_7 = arith.constant 0 : index
    %c0_8 = arith.constant 0 : index
    %c1 = arith.constant 1 : index
    %c0_9 = arith.constant 0 : index
    %3 = vector.load %arg0[%c0_7, %c0_8, %c1, %c0_9] : memref<2x9x9x128xbf16, #tpu.memory_space<vmem>>, vector<2x8x8x128xbf16>
    %4 = arith.maximumf %2, %3 : vector<2x8x8x128xbf16>
    %c0_10 = arith.constant 0 : index
    %c1_11 = arith.constant 1 : index
    %c0_12 = arith.constant 0 : index
    %c0_13 = arith.constant 0 : index
    %5 = vector.load %arg0[%c0_10, %c1_11, %c0_12, %c0_13] : memref<2x9x9x128xbf16, #tpu.memory_space<vmem>>, vector<2x8x8x128xbf16>
    %6 = arith.maximumf %4, %5 : vector<2x8x8x128xbf16>
    %c0_14 = arith.constant 0 : index
    %c1_15 = arith.constant 1 : index
    %c1_16 = arith.constant 1 : index
    %c0_17 = arith.constant 0 : index
    %7 = vector.load %arg0[%c0_14, %c1_15, %c1_16, %c0_17] : memref<2x9x9x128xbf16, #tpu.memory_space<vmem>>, vector<2x8x8x128xbf16>
    %8 = arith.maximumf %6, %7 : vector<2x8x8x128xbf16>
    %c0_18 = arith.constant 0 : index
    %c0_19 = arith.constant 0 : index
    %c0_20 = arith.constant 0 : index
    %c0_21 = arith.constant 0 : index
    %9 = vector.load %arg1[%c0_18, %c0_19, %c0_20, %c0_21] : memref<2x9x9x128xbf16, #tpu.memory_space<vmem>>, vector<2x8x8x128xbf16>
    %10 = arith.maximumf %8, %9 : vector<2x8x8x128xbf16>
    %c0_22 = arith.constant 0 : index
    %c1_23 = arith.constant 1 : index
    %c0_24 = arith.constant 0 : index
    %c0_25 = arith.constant 0 : index
    %11 = vector.load %arg1[%c0_22, %c1_23, %c0_24, %c0_25] : memref<2x9x9x128xbf16, #tpu.memory_space<vmem>>, vector<2x8x8x128xbf16>
    %12 = arith.maximumf %10, %11 : vector<2x8x8x128xbf16>
    %c0_26 = arith.constant 0 : index
    %c0_27 = arith.constant 0 : index
    %c0_28 = arith.constant 0 : index
    %c0_29 = arith.constant 0 : index
    %13 = vector.load %arg2[%c0_26, %c0_27, %c0_28, %c0_29] : memref<2x9x9x128xbf16, #tpu.memory_space<vmem>>, vector<2x8x8x128xbf16>
    %14 = arith.maximumf %12, %13 : vector<2x8x8x128xbf16>
    %c0_30 = arith.constant 0 : index
    %c0_31 = arith.constant 0 : index
    %c1_32 = arith.constant 1 : index
    %c0_33 = arith.constant 0 : index
    %15 = vector.load %arg2[%c0_30, %c0_31, %c1_32, %c0_33] : memref<2x9x9x128xbf16, #tpu.memory_space<vmem>>, vector<2x8x8x128xbf16>
    %16 = arith.maximumf %14, %15 : vector<2x8x8x128xbf16>
    %c0_34 = arith.constant 0 : index
    %c0_35 = arith.constant 0 : index
    %c0_36 = arith.constant 0 : index
    %c0_37 = arith.constant 0 : index
    %17 = vector.load %arg4[%c0_34, %c0_35, %c0_36, %c0_37] : memref<2x8x8x128xbf16, #tpu.memory_space<vmem>>, vector<2x8x8x128xbf16>
    tpu.vector_store %arg4[%c0_34, %c0_35, %c0_36, %c0_37], %16 {strides = array<i32>} : memref<2x8x8x128xbf16, #tpu.memory_space<vmem>>, vector<2x8x8x128xbf16>,
    return
  }
}

module attributes {stable_mosaic.version = 11 : i64} {
  func.func @_conv_mm_kernel(%arg0: i32, %arg1: i32, %arg2: i32, %arg3: memref<128x384xbf16, #tpu.memory_space<vmem>>, %arg4: memref<384x128xbf16, #tpu.memory_space<vmem>>, %arg5: memref<1x128xf32, #tpu.memory_space<vmem>>, %arg6: memref<128x128xbf16, #tpu.memory_space<vmem>>, %arg7: memref<128x128xf32, #tpu.memory_space<vmem>>) attributes {dimension_semantics = [#tpu.dimension_semantics<parallel>, #tpu.dimension_semantics<parallel>, #tpu.dimension_semantics<arbitrary>], iteration_bounds = array<i64: 1, 1, 3>, scalar_prefetch = 0 : i64, scratch_operands = 1 : i64, tpu.core_type = #tpu.core_type<tc>, window_params = [{transform_indices = @transform_0, window_bounds = array<i64: 128, 384>}, {transform_indices = @transform_1, window_bounds = array<i64: 384, 128>}, {transform_indices = @transform_2, window_bounds = array<i64: 1, 128>}, {transform_indices = @transform_3, window_bounds = array<i64: 128, 128>}]} {
    %c0_i32 = arith.constant 0 : i32
    %0 = arith.cmpi eq, %arg2, %c0_i32 : i32
    %1 = arith.extui %0 : i1 to i32
    %c0_i32_0 = arith.constant 0 : i32
    %2 = arith.cmpi ne, %1, %c0_i32_0 : i32
    scf.if %2 {
      %cst_9 = arith.constant 0.000000e+00 : f32
      %12 = vector.broadcast %cst_9 : f32 to vector<128x128xf32>
      %c0_10 = arith.constant 0 : index
      %c0_11 = arith.constant 0 : index
      %13 = vector.load %arg7[%c0_10, %c0_11] : memref<128x128xf32, #tpu.memory_space<vmem>>, vector<128x128xf32>
      tpu.vector_store %arg7[%c0_10, %c0_11], %12 {strides = array<i32>} : memref<128x128xf32, #tpu.memory_space<vmem>>, vector<128x128xf32>,
    } else {
    }
    %c0 = arith.constant 0 : index
    %c0_1 = arith.constant 0 : index
    %3 = vector.load %arg7[%c0, %c0_1] : memref<128x128xf32, #tpu.memory_space<vmem>>, vector<128x128xf32>
    %c0_2 = arith.constant 0 : index
    %c0_3 = arith.constant 0 : index
    %4 = vector.load %arg3[%c0_2, %c0_3] : memref<128x384xbf16, #tpu.memory_space<vmem>>, vector<128x384xbf16>
    %c0_4 = arith.constant 0 : index
    %c0_5 = arith.constant 0 : index
    %5 = vector.load %arg4[%c0_4, %c0_5] : memref<384x128xbf16, #tpu.memory_space<vmem>>, vector<384x128xbf16>
    %cst = arith.constant dense<0.000000e+00> : vector<128x128xf32>
    %6 = tpu.matmul %4, %5, %cst {dimension_numbers = #tpu.dot_dimension_numbers<[1], [0], [0], [1], [0, 0, 1, 1], [], []>} : vector<128x384xbf16>, vector<384x128xbf16>, vector<128x128xf32> -> vector<128x128xf32>
    %7 = arith.addf %3, %6 : vector<128x128xf32>
    %c0_6 = arith.constant 0 : index
    %c0_7 = arith.constant 0 : index
    %8 = vector.load %arg7[%c0_6, %c0_7] : memref<128x128xf32, #tpu.memory_space<vmem>>, vector<128x128xf32>
    tpu.vector_store %arg7[%c0_6, %c0_7], %7 {strides = array<i32>} : memref<128x128xf32, #tpu.memory_space<vmem>>, vector<128x128xf32>,
    %c2_i32 = arith.constant 2 : i32
    %9 = arith.cmpi eq, %arg2, %c2_i32 : i32
    %10 = arith.extui %9 : i1 to i32
    %c0_i32_8 = arith.constant 0 : i32
    %11 = arith.cmpi ne, %10, %c0_i32_8 : i32
    scf.if %11 {
      %c0_9 = arith.constant 0 : index
      %c0_10 = arith.constant 0 : index
      %12 = vector.load %arg7[%c0_9, %c0_10] : memref<128x128xf32, #tpu.memory_space<vmem>>, vector<128x128xf32>
      %c0_11 = arith.constant 0 : index
      %c0_12 = arith.constant 0 : index
      %13 = vector.load %arg5[%c0_11, %c0_12] : memref<1x128xf32, #tpu.memory_space<vmem>>, vector<1x128xf32>
      %14 = vector.broadcast %13 : vector<1x128xf32> to vector<128x128xf32>
      %15 = arith.addf %12, %14 : vector<128x128xf32>
      %cst_13 = arith.constant 0.000000e+00 : f32
      %16 = vector.broadcast %cst_13 : f32 to vector<128x128xf32>
      %17 = arith.maximumf %15, %16 : vector<128x128xf32>
      %18 = arith.truncf %17 : vector<128x128xf32> to vector<128x128xbf16>
      %c0_14 = arith.constant 0 : index
      %c0_15 = arith.constant 0 : index
      %19 = vector.load %arg6[%c0_14, %c0_15] : memref<128x128xbf16, #tpu.memory_space<vmem>>, vector<128x128xbf16>
      tpu.vector_store %arg6[%c0_14, %c0_15], %18 {strides = array<i32>} : memref<128x128xbf16, #tpu.memory_space<vmem>>, vector<128x128xbf16>,
    } else {
    }
    return
  }
  func.func @transform_0(%arg0: i32, %arg1: i32, %arg2: i32) -> (i32, i32) {
    %c0_i32 = arith.constant 0 : i32
    return %arg0, %arg2 : i32, i32
  }
  func.func @transform_1(%arg0: i32, %arg1: i32, %arg2: i32) -> (i32, i32) {
    %c0_i32 = arith.constant 0 : i32
    return %arg2, %arg1 : i32, i32
  }
  func.func @transform_2(%arg0: i32, %arg1: i32, %arg2: i32) -> (i32, i32) {
    %c0_i32 = arith.constant 0 : i32
    %c0_i32_0 = arith.constant 0 : i32
    return %c0_i32, %arg1 : i32, i32
  }
  func.func @transform_3(%arg0: i32, %arg1: i32, %arg2: i32) -> (i32, i32) {
    %c0_i32 = arith.constant 0 : i32
    return %arg0, %arg1 : i32, i32
  }
}

module attributes {stable_mosaic.version = 11 : i64} {
  func.func @_conv_mm_kernel(%arg0: i32, %arg1: i32, %arg2: i32, %arg3: memref<128x384xbf16, #tpu.memory_space<vmem>>, %arg4: memref<384x128xbf16, #tpu.memory_space<vmem>>, %arg5: memref<1x128xf32, #tpu.memory_space<vmem>>, %arg6: memref<128x128xbf16, #tpu.memory_space<vmem>>, %arg7: memref<128x128xbf16, #tpu.memory_space<vmem>>, %arg8: memref<128x128xf32, #tpu.memory_space<vmem>>) attributes {dimension_semantics = [#tpu.dimension_semantics<parallel>, #tpu.dimension_semantics<parallel>, #tpu.dimension_semantics<arbitrary>], iteration_bounds = array<i64: 1, 1, 3>, scalar_prefetch = 0 : i64, scratch_operands = 1 : i64, tpu.core_type = #tpu.core_type<tc>, window_params = [{transform_indices = @transform_0, window_bounds = array<i64: 128, 384>}, {transform_indices = @transform_1, window_bounds = array<i64: 384, 128>}, {transform_indices = @transform_2, window_bounds = array<i64: 1, 128>}, {transform_indices = @transform_3, window_bounds = array<i64: 128, 128>}, {transform_indices = @transform_4, window_bounds = array<i64: 128, 128>}]} {
    %c0_i32 = arith.constant 0 : i32
    %0 = arith.cmpi eq, %arg2, %c0_i32 : i32
    %1 = arith.extui %0 : i1 to i32
    %c0_i32_0 = arith.constant 0 : i32
    %2 = arith.cmpi ne, %1, %c0_i32_0 : i32
    scf.if %2 {
      %cst_9 = arith.constant 0.000000e+00 : f32
      %12 = vector.broadcast %cst_9 : f32 to vector<128x128xf32>
      %c0_10 = arith.constant 0 : index
      %c0_11 = arith.constant 0 : index
      %13 = vector.load %arg8[%c0_10, %c0_11] : memref<128x128xf32, #tpu.memory_space<vmem>>, vector<128x128xf32>
      tpu.vector_store %arg8[%c0_10, %c0_11], %12 {strides = array<i32>} : memref<128x128xf32, #tpu.memory_space<vmem>>, vector<128x128xf32>,
    } else {
    }
    %c0 = arith.constant 0 : index
    %c0_1 = arith.constant 0 : index
    %3 = vector.load %arg8[%c0, %c0_1] : memref<128x128xf32, #tpu.memory_space<vmem>>, vector<128x128xf32>
    %c0_2 = arith.constant 0 : index
    %c0_3 = arith.constant 0 : index
    %4 = vector.load %arg3[%c0_2, %c0_3] : memref<128x384xbf16, #tpu.memory_space<vmem>>, vector<128x384xbf16>
    %c0_4 = arith.constant 0 : index
    %c0_5 = arith.constant 0 : index
    %5 = vector.load %arg4[%c0_4, %c0_5] : memref<384x128xbf16, #tpu.memory_space<vmem>>, vector<384x128xbf16>
    %cst = arith.constant dense<0.000000e+00> : vector<128x128xf32>
    %6 = tpu.matmul %4, %5, %cst {dimension_numbers = #tpu.dot_dimension_numbers<[1], [0], [0], [1], [0, 0, 1, 1], [], []>} : vector<128x384xbf16>, vector<384x128xbf16>, vector<128x128xf32> -> vector<128x128xf32>
    %7 = arith.addf %3, %6 : vector<128x128xf32>
    %c0_6 = arith.constant 0 : index
    %c0_7 = arith.constant 0 : index
    %8 = vector.load %arg8[%c0_6, %c0_7] : memref<128x128xf32, #tpu.memory_space<vmem>>, vector<128x128xf32>
    tpu.vector_store %arg8[%c0_6, %c0_7], %7 {strides = array<i32>} : memref<128x128xf32, #tpu.memory_space<vmem>>, vector<128x128xf32>,
    %c2_i32 = arith.constant 2 : i32
    %9 = arith.cmpi eq, %arg2, %c2_i32 : i32
    %10 = arith.extui %9 : i1 to i32
    %c0_i32_8 = arith.constant 0 : i32
    %11 = arith.cmpi ne, %10, %c0_i32_8 : i32
    scf.if %11 {
      %c0_9 = arith.constant 0 : index
      %c0_10 = arith.constant 0 : index
      %12 = vector.load %arg8[%c0_9, %c0_10] : memref<128x128xf32, #tpu.memory_space<vmem>>, vector<128x128xf32>
      %c0_11 = arith.constant 0 : index
      %c0_12 = arith.constant 0 : index
      %13 = vector.load %arg5[%c0_11, %c0_12] : memref<1x128xf32, #tpu.memory_space<vmem>>, vector<1x128xf32>
      %14 = vector.broadcast %13 : vector<1x128xf32> to vector<128x128xf32>
      %15 = arith.addf %12, %14 : vector<128x128xf32>
      %c0_13 = arith.constant 0 : index
      %c0_14 = arith.constant 0 : index
      %16 = vector.load %arg6[%c0_13, %c0_14] : memref<128x128xbf16, #tpu.memory_space<vmem>>, vector<128x128xbf16>
      %17 = arith.extf %16 : vector<128x128xbf16> to vector<128x128xf32>
      %18 = arith.addf %15, %17 : vector<128x128xf32>
      %cst_15 = arith.constant 0.000000e+00 : f32
      %19 = vector.broadcast %cst_15 : f32 to vector<128x128xf32>
      %20 = arith.maximumf %18, %19 : vector<128x128xf32>
      %21 = arith.truncf %20 : vector<128x128xf32> to vector<128x128xbf16>
      %c0_16 = arith.constant 0 : index
      %c0_17 = arith.constant 0 : index
      %22 = vector.load %arg7[%c0_16, %c0_17] : memref<128x128xbf16, #tpu.memory_space<vmem>>, vector<128x128xbf16>
      tpu.vector_store %arg7[%c0_16, %c0_17], %21 {strides = array<i32>} : memref<128x128xbf16, #tpu.memory_space<vmem>>, vector<128x128xbf16>,
    } else {
    }
    return
  }
  func.func @transform_0(%arg0: i32, %arg1: i32, %arg2: i32) -> (i32, i32) {
    %c0_i32 = arith.constant 0 : i32
    return %arg0, %arg2 : i32, i32
  }
  func.func @transform_1(%arg0: i32, %arg1: i32, %arg2: i32) -> (i32, i32) {
    %c0_i32 = arith.constant 0 : i32
    return %arg2, %arg1 : i32, i32
  }
  func.func @transform_2(%arg0: i32, %arg1: i32, %arg2: i32) -> (i32, i32) {
    %c0_i32 = arith.constant 0 : i32
    %c0_i32_0 = arith.constant 0 : i32
    return %c0_i32, %arg1 : i32, i32
  }
  func.func @transform_3(%arg0: i32, %arg1: i32, %arg2: i32) -> (i32, i32) {
    %c0_i32 = arith.constant 0 : i32
    return %arg0, %arg1 : i32, i32
  }
  func.func @transform_4(%arg0: i32, %arg1: i32, %arg2: i32) -> (i32, i32) {
    %c0_i32 = arith.constant 0 : i32
    return %arg0, %arg1 : i32, i32
  }
}

module attributes {stable_mosaic.version = 11 : i64} {
  func.func @_conv_mm_kernel(%arg0: i32, %arg1: i32, %arg2: i32, %arg3: memref<32x384xbf16, #tpu.memory_space<vmem>>, %arg4: memref<384x128xbf16, #tpu.memory_space<vmem>>, %arg5: memref<1x128xf32, #tpu.memory_space<vmem>>, %arg6: memref<32x128xbf16, #tpu.memory_space<vmem>>, %arg7: memref<32x128xf32, #tpu.memory_space<vmem>>) attributes {dimension_semantics = [#tpu.dimension_semantics<parallel>, #tpu.dimension_semantics<parallel>, #tpu.dimension_semantics<arbitrary>], iteration_bounds = array<i64: 1, 1, 3>, scalar_prefetch = 0 : i64, scratch_operands = 1 : i64, tpu.core_type = #tpu.core_type<tc>, window_params = [{transform_indices = @transform_0, window_bounds = array<i64: 32, 384>}, {transform_indices = @transform_1, window_bounds = array<i64: 384, 128>}, {transform_indices = @transform_2, window_bounds = array<i64: 1, 128>}, {transform_indices = @transform_3, window_bounds = array<i64: 32, 128>}]} {
    %c0_i32 = arith.constant 0 : i32
    %0 = arith.cmpi eq, %arg2, %c0_i32 : i32
    %1 = arith.extui %0 : i1 to i32
    %c0_i32_0 = arith.constant 0 : i32
    %2 = arith.cmpi ne, %1, %c0_i32_0 : i32
    scf.if %2 {
      %cst_9 = arith.constant 0.000000e+00 : f32
      %12 = vector.broadcast %cst_9 : f32 to vector<32x128xf32>
      %c0_10 = arith.constant 0 : index
      %c0_11 = arith.constant 0 : index
      %13 = vector.load %arg7[%c0_10, %c0_11] : memref<32x128xf32, #tpu.memory_space<vmem>>, vector<32x128xf32>
      tpu.vector_store %arg7[%c0_10, %c0_11], %12 {strides = array<i32>} : memref<32x128xf32, #tpu.memory_space<vmem>>, vector<32x128xf32>,
    } else {
    }
    %c0 = arith.constant 0 : index
    %c0_1 = arith.constant 0 : index
    %3 = vector.load %arg7[%c0, %c0_1] : memref<32x128xf32, #tpu.memory_space<vmem>>, vector<32x128xf32>
    %c0_2 = arith.constant 0 : index
    %c0_3 = arith.constant 0 : index
    %4 = vector.load %arg3[%c0_2, %c0_3] : memref<32x384xbf16, #tpu.memory_space<vmem>>, vector<32x384xbf16>
    %c0_4 = arith.constant 0 : index
    %c0_5 = arith.constant 0 : index
    %5 = vector.load %arg4[%c0_4, %c0_5] : memref<384x128xbf16, #tpu.memory_space<vmem>>, vector<384x128xbf16>
    %cst = arith.constant dense<0.000000e+00> : vector<32x128xf32>
    %6 = tpu.matmul %4, %5, %cst {dimension_numbers = #tpu.dot_dimension_numbers<[1], [0], [0], [1], [0, 0, 1, 1], [], []>} : vector<32x384xbf16>, vector<384x128xbf16>, vector<32x128xf32> -> vector<32x128xf32>
    %7 = arith.addf %3, %6 : vector<32x128xf32>
    %c0_6 = arith.constant 0 : index
    %c0_7 = arith.constant 0 : index
    %8 = vector.load %arg7[%c0_6, %c0_7] : memref<32x128xf32, #tpu.memory_space<vmem>>, vector<32x128xf32>
    tpu.vector_store %arg7[%c0_6, %c0_7], %7 {strides = array<i32>} : memref<32x128xf32, #tpu.memory_space<vmem>>, vector<32x128xf32>,
    %c2_i32 = arith.constant 2 : i32
    %9 = arith.cmpi eq, %arg2, %c2_i32 : i32
    %10 = arith.extui %9 : i1 to i32
    %c0_i32_8 = arith.constant 0 : i32
    %11 = arith.cmpi ne, %10, %c0_i32_8 : i32
    scf.if %11 {
      %c0_9 = arith.constant 0 : index
      %c0_10 = arith.constant 0 : index
      %12 = vector.load %arg7[%c0_9, %c0_10] : memref<32x128xf32, #tpu.memory_space<vmem>>, vector<32x128xf32>
      %c0_11 = arith.constant 0 : index
      %c0_12 = arith.constant 0 : index
      %13 = vector.load %arg5[%c0_11, %c0_12] : memref<1x128xf32, #tpu.memory_space<vmem>>, vector<1x128xf32>
      %14 = vector.broadcast %13 : vector<1x128xf32> to vector<32x128xf32>
      %15 = arith.addf %12, %14 : vector<32x128xf32>
      %cst_13 = arith.constant 0.000000e+00 : f32
      %16 = vector.broadcast %cst_13 : f32 to vector<32x128xf32>
      %17 = arith.maximumf %15, %16 : vector<32x128xf32>
      %18 = arith.truncf %17 : vector<32x128xf32> to vector<32x128xbf16>
      %c0_14 = arith.constant 0 : index
      %c0_15 = arith.constant 0 : index
      %19 = vector.load %arg6[%c0_14, %c0_15] : memref<32x128xbf16, #tpu.memory_space<vmem>>, vector<32x128xbf16>
      tpu.vector_store %arg6[%c0_14, %c0_15], %18 {strides = array<i32>} : memref<32x128xbf16, #tpu.memory_space<vmem>>, vector<32x128xbf16>,
    } else {
    }
    return
  }
  func.func @transform_0(%arg0: i32, %arg1: i32, %arg2: i32) -> (i32, i32) {
    %c0_i32 = arith.constant 0 : i32
    return %arg0, %arg2 : i32, i32
  }
  func.func @transform_1(%arg0: i32, %arg1: i32, %arg2: i32) -> (i32, i32) {
    %c0_i32 = arith.constant 0 : i32
    return %arg2, %arg1 : i32, i32
  }
  func.func @transform_2(%arg0: i32, %arg1: i32, %arg2: i32) -> (i32, i32) {
    %c0_i32 = arith.constant 0 : i32
    %c0_i32_0 = arith.constant 0 : i32
    return %c0_i32, %arg1 : i32, i32
  }
  func.func @transform_3(%arg0: i32, %arg1: i32, %arg2: i32) -> (i32, i32) {
    %c0_i32 = arith.constant 0 : i32
    return %arg0, %arg1 : i32, i32
  }
}

module attributes {stable_mosaic.version = 11 : i64} {
  func.func @_conv_mm_kernel(%arg0: i32, %arg1: i32, %arg2: i32, %arg3: memref<32x384xbf16, #tpu.memory_space<vmem>>, %arg4: memref<384x128xbf16, #tpu.memory_space<vmem>>, %arg5: memref<1x128xf32, #tpu.memory_space<vmem>>, %arg6: memref<32x128xbf16, #tpu.memory_space<vmem>>, %arg7: memref<32x128xbf16, #tpu.memory_space<vmem>>, %arg8: memref<32x128xf32, #tpu.memory_space<vmem>>) attributes {dimension_semantics = [#tpu.dimension_semantics<parallel>, #tpu.dimension_semantics<parallel>, #tpu.dimension_semantics<arbitrary>], iteration_bounds = array<i64: 1, 1, 3>, scalar_prefetch = 0 : i64, scratch_operands = 1 : i64, tpu.core_type = #tpu.core_type<tc>, window_params = [{transform_indices = @transform_0, window_bounds = array<i64: 32, 384>}, {transform_indices = @transform_1, window_bounds = array<i64: 384, 128>}, {transform_indices = @transform_2, window_bounds = array<i64: 1, 128>}, {transform_indices = @transform_3, window_bounds = array<i64: 32, 128>}, {transform_indices = @transform_4, window_bounds = array<i64: 32, 128>}]} {
    %c0_i32 = arith.constant 0 : i32
    %0 = arith.cmpi eq, %arg2, %c0_i32 : i32
    %1 = arith.extui %0 : i1 to i32
    %c0_i32_0 = arith.constant 0 : i32
    %2 = arith.cmpi ne, %1, %c0_i32_0 : i32
    scf.if %2 {
      %cst_9 = arith.constant 0.000000e+00 : f32
      %12 = vector.broadcast %cst_9 : f32 to vector<32x128xf32>
      %c0_10 = arith.constant 0 : index
      %c0_11 = arith.constant 0 : index
      %13 = vector.load %arg8[%c0_10, %c0_11] : memref<32x128xf32, #tpu.memory_space<vmem>>, vector<32x128xf32>
      tpu.vector_store %arg8[%c0_10, %c0_11], %12 {strides = array<i32>} : memref<32x128xf32, #tpu.memory_space<vmem>>, vector<32x128xf32>,
    } else {
    }
    %c0 = arith.constant 0 : index
    %c0_1 = arith.constant 0 : index
    %3 = vector.load %arg8[%c0, %c0_1] : memref<32x128xf32, #tpu.memory_space<vmem>>, vector<32x128xf32>
    %c0_2 = arith.constant 0 : index
    %c0_3 = arith.constant 0 : index
    %4 = vector.load %arg3[%c0_2, %c0_3] : memref<32x384xbf16, #tpu.memory_space<vmem>>, vector<32x384xbf16>
    %c0_4 = arith.constant 0 : index
    %c0_5 = arith.constant 0 : index
    %5 = vector.load %arg4[%c0_4, %c0_5] : memref<384x128xbf16, #tpu.memory_space<vmem>>, vector<384x128xbf16>
    %cst = arith.constant dense<0.000000e+00> : vector<32x128xf32>
    %6 = tpu.matmul %4, %5, %cst {dimension_numbers = #tpu.dot_dimension_numbers<[1], [0], [0], [1], [0, 0, 1, 1], [], []>} : vector<32x384xbf16>, vector<384x128xbf16>, vector<32x128xf32> -> vector<32x128xf32>
    %7 = arith.addf %3, %6 : vector<32x128xf32>
    %c0_6 = arith.constant 0 : index
    %c0_7 = arith.constant 0 : index
    %8 = vector.load %arg8[%c0_6, %c0_7] : memref<32x128xf32, #tpu.memory_space<vmem>>, vector<32x128xf32>
    tpu.vector_store %arg8[%c0_6, %c0_7], %7 {strides = array<i32>} : memref<32x128xf32, #tpu.memory_space<vmem>>, vector<32x128xf32>,
    %c2_i32 = arith.constant 2 : i32
    %9 = arith.cmpi eq, %arg2, %c2_i32 : i32
    %10 = arith.extui %9 : i1 to i32
    %c0_i32_8 = arith.constant 0 : i32
    %11 = arith.cmpi ne, %10, %c0_i32_8 : i32
    scf.if %11 {
      %c0_9 = arith.constant 0 : index
      %c0_10 = arith.constant 0 : index
      %12 = vector.load %arg8[%c0_9, %c0_10] : memref<32x128xf32, #tpu.memory_space<vmem>>, vector<32x128xf32>
      %c0_11 = arith.constant 0 : index
      %c0_12 = arith.constant 0 : index
      %13 = vector.load %arg5[%c0_11, %c0_12] : memref<1x128xf32, #tpu.memory_space<vmem>>, vector<1x128xf32>
      %14 = vector.broadcast %13 : vector<1x128xf32> to vector<32x128xf32>
      %15 = arith.addf %12, %14 : vector<32x128xf32>
      %c0_13 = arith.constant 0 : index
      %c0_14 = arith.constant 0 : index
      %16 = vector.load %arg6[%c0_13, %c0_14] : memref<32x128xbf16, #tpu.memory_space<vmem>>, vector<32x128xbf16>
      %17 = arith.extf %16 : vector<32x128xbf16> to vector<32x128xf32>
      %18 = arith.addf %15, %17 : vector<32x128xf32>
      %cst_15 = arith.constant 0.000000e+00 : f32
      %19 = vector.broadcast %cst_15 : f32 to vector<32x128xf32>
      %20 = arith.maximumf %18, %19 : vector<32x128xf32>
      %21 = arith.truncf %20 : vector<32x128xf32> to vector<32x128xbf16>
      %c0_16 = arith.constant 0 : index
      %c0_17 = arith.constant 0 : index
      %22 = vector.load %arg7[%c0_16, %c0_17] : memref<32x128xbf16, #tpu.memory_space<vmem>>, vector<32x128xbf16>
      tpu.vector_store %arg7[%c0_16, %c0_17], %21 {strides = array<i32>} : memref<32x128xbf16, #tpu.memory_space<vmem>>, vector<32x128xbf16>,
    } else {
    }
    return
  }
  func.func @transform_0(%arg0: i32, %arg1: i32, %arg2: i32) -> (i32, i32) {
    %c0_i32 = arith.constant 0 : i32
    return %arg0, %arg2 : i32, i32
  }
  func.func @transform_1(%arg0: i32, %arg1: i32, %arg2: i32) -> (i32, i32) {
    %c0_i32 = arith.constant 0 : i32
    return %arg2, %arg1 : i32, i32
  }
  func.func @transform_2(%arg0: i32, %arg1: i32, %arg2: i32) -> (i32, i32) {
    %c0_i32 = arith.constant 0 : i32
    %c0_i32_0 = arith.constant 0 : i32
    return %c0_i32, %arg1 : i32, i32
  }
  func.func @transform_3(%arg0: i32, %arg1: i32, %arg2: i32) -> (i32, i32) {
    %c0_i32 = arith.constant 0 : i32
    return %arg0, %arg1 : i32, i32
  }
  func.func @transform_4(%arg0: i32, %arg1: i32, %arg2: i32) -> (i32, i32) {
    %c0_i32 = arith.constant 0 : i32
    return %arg0, %arg1 : i32, i32
  }
}

module attributes {stable_mosaic.version = 11 : i64} {
  func.func @_conv_mm_kernel(%arg0: i32, %arg1: i32, %arg2: i32, %arg3: memref<32x128xbf16, #tpu.memory_space<vmem>>, %arg4: memref<128x128xbf16, #tpu.memory_space<vmem>>, %arg5: memref<1x128xf32, #tpu.memory_space<vmem>>, %arg6: memref<32x128xbf16, #tpu.memory_space<vmem>>, %arg7: memref<32x128xf32, #tpu.memory_space<vmem>>) attributes {dimension_semantics = [#tpu.dimension_semantics<parallel>, #tpu.dimension_semantics<parallel>, #tpu.dimension_semantics<arbitrary>], iteration_bounds = array<i64: 1, 1, 1>, scalar_prefetch = 0 : i64, scratch_operands = 1 : i64, tpu.core_type = #tpu.core_type<tc>, window_params = [{transform_indices = @transform_0, window_bounds = array<i64: 32, 128>}, {transform_indices = @transform_1, window_bounds = array<i64: 128, 128>}, {transform_indices = @transform_2, window_bounds = array<i64: 1, 128>}, {transform_indices = @transform_3, window_bounds = array<i64: 32, 128>}]} {
    %c0_i32 = arith.constant 0 : i32
    %0 = arith.cmpi eq, %arg2, %c0_i32 : i32
    %1 = arith.extui %0 : i1 to i32
    %c0_i32_0 = arith.constant 0 : i32
    %2 = arith.cmpi ne, %1, %c0_i32_0 : i32
    scf.if %2 {
      %cst_10 = arith.constant 0.000000e+00 : f32
      %12 = vector.broadcast %cst_10 : f32 to vector<32x128xf32>
      %c0_11 = arith.constant 0 : index
      %c0_12 = arith.constant 0 : index
      %13 = vector.load %arg7[%c0_11, %c0_12] : memref<32x128xf32, #tpu.memory_space<vmem>>, vector<32x128xf32>
      tpu.vector_store %arg7[%c0_11, %c0_12], %12 {strides = array<i32>} : memref<32x128xf32, #tpu.memory_space<vmem>>, vector<32x128xf32>,
    } else {
    }
    %c0 = arith.constant 0 : index
    %c0_1 = arith.constant 0 : index
    %3 = vector.load %arg7[%c0, %c0_1] : memref<32x128xf32, #tpu.memory_space<vmem>>, vector<32x128xf32>
    %c0_2 = arith.constant 0 : index
    %c0_3 = arith.constant 0 : index
    %4 = vector.load %arg3[%c0_2, %c0_3] : memref<32x128xbf16, #tpu.memory_space<vmem>>, vector<32x128xbf16>
    %c0_4 = arith.constant 0 : index
    %c0_5 = arith.constant 0 : index
    %5 = vector.load %arg4[%c0_4, %c0_5] : memref<128x128xbf16, #tpu.memory_space<vmem>>, vector<128x128xbf16>
    %cst = arith.constant dense<0.000000e+00> : vector<32x128xf32>
    %6 = tpu.matmul %4, %5, %cst {dimension_numbers = #tpu.dot_dimension_numbers<[1], [0], [0], [1], [0, 0, 1, 1], [], []>} : vector<32x128xbf16>, vector<128x128xbf16>, vector<32x128xf32> -> vector<32x128xf32>
    %7 = arith.addf %3, %6 : vector<32x128xf32>
    %c0_6 = arith.constant 0 : index
    %c0_7 = arith.constant 0 : index
    %8 = vector.load %arg7[%c0_6, %c0_7] : memref<32x128xf32, #tpu.memory_space<vmem>>, vector<32x128xf32>
    tpu.vector_store %arg7[%c0_6, %c0_7], %7 {strides = array<i32>} : memref<32x128xf32, #tpu.memory_space<vmem>>, vector<32x128xf32>,
    %c0_i32_8 = arith.constant 0 : i32
    %9 = arith.cmpi eq, %arg2, %c0_i32_8 : i32
    %10 = arith.extui %9 : i1 to i32
    %c0_i32_9 = arith.constant 0 : i32
    %11 = arith.cmpi ne, %10, %c0_i32_9 : i32
    scf.if %11 {
      %c0_10 = arith.constant 0 : index
      %c0_11 = arith.constant 0 : index
      %12 = vector.load %arg7[%c0_10, %c0_11] : memref<32x128xf32, #tpu.memory_space<vmem>>, vector<32x128xf32>
      %c0_12 = arith.constant 0 : index
      %c0_13 = arith.constant 0 : index
      %13 = vector.load %arg5[%c0_12, %c0_13] : memref<1x128xf32, #tpu.memory_space<vmem>>, vector<1x128xf32>
      %14 = vector.broadcast %13 : vector<1x128xf32> to vector<32x128xf32>
      %15 = arith.addf %12, %14 : vector<32x128xf32>
      %16 = arith.truncf %15 : vector<32x128xf32> to vector<32x128xbf16>
      %c0_14 = arith.constant 0 : index
      %c0_15 = arith.constant 0 : index
      %17 = vector.load %arg6[%c0_14, %c0_15] : memref<32x128xbf16, #tpu.memory_space<vmem>>, vector<32x128xbf16>
      tpu.vector_store %arg6[%c0_14, %c0_15], %16 {strides = array<i32>} : memref<32x128xbf16, #tpu.memory_space<vmem>>, vector<32x128xbf16>,
    } else {
    }
    return
  }
  func.func @transform_0(%arg0: i32, %arg1: i32, %arg2: i32) -> (i32, i32) {
    %c0_i32 = arith.constant 0 : i32
    return %arg0, %arg2 : i32, i32
  }
  func.func @transform_1(%arg0: i32, %arg1: i32, %arg2: i32) -> (i32, i32) {
    %c0_i32 = arith.constant 0 : i32
    return %arg2, %arg1 : i32, i32
  }
  func.func @transform_2(%arg0: i32, %arg1: i32, %arg2: i32) -> (i32, i32) {
    %c0_i32 = arith.constant 0 : i32
    %c0_i32_0 = arith.constant 0 : i32
    return %c0_i32, %arg1 : i32, i32
  }
  func.func @transform_3(%arg0: i32, %arg1: i32, %arg2: i32) -> (i32, i32) {
    %c0_i32 = arith.constant 0 : i32
    return %arg0, %arg1 : i32, i32
  }
}

module attributes {stable_mosaic.version = 11 : i64} {
  func.func @_conv_mm_kernel(%arg0: i32, %arg1: i32, %arg2: i32, %arg3: memref<16x384xbf16, #tpu.memory_space<vmem>>, %arg4: memref<384x256xbf16, #tpu.memory_space<vmem>>, %arg5: memref<1x256xf32, #tpu.memory_space<vmem>>, %arg6: memref<16x256xbf16, #tpu.memory_space<vmem>>, %arg7: memref<16x256xf32, #tpu.memory_space<vmem>>) attributes {dimension_semantics = [#tpu.dimension_semantics<parallel>, #tpu.dimension_semantics<parallel>, #tpu.dimension_semantics<arbitrary>], iteration_bounds = array<i64: 1, 1, 3>, scalar_prefetch = 0 : i64, scratch_operands = 1 : i64, tpu.core_type = #tpu.core_type<tc>, window_params = [{transform_indices = @transform_0, window_bounds = array<i64: 16, 384>}, {transform_indices = @transform_1, window_bounds = array<i64: 384, 256>}, {transform_indices = @transform_2, window_bounds = array<i64: 1, 256>}, {transform_indices = @transform_3, window_bounds = array<i64: 16, 256>}]} {
    %c0_i32 = arith.constant 0 : i32
    %0 = arith.cmpi eq, %arg2, %c0_i32 : i32
    %1 = arith.extui %0 : i1 to i32
    %c0_i32_0 = arith.constant 0 : i32
    %2 = arith.cmpi ne, %1, %c0_i32_0 : i32
    scf.if %2 {
      %cst_9 = arith.constant 0.000000e+00 : f32
      %12 = vector.broadcast %cst_9 : f32 to vector<16x256xf32>
      %c0_10 = arith.constant 0 : index
      %c0_11 = arith.constant 0 : index
      %13 = vector.load %arg7[%c0_10, %c0_11] : memref<16x256xf32, #tpu.memory_space<vmem>>, vector<16x256xf32>
      tpu.vector_store %arg7[%c0_10, %c0_11], %12 {strides = array<i32>} : memref<16x256xf32, #tpu.memory_space<vmem>>, vector<16x256xf32>,
    } else {
    }
    %c0 = arith.constant 0 : index
    %c0_1 = arith.constant 0 : index
    %3 = vector.load %arg7[%c0, %c0_1] : memref<16x256xf32, #tpu.memory_space<vmem>>, vector<16x256xf32>
    %c0_2 = arith.constant 0 : index
    %c0_3 = arith.constant 0 : index
    %4 = vector.load %arg3[%c0_2, %c0_3] : memref<16x384xbf16, #tpu.memory_space<vmem>>, vector<16x384xbf16>
    %c0_4 = arith.constant 0 : index
    %c0_5 = arith.constant 0 : index
    %5 = vector.load %arg4[%c0_4, %c0_5] : memref<384x256xbf16, #tpu.memory_space<vmem>>, vector<384x256xbf16>
    %cst = arith.constant dense<0.000000e+00> : vector<16x256xf32>
    %6 = tpu.matmul %4, %5, %cst {dimension_numbers = #tpu.dot_dimension_numbers<[1], [0], [0], [1], [0, 0, 1, 1], [], []>} : vector<16x384xbf16>, vector<384x256xbf16>, vector<16x256xf32> -> vector<16x256xf32>
    %7 = arith.addf %3, %6 : vector<16x256xf32>
    %c0_6 = arith.constant 0 : index
    %c0_7 = arith.constant 0 : index
    %8 = vector.load %arg7[%c0_6, %c0_7] : memref<16x256xf32, #tpu.memory_space<vmem>>, vector<16x256xf32>
    tpu.vector_store %arg7[%c0_6, %c0_7], %7 {strides = array<i32>} : memref<16x256xf32, #tpu.memory_space<vmem>>, vector<16x256xf32>,
    %c2_i32 = arith.constant 2 : i32
    %9 = arith.cmpi eq, %arg2, %c2_i32 : i32
    %10 = arith.extui %9 : i1 to i32
    %c0_i32_8 = arith.constant 0 : i32
    %11 = arith.cmpi ne, %10, %c0_i32_8 : i32
    scf.if %11 {
      %c0_9 = arith.constant 0 : index
      %c0_10 = arith.constant 0 : index
      %12 = vector.load %arg7[%c0_9, %c0_10] : memref<16x256xf32, #tpu.memory_space<vmem>>, vector<16x256xf32>
      %c0_11 = arith.constant 0 : index
      %c0_12 = arith.constant 0 : index
      %13 = vector.load %arg5[%c0_11, %c0_12] : memref<1x256xf32, #tpu.memory_space<vmem>>, vector<1x256xf32>
      %14 = vector.broadcast %13 : vector<1x256xf32> to vector<16x256xf32>
      %15 = arith.addf %12, %14 : vector<16x256xf32>
      %cst_13 = arith.constant 0.000000e+00 : f32
      %16 = vector.broadcast %cst_13 : f32 to vector<16x256xf32>
      %17 = arith.maximumf %15, %16 : vector<16x256xf32>
      %18 = arith.truncf %17 : vector<16x256xf32> to vector<16x256xbf16>
      %c0_14 = arith.constant 0 : index
      %c0_15 = arith.constant 0 : index
      %19 = vector.load %arg6[%c0_14, %c0_15] : memref<16x256xbf16, #tpu.memory_space<vmem>>, vector<16x256xbf16>
      tpu.vector_store %arg6[%c0_14, %c0_15], %18 {strides = array<i32>} : memref<16x256xbf16, #tpu.memory_space<vmem>>, vector<16x256xbf16>,
    } else {
    }
    return
  }
  func.func @transform_0(%arg0: i32, %arg1: i32, %arg2: i32) -> (i32, i32) {
    %c0_i32 = arith.constant 0 : i32
    return %arg0, %arg2 : i32, i32
  }
  func.func @transform_1(%arg0: i32, %arg1: i32, %arg2: i32) -> (i32, i32) {
    %c0_i32 = arith.constant 0 : i32
    return %arg2, %arg1 : i32, i32
  }
  func.func @transform_2(%arg0: i32, %arg1: i32, %arg2: i32) -> (i32, i32) {
    %c0_i32 = arith.constant 0 : i32
    %c0_i32_0 = arith.constant 0 : i32
    return %c0_i32, %arg1 : i32, i32
  }
  func.func @transform_3(%arg0: i32, %arg1: i32, %arg2: i32) -> (i32, i32) {
    %c0_i32 = arith.constant 0 : i32
    return %arg0, %arg1 : i32, i32
  }
}

module attributes {stable_mosaic.version = 11 : i64} {
  func.func @_conv_mm_kernel(%arg0: i32, %arg1: i32, %arg2: i32, %arg3: memref<16x128xbf16, #tpu.memory_space<vmem>>, %arg4: memref<128x256xbf16, #tpu.memory_space<vmem>>, %arg5: memref<1x256xf32, #tpu.memory_space<vmem>>, %arg6: memref<16x256xbf16, #tpu.memory_space<vmem>>, %arg7: memref<16x256xf32, #tpu.memory_space<vmem>>) attributes {dimension_semantics = [#tpu.dimension_semantics<parallel>, #tpu.dimension_semantics<parallel>, #tpu.dimension_semantics<arbitrary>], iteration_bounds = array<i64: 1, 1, 1>, scalar_prefetch = 0 : i64, scratch_operands = 1 : i64, tpu.core_type = #tpu.core_type<tc>, window_params = [{transform_indices = @transform_0, window_bounds = array<i64: 16, 128>}, {transform_indices = @transform_1, window_bounds = array<i64: 128, 256>}, {transform_indices = @transform_2, window_bounds = array<i64: 1, 256>}, {transform_indices = @transform_3, window_bounds = array<i64: 16, 256>}]} {
    %c0_i32 = arith.constant 0 : i32
    %0 = arith.cmpi eq, %arg2, %c0_i32 : i32
    %1 = arith.extui %0 : i1 to i32
    %c0_i32_0 = arith.constant 0 : i32
    %2 = arith.cmpi ne, %1, %c0_i32_0 : i32
    scf.if %2 {
      %cst_10 = arith.constant 0.000000e+00 : f32
      %12 = vector.broadcast %cst_10 : f32 to vector<16x256xf32>
      %c0_11 = arith.constant 0 : index
      %c0_12 = arith.constant 0 : index
      %13 = vector.load %arg7[%c0_11, %c0_12] : memref<16x256xf32, #tpu.memory_space<vmem>>, vector<16x256xf32>
      tpu.vector_store %arg7[%c0_11, %c0_12], %12 {strides = array<i32>} : memref<16x256xf32, #tpu.memory_space<vmem>>, vector<16x256xf32>,
    } else {
    }
    %c0 = arith.constant 0 : index
    %c0_1 = arith.constant 0 : index
    %3 = vector.load %arg7[%c0, %c0_1] : memref<16x256xf32, #tpu.memory_space<vmem>>, vector<16x256xf32>
    %c0_2 = arith.constant 0 : index
    %c0_3 = arith.constant 0 : index
    %4 = vector.load %arg3[%c0_2, %c0_3] : memref<16x128xbf16, #tpu.memory_space<vmem>>, vector<16x128xbf16>
    %c0_4 = arith.constant 0 : index
    %c0_5 = arith.constant 0 : index
    %5 = vector.load %arg4[%c0_4, %c0_5] : memref<128x256xbf16, #tpu.memory_space<vmem>>, vector<128x256xbf16>
    %cst = arith.constant dense<0.000000e+00> : vector<16x256xf32>
    %6 = tpu.matmul %4, %5, %cst {dimension_numbers = #tpu.dot_dimension_numbers<[1], [0], [0], [1], [0, 0, 1, 1], [], []>} : vector<16x128xbf16>, vector<128x256xbf16>, vector<16x256xf32> -> vector<16x256xf32>
    %7 = arith.addf %3, %6 : vector<16x256xf32>
    %c0_6 = arith.constant 0 : index
    %c0_7 = arith.constant 0 : index
    %8 = vector.load %arg7[%c0_6, %c0_7] : memref<16x256xf32, #tpu.memory_space<vmem>>, vector<16x256xf32>
    tpu.vector_store %arg7[%c0_6, %c0_7], %7 {strides = array<i32>} : memref<16x256xf32, #tpu.memory_space<vmem>>, vector<16x256xf32>,
    %c0_i32_8 = arith.constant 0 : i32
    %9 = arith.cmpi eq, %arg2, %c0_i32_8 : i32
    %10 = arith.extui %9 : i1 to i32
    %c0_i32_9 = arith.constant 0 : i32
    %11 = arith.cmpi ne, %10, %c0_i32_9 : i32
    scf.if %11 {
      %c0_10 = arith.constant 0 : index
      %c0_11 = arith.constant 0 : index
      %12 = vector.load %arg7[%c0_10, %c0_11] : memref<16x256xf32, #tpu.memory_space<vmem>>, vector<16x256xf32>
      %c0_12 = arith.constant 0 : index
      %c0_13 = arith.constant 0 : index
      %13 = vector.load %arg5[%c0_12, %c0_13] : memref<1x256xf32, #tpu.memory_space<vmem>>, vector<1x256xf32>
      %14 = vector.broadcast %13 : vector<1x256xf32> to vector<16x256xf32>
      %15 = arith.addf %12, %14 : vector<16x256xf32>
      %16 = arith.truncf %15 : vector<16x256xf32> to vector<16x256xbf16>
      %c0_14 = arith.constant 0 : index
      %c0_15 = arith.constant 0 : index
      %17 = vector.load %arg6[%c0_14, %c0_15] : memref<16x256xbf16, #tpu.memory_space<vmem>>, vector<16x256xbf16>
      tpu.vector_store %arg6[%c0_14, %c0_15], %16 {strides = array<i32>} : memref<16x256xbf16, #tpu.memory_space<vmem>>, vector<16x256xbf16>,
    } else {
    }
    return
  }
  func.func @transform_0(%arg0: i32, %arg1: i32, %arg2: i32) -> (i32, i32) {
    %c0_i32 = arith.constant 0 : i32
    return %arg0, %arg2 : i32, i32
  }
  func.func @transform_1(%arg0: i32, %arg1: i32, %arg2: i32) -> (i32, i32) {
    %c0_i32 = arith.constant 0 : i32
    return %arg2, %arg1 : i32, i32
  }
  func.func @transform_2(%arg0: i32, %arg1: i32, %arg2: i32) -> (i32, i32) {
    %c0_i32 = arith.constant 0 : i32
    %c0_i32_0 = arith.constant 0 : i32
    return %c0_i32, %arg1 : i32, i32
  }
  func.func @transform_3(%arg0: i32, %arg1: i32, %arg2: i32) -> (i32, i32) {
    %c0_i32 = arith.constant 0 : i32
    return %arg0, %arg1 : i32, i32
  }
}

module attributes {stable_mosaic.version = 11 : i64} {
  func.func @_conv_mm_kernel(%arg0: i32, %arg1: i32, %arg2: i32, %arg3: memref<16x384xbf16, #tpu.memory_space<vmem>>, %arg4: memref<384x256xbf16, #tpu.memory_space<vmem>>, %arg5: memref<1x256xf32, #tpu.memory_space<vmem>>, %arg6: memref<16x256xbf16, #tpu.memory_space<vmem>>, %arg7: memref<16x256xbf16, #tpu.memory_space<vmem>>, %arg8: memref<16x256xf32, #tpu.memory_space<vmem>>) attributes {dimension_semantics = [#tpu.dimension_semantics<parallel>, #tpu.dimension_semantics<parallel>, #tpu.dimension_semantics<arbitrary>], iteration_bounds = array<i64: 1, 1, 6>, scalar_prefetch = 0 : i64, scratch_operands = 1 : i64, tpu.core_type = #tpu.core_type<tc>, window_params = [{transform_indices = @transform_0, window_bounds = array<i64: 16, 384>}, {transform_indices = @transform_1, window_bounds = array<i64: 384, 256>}, {transform_indices = @transform_2, window_bounds = array<i64: 1, 256>}, {transform_indices = @transform_3, window_bounds = array<i64: 16, 256>}, {transform_indices = @transform_4, window_bounds = array<i64: 16, 256>}]} {
    %c0_i32 = arith.constant 0 : i32
    %0 = arith.cmpi eq, %arg2, %c0_i32 : i32
    %1 = arith.extui %0 : i1 to i32
    %c0_i32_0 = arith.constant 0 : i32
    %2 = arith.cmpi ne, %1, %c0_i32_0 : i32
    scf.if %2 {
      %cst_9 = arith.constant 0.000000e+00 : f32
      %12 = vector.broadcast %cst_9 : f32 to vector<16x256xf32>
      %c0_10 = arith.constant 0 : index
      %c0_11 = arith.constant 0 : index
      %13 = vector.load %arg8[%c0_10, %c0_11] : memref<16x256xf32, #tpu.memory_space<vmem>>, vector<16x256xf32>
      tpu.vector_store %arg8[%c0_10, %c0_11], %12 {strides = array<i32>} : memref<16x256xf32, #tpu.memory_space<vmem>>, vector<16x256xf32>,
    } else {
    }
    %c0 = arith.constant 0 : index
    %c0_1 = arith.constant 0 : index
    %3 = vector.load %arg8[%c0, %c0_1] : memref<16x256xf32, #tpu.memory_space<vmem>>, vector<16x256xf32>
    %c0_2 = arith.constant 0 : index
    %c0_3 = arith.constant 0 : index
    %4 = vector.load %arg3[%c0_2, %c0_3] : memref<16x384xbf16, #tpu.memory_space<vmem>>, vector<16x384xbf16>
    %c0_4 = arith.constant 0 : index
    %c0_5 = arith.constant 0 : index
    %5 = vector.load %arg4[%c0_4, %c0_5] : memref<384x256xbf16, #tpu.memory_space<vmem>>, vector<384x256xbf16>
    %cst = arith.constant dense<0.000000e+00> : vector<16x256xf32>
    %6 = tpu.matmul %4, %5, %cst {dimension_numbers = #tpu.dot_dimension_numbers<[1], [0], [0], [1], [0, 0, 1, 1], [], []>} : vector<16x384xbf16>, vector<384x256xbf16>, vector<16x256xf32> -> vector<16x256xf32>
    %7 = arith.addf %3, %6 : vector<16x256xf32>
    %c0_6 = arith.constant 0 : index
    %c0_7 = arith.constant 0 : index
    %8 = vector.load %arg8[%c0_6, %c0_7] : memref<16x256xf32, #tpu.memory_space<vmem>>, vector<16x256xf32>
    tpu.vector_store %arg8[%c0_6, %c0_7], %7 {strides = array<i32>} : memref<16x256xf32, #tpu.memory_space<vmem>>, vector<16x256xf32>,
    %c5_i32 = arith.constant 5 : i32
    %9 = arith.cmpi eq, %arg2, %c5_i32 : i32
    %10 = arith.extui %9 : i1 to i32
    %c0_i32_8 = arith.constant 0 : i32
    %11 = arith.cmpi ne, %10, %c0_i32_8 : i32
    scf.if %11 {
      %c0_9 = arith.constant 0 : index
      %c0_10 = arith.constant 0 : index
      %12 = vector.load %arg8[%c0_9, %c0_10] : memref<16x256xf32, #tpu.memory_space<vmem>>, vector<16x256xf32>
      %c0_11 = arith.constant 0 : index
      %c0_12 = arith.constant 0 : index
      %13 = vector.load %arg5[%c0_11, %c0_12] : memref<1x256xf32, #tpu.memory_space<vmem>>, vector<1x256xf32>
      %14 = vector.broadcast %13 : vector<1x256xf32> to vector<16x256xf32>
      %15 = arith.addf %12, %14 : vector<16x256xf32>
      %c0_13 = arith.constant 0 : index
      %c0_14 = arith.constant 0 : index
      %16 = vector.load %arg6[%c0_13, %c0_14] : memref<16x256xbf16, #tpu.memory_space<vmem>>, vector<16x256xbf16>
      %17 = arith.extf %16 : vector<16x256xbf16> to vector<16x256xf32>
      %18 = arith.addf %15, %17 : vector<16x256xf32>
      %cst_15 = arith.constant 0.000000e+00 : f32
      %19 = vector.broadcast %cst_15 : f32 to vector<16x256xf32>
      %20 = arith.maximumf %18, %19 : vector<16x256xf32>
      %21 = arith.truncf %20 : vector<16x256xf32> to vector<16x256xbf16>
      %c0_16 = arith.constant 0 : index
      %c0_17 = arith.constant 0 : index
      %22 = vector.load %arg7[%c0_16, %c0_17] : memref<16x256xbf16, #tpu.memory_space<vmem>>, vector<16x256xbf16>
      tpu.vector_store %arg7[%c0_16, %c0_17], %21 {strides = array<i32>} : memref<16x256xbf16, #tpu.memory_space<vmem>>, vector<16x256xbf16>,
    } else {
    }
    return
  }
  func.func @transform_0(%arg0: i32, %arg1: i32, %arg2: i32) -> (i32, i32) {
    %c0_i32 = arith.constant 0 : i32
    return %arg0, %arg2 : i32, i32
  }
  func.func @transform_1(%arg0: i32, %arg1: i32, %arg2: i32) -> (i32, i32) {
    %c0_i32 = arith.constant 0 : i32
    return %arg2, %arg1 : i32, i32
  }
  func.func @transform_2(%arg0: i32, %arg1: i32, %arg2: i32) -> (i32, i32) {
    %c0_i32 = arith.constant 0 : i32
    %c0_i32_0 = arith.constant 0 : i32
    return %c0_i32, %arg1 : i32, i32
  }
  func.func @transform_3(%arg0: i32, %arg1: i32, %arg2: i32) -> (i32, i32) {
    %c0_i32 = arith.constant 0 : i32
    return %arg0, %arg1 : i32, i32
  }
  func.func @transform_4(%arg0: i32, %arg1: i32, %arg2: i32) -> (i32, i32) {
    %c0_i32 = arith.constant 0 : i32
    return %arg0, %arg1 : i32, i32
  }
}

module attributes {stable_mosaic.version = 11 : i64} {
  func.func @_conv_mm_kernel(%arg0: i32, %arg1: i32, %arg2: i32, %arg3: memref<16x384xbf16, #tpu.memory_space<vmem>>, %arg4: memref<384x256xbf16, #tpu.memory_space<vmem>>, %arg5: memref<1x256xf32, #tpu.memory_space<vmem>>, %arg6: memref<16x256xbf16, #tpu.memory_space<vmem>>, %arg7: memref<16x256xf32, #tpu.memory_space<vmem>>) attributes {dimension_semantics = [#tpu.dimension_semantics<parallel>, #tpu.dimension_semantics<parallel>, #tpu.dimension_semantics<arbitrary>], iteration_bounds = array<i64: 1, 1, 6>, scalar_prefetch = 0 : i64, scratch_operands = 1 : i64, tpu.core_type = #tpu.core_type<tc>, window_params = [{transform_indices = @transform_0, window_bounds = array<i64: 16, 384>}, {transform_indices = @transform_1, window_bounds = array<i64: 384, 256>}, {transform_indices = @transform_2, window_bounds = array<i64: 1, 256>}, {transform_indices = @transform_3, window_bounds = array<i64: 16, 256>}]} {
    %c0_i32 = arith.constant 0 : i32
    %0 = arith.cmpi eq, %arg2, %c0_i32 : i32
    %1 = arith.extui %0 : i1 to i32
    %c0_i32_0 = arith.constant 0 : i32
    %2 = arith.cmpi ne, %1, %c0_i32_0 : i32
    scf.if %2 {
      %cst_9 = arith.constant 0.000000e+00 : f32
      %12 = vector.broadcast %cst_9 : f32 to vector<16x256xf32>
      %c0_10 = arith.constant 0 : index
      %c0_11 = arith.constant 0 : index
      %13 = vector.load %arg7[%c0_10, %c0_11] : memref<16x256xf32, #tpu.memory_space<vmem>>, vector<16x256xf32>
      tpu.vector_store %arg7[%c0_10, %c0_11], %12 {strides = array<i32>} : memref<16x256xf32, #tpu.memory_space<vmem>>, vector<16x256xf32>,
    } else {
    }
    %c0 = arith.constant 0 : index
    %c0_1 = arith.constant 0 : index
    %3 = vector.load %arg7[%c0, %c0_1] : memref<16x256xf32, #tpu.memory_space<vmem>>, vector<16x256xf32>
    %c0_2 = arith.constant 0 : index
    %c0_3 = arith.constant 0 : index
    %4 = vector.load %arg3[%c0_2, %c0_3] : memref<16x384xbf16, #tpu.memory_space<vmem>>, vector<16x384xbf16>
    %c0_4 = arith.constant 0 : index
    %c0_5 = arith.constant 0 : index
    %5 = vector.load %arg4[%c0_4, %c0_5] : memref<384x256xbf16, #tpu.memory_space<vmem>>, vector<384x256xbf16>
    %cst = arith.constant dense<0.000000e+00> : vector<16x256xf32>
    %6 = tpu.matmul %4, %5, %cst {dimension_numbers = #tpu.dot_dimension_numbers<[1], [0], [0], [1], [0, 0, 1, 1], [], []>} : vector<16x384xbf16>, vector<384x256xbf16>, vector<16x256xf32> -> vector<16x256xf32>
    %7 = arith.addf %3, %6 : vector<16x256xf32>
    %c0_6 = arith.constant 0 : index
    %c0_7 = arith.constant 0 : index
    %8 = vector.load %arg7[%c0_6, %c0_7] : memref<16x256xf32, #tpu.memory_space<vmem>>, vector<16x256xf32>
    tpu.vector_store %arg7[%c0_6, %c0_7], %7 {strides = array<i32>} : memref<16x256xf32, #tpu.memory_space<vmem>>, vector<16x256xf32>,
    %c5_i32 = arith.constant 5 : i32
    %9 = arith.cmpi eq, %arg2, %c5_i32 : i32
    %10 = arith.extui %9 : i1 to i32
    %c0_i32_8 = arith.constant 0 : i32
    %11 = arith.cmpi ne, %10, %c0_i32_8 : i32
    scf.if %11 {
      %c0_9 = arith.constant 0 : index
      %c0_10 = arith.constant 0 : index
      %12 = vector.load %arg7[%c0_9, %c0_10] : memref<16x256xf32, #tpu.memory_space<vmem>>, vector<16x256xf32>
      %c0_11 = arith.constant 0 : index
      %c0_12 = arith.constant 0 : index
      %13 = vector.load %arg5[%c0_11, %c0_12] : memref<1x256xf32, #tpu.memory_space<vmem>>, vector<1x256xf32>
      %14 = vector.broadcast %13 : vector<1x256xf32> to vector<16x256xf32>
      %15 = arith.addf %12, %14 : vector<16x256xf32>
      %cst_13 = arith.constant 0.000000e+00 : f32
      %16 = vector.broadcast %cst_13 : f32 to vector<16x256xf32>
      %17 = arith.maximumf %15, %16 : vector<16x256xf32>
      %18 = arith.truncf %17 : vector<16x256xf32> to vector<16x256xbf16>
      %c0_14 = arith.constant 0 : index
      %c0_15 = arith.constant 0 : index
      %19 = vector.load %arg6[%c0_14, %c0_15] : memref<16x256xbf16, #tpu.memory_space<vmem>>, vector<16x256xbf16>
      tpu.vector_store %arg6[%c0_14, %c0_15], %18 {strides = array<i32>} : memref<16x256xbf16, #tpu.memory_space<vmem>>, vector<16x256xbf16>,
    } else {
    }
    return
  }
  func.func @transform_0(%arg0: i32, %arg1: i32, %arg2: i32) -> (i32, i32) {
    %c0_i32 = arith.constant 0 : i32
    return %arg0, %arg2 : i32, i32
  }
  func.func @transform_1(%arg0: i32, %arg1: i32, %arg2: i32) -> (i32, i32) {
    %c0_i32 = arith.constant 0 : i32
    return %arg2, %arg1 : i32, i32
  }
  func.func @transform_2(%arg0: i32, %arg1: i32, %arg2: i32) -> (i32, i32) {
    %c0_i32 = arith.constant 0 : i32
    %c0_i32_0 = arith.constant 0 : i32
    return %c0_i32, %arg1 : i32, i32
  }
  func.func @transform_3(%arg0: i32, %arg1: i32, %arg2: i32) -> (i32, i32) {
    %c0_i32 = arith.constant 0 : i32
    return %arg0, %arg1 : i32, i32
  }
}

module attributes {stable_mosaic.version = 11 : i64} {
  func.func @_gap_kernel(%arg0: memref<2x4x256xbf16, #tpu.memory_space<vmem>>, %arg1: memref<2x256xf32, #tpu.memory_space<vmem>>) attributes {dimension_semantics = [], scalar_prefetch = 0 : i64, scratch_operands = 0 : i64, tpu.core_type = #tpu.core_type<tc>} {
    %c0 = arith.constant 0 : index
    %c0_0 = arith.constant 0 : index
    %c0_1 = arith.constant 0 : index
    %0 = vector.load %arg0[%c0, %c0_0, %c0_1] : memref<2x4x256xbf16, #tpu.memory_space<vmem>>, vector<2x4x256xbf16>
    %1 = arith.extf %0 : vector<2x4x256xbf16> to vector<2x4x256xf32>
    %cst = arith.constant dense<0.000000e+00> : vector<2x256xf32>
    %2 = vector.multi_reduction <add>, %1, %cst [1] : vector<2x4x256xf32> to vector<2x256xf32>
    %cst_2 = arith.constant 4.000000e+00 : f32
    %3 = vector.broadcast %cst_2 : f32 to vector<2x256xf32>
    %4 = arith.divf %2, %3 : vector<2x256xf32>
    %c0_3 = arith.constant 0 : index
    %c0_4 = arith.constant 0 : index
    %5 = vector.load %arg1[%c0_3, %c0_4] : memref<2x256xf32, #tpu.memory_space<vmem>>, vector<2x256xf32>
    tpu.vector_store %arg1[%c0_3, %c0_4], %4 {strides = array<i32>} : memref<2x256xf32, #tpu.memory_space<vmem>>, vector<2x256xf32>,
    return
  }
}

</mosaic_0001>

<llo_original>
// kernel: _lambda_.17
$region0: #{_lambda_.17}
  #allocation0 [shape = 'u32[]', space=smem, size = 0x4, offset = 0x4, fixed_abs, tag = 'smem constant byte address 0x4 - core index']
  #allocation1 [shape = 'u32[144,128]{1,0:T(1,128)}', space=vmem, size = 0x12000, scoped, tag = 'internal scratch']
  #allocation2 [shape = 'f32[128,128]{1,0:T(8,128)}', space=vmem, size = 0x10000, scoped, tag = 'scratch operand']
  %s0 = inlined_call_operand.vmem [shape: bf16[512,256], index: 0, kind: input, shape index: {}]
  %s1 = inlined_call_operand.vmem [shape: bf16[256,128], index: 1, kind: input, shape index: {}]
  %s2 = inlined_call_operand.vmem [shape: f32[1,128], index: 2, kind: input, shape index: {}]
  %s3 = inlined_call_operand.vmem [shape: bf16[512,128], index: 3, kind: output, shape index: {}]
  %s4 = sld [smem:[#allocation0]]
  $region53: #{_lambda_.17} parent=0
    _
  %s6 = ssub.s32 1, %s4
  %s7 = scalar_select 0, %s6, %s4
  loop: start=0, step=1, limit=6
  $region2: #{_lambda_.17} parent=0 // loop_pre_header
    _
  $region3: #{_lambda_.17} parent=0 // loop_header
    %s9 = sphi 0, %s13
    %p10 = scmp.ge.s32.totalorder %s9, 6
    %s16 = sphi 0, %s35
    %s17 = sphi 0, %s31
    %s18 = sphi 0, %s27
    %s19 = sphi 0, %s16
    %s20 = sphi 0, %s17
    %s21 = sphi 0, %s18
    %s22 = sphi 0, %s19
    %s23 = sphi 0, %s20
    %s24 = sphi 0, %s21
    %s40 = sphi 0, %s42
    %s43 = sphi 0, %s40
    %s44 = sphi 0, %s43
    %s60 = sphi 0, %s44
    %s68 = sphi 0, %s70
    %s71 = sphi 0, %s68
    %s72 = sphi 0, %s71
    %s88 = sphi 0, %s72
    %s94 = sphi 0, %s96
    %s97 = sphi 0, %s94
    %s98 = sphi 0, %s97
    %s114 = sphi 0, %s98
    %s122 = sphi 0, %s124
    %s125 = sphi 0, %s122
    %s126 = sphi 0, %s125
    %s142 = sphi 0, %s126
  $region4: #{_lambda_.17} parent=0 // loop_header_branch
    %12 = sbr.rel (%p10) target = $region8
  $region5: #{_lambda_.17} parent=0 // loop_body
    %s14 = ssub.s32 %s9, 1
    %s15 = ssub.s32 %s9, 2
    %s25 = sadd.s32 1, %s18
    %p26 = scmp.ge.s32.totalorder %s25, 1
    %s27 = scalar_select %p26, 0, %s25
    %s28 = sadd.s32 1, %s17
    %s29 = scalar_select %p26, %s28, %s17
    %p30 = scmp.ge.s32.totalorder %s29, 1
    %s31 = scalar_select %p30, 0, %s29
    %s32 = sadd.s32 1, %s16
    %s33 = scalar_select %p30, %s32, %s16
    %p34 = scmp.ge.s32.totalorder %s33, 4
    %s35 = scalar_select %p34, 0, %s33
    %s36 = ssub.s32 %s16, %s35
    %s37 = ssub.s32 %s18, %s27
    %s38 = sor.u32 %s36, %s37
    %p39 = scmp.eq.s32.totalorder %s38, 0
    %s41 = sadd.s32 %s40, 1
    %s42 = scalar_select %p39, %s40, %s41
    %p45 = pneg %p39
    %p46 = scmp.eq.s32.totalorder %s9, 3
    %p47 = por %p45, %p46
    %p48 = scmp.ne.s32.totalorder %s40, %s43
    %p49 = scmp.eq.s32.totalorder %s9, 0
    %p50 = por %p48, %p49
    %p51 = scmp.ne.s32.totalorder %s40, %s43
    %p52 = scmp.eq.s32.totalorder %s14, 3
    %p53 = por %p51, %p52
    %p54 = scmp.ne.s32.totalorder %s43, %s44
    %p55 = scmp.eq.s32.totalorder %s14, 0
    %p56 = por %p54, %p55
    %p57 = scmp.ne.s32.totalorder %s43, %s44
    %p58 = scmp.eq.s32.totalorder %s15, 3
    %p59 = por %p57, %p58
    %p61 = scmp.ne.s32.totalorder %s44, %s60
    %p62 = scmp.eq.s32.totalorder %s15, 0
    %p63 = por %p61, %p62
    %s64 = ssub.s32 %s18, %s27
    %s65 = ssub.s32 %s17, %s31
    %s66 = sor.u32 %s64, %s65
    %p67 = scmp.eq.s32.totalorder %s66, 0
    %s69 = sadd.s32 %s68, 1
    %s70 = scalar_select %p67, %s68, %s69
    %p73 = pneg %p67
    %p74 = scmp.eq.s32.totalorder %s9, 3
    %p75 = por %p73, %p74
    %p76 = scmp.ne.s32.totalorder %s68, %s71
    %p77 = scmp.eq.s32.totalorder %s9, 0
    %p78 = por %p76, %p77
    %p79 = scmp.ne.s32.totalorder %s68, %s71
    %p80 = scmp.eq.s32.totalorder %s14, 3
    %p81 = por %p79, %p80
    %p82 = scmp.ne.s32.totalorder %s71, %s72
    %p83 = scmp.eq.s32.totalorder %s14, 0
    %p84 = por %p82, %p83
    %p85 = scmp.ne.s32.totalorder %s71, %s72
    %p86 = scmp.eq.s32.totalorder %s15, 3
    %p87 = por %p85, %p86
    %p89 = scmp.ne.s32.totalorder %s72, %s88
    %p90 = scmp.eq.s32.totalorder %s15, 0
    %p91 = por %p89, %p90
    %s92 = ssub.s32 %s17, %s31
    %p93 = scmp.eq.s32.totalorder %s92, 0
    %s95 = sadd.s32 %s94, 1
    %s96 = scalar_select %p93, %s94, %s95
    %p99 = pneg %p93
    %p100 = scmp.eq.s32.totalorder %s9, 3
    %p101 = por %p99, %p100
    %p102 = scmp.ne.s32.totalorder %s94, %s97
    %p103 = scmp.eq.s32.totalorder %s9, 0
    %p104 = por %p102, %p103
    %p105 = scmp.ne.s32.totalorder %s94, %s97
    %p106 = scmp.eq.s32.totalorder %s14, 3
    %p107 = por %p105, %p106
    %p108 = scmp.ne.s32.totalorder %s97, %s98
    %p109 = scmp.eq.s32.totalorder %s14, 0
    %p110 = por %p108, %p109
    %p111 = scmp.ne.s32.totalorder %s97, %s98
    %p112 = scmp.eq.s32.totalorder %s15, 3
    %p113 = por %p111, %p112
    %p115 = scmp.ne.s32.totalorder %s98, %s114
    %p116 = scmp.eq.s32.totalorder %s15, 0
    %p117 = por %p115, %p116
    %s118 = ssub.s32 %s16, %s35
    %s119 = ssub.s32 %s17, %s31
    %s120 = sor.u32 %s118, %s119
    %p121 = scmp.eq.s32.totalorder %s120, 0
    %s123 = sadd.s32 %s122, 1
    %s124 = scalar_select %p121, %s122, %s123
    %p127 = pneg %p121
    %p128 = scmp.eq.s32.totalorder %s9, 3
    %p129 = por %p127, %p128
    %p130 = scmp.ne.s32.totalorder %s122, %s125
    %p131 = scmp.eq.s32.totalorder %s9, 0
    %p132 = por %p130, %p131
    %p133 = scmp.ne.s32.totalorder %s122, %s125
    %p134 = scmp.eq.s32.totalorder %s14, 3
    %p135 = por %p133, %p134
    %p136 = scmp.ne.s32.totalorder %s125, %s126
    %p137 = scmp.eq.s32.totalorder %s14, 0
    %p138 = por %p136, %p137
    %p139 = scmp.ne.s32.totalorder %s125, %s126
    %p140 = scmp.eq.s32.totalorder %s15, 3
    %p141 = por %p139, %p140
    %p143 = scmp.ne.s32.totalorder %s126, %s142
    %p144 = scmp.eq.s32.totalorder %s15, 0
    %p145 = por %p143, %p144
    %p146 = scmp.le.s32.totalorder 1, %s9
    %p147 = scmp.lt.s32.totalorder %s9, 5
    %p148 = pnand %p146, %p147
    %p149 = pneg %p148
    // Predicated region
    $region9: #{_lambda_.17} parent=5 // pred_check
      _
    $region10: #{_lambda_.17} parent=5 // pred_check_branch
      %151 = sbr.rel (%p148) target = $region12
    $region11: #{_lambda_.17} parent=5 // pred_region
      %s152 = ssub.s32 %s9, 1
      // Predicated region
      $region13: #{_lambda_.17} parent=11 // pred_check
        %p153 = pneg %p84
      $region14: #{_lambda_.17} parent=11 // pred_check_branch
        %155 = sbr.rel (%p153) target = $region16
      $region15: #{_lambda_.17} parent=11 // pred_region
        %s156 = smul.u32 32, %s21
        %p157 = scmp.lt.s32.totalorder %s156, 31
        %s158 = scalar_select %p157, %s156, 31
        %p159 = scmp.lt.s32.totalorder %s20, 0
        %s160 = scalar_select %p159, %s20, 0
        %s161 = sadd.s32 %s160, %s158
        %s162 = smul.addr %s161, 4
        %s163 = scalar_lea.vmem %s1, %s162
        %s164 = smul.u32 32, %s21
      $region16: #{_lambda_.17} parent=11 // pred_fallthru
        _
      // Predicated region
      $region17: #{_lambda_.17} parent=11 // pred_check
        %p165 = pneg %p110
      $region18: #{_lambda_.17} parent=11 // pred_check_branch
        %167 = sbr.rel (%p165) target = $region20
      $region19: #{_lambda_.17} parent=11 // pred_region
        %p168 = scmp.lt.s32.totalorder %s20, 0
        %s169 = scalar_select %p168, %s20, 0
        %s170 = scalar_lea.vmem %s2, %s169
      $region20: #{_lambda_.17} parent=11 // pred_fallthru
        _
    $region12: #{_lambda_.17} parent=5 // pred_fallthru
      _
    %p171 = scmp.lt.s32.totalorder %s9, 4
    // Predicated region
    $region21: #{_lambda_.17} parent=5 // pred_check
      %p172 = pneg %p171
    $region22: #{_lambda_.17} parent=5 // pred_check_branch
      %174 = sbr.rel (%p172) target = $region24
    $region23: #{_lambda_.17} parent=5 // pred_region
      // Predicated region
      $region25: #{_lambda_.17} parent=23 // pred_check
        %p175 = pneg %p50
      $region26: #{_lambda_.17} parent=23 // pred_check_branch
        %177 = sbr.rel (%p175) target = $region28
      $region27: #{_lambda_.17} parent=23 // pred_region
        %s178 = smul.u32 16, %s16
        %s179 = smul.u32 2, %s18
        %p180 = scmp.lt.s32.totalorder %s178, 63
        %s181 = scalar_select %p180, %s178, 63
        %p182 = scmp.lt.s32.totalorder %s179, 1
        %s183 = scalar_select %p182, %s179, 1
        %s184 = smul.addr %s181, 2
        %s185 = sadd.s32 %s183, %s184
        %s186 = smul.addr %s185, 4
        %s187 = scalar_lea.vmem %s0, %s186
        %s188 = smul.u32 16, %s16
        %s189 = smul.u32 2, %s18
      $region28: #{_lambda_.17} parent=23 // pred_fallthru
        _
    $region24: #{_lambda_.17} parent=5 // pred_fallthru
      _
    %p190 = scmp.le.s32.totalorder 1, %s9
    %p191 = scmp.lt.s32.totalorder %s9, 5
    %p192 = pnand %p190, %p191
    %p193 = pneg %p192
    // Predicated region
    $region29: #{_lambda_.17} parent=5 // pred_check
      _
    $region30: #{_lambda_.17} parent=5 // pred_check_branch
      %195 = sbr.rel (%p192) target = $region32
    $region31: #{_lambda_.17} parent=5 // pred_region
      %s196 = ssub.s32 %s9, 1
      %s197 = smul.u32 16, %s19
      %s198 = smul.u32 2, %s21
      %p199 = scmp.lt.s32.totalorder %s197, 63
      %s200 = scalar_select %p199, %s197, 63
      %p201 = scmp.lt.s32.totalorder %s198, 1
      %s202 = scalar_select %p201, %s198, 1
      %s203 = smul.addr %s200, 2
      %s204 = sadd.s32 %s202, %s203
      %s205 = smul.addr %s204, 4
      %s206 = scalar_lea.vmem %s0, %s205
      %p207 = pneg %p56
      %p208 = pneg %p53
      %s209 = smul.u32 32, %s21
      %p210 = scmp.lt.s32.totalorder %s209, 31
      %s211 = scalar_select %p210, %s209, 31
      %p212 = scmp.lt.s32.totalorder %s20, 0
      %s213 = scalar_select %p212, %s20, 0
      %s214 = sadd.s32 %s213, %s211
      %s215 = smul.addr %s214, 4
      %s216 = scalar_lea.vmem %s1, %s215
      %p217 = pneg %p84
      %p218 = pneg %p81
      %p219 = scmp.lt.s32.totalorder %s20, 0
      %s220 = scalar_select %p219, %s20, 0
      %s221 = scalar_lea.vmem %s2, %s220
      %p222 = pneg %p110
      %p223 = pneg %p107
      %p224 = pneg %p138
      %p225 = pneg %p135
      %s226 = smul.u32 16, %s19
      %p227 = scmp.lt.s32.totalorder %s226, 63
      %s228 = scalar_select %p227, %s226, 63
      %p229 = scmp.lt.s32.totalorder %s20, 0
      %s230 = scalar_select %p229, %s20, 0
      %s231 = sadd.s32 %s230, %s228
      %s232 = smul.addr %s231, 4
      %s233 = scalar_lea.vmem %s3, %s232
      %s234 = smul.u32 16, %s19
      %s235 = smul.u32 2, %s21
      %p236 = scmp.lt.s32.totalorder %s234, 63
      %s237 = scalar_select %p236, %s234, 63
      %p238 = scmp.lt.s32.totalorder %s235, 1
      %s239 = scalar_select %p238, %s235, 1
      %s240 = smul.addr %s237, 2
      %s241 = sadd.s32 %s239, %s240
      %s242 = smul.addr %s241, 4
      %s243 = scalar_lea.vmem %s0, %s242
      %s244 = smul.u32 16, %s19
      %s245 = smul.u32 2, %s21
      %s246 = smul.u32 32, %s21
      %p247 = scmp.lt.s32.totalorder %s246, 31
      %s248 = scalar_select %p247, %s246, 31
      %p249 = scmp.lt.s32.totalorder %s20, 0
      %s250 = scalar_select %p249, %s20, 0
      %s251 = sadd.s32 %s250, %s248
      %s252 = smul.addr %s251, 4
      %s253 = scalar_lea.vmem %s1, %s252
      %s254 = smul.u32 32, %s21
      %p255 = scmp.lt.s32.totalorder %s20, 0
      %s256 = scalar_select %p255, %s20, 0
      %s257 = scalar_lea.vmem %s2, %s256
      %s258 = smul.u32 16, %s19
      %p259 = scmp.lt.s32.totalorder %s258, 63
      %s260 = scalar_select %p259, %s258, 63
      %p261 = scmp.lt.s32.totalorder %s20, 0
      %s262 = scalar_select %p261, %s20, 0
      %s263 = sadd.s32 %s262, %s260
      %s264 = smul.addr %s263, 4
      %s265 = scalar_lea.vmem %s3, %s264
      %s266 = smul.u32 16, %s19
      %p268 = scmp.eq.s32.totalorder %s21, 0
      // Predicated region
      $region33: #{_lambda_.17} parent=31 // pred_check
        %p269 = pneg %p268
      $region34: #{_lambda_.17} parent=31 // pred_check_branch
        %271 = sbr.rel (%p269) target = $region36
      $region35: #{_lambda_.17} parent=31 // pred_region
        %272 = vst [vmem:[#allocation2] sm:$0xff] 0.0
        %273 = vst [vmem:[#allocation2 + $0x8] sm:$0xff] 0.0
        %274 = vst [vmem:[#allocation2 + $0x10] sm:$0xff] 0.0
        %275 = vst [vmem:[#allocation2 + $0x18] sm:$0xff] 0.0
        %276 = vst [vmem:[#allocation2 + $0x20] sm:$0xff] 0.0
        %277 = vst [vmem:[#allocation2 + $0x28] sm:$0xff] 0.0
        %278 = vst [vmem:[#allocation2 + $0x30] sm:$0xff] 0.0
        %279 = vst [vmem:[#allocation2 + $0x38] sm:$0xff] 0.0
        %280 = vst [vmem:[#allocation2 + $0x40] sm:$0xff] 0.0
        %281 = vst [vmem:[#allocation2 + $0x48] sm:$0xff] 0.0
        %282 = vst [vmem:[#allocation2 + $0x50] sm:$0xff] 0.0
        %283 = vst [vmem:[#allocation2 + $0x58] sm:$0xff] 0.0
        %284 = vst [vmem:[#allocation2 + $0x60] sm:$0xff] 0.0
        %285 = vst [vmem:[#allocation2 + $0x68] sm:$0xff] 0.0
        %286 = vst [vmem:[#allocation2 + $0x70] sm:$0xff] 0.0
        %287 = vst [vmem:[#allocation2 + $0x78] sm:$0xff] 0.0
      $region36: #{_lambda_.17} parent=31 // pred_fallthru
        _
      %v288 = vld [vmem:[#allocation2] sm:$0xff]
      %v289 = vld [vmem:[#allocation2 + $0x8] sm:$0xff]
      %v290 = vld [vmem:[#allocation2 + $0x10] sm:$0xff]
      %v291 = vld [vmem:[#allocation2 + $0x18] sm:$0xff]
      %v292 = vld [vmem:[#allocation2 + $0x20] sm:$0xff]
      %v293 = vld [vmem:[#allocation2 + $0x28] sm:$0xff]
      %v294 = vld [vmem:[#allocation2 + $0x30] sm:$0xff]
      %v295 = vld [vmem:[#allocation2 + $0x38] sm:$0xff]
      %v296 = vld [vmem:[#allocation2 + $0x40] sm:$0xff]
      %v297 = vld [vmem:[#allocation2 + $0x48] sm:$0xff]
      %v298 = vld [vmem:[#allocation2 + $0x50] sm:$0xff]
      %v299 = vld [vmem:[#allocation2 + $0x58] sm:$0xff]
      %v300 = vld [vmem:[#allocation2 + $0x60] sm:$0xff]
      %v301 = vld [vmem:[#allocation2 + $0x68] sm:$0xff]
      %v302 = vld [vmem:[#allocation2 + $0x70] sm:$0xff]
      %v303 = vld [vmem:[#allocation2 + $0x78] sm:$0xff]
      %v304 = vld [vmem:[%s243] sm:$0xff]
      %v305 = vld [vmem:[%s243 + $0x8] sm:$0xff]
      %v306 = vld [vmem:[%s243 + $0x10] sm:$0xff]
      %v307 = vld [vmem:[%s243 + $0x18] sm:$0xff]
      %v308 = vld [vmem:[%s243 + $0x20] sm:$0xff]
      %v309 = vld [vmem:[%s243 + $0x28] sm:$0xff]
      %v310 = vld [vmem:[%s243 + $0x30] sm:$0xff]
      %v311 = vld [vmem:[%s243 + $0x38] sm:$0xff]
      %v312 = vld [vmem:[%s243 + $0x40] sm:$0xff]
      %v313 = vld [vmem:[%s243 + $0x48] sm:$0xff]
      %v314 = vld [vmem:[%s243 + $0x50] sm:$0xff]
      %v315 = vld [vmem:[%s243 + $0x58] sm:$0xff]
      %v316 = vld [vmem:[%s243 + $0x60] sm:$0xff]
      %v317 = vld [vmem:[%s243 + $0x68] sm:$0xff]
      %v318 = vld [vmem:[%s243 + $0x70] sm:$0xff]
      %v319 = vld [vmem:[%s243 + $0x78] sm:$0xff]
      %v320 = vld [vmem:[%s253] sm:$0xf]
      %v321 = vld [vmem:[%s253 + $0x4] sm:$0xf]
      %v322 = vld [vmem:[%s253 + $0x8] sm:$0xf]
      %v323 = vld [vmem:[%s253 + $0xc] sm:$0xf]
      %v324 = vld [vmem:[%s253 + $0x10] sm:$0xf]
      %v325 = vld [vmem:[%s253 + $0x14] sm:$0xf]
      %v326 = vld [vmem:[%s253 + $0x18] sm:$0xf]
      %v327 = vld [vmem:[%s253 + $0x1c] sm:$0xf]
      %v328 = vld [vmem:[%s253 + $0x20] sm:$0xf]
      %v329 = vld [vmem:[%s253 + $0x24] sm:$0xf]
      %v330 = vld [vmem:[%s253 + $0x28] sm:$0xf]
      %v331 = vld [vmem:[%s253 + $0x2c] sm:$0xf]
      %v332 = vld [vmem:[%s253 + $0x30] sm:$0xf]
      %v333 = vld [vmem:[%s253 + $0x34] sm:$0xf]
      %v334 = vld [vmem:[%s253 + $0x38] sm:$0xf]
      %v335 = vld [vmem:[%s253 + $0x3c] sm:$0xf]
      %v336 = vld [vmem:[%s253 + $0x40] sm:$0xf]
      %v337 = vld [vmem:[%s253 + $0x44] sm:$0xf]
      %v338 = vld [vmem:[%s253 + $0x48] sm:$0xf]
      %v339 = vld [vmem:[%s253 + $0x4c] sm:$0xf]
      %v340 = vld [vmem:[%s253 + $0x50] sm:$0xf]
      %v341 = vld [vmem:[%s253 + $0x54] sm:$0xf]
      %v342 = vld [vmem:[%s253 + $0x58] sm:$0xf]
      %v343 = vld [vmem:[%s253 + $0x5c] sm:$0xf]
      %v344 = vld [vmem:[%s253 + $0x60] sm:$0xf]
      %v345 = vld [vmem:[%s253 + $0x64] sm:$0xf]
      %v346 = vld [vmem:[%s253 + $0x68] sm:$0xf]
      %v347 = vld [vmem:[%s253 + $0x6c] sm:$0xf]
      %v348 = vld [vmem:[%s253 + $0x70] sm:$0xf]
      %v349 = vld [vmem:[%s253 + $0x74] sm:$0xf]
      %v350 = vld [vmem:[%s253 + $0x78] sm:$0xf]
      %v351 = vld [vmem:[%s253 + $0x7c] sm:$0xf]
      %v368 = vunpack.c.l.b16 %v304
      %v369 = vunpack.c.h.b16 %v304
      %v370 = vunpack.c.l.b16 %v305
      %v371 = vunpack.c.h.b16 %v305
      %v372 = vunpack.c.l.b16 %v306
      %v373 = vunpack.c.h.b16 %v306
      %v374 = vunpack.c.l.b16 %v307
      %v375 = vunpack.c.h.b16 %v307
      %v376 = vunpack.c.l.b16 %v308
      %v377 = vunpack.c.h.b16 %v308
      %v378 = vunpack.c.l.b16 %v309
      %v379 = vunpack.c.h.b16 %v309
      %v380 = vunpack.c.l.b16 %v310
      %v381 = vunpack.c.h.b16 %v310
      %v382 = vunpack.c.l.b16 %v311
      %v383 = vunpack.c.h.b16 %v311
      %v384 = vunpack.c.l.b16 %v312
      %v385 = vunpack.c.h.b16 %v312
      %v386 = vunpack.c.l.b16 %v313
      %v387 = vunpack.c.h.b16 %v313
      %v388 = vunpack.c.l.b16 %v314
      %v389 = vunpack.c.h.b16 %v314
      %v390 = vunpack.c.l.b16 %v315
      %v391 = vunpack.c.h.b16 %v315
      %v392 = vunpack.c.l.b16 %v316
      %v393 = vunpack.c.h.b16 %v316
      %v394 = vunpack.c.l.b16 %v317
      %v395 = vunpack.c.h.b16 %v317
      %v396 = vunpack.c.l.b16 %v318
      %v397 = vunpack.c.h.b16 %v318
      %v398 = vunpack.c.l.b16 %v319
      %v399 = vunpack.c.h.b16 %v319
      %v400 = vpack.c.b16 %v370, %v368
      %v401 = vpack.c.b16 %v371, %v369
      %v402 = vpack.c.b16 %v374, %v372
      %v403 = vpack.c.b16 %v375, %v373
      %v404 = vpack.c.b16 %v378, %v376
      %v405 = vpack.c.b16 %v379, %v377
      %v406 = vpack.c.b16 %v382, %v380
      %v407 = vpack.c.b16 %v383, %v381
      %v408 = vpack.c.b16 %v386, %v384
      %v409 = vpack.c.b16 %v387, %v385
      %v410 = vpack.c.b16 %v390, %v388
      %v411 = vpack.c.b16 %v391, %v389
      %v412 = vpack.c.b16 %v394, %v392
      %v413 = vpack.c.b16 %v395, %v393
      %v414 = vpack.c.b16 %v398, %v396
      %v415 = vpack.c.b16 %v399, %v397
      %v464 = vunpack.c.l.b16 %v320
      %v465 = vunpack.c.l.b16 %v321
      %v466 = vunpack.c.l.b16 %v322
      %v467 = vunpack.c.l.b16 %v323
      %v468 = vunpack.c.l.b16 %v324
      %v469 = vunpack.c.l.b16 %v325
      %v470 = vunpack.c.l.b16 %v326
      %v471 = vunpack.c.l.b16 %v327
      %v472 = vunpack.c.l.b16 %v328
      %v473 = vunpack.c.l.b16 %v329
      %v474 = vunpack.c.l.b16 %v330
      %v475 = vunpack.c.l.b16 %v331
      %v476 = vunpack.c.l.b16 %v332
      %v477 = vunpack.c.l.b16 %v333
      %v478 = vunpack.c.l.b16 %v334
      %v479 = vunpack.c.l.b16 %v335
      %v480 = vunpack.c.l.b16 %v336
      %v481 = vunpack.c.l.b16 %v337
      %v482 = vunpack.c.l.b16 %v338
      %v483 = vunpack.c.l.b16 %v339
      %v484 = vunpack.c.l.b16 %v340
      %v485 = vunpack.c.l.b16 %v341
      %v486 = vunpack.c.l.b16 %v342
      %v487 = vunpack.c.l.b16 %v343
      %v488 = vunpack.c.l.b16 %v344
      %v489 = vunpack.c.l.b16 %v345
      %v490 = vunpack.c.l.b16 %v346
      %v491 = vunpack.c.l.b16 %v347
      %v492 = vunpack.c.l.b16 %v348
      %v493 = vunpack.c.l.b16 %v349
      %v494 = vunpack.c.l.b16 %v350
      %v495 = vunpack.c.l.b16 %v351
      %v496 = vpack.c.b16 %v465, %v464
      %v497 = vpack.c.b16 %v467, %v466
      %v498 = vpack.c.b16 %v469, %v468
      %v499 = vpack.c.b16 %v471, %v470
      %v500 = vpack.c.b16 %v473, %v472
      %v501 = vpack.c.b16 %v475, %v474
      %v502 = vpack.c.b16 %v477, %v476
      %v503 = vpack.c.b16 %v479, %v478
      %v504 = vpack.c.b16 %v481, %v480
      %v505 = vpack.c.b16 %v483, %v482
      %v506 = vpack.c.b16 %v485, %v484
      %v507 = vpack.c.b16 %v487, %v486
      %v508 = vpack.c.b16 %v489, %v488
      %v509 = vpack.c.b16 %v491, %v490
      %v510 = vpack.c.b16 %v493, %v492
      %v511 = vpack.c.b16 %v495, %v494
      %528 = vmatprep.subr.bf16.mxu0 0
      %529 = vmatpush1.bf16.msra.mxu0 %v496
      %530 = vmatprep.subr.bf16.mxu0 0
      %531 = vmatpush1.bf16.msra.mxu0 %v497
      %532 = vmatprep.subr.bf16.mxu0 0
      %533 = vmatpush1.bf16.msra.mxu0 %v498
      %534 = vmatprep.subr.bf16.mxu0 0
      %535 = vmatpush1.bf16.msra.mxu0 %v499
      %536 = vmatprep.subr.bf16.mxu0 0
      %537 = vmatpush1.bf16.msra.mxu0 %v500
      %538 = vmatprep.subr.bf16.mxu0 0
      %539 = vmatpush1.bf16.msra.mxu0 %v501
      %540 = vmatprep.subr.bf16.mxu0 0
      %541 = vmatpush1.bf16.msra.mxu0 %v502
      %542 = vmatprep.subr.bf16.mxu0 0
      %543 = vmatpush1.bf16.msra.mxu0 %v503
      %544 = vmatprep.subr.bf16.mxu0 0
      %545 = vmatpush1.bf16.msra.mxu0 %v504
      %546 = vmatprep.subr.bf16.mxu0 0
      %547 = vmatpush1.bf16.msra.mxu0 %v505
      %548 = vmatprep.subr.bf16.mxu0 0
      %549 = vmatpush1.bf16.msra.mxu0 %v506
      %550 = vmatprep.subr.bf16.mxu0 0
      %551 = vmatpush1.bf16.msra.mxu0 %v507
      %552 = vmatprep.subr.bf16.mxu0 0
      %553 = vmatpush1.bf16.msra.mxu0 %v508
      %554 = vmatprep.subr.bf16.mxu0 0
      %555 = vmatpush1.bf16.msra.mxu0 %v509
      %556 = vmatprep.subr.bf16.mxu0 0
      %557 = vmatpush1.bf16.msra.mxu0 %v510
      %558 = vmatprep.subr.bf16.mxu0 0
      %559 = vmatpush1.bf16.msra.mxu0 %v511
      %560 = vmatprep.mubr.bf16.mxu0 %v401
      %561 = vmatmul.mubr.bf16.gmra.mrb[0].mxu0 %v400
      %v562 = vpop.f32.mrb[0].mxu0
      %v563 = vadd.f32 0.0, %v562
      %v564 = vpop.f32.mrb[0].mxu0
      %v565 = vpop.f32.mrb[0].mxu0
      %v566 = vadd.f32 0.0, %v565
      %v567 = vpop.f32.mrb[0].mxu0
      %568 = vmatprep.mubr.bf16.mxu0 %v403
      %569 = vmatmul.mubr.bf16.gmra.mrb[0].mxu0 %v402
      %v570 = vpop.f32.mrb[0].mxu0
      %v571 = vadd.f32 0.0, %v570
      %v572 = vpop.f32.mrb[0].mxu0
      %v573 = vpop.f32.mrb[0].mxu0
      %v574 = vadd.f32 0.0, %v573
      %v575 = vpop.f32.mrb[0].mxu0
      %576 = vmatprep.mubr.bf16.mxu0 %v405
      %577 = vmatmul.mubr.bf16.gmra.mrb[0].mxu0 %v404
      %v578 = vpop.f32.mrb[0].mxu0
      %v579 = vadd.f32 0.0, %v578
      %v580 = vpop.f32.mrb[0].mxu0
      %v581 = vpop.f32.mrb[0].mxu0
      %v582 = vadd.f32 0.0, %v581
      %v583 = vpop.f32.mrb[0].mxu0
      %584 = vmatprep.mubr.bf16.mxu0 %v407
      %585 = vmatmul.mubr.bf16.gmra.mrb[0].mxu0 %v406
      %v586 = vpop.f32.mrb[0].mxu0
      %v587 = vadd.f32 0.0, %v586
      %v588 = vpop.f32.mrb[0].mxu0
      %v589 = vpop.f32.mrb[0].mxu0
      %v590 = vadd.f32 0.0, %v589
      %v591 = vpop.f32.mrb[0].mxu0
      %592 = vmatprep.mubr.bf16.mxu0 %v409
      %593 = vmatmul.mubr.bf16.gmra.mrb[0].mxu0 %v408
      %v594 = vpop.f32.mrb[0].mxu0
      %v595 = vadd.f32 0.0, %v594
      %v596 = vpop.f32.mrb[0].mxu0
      %v597 = vpop.f32.mrb[0].mxu0
      %v598 = vadd.f32 0.0, %v597
      %v599 = vpop.f32.mrb[0].mxu0
      %600 = vmatprep.mubr.bf16.mxu0 %v411
      %601 = vmatmul.mubr.bf16.gmra.mrb[0].mxu0 %v410
      %v602 = vpop.f32.mrb[0].mxu0
      %v603 = vadd.f32 0.0, %v602
      %v604 = vpop.f32.mrb[0].mxu0
      %v605 = vpop.f32.mrb[0].mxu0
      %v606 = vadd.f32 0.0, %v605
      %v607 = vpop.f32.mrb[0].mxu0
      %608 = vmatprep.mubr.bf16.mxu0 %v413
      %609 = vmatmul.mubr.bf16.gmra.mrb[0].mxu0 %v412
      %v610 = vpop.f32.mrb[0].mxu0
      %v611 = vadd.f32 0.0, %v610
      %v612 = vpop.f32.mrb[0].mxu0
      %v613 = vpop.f32.mrb[0].mxu0
      %v614 = vadd.f32 0.0, %v613
      %v615 = vpop.f32.mrb[0].mxu0
      %616 = vmatprep.mubr.bf16.mxu0 %v415
      %617 = vmatmul.mubr.bf16.gmra.mrb[0].mxu0 %v414
      %v618 = vpop.f32.mrb[0].mxu0
      %v619 = vadd.f32 0.0, %v618
      %v620 = vpop.f32.mrb[0].mxu0
      %v621 = vpop.f32.mrb[0].mxu0
      %v622 = vadd.f32 0.0, %v621
      %v623 = vpop.f32.mrb[0].mxu0
      %624 = vdwg.mxu0
      %v625 = vadd.f32 %v288, %v563
      %v626 = vadd.f32 %v289, %v566
      %v627 = vadd.f32 %v290, %v571
      %v628 = vadd.f32 %v291, %v574
      %v629 = vadd.f32 %v292, %v579
      %v630 = vadd.f32 %v293, %v582
      %v631 = vadd.f32 %v294, %v587
      %v632 = vadd.f32 %v295, %v590
      %v633 = vadd.f32 %v296, %v595
      %v634 = vadd.f32 %v297, %v598
      %v635 = vadd.f32 %v298, %v603
      %v636 = vadd.f32 %v299, %v606
      %v637 = vadd.f32 %v300, %v611
      %v638 = vadd.f32 %v301, %v614
      %v639 = vadd.f32 %v302, %v619
      %v640 = vadd.f32 %v303, %v622
      %641 = vst [vmem:[#allocation2] sm:$0xff] %v625
      %642 = vst [vmem:[#allocation2 + $0x8] sm:$0xff] %v626
      %643 = vst [vmem:[#allocation2 + $0x10] sm:$0xff] %v627
      %644 = vst [vmem:[#allocation2 + $0x18] sm:$0xff] %v628
      %645 = vst [vmem:[#allocation2 + $0x20] sm:$0xff] %v629
      %646 = vst [vmem:[#allocation2 + $0x28] sm:$0xff] %v630
      %647 = vst [vmem:[#allocation2 + $0x30] sm:$0xff] %v631
      %648 = vst [vmem:[#allocation2 + $0x38] sm:$0xff] %v632
      %649 = vst [vmem:[#allocation2 + $0x40] sm:$0xff] %v633
      %650 = vst [vmem:[#allocation2 + $0x48] sm:$0xff] %v634
      %651 = vst [vmem:[#allocation2 + $0x50] sm:$0xff] %v635
      %652 = vst [vmem:[#allocation2 + $0x58] sm:$0xff] %v636
      %653 = vst [vmem:[#allocation2 + $0x60] sm:$0xff] %v637
      %654 = vst [vmem:[#allocation2 + $0x68] sm:$0xff] %v638
      %655 = vst [vmem:[#allocation2 + $0x70] sm:$0xff] %v639
      %656 = vst [vmem:[#allocation2 + $0x78] sm:$0xff] %v640
      // Predicated region
      $region37: #{_lambda_.17} parent=31 // pred_check
        %p657 = pneg %p268
      $region38: #{_lambda_.17} parent=31 // pred_check_branch
        %659 = sbr.rel (%p657) target = $region40
      $region39: #{_lambda_.17} parent=31 // pred_region
        %v660 = vld [vmem:[#allocation2] sm:$0xff]
        %v661 = vld [vmem:[#allocation2 + $0x8] sm:$0xff]
        %v662 = vld [vmem:[#allocation2 + $0x10] sm:$0xff]
        %v663 = vld [vmem:[#allocation2 + $0x18] sm:$0xff]
        %v664 = vld [vmem:[#allocation2 + $0x20] sm:$0xff]
        %v665 = vld [vmem:[#allocation2 + $0x28] sm:$0xff]
        %v666 = vld [vmem:[#allocation2 + $0x30] sm:$0xff]
        %v667 = vld [vmem:[#allocation2 + $0x38] sm:$0xff]
        %v668 = vld [vmem:[#allocation2 + $0x40] sm:$0xff]
        %v669 = vld [vmem:[#allocation2 + $0x48] sm:$0xff]
        %v670 = vld [vmem:[#allocation2 + $0x50] sm:$0xff]
        %v671 = vld [vmem:[#allocation2 + $0x58] sm:$0xff]
        %v672 = vld [vmem:[#allocation2 + $0x60] sm:$0xff]
        %v673 = vld [vmem:[#allocation2 + $0x68] sm:$0xff]
        %v674 = vld [vmem:[#allocation2 + $0x70] sm:$0xff]
        %v675 = vld [vmem:[#allocation2 + $0x78] sm:$0xff]
        %v676 = vld [vmem:[%s257] sm:$0x1]
        %v678 = vlaneseq
        %v679 = vshrl.u32 %v678, 7
        %v680 = vsub.s32 0, %v679
        %v681 = vrot.slane %v676, %v680
        %v683 = vadd.f32 %v660, %v681
        %v684 = vadd.f32 %v661, %v681
        %v685 = vadd.f32 %v662, %v681
        %v686 = vadd.f32 %v663, %v681
        %v687 = vadd.f32 %v664, %v681
        %v688 = vadd.f32 %v665, %v681
        %v689 = vadd.f32 %v666, %v681
        %v690 = vadd.f32 %v667, %v681
        %v691 = vadd.f32 %v668, %v681
        %v692 = vadd.f32 %v669, %v681
        %v693 = vadd.f32 %v670, %v681
        %v694 = vadd.f32 %v671, %v681
        %v695 = vadd.f32 %v672, %v681
        %v696 = vadd.f32 %v673, %v681
        %v697 = vadd.f32 %v674, %v681
        %v698 = vadd.f32 %v675, %v681
        %v699 = vmax.f32 %v683, 0.0
        %v700 = vmax.f32 %v684, 0.0
        %v701 = vmax.f32 %v685, 0.0
        %v702 = vmax.f32 %v686, 0.0
        %v703 = vmax.f32 %v687, 0.0
        %v704 = vmax.f32 %v688, 0.0
        %v705 = vmax.f32 %v689, 0.0
        %v706 = vmax.f32 %v690, 0.0
        %v707 = vmax.f32 %v691, 0.0
        %v708 = vmax.f32 %v692, 0.0
        %v709 = vmax.f32 %v693, 0.0
        %v710 = vmax.f32 %v694, 0.0
        %v711 = vmax.f32 %v695, 0.0
        %v712 = vmax.f32 %v696, 0.0
        %v713 = vmax.f32 %v697, 0.0
        %v714 = vmax.f32 %v698, 0.0
        %v715 = vpack.c.bf16 %v700, %v699
        %v716 = vpack.c.bf16 %v702, %v701
        %v717 = vpack.c.bf16 %v704, %v703
        %v718 = vpack.c.bf16 %v706, %v705
        %v719 = vpack.c.bf16 %v708, %v707
        %v720 = vpack.c.bf16 %v710, %v709
        %v721 = vpack.c.bf16 %v712, %v711
        %v722 = vpack.c.bf16 %v714, %v713
        %v731 = vunpack.c.l.b16 %v715
        %v732 = vunpack.c.h.b16 %v715
        %v733 = vunpack.c.l.b16 %v716
        %v734 = vunpack.c.h.b16 %v716
        %v735 = vunpack.c.l.b16 %v717
        %v736 = vunpack.c.h.b16 %v717
        %v737 = vunpack.c.l.b16 %v718
        %v738 = vunpack.c.h.b16 %v718
        %v739 = vunpack.c.l.b16 %v719
        %v740 = vunpack.c.h.b16 %v719
        %v741 = vunpack.c.l.b16 %v720
        %v742 = vunpack.c.h.b16 %v720
        %v743 = vunpack.c.l.b16 %v721
        %v744 = vunpack.c.h.b16 %v721
        %v745 = vunpack.c.l.b16 %v722
        %v746 = vunpack.c.h.b16 %v722
        %v747 = vpack.c.b16 %v731, %v731
        %v748 = vpack.c.b16 %v732, %v732
        %v749 = vpack.c.b16 %v733, %v733
        %v750 = vpack.c.b16 %v734, %v734
        %v751 = vpack.c.b16 %v735, %v735
        %v752 = vpack.c.b16 %v736, %v736
        %v753 = vpack.c.b16 %v737, %v737
        %v754 = vpack.c.b16 %v738, %v738
        %v755 = vpack.c.b16 %v739, %v739
        %v756 = vpack.c.b16 %v740, %v740
        %v757 = vpack.c.b16 %v741, %v741
        %v758 = vpack.c.b16 %v742, %v742
        %v759 = vpack.c.b16 %v743, %v743
        %v760 = vpack.c.b16 %v744, %v744
        %v761 = vpack.c.b16 %v745, %v745
        %v762 = vpack.c.b16 %v746, %v746
        %779 = vst [vmem:[%s265] sm:$0xf] %v747
        %780 = vst [vmem:[%s265 + $0x4] sm:$0xf] %v748
        %781 = vst [vmem:[%s265 + $0x8] sm:$0xf] %v749
        %782 = vst [vmem:[%s265 + $0xc] sm:$0xf] %v750
        %783 = vst [vmem:[%s265 + $0x10] sm:$0xf] %v751
        %784 = vst [vmem:[%s265 + $0x14] sm:$0xf] %v752
        %785 = vst [vmem:[%s265 + $0x18] sm:$0xf] %v753
        %786 = vst [vmem:[%s265 + $0x1c] sm:$0xf] %v754
        %787 = vst [vmem:[%s265 + $0x20] sm:$0xf] %v755
        %788 = vst [vmem:[%s265 + $0x24] sm:$0xf] %v756
        %789 = vst [vmem:[%s265 + $0x28] sm:$0xf] %v757
        %790 = vst [vmem:[%s265 + $0x2c] sm:$0xf] %v758
        %791 = vst [vmem:[%s265 + $0x30] sm:$0xf] %v759
        %792 = vst [vmem:[%s265 + $0x34] sm:$0xf] %v760
        %793 = vst [vmem:[%s265 + $0x38] sm:$0xf] %v761
        %794 = vst [vmem:[%s265 + $0x3c] sm:$0xf] %v762
      $region40: #{_lambda_.17} parent=31 // pred_fallthru
        _
      %s795 = smul.u32 16, %s19
      %p796 = scmp.lt.s32.totalorder %s795, 63
      %s797 = scalar_select %p796, %s795, 63
      %p798 = scmp.lt.s32.totalorder %s20, 0
      %s799 = scalar_select %p798, %s20, 0
      %s800 = sadd.s32 %s799, %s797
      %s801 = smul.addr %s800, 4
      %s802 = scalar_lea.vmem %s3, %s801
      // Predicated region
      $region41: #{_lambda_.17} parent=31 // pred_check
        %p803 = pneg %p135
      $region42: #{_lambda_.17} parent=31 // pred_check_branch
        %805 = sbr.rel (%p803) target = $region44
      $region43: #{_lambda_.17} parent=31 // pred_region
        %s806 = smul.u32 16, %s19
      $region44: #{_lambda_.17} parent=31 // pred_fallthru
        _
    $region32: #{_lambda_.17} parent=5 // pred_fallthru
      _
    %p807 = scmp.le.s32.totalorder 2, %s9
    // Predicated region
    $region45: #{_lambda_.17} parent=5 // pred_check
      %p808 = pneg %p807
    $region46: #{_lambda_.17} parent=5 // pred_check_branch
      %810 = sbr.rel (%p808) target = $region48
    $region47: #{_lambda_.17} parent=5 // pred_region
      %s811 = ssub.s32 %s9, 2
      // Predicated region
      $region49: #{_lambda_.17} parent=47 // pred_check
        %p812 = pneg %p141
      $region50: #{_lambda_.17} parent=47 // pred_check_branch
        %814 = sbr.rel (%p812) target = $region52
      $region51: #{_lambda_.17} parent=47 // pred_region
        %s815 = smul.u32 16, %s22
        %p816 = scmp.lt.s32.totalorder %s815, 63
        %s817 = scalar_select %p816, %s815, 63
        %p818 = scmp.lt.s32.totalorder %s23, 0
        %s819 = scalar_select %p818, %s23, 0
        %s820 = sadd.s32 %s819, %s817
        %s821 = smul.addr %s820, 4
        %s822 = scalar_lea.vmem %s3, %s821
      $region52: #{_lambda_.17} parent=47 // pred_fallthru
        _
    $region48: #{_lambda_.17} parent=5 // pred_fallthru
      _
  $region6: #{_lambda_.17} parent=0 // loop_footer
    %s13 = sadd.s32 1, %s9
  $region7: #{_lambda_.17} parent=0 // loop_footer_branch
    %8 = sbr.rel target = $region3
  $region8: #{_lambda_.17} parent=0 // loop_exit
    _

// kernel: _lambda_.18
$region0: #{_lambda_.18}
  #allocation0 [shape = 'u32[]', space=smem, size = 0x4, offset = 0x4, fixed_abs, tag = 'smem constant byte address 0x4 - core index']
  #allocation1 [shape = 'u32[144,128]{1,0:T(1,128)}', space=vmem, size = 0x12000, scoped, tag = 'internal scratch']
  %s0 = inlined_call_operand.vmem [shape: bf16[2,9,9,128], index: 0, kind: input, shape index: {}]
  %s1 = inlined_call_operand.vmem [shape: bf16[2,9,9,128], index: 1, kind: input, shape index: {}]
  %s2 = inlined_call_operand.vmem [shape: bf16[2,9,9,128], index: 2, kind: input, shape index: {}]
  %s3 = inlined_call_operand.vmem [shape: bf16[2,9,9,128], index: 3, kind: input, shape index: {}]
  %s4 = inlined_call_operand.vmem [shape: bf16[2,8,8,128], index: 4, kind: output, shape index: {}]
  %s5 = sld [smem:[#allocation0]]
  $region26: #{_lambda_.18} parent=0
    _
  %s7 = ssub.s32 1, %s5
  %s8 = scalar_select 0, %s7, %s5
  // Predicated region
  $region2: #{_lambda_.18} parent=0 // pred_check
    _
  $region3: #{_lambda_.18} parent=0 // pred_check_branch
    %10 = sbr.rel (0) target = $region5
  $region4: #{_lambda_.18} parent=0 // pred_region
    _
  $region5: #{_lambda_.18} parent=0 // pred_fallthru
    _
  // Predicated region
  $region6: #{_lambda_.18} parent=0 // pred_check
    _
  $region7: #{_lambda_.18} parent=0 // pred_check_branch
    %12 = sbr.rel (0) target = $region9
  $region8: #{_lambda_.18} parent=0 // pred_region
    _
  $region9: #{_lambda_.18} parent=0 // pred_fallthru
    _
  // Predicated region
  $region10: #{_lambda_.18} parent=0 // pred_check
    _
  $region11: #{_lambda_.18} parent=0 // pred_check_branch
    %14 = sbr.rel (0) target = $region13
  $region12: #{_lambda_.18} parent=0 // pred_region
    _
  $region13: #{_lambda_.18} parent=0 // pred_fallthru
    _
  // Predicated region
  $region14: #{_lambda_.18} parent=0 // pred_check
    _
  $region15: #{_lambda_.18} parent=0 // pred_check_branch
    %16 = sbr.rel (0) target = $region17
  $region16: #{_lambda_.18} parent=0 // pred_region
    _
  $region17: #{_lambda_.18} parent=0 // pred_fallthru
    _
  %v17 = vld [vmem:[%s3] sm:$0xf]
  %v18 = vld [vmem:[%s3 + $0x8] sm:$0xf]
  %v19 = vld [vmem:[%s3 + $0x10] sm:$0xf]
  %v20 = vld [vmem:[%s3 + $0x18] sm:$0xf]
  %v21 = vld [vmem:[%s3 + $0x20] sm:$0xf]
  %v22 = vld [vmem:[%s3 + $0x28] sm:$0xf]
  %v23 = vld [vmem:[%s3 + $0x30] sm:$0xf]
  %v24 = vld [vmem:[%s3 + $0x38] sm:$0xf]
  %v25 = vld [vmem:[%s3 + $0x48] sm:$0xf]
  %v26 = vld [vmem:[%s3 + $0x50] sm:$0xf]
  %v27 = vld [vmem:[%s3 + $0x58] sm:$0xf]
  %v28 = vld [vmem:[%s3 + $0x60] sm:$0xf]
  %v29 = vld [vmem:[%s3 + $0x68] sm:$0xf]
  %v30 = vld [vmem:[%s3 + $0x70] sm:$0xf]
  %v31 = vld [vmem:[%s3 + $0x78] sm:$0xf]
  %v32 = vld [vmem:[%s3 + $0x80] sm:$0xf]
  %v33 = vld [vmem:[%s0] sm:$0xf]
  %v34 = vld [vmem:[%s0 + $0x8] sm:$0xf]
  %v35 = vld [vmem:[%s0 + $0x10] sm:$0xf]
  %v36 = vld [vmem:[%s0 + $0x18] sm:$0xf]
  %v37 = vld [vmem:[%s0 + $0x20] sm:$0xf]
  %v38 = vld [vmem:[%s0 + $0x28] sm:$0xf]
  %v39 = vld [vmem:[%s0 + $0x30] sm:$0xf]
  %v40 = vld [vmem:[%s0 + $0x38] sm:$0xf]
  %v41 = vld [vmem:[%s0 + $0x48] sm:$0xf]
  %v42 = vld [vmem:[%s0 + $0x50] sm:$0xf]
  %v43 = vld [vmem:[%s0 + $0x58] sm:$0xf]
  %v44 = vld [vmem:[%s0 + $0x60] sm:$0xf]
  %v45 = vld [vmem:[%s0 + $0x68] sm:$0xf]
  %v46 = vld [vmem:[%s0 + $0x70] sm:$0xf]
  %v47 = vld [vmem:[%s0 + $0x78] sm:$0xf]
  %v48 = vld [vmem:[%s0 + $0x80] sm:$0xf]
  %v49 = vmax.bf16 %v17, %v33
  %v50 = vmax.bf16 %v18, %v34
  %v51 = vmax.bf16 %v19, %v35
  %v52 = vmax.bf16 %v20, %v36
  %v53 = vmax.bf16 %v21, %v37
  %v54 = vmax.bf16 %v22, %v38
  %v55 = vmax.bf16 %v23, %v39
  %v56 = vmax.bf16 %v24, %v40
  %v57 = vmax.bf16 %v25, %v41
  %v58 = vmax.bf16 %v26, %v42
  %v59 = vmax.bf16 %v27, %v43
  %v60 = vmax.bf16 %v28, %v44
  %v61 = vmax.bf16 %v29, %v45
  %v62 = vmax.bf16 %v30, %v46
  %v63 = vmax.bf16 %v31, %v47
  %v64 = vmax.bf16 %v32, %v48
  %v65 = vld [vmem:[%s0 + $0x4] sm:$0x1]
  %v66 = vld [vmem:[%s0 + $0xc] sm:$0x1]
  %v67 = vld [vmem:[%s0 + $0x14] sm:$0x1]
  %v68 = vld [vmem:[%s0 + $0x1c] sm:$0x1]
  %v69 = vld [vmem:[%s0 + $0x24] sm:$0x1]
  %v70 = vld [vmem:[%s0 + $0x2c] sm:$0x1]
  %v71 = vld [vmem:[%s0 + $0x34] sm:$0x1]
  %v72 = vld [vmem:[%s0 + $0x3c] sm:$0x1]
  %v73 = vld [vmem:[%s0 + $0x4c] sm:$0x1]
  %v74 = vld [vmem:[%s0 + $0x54] sm:$0x1]
  %v75 = vld [vmem:[%s0 + $0x5c] sm:$0x1]
  %v76 = vld [vmem:[%s0 + $0x64] sm:$0x1]
  %v77 = vld [vmem:[%s0 + $0x6c] sm:$0x1]
  %v78 = vld [vmem:[%s0 + $0x74] sm:$0x1]
  %v79 = vld [vmem:[%s0 + $0x7c] sm:$0x1]
  %v80 = vld [vmem:[%s0 + $0x84] sm:$0x1]
  %vm81 = vsmask.f32 3328
  %vm82 = vsmask.f32 7440
  %vm83 = vmor %vm81, %vm82
  %v85 = vshrl.u32 %v33, 16
  %v87 = vrot.slane %v85, 4
  %v88 = vshll.u32 %v33, 16
  %v90 = vrot.slane %v88, 5
  %v91 = vor.u32 %v87, %v90
  %v92 = vrot.slane %v91, 4
  %v94 = vshll.u32 %v65, 16
  %v96 = vrot.slane %v94, 5
  %v97 = vsel %vm83, %v92, %v96
  %v99 = vshrl.u32 %v34, 16
  %v101 = vrot.slane %v99, 4
  %v102 = vshll.u32 %v34, 16
  %v104 = vrot.slane %v102, 5
  %v105 = vor.u32 %v101, %v104
  %v106 = vrot.slane %v105, 4
  %v108 = vshll.u32 %v66, 16
  %v110 = vrot.slane %v108, 5
  %v111 = vsel %vm83, %v106, %v110
  %v113 = vshrl.u32 %v35, 16
  %v115 = vrot.slane %v113, 4
  %v116 = vshll.u32 %v35, 16
  %v118 = vrot.slane %v116, 5
  %v119 = vor.u32 %v115, %v118
  %v120 = vrot.slane %v119, 4
  %v122 = vshll.u32 %v67, 16
  %v124 = vrot.slane %v122, 5
  %v125 = vsel %vm83, %v120, %v124
  %v127 = vshrl.u32 %v36, 16
  %v129 = vrot.slane %v127, 4
  %v130 = vshll.u32 %v36, 16
  %v132 = vrot.slane %v130, 5
  %v133 = vor.u32 %v129, %v132
  %v134 = vrot.slane %v133, 4
  %v136 = vshll.u32 %v68, 16
  %v138 = vrot.slane %v136, 5
  %v139 = vsel %vm83, %v134, %v138
  %v141 = vshrl.u32 %v37, 16
  %v143 = vrot.slane %v141, 4
  %v144 = vshll.u32 %v37, 16
  %v146 = vrot.slane %v144, 5
  %v147 = vor.u32 %v143, %v146
  %v148 = vrot.slane %v147, 4
  %v150 = vshll.u32 %v69, 16
  %v152 = vrot.slane %v150, 5
  %v153 = vsel %vm83, %v148, %v152
  %v155 = vshrl.u32 %v38, 16
  %v157 = vrot.slane %v155, 4
  %v158 = vshll.u32 %v38, 16
  %v160 = vrot.slane %v158, 5
  %v161 = vor.u32 %v157, %v160
  %v162 = vrot.slane %v161, 4
  %v164 = vshll.u32 %v70, 16
  %v166 = vrot.slane %v164, 5
  %v167 = vsel %vm83, %v162, %v166
  %v169 = vshrl.u32 %v39, 16
  %v171 = vrot.slane %v169, 4
  %v172 = vshll.u32 %v39, 16
  %v174 = vrot.slane %v172, 5
  %v175 = vor.u32 %v171, %v174
  %v176 = vrot.slane %v175, 4
  %v178 = vshll.u32 %v71, 16
  %v180 = vrot.slane %v178, 5
  %v181 = vsel %vm83, %v176, %v180
  %v183 = vshrl.u32 %v40, 16
  %v185 = vrot.slane %v183, 4
  %v186 = vshll.u32 %v40, 16
  %v188 = vrot.slane %v186, 5
  %v189 = vor.u32 %v185, %v188
  %v190 = vrot.slane %v189, 4
  %v192 = vshll.u32 %v72, 16
  %v194 = vrot.slane %v192, 5
  %v195 = vsel %vm83, %v190, %v194
  %v197 = vshrl.u32 %v41, 16
  %v199 = vrot.slane %v197, 4
  %v200 = vshll.u32 %v41, 16
  %v202 = vrot.slane %v200, 5
  %v203 = vor.u32 %v199, %v202
  %v204 = vrot.slane %v203, 4
  %v206 = vshll.u32 %v73, 16
  %v208 = vrot.slane %v206, 5
  %v209 = vsel %vm83, %v204, %v208
  %v211 = vshrl.u32 %v42, 16
  %v213 = vrot.slane %v211, 4
  %v214 = vshll.u32 %v42, 16
  %v216 = vrot.slane %v214, 5
  %v217 = vor.u32 %v213, %v216
  %v218 = vrot.slane %v217, 4
  %v220 = vshll.u32 %v74, 16
  %v222 = vrot.slane %v220, 5
  %v223 = vsel %vm83, %v218, %v222
  %v225 = vshrl.u32 %v43, 16
  %v227 = vrot.slane %v225, 4
  %v228 = vshll.u32 %v43, 16
  %v230 = vrot.slane %v228, 5
  %v231 = vor.u32 %v227, %v230
  %v232 = vrot.slane %v231, 4
  %v234 = vshll.u32 %v75, 16
  %v236 = vrot.slane %v234, 5
  %v237 = vsel %vm83, %v232, %v236
  %v239 = vshrl.u32 %v44, 16
  %v241 = vrot.slane %v239, 4
  %v242 = vshll.u32 %v44, 16
  %v244 = vrot.slane %v242, 5
  %v245 = vor.u32 %v241, %v244
  %v246 = vrot.slane %v245, 4
  %v248 = vshll.u32 %v76, 16
  %v250 = vrot.slane %v248, 5
  %v251 = vsel %vm83, %v246, %v250
  %v253 = vshrl.u32 %v45, 16
  %v255 = vrot.slane %v253, 4
  %v256 = vshll.u32 %v45, 16
  %v258 = vrot.slane %v256, 5
  %v259 = vor.u32 %v255, %v258
  %v260 = vrot.slane %v259, 4
  %v262 = vshll.u32 %v77, 16
  %v264 = vrot.slane %v262, 5
  %v265 = vsel %vm83, %v260, %v264
  %v267 = vshrl.u32 %v46, 16
  %v269 = vrot.slane %v267, 4
  %v270 = vshll.u32 %v46, 16
  %v272 = vrot.slane %v270, 5
  %v273 = vor.u32 %v269, %v272
  %v274 = vrot.slane %v273, 4
  %v276 = vshll.u32 %v78, 16
  %v278 = vrot.slane %v276, 5
  %v279 = vsel %vm83, %v274, %v278
  %v281 = vshrl.u32 %v47, 16
  %v283 = vrot.slane %v281, 4
  %v284 = vshll.u32 %v47, 16
  %v286 = vrot.slane %v284, 5
  %v287 = vor.u32 %v283, %v286
  %v288 = vrot.slane %v287, 4
  %v290 = vshll.u32 %v79, 16
  %v292 = vrot.slane %v290, 5
  %v293 = vsel %vm83, %v288, %v292
  %v295 = vshrl.u32 %v48, 16
  %v297 = vrot.slane %v295, 4
  %v298 = vshll.u32 %v48, 16
  %v300 = vrot.slane %v298, 5
  %v301 = vor.u32 %v297, %v300
  %v302 = vrot.slane %v301, 4
  %v304 = vshll.u32 %v80, 16
  %v306 = vrot.slane %v304, 5
  %v307 = vsel %vm83, %v302, %v306
  %v324 = vmax.bf16 %v49, %v97
  %v325 = vmax.bf16 %v50, %v111
  %v326 = vmax.bf16 %v51, %v125
  %v327 = vmax.bf16 %v52, %v139
  %v328 = vmax.bf16 %v53, %v153
  %v329 = vmax.bf16 %v54, %v167
  %v330 = vmax.bf16 %v55, %v181
  %v331 = vmax.bf16 %v56, %v195
  %v332 = vmax.bf16 %v57, %v209
  %v333 = vmax.bf16 %v58, %v223
  %v334 = vmax.bf16 %v59, %v237
  %v335 = vmax.bf16 %v60, %v251
  %v336 = vmax.bf16 %v61, %v265
  %v337 = vmax.bf16 %v62, %v279
  %v338 = vmax.bf16 %v63, %v293
  %v339 = vmax.bf16 %v64, %v307
  %s340 = scalar_lea.vmem %s0, 8
  %v341 = vld [vmem:[%s340] sm:$0xf]
  %v342 = vld [vmem:[%s340 + $0x8] sm:$0xf]
  %v343 = vld [vmem:[%s340 + $0x10] sm:$0xf]
  %v344 = vld [vmem:[%s340 + $0x18] sm:$0xf]
  %v345 = vld [vmem:[%s340 + $0x20] sm:$0xf]
  %v346 = vld [vmem:[%s340 + $0x28] sm:$0xf]
  %v347 = vld [vmem:[%s340 + $0x30] sm:$0xf]
  %v348 = vld [vmem:[%s340 + $0x38] sm:$0xf]
  %v349 = vld [vmem:[%s340 + $0x48] sm:$0xf]
  %v350 = vld [vmem:[%s340 + $0x50] sm:$0xf]
  %v351 = vld [vmem:[%s340 + $0x58] sm:$0xf]
  %v352 = vld [vmem:[%s340 + $0x60] sm:$0xf]
  %v353 = vld [vmem:[%s340 + $0x68] sm:$0xf]
  %v354 = vld [vmem:[%s340 + $0x70] sm:$0xf]
  %v355 = vld [vmem:[%s340 + $0x78] sm:$0xf]
  %v356 = vld [vmem:[%s340 + $0x80] sm:$0xf]
  %v357 = vmax.bf16 %v324, %v341
  %v358 = vmax.bf16 %v325, %v342
  %v359 = vmax.bf16 %v326, %v343
  %v360 = vmax.bf16 %v327, %v344
  %v361 = vmax.bf16 %v328, %v345
  %v362 = vmax.bf16 %v329, %v346
  %v363 = vmax.bf16 %v330, %v347
  %v364 = vmax.bf16 %v331, %v348
  %v365 = vmax.bf16 %v332, %v349
  %v366 = vmax.bf16 %v333, %v350
  %v367 = vmax.bf16 %v334, %v351
  %v368 = vmax.bf16 %v335, %v352
  %v369 = vmax.bf16 %v336, %v353
  %v370 = vmax.bf16 %v337, %v354
  %v371 = vmax.bf16 %v338, %v355
  %v372 = vmax.bf16 %v339, %v356
  %v373 = vld [vmem:[%s340 + $0x4] sm:$0x1]
  %v374 = vld [vmem:[%s340 + $0xc] sm:$0x1]
  %v375 = vld [vmem:[%s340 + $0x14] sm:$0x1]
  %v376 = vld [vmem:[%s340 + $0x1c] sm:$0x1]
  %v377 = vld [vmem:[%s340 + $0x24] sm:$0x1]
  %v378 = vld [vmem:[%s340 + $0x2c] sm:$0x1]
  %v379 = vld [vmem:[%s340 + $0x34] sm:$0x1]
  %v380 = vld [vmem:[%s340 + $0x3c] sm:$0x1]
  %v381 = vld [vmem:[%s340 + $0x4c] sm:$0x1]
  %v382 = vld [vmem:[%s340 + $0x54] sm:$0x1]
  %v383 = vld [vmem:[%s340 + $0x5c] sm:$0x1]
  %v384 = vld [vmem:[%s340 + $0x64] sm:$0x1]
  %v385 = vld [vmem:[%s340 + $0x6c] sm:$0x1]
  %v386 = vld [vmem:[%s340 + $0x74] sm:$0x1]
  %v387 = vld [vmem:[%s340 + $0x7c] sm:$0x1]
  %v388 = vld [vmem:[%s340 + $0x84] sm:$0x1]
  %v390 = vshrl.u32 %v341, 16
  %v392 = vrot.slane %v390, 4
  %v393 = vshll.u32 %v341, 16
  %v395 = vrot.slane %v393, 5
  %v396 = vor.u32 %v392, %v395
  %v397 = vrot.slane %v396, 4
  %v399 = vshll.u32 %v373, 16
  %v401 = vrot.slane %v399, 5
  %v402 = vsel %vm83, %v397, %v401
  %v404 = vshrl.u32 %v342, 16
  %v406 = vrot.slane %v404, 4
  %v407 = vshll.u32 %v342, 16
  %v409 = vrot.slane %v407, 5
  %v410 = vor.u32 %v406, %v409
  %v411 = vrot.slane %v410, 4
  %v413 = vshll.u32 %v374, 16
  %v415 = vrot.slane %v413, 5
  %v416 = vsel %vm83, %v411, %v415
  %v418 = vshrl.u32 %v343, 16
  %v420 = vrot.slane %v418, 4
  %v421 = vshll.u32 %v343, 16
  %v423 = vrot.slane %v421, 5
  %v424 = vor.u32 %v420, %v423
  %v425 = vrot.slane %v424, 4
  %v427 = vshll.u32 %v375, 16
  %v429 = vrot.slane %v427, 5
  %v430 = vsel %vm83, %v425, %v429
  %v432 = vshrl.u32 %v344, 16
  %v434 = vrot.slane %v432, 4
  %v435 = vshll.u32 %v344, 16
  %v437 = vrot.slane %v435, 5
  %v438 = vor.u32 %v434, %v437
  %v439 = vrot.slane %v438, 4
  %v441 = vshll.u32 %v376, 16
  %v443 = vrot.slane %v441, 5
  %v444 = vsel %vm83, %v439, %v443
  %v446 = vshrl.u32 %v345, 16
  %v448 = vrot.slane %v446, 4
  %v449 = vshll.u32 %v345, 16
  %v451 = vrot.slane %v449, 5
  %v452 = vor.u32 %v448, %v451
  %v453 = vrot.slane %v452, 4
  %v455 = vshll.u32 %v377, 16
  %v457 = vrot.slane %v455, 5
  %v458 = vsel %vm83, %v453, %v457
  %v460 = vshrl.u32 %v346, 16
  %v462 = vrot.slane %v460, 4
  %v463 = vshll.u32 %v346, 16
  %v465 = vrot.slane %v463, 5
  %v466 = vor.u32 %v462, %v465
  %v467 = vrot.slane %v466, 4
  %v469 = vshll.u32 %v378, 16
  %v471 = vrot.slane %v469, 5
  %v472 = vsel %vm83, %v467, %v471
  %v474 = vshrl.u32 %v347, 16
  %v476 = vrot.slane %v474, 4
  %v477 = vshll.u32 %v347, 16
  %v479 = vrot.slane %v477, 5
  %v480 = vor.u32 %v476, %v479
  %v481 = vrot.slane %v480, 4
  %v483 = vshll.u32 %v379, 16
  %v485 = vrot.slane %v483, 5
  %v486 = vsel %vm83, %v481, %v485
  %v488 = vshrl.u32 %v348, 16
  %v490 = vrot.slane %v488, 4
  %v491 = vshll.u32 %v348, 16
  %v493 = vrot.slane %v491, 5
  %v494 = vor.u32 %v490, %v493
  %v495 = vrot.slane %v494, 4
  %v497 = vshll.u32 %v380, 16
  %v499 = vrot.slane %v497, 5
  %v500 = vsel %vm83, %v495, %v499
  %v502 = vshrl.u32 %v349, 16
  %v504 = vrot.slane %v502, 4
  %v505 = vshll.u32 %v349, 16
  %v507 = vrot.slane %v505, 5
  %v508 = vor.u32 %v504, %v507
  %v509 = vrot.slane %v508, 4
  %v511 = vshll.u32 %v381, 16
  %v513 = vrot.slane %v511, 5
  %v514 = vsel %vm83, %v509, %v513
  %v516 = vshrl.u32 %v350, 16
  %v518 = vrot.slane %v516, 4
  %v519 = vshll.u32 %v350, 16
  %v521 = vrot.slane %v519, 5
  %v522 = vor.u32 %v518, %v521
  %v523 = vrot.slane %v522, 4
  %v525 = vshll.u32 %v382, 16
  %v527 = vrot.slane %v525, 5
  %v528 = vsel %vm83, %v523, %v527
  %v530 = vshrl.u32 %v351, 16
  %v532 = vrot.slane %v530, 4
  %v533 = vshll.u32 %v351, 16
  %v535 = vrot.slane %v533, 5
  %v536 = vor.u32 %v532, %v535
  %v537 = vrot.slane %v536, 4
  %v539 = vshll.u32 %v383, 16
  %v541 = vrot.slane %v539, 5
  %v542 = vsel %vm83, %v537, %v541
  %v544 = vshrl.u32 %v352, 16
  %v546 = vrot.slane %v544, 4
  %v547 = vshll.u32 %v352, 16
  %v549 = vrot.slane %v547, 5
  %v550 = vor.u32 %v546, %v549
  %v551 = vrot.slane %v550, 4
  %v553 = vshll.u32 %v384, 16
  %v555 = vrot.slane %v553, 5
  %v556 = vsel %vm83, %v551, %v555
  %v558 = vshrl.u32 %v353, 16
  %v560 = vrot.slane %v558, 4
  %v561 = vshll.u32 %v353, 16
  %v563 = vrot.slane %v561, 5
  %v564 = vor.u32 %v560, %v563
  %v565 = vrot.slane %v564, 4
  %v567 = vshll.u32 %v385, 16
  %v569 = vrot.slane %v567, 5
  %v570 = vsel %vm83, %v565, %v569
  %v572 = vshrl.u32 %v354, 16
  %v574 = vrot.slane %v572, 4
  %v575 = vshll.u32 %v354, 16
  %v577 = vrot.slane %v575, 5
  %v578 = vor.u32 %v574, %v577
  %v579 = vrot.slane %v578, 4
  %v581 = vshll.u32 %v386, 16
  %v583 = vrot.slane %v581, 5
  %v584 = vsel %vm83, %v579, %v583
  %v586 = vshrl.u32 %v355, 16
  %v588 = vrot.slane %v586, 4
  %v589 = vshll.u32 %v355, 16
  %v591 = vrot.slane %v589, 5
  %v592 = vor.u32 %v588, %v591
  %v593 = vrot.slane %v592, 4
  %v595 = vshll.u32 %v387, 16
  %v597 = vrot.slane %v595, 5
  %v598 = vsel %vm83, %v593, %v597
  %v600 = vshrl.u32 %v356, 16
  %v602 = vrot.slane %v600, 4
  %v603 = vshll.u32 %v356, 16
  %v605 = vrot.slane %v603, 5
  %v606 = vor.u32 %v602, %v605
  %v607 = vrot.slane %v606, 4
  %v609 = vshll.u32 %v388, 16
  %v611 = vrot.slane %v609, 5
  %v612 = vsel %vm83, %v607, %v611
  %v629 = vmax.bf16 %v357, %v402
  %v630 = vmax.bf16 %v358, %v416
  %v631 = vmax.bf16 %v359, %v430
  %v632 = vmax.bf16 %v360, %v444
  %v633 = vmax.bf16 %v361, %v458
  %v634 = vmax.bf16 %v362, %v472
  %v635 = vmax.bf16 %v363, %v486
  %v636 = vmax.bf16 %v364, %v500
  %v637 = vmax.bf16 %v365, %v514
  %v638 = vmax.bf16 %v366, %v528
  %v639 = vmax.bf16 %v367, %v542
  %v640 = vmax.bf16 %v368, %v556
  %v641 = vmax.bf16 %v369, %v570
  %v642 = vmax.bf16 %v370, %v584
  %v643 = vmax.bf16 %v371, %v598
  %v644 = vmax.bf16 %v372, %v612
  %v645 = vld [vmem:[%s1] sm:$0xf]
  %v646 = vld [vmem:[%s1 + $0x8] sm:$0xf]
  %v647 = vld [vmem:[%s1 + $0x10] sm:$0xf]
  %v648 = vld [vmem:[%s1 + $0x18] sm:$0xf]
  %v649 = vld [vmem:[%s1 + $0x20] sm:$0xf]
  %v650 = vld [vmem:[%s1 + $0x28] sm:$0xf]
  %v651 = vld [vmem:[%s1 + $0x30] sm:$0xf]
  %v652 = vld [vmem:[%s1 + $0x38] sm:$0xf]
  %v653 = vld [vmem:[%s1 + $0x48] sm:$0xf]
  %v654 = vld [vmem:[%s1 + $0x50] sm:$0xf]
  %v655 = vld [vmem:[%s1 + $0x58] sm:$0xf]
  %v656 = vld [vmem:[%s1 + $0x60] sm:$0xf]
  %v657 = vld [vmem:[%s1 + $0x68] sm:$0xf]
  %v658 = vld [vmem:[%s1 + $0x70] sm:$0xf]
  %v659 = vld [vmem:[%s1 + $0x78] sm:$0xf]
  %v660 = vld [vmem:[%s1 + $0x80] sm:$0xf]
  %v661 = vmax.bf16 %v629, %v645
  %v662 = vmax.bf16 %v630, %v646
  %v663 = vmax.bf16 %v631, %v647
  %v664 = vmax.bf16 %v632, %v648
  %v665 = vmax.bf16 %v633, %v649
  %v666 = vmax.bf16 %v634, %v650
  %v667 = vmax.bf16 %v635, %v651
  %v668 = vmax.bf16 %v636, %v652
  %v669 = vmax.bf16 %v637, %v653
  %v670 = vmax.bf16 %v638, %v654
  %v671 = vmax.bf16 %v639, %v655
  %v672 = vmax.bf16 %v640, %v656
  %v673 = vmax.bf16 %v641, %v657
  %v674 = vmax.bf16 %v642, %v658
  %v675 = vmax.bf16 %v643, %v659
  %v676 = vmax.bf16 %v644, %v660
  %s677 = scalar_lea.vmem %s1, 8
  %v678 = vld [vmem:[%s677] sm:$0xf]
  %v679 = vld [vmem:[%s677 + $0x8] sm:$0xf]
  %v680 = vld [vmem:[%s677 + $0x10] sm:$0xf]
  %v681 = vld [vmem:[%s677 + $0x18] sm:$0xf]
  %v682 = vld [vmem:[%s677 + $0x20] sm:$0xf]
  %v683 = vld [vmem:[%s677 + $0x28] sm:$0xf]
  %v684 = vld [vmem:[%s677 + $0x30] sm:$0xf]
  %v685 = vld [vmem:[%s677 + $0x38] sm:$0xf]
  %v686 = vld [vmem:[%s677 + $0x48] sm:$0xf]
  %v687 = vld [vmem:[%s677 + $0x50] sm:$0xf]
  %v688 = vld [vmem:[%s677 + $0x58] sm:$0xf]
  %v689 = vld [vmem:[%s677 + $0x60] sm:$0xf]
  %v690 = vld [vmem:[%s677 + $0x68] sm:$0xf]
  %v691 = vld [vmem:[%s677 + $0x70] sm:$0xf]
  %v692 = vld [vmem:[%s677 + $0x78] sm:$0xf]
  %v693 = vld [vmem:[%s677 + $0x80] sm:$0xf]
  %v694 = vmax.bf16 %v661, %v678
  %v695 = vmax.bf16 %v662, %v679
  %v696 = vmax.bf16 %v663, %v680
  %v697 = vmax.bf16 %v664, %v681
  %v698 = vmax.bf16 %v665, %v682
  %v699 = vmax.bf16 %v666, %v683
  %v700 = vmax.bf16 %v667, %v684
  %v701 = vmax.bf16 %v668, %v685
  %v702 = vmax.bf16 %v669, %v686
  %v703 = vmax.bf16 %v670, %v687
  %v704 = vmax.bf16 %v671, %v688
  %v705 = vmax.bf16 %v672, %v689
  %v706 = vmax.bf16 %v673, %v690
  %v707 = vmax.bf16 %v674, %v691
  %v708 = vmax.bf16 %v675, %v692
  %v709 = vmax.bf16 %v676, %v693
  %v710 = vld [vmem:[%s2] sm:$0xf]
  %v711 = vld [vmem:[%s2 + $0x8] sm:$0xf]
  %v712 = vld [vmem:[%s2 + $0x10] sm:$0xf]
  %v713 = vld [vmem:[%s2 + $0x18] sm:$0xf]
  %v714 = vld [vmem:[%s2 + $0x20] sm:$0xf]
  %v715 = vld [vmem:[%s2 + $0x28] sm:$0xf]
  %v716 = vld [vmem:[%s2 + $0x30] sm:$0xf]
  %v717 = vld [vmem:[%s2 + $0x38] sm:$0xf]
  %v718 = vld [vmem:[%s2 + $0x48] sm:$0xf]
  %v719 = vld [vmem:[%s2 + $0x50] sm:$0xf]
  %v720 = vld [vmem:[%s2 + $0x58] sm:$0xf]
  %v721 = vld [vmem:[%s2 + $0x60] sm:$0xf]
  %v722 = vld [vmem:[%s2 + $0x68] sm:$0xf]
  %v723 = vld [vmem:[%s2 + $0x70] sm:$0xf]
  %v724 = vld [vmem:[%s2 + $0x78] sm:$0xf]
  %v725 = vld [vmem:[%s2 + $0x80] sm:$0xf]
  %v726 = vmax.bf16 %v694, %v710
  %v727 = vmax.bf16 %v695, %v711
  %v728 = vmax.bf16 %v696, %v712
  %v729 = vmax.bf16 %v697, %v713
  %v730 = vmax.bf16 %v698, %v714
  %v731 = vmax.bf16 %v699, %v715
  %v732 = vmax.bf16 %v700, %v716
  %v733 = vmax.bf16 %v701, %v717
  %v734 = vmax.bf16 %v702, %v718
  %v735 = vmax.bf16 %v703, %v719
  %v736 = vmax.bf16 %v704, %v720
  %v737 = vmax.bf16 %v705, %v721
  %v738 = vmax.bf16 %v706, %v722
  %v739 = vmax.bf16 %v707, %v723
  %v740 = vmax.bf16 %v708, %v724
  %v741 = vmax.bf16 %v709, %v725
  %v742 = vld [vmem:[%s2 + $0x4] sm:$0x1]
  %v743 = vld [vmem:[%s2 + $0xc] sm:$0x1]
  %v744 = vld [vmem:[%s2 + $0x14] sm:$0x1]
  %v745 = vld [vmem:[%s2 + $0x1c] sm:$0x1]
  %v746 = vld [vmem:[%s2 + $0x24] sm:$0x1]
  %v747 = vld [vmem:[%s2 + $0x2c] sm:$0x1]
  %v748 = vld [vmem:[%s2 + $0x34] sm:$0x1]
  %v749 = vld [vmem:[%s2 + $0x3c] sm:$0x1]
  %v750 = vld [vmem:[%s2 + $0x4c] sm:$0x1]
  %v751 = vld [vmem:[%s2 + $0x54] sm:$0x1]
  %v752 = vld [vmem:[%s2 + $0x5c] sm:$0x1]
  %v753 = vld [vmem:[%s2 + $0x64] sm:$0x1]
  %v754 = vld [vmem:[%s2 + $0x6c] sm:$0x1]
  %v755 = vld [vmem:[%s2 + $0x74] sm:$0x1]
  %v756 = vld [vmem:[%s2 + $0x7c] sm:$0x1]
  %v757 = vld [vmem:[%s2 + $0x84] sm:$0x1]
  %v759 = vshrl.u32 %v710, 16
  %v761 = vrot.slane %v759, 4
  %v762 = vshll.u32 %v710, 16
  %v764 = vrot.slane %v762, 5
  %v765 = vor.u32 %v761, %v764
  %v766 = vrot.slane %v765, 4
  %v768 = vshll.u32 %v742, 16
  %v770 = vrot.slane %v768, 5
  %v771 = vsel %vm83, %v766, %v770
  %v773 = vshrl.u32 %v711, 16
  %v775 = vrot.slane %v773, 4
  %v776 = vshll.u32 %v711, 16
  %v778 = vrot.slane %v776, 5
  %v779 = vor.u32 %v775, %v778
  %v780 = vrot.slane %v779, 4
  %v782 = vshll.u32 %v743, 16
  %v784 = vrot.slane %v782, 5
  %v785 = vsel %vm83, %v780, %v784
  %v787 = vshrl.u32 %v712, 16
  %v789 = vrot.slane %v787, 4
  %v790 = vshll.u32 %v712, 16
  %v792 = vrot.slane %v790, 5
  %v793 = vor.u32 %v789, %v792
  %v794 = vrot.slane %v793, 4
  %v796 = vshll.u32 %v744, 16
  %v798 = vrot.slane %v796, 5
  %v799 = vsel %vm83, %v794, %v798
  %v801 = vshrl.u32 %v713, 16
  %v803 = vrot.slane %v801, 4
  %v804 = vshll.u32 %v713, 16
  %v806 = vrot.slane %v804, 5
  %v807 = vor.u32 %v803, %v806
  %v808 = vrot.slane %v807, 4
  %v810 = vshll.u32 %v745, 16
  %v812 = vrot.slane %v810, 5
  %v813 = vsel %vm83, %v808, %v812
  %v815 = vshrl.u32 %v714, 16
  %v817 = vrot.slane %v815, 4
  %v818 = vshll.u32 %v714, 16
  %v820 = vrot.slane %v818, 5
  %v821 = vor.u32 %v817, %v820
  %v822 = vrot.slane %v821, 4
  %v824 = vshll.u32 %v746, 16
  %v826 = vrot.slane %v824, 5
  %v827 = vsel %vm83, %v822, %v826
  %v829 = vshrl.u32 %v715, 16
  %v831 = vrot.slane %v829, 4
  %v832 = vshll.u32 %v715, 16
  %v834 = vrot.slane %v832, 5
  %v835 = vor.u32 %v831, %v834
  %v836 = vrot.slane %v835, 4
  %v838 = vshll.u32 %v747, 16
  %v840 = vrot.slane %v838, 5
  %v841 = vsel %vm83, %v836, %v840
  %v843 = vshrl.u32 %v716, 16
  %v845 = vrot.slane %v843, 4
  %v846 = vshll.u32 %v716, 16
  %v848 = vrot.slane %v846, 5
  %v849 = vor.u32 %v845, %v848
  %v850 = vrot.slane %v849, 4
  %v852 = vshll.u32 %v748, 16
  %v854 = vrot.slane %v852, 5
  %v855 = vsel %vm83, %v850, %v854
  %v857 = vshrl.u32 %v717, 16
  %v859 = vrot.slane %v857, 4
  %v860 = vshll.u32 %v717, 16
  %v862 = vrot.slane %v860, 5
  %v863 = vor.u32 %v859, %v862
  %v864 = vrot.slane %v863, 4
  %v866 = vshll.u32 %v749, 16
  %v868 = vrot.slane %v866, 5
  %v869 = vsel %vm83, %v864, %v868
  %v871 = vshrl.u32 %v718, 16
  %v873 = vrot.slane %v871, 4
  %v874 = vshll.u32 %v718, 16
  %v876 = vrot.slane %v874, 5
  %v877 = vor.u32 %v873, %v876
  %v878 = vrot.slane %v877, 4
  %v880 = vshll.u32 %v750, 16
  %v882 = vrot.slane %v880, 5
  %v883 = vsel %vm83, %v878, %v882
  %v885 = vshrl.u32 %v719, 16
  %v887 = vrot.slane %v885, 4
  %v888 = vshll.u32 %v719, 16
  %v890 = vrot.slane %v888, 5
  %v891 = vor.u32 %v887, %v890
  %v892 = vrot.slane %v891, 4
  %v894 = vshll.u32 %v751, 16
  %v896 = vrot.slane %v894, 5
  %v897 = vsel %vm83, %v892, %v896
  %v899 = vshrl.u32 %v720, 16
  %v901 = vrot.slane %v899, 4
  %v902 = vshll.u32 %v720, 16
  %v904 = vrot.slane %v902, 5
  %v905 = vor.u32 %v901, %v904
  %v906 = vrot.slane %v905, 4
  %v908 = vshll.u32 %v752, 16
  %v910 = vrot.slane %v908, 5
  %v911 = vsel %vm83, %v906, %v910
  %v913 = vshrl.u32 %v721, 16
  %v915 = vrot.slane %v913, 4
  %v916 = vshll.u32 %v721, 16
  %v918 = vrot.slane %v916, 5
  %v919 = vor.u32 %v915, %v918
  %v920 = vrot.slane %v919, 4
  %v922 = vshll.u32 %v753, 16
  %v924 = vrot.slane %v922, 5
  %v925 = vsel %vm83, %v920, %v924
  %v927 = vshrl.u32 %v722, 16
  %v929 = vrot.slane %v927, 4
  %v930 = vshll.u32 %v722, 16
  %v932 = vrot.slane %v930, 5
  %v933 = vor.u32 %v929, %v932
  %v934 = vrot.slane %v933, 4
  %v936 = vshll.u32 %v754, 16
  %v938 = vrot.slane %v936, 5
  %v939 = vsel %vm83, %v934, %v938
  %v941 = vshrl.u32 %v723, 16
  %v943 = vrot.slane %v941, 4
  %v944 = vshll.u32 %v723, 16
  %v946 = vrot.slane %v944, 5
  %v947 = vor.u32 %v943, %v946
  %v948 = vrot.slane %v947, 4
  %v950 = vshll.u32 %v755, 16
  %v952 = vrot.slane %v950, 5
  %v953 = vsel %vm83, %v948, %v952
  %v955 = vshrl.u32 %v724, 16
  %v957 = vrot.slane %v955, 4
  %v958 = vshll.u32 %v724, 16
  %v960 = vrot.slane %v958, 5
  %v961 = vor.u32 %v957, %v960
  %v962 = vrot.slane %v961, 4
  %v964 = vshll.u32 %v756, 16
  %v966 = vrot.slane %v964, 5
  %v967 = vsel %vm83, %v962, %v966
  %v969 = vshrl.u32 %v725, 16
  %v971 = vrot.slane %v969, 4
  %v972 = vshll.u32 %v725, 16
  %v974 = vrot.slane %v972, 5
  %v975 = vor.u32 %v971, %v974
  %v976 = vrot.slane %v975, 4
  %v978 = vshll.u32 %v757, 16
  %v980 = vrot.slane %v978, 5
  %v981 = vsel %vm83, %v976, %v980
  %v998 = vmax.bf16 %v726, %v771
  %v999 = vmax.bf16 %v727, %v785
  %v1000 = vmax.bf16 %v728, %v799
  %v1001 = vmax.bf16 %v729, %v813
  %v1002 = vmax.bf16 %v730, %v827
  %v1003 = vmax.bf16 %v731, %v841
  %v1004 = vmax.bf16 %v732, %v855
  %v1005 = vmax.bf16 %v733, %v869
  %v1006 = vmax.bf16 %v734, %v883
  %v1007 = vmax.bf16 %v735, %v897
  %v1008 = vmax.bf16 %v736, %v911
  %v1009 = vmax.bf16 %v737, %v925
  %v1010 = vmax.bf16 %v738, %v939
  %v1011 = vmax.bf16 %v739, %v953
  %v1012 = vmax.bf16 %v740, %v967
  %v1013 = vmax.bf16 %v741, %v981
  %1014 = vst [vmem:[%s4] sm:$0xf] %v998
  %1015 = vst [vmem:[%s4 + $0x4] sm:$0xf] %v999
  %1016 = vst [vmem:[%s4 + $0x8] sm:$0xf] %v1000
  %1017 = vst [vmem:[%s4 + $0xc] sm:$0xf] %v1001
  %1018 = vst [vmem:[%s4 + $0x10] sm:$0xf] %v1002
  %1019 = vst [vmem:[%s4 + $0x14] sm:$0xf] %v1003
  %1020 = vst [vmem:[%s4 + $0x18] sm:$0xf] %v1004
  %1021 = vst [vmem:[%s4 + $0x1c] sm:$0xf] %v1005
  %1022 = vst [vmem:[%s4 + $0x20] sm:$0xf] %v1006
  %1023 = vst [vmem:[%s4 + $0x24] sm:$0xf] %v1007
  %1024 = vst [vmem:[%s4 + $0x28] sm:$0xf] %v1008
  %1025 = vst [vmem:[%s4 + $0x2c] sm:$0xf] %v1009
  %1026 = vst [vmem:[%s4 + $0x30] sm:$0xf] %v1010
  %1027 = vst [vmem:[%s4 + $0x34] sm:$0xf] %v1011
  %1028 = vst [vmem:[%s4 + $0x38] sm:$0xf] %v1012
  %1029 = vst [vmem:[%s4 + $0x3c] sm:$0xf] %v1013
  // Predicated region
  $region18: #{_lambda_.18} parent=0 // pred_check
    _
  $region19: #{_lambda_.18} parent=0 // pred_check_branch
    %1031 = sbr.rel (0) target = $region21
  $region20: #{_lambda_.18} parent=0 // pred_region
    _
  $region21: #{_lambda_.18} parent=0 // pred_fallthru
    _
  // Predicated region
  $region22: #{_lambda_.18} parent=0 // pred_check
    _
  $region23: #{_lambda_.18} parent=0 // pred_check_branch
    %1033 = sbr.rel (0) target = $region25
  $region24: #{_lambda_.18} parent=0 // pred_region
    _
  $region25: #{_lambda_.18} parent=0 // pred_fallthru
    _

// kernel: _lambda_.19
$region0: #{_lambda_.19}
  #allocation0 [shape = 'u32[]', space=smem, size = 0x4, offset = 0x4, fixed_abs, tag = 'smem constant byte address 0x4 - core index']
  #allocation1 [shape = 'u32[144,128]{1,0:T(1,128)}', space=vmem, size = 0x12000, scoped, tag = 'internal scratch']
  #allocation2 [shape = 'f32[128,128]{1,0:T(8,128)}', space=vmem, size = 0x10000, scoped, tag = 'scratch operand']
  %s0 = inlined_call_operand.vmem [shape: bf16[128,1152], index: 0, kind: input, shape index: {}]
  %s1 = inlined_call_operand.vmem [shape: bf16[1152,128], index: 1, kind: input, shape index: {}]
  %s2 = inlined_call_operand.vmem [shape: f32[1,128], index: 2, kind: input, shape index: {}]
  %s3 = inlined_call_operand.vmem [shape: bf16[128,128], index: 3, kind: output, shape index: {}]
  %s4 = sld [smem:[#allocation0]]
  $region79: #{_lambda_.19} parent=0
    _
  %s6 = ssub.s32 1, %s4
  %s7 = scalar_select 0, %s6, %s4
  $region1: #{_lambda_.19} parent=0
    #allocation3 [shape = 'u8[196608]{0}', space=vmem, size = 0x30000, scoped, tag = 'input window, operand 0']
    loop: start=0, step=1, limit=5
    $region2: #{_lambda_.19} parent=1 // loop_pre_header
      _
    $region3: #{_lambda_.19} parent=1 // loop_header
      %s9 = sphi 0, %s13
      %p10 = scmp.ge.s32.totalorder %s9, 5
      %s16 = sphi 0, %s35
      %s17 = sphi 0, %s31
      %s18 = sphi 0, %s27
      %s19 = sphi 0, %s16
      %s20 = sphi 0, %s17
      %s21 = sphi 0, %s18
      %s22 = sphi 0, %s19
      %s23 = sphi 0, %s20
      %s24 = sphi 0, %s21
      %s40 = sphi 0, %s42
      %s43 = sphi 0, %s40
      %s44 = sphi 0, %s43
      %s60 = sphi 0, %s44
      %s68 = sphi 0, %s70
      %s71 = sphi 0, %s68
      %s72 = sphi 0, %s71
      %s88 = sphi 0, %s72
      %s94 = sphi 0, %s96
      %s97 = sphi 0, %s94
      %s98 = sphi 0, %s97
      %s114 = sphi 0, %s98
      %s122 = sphi 0, %s124
      %s125 = sphi 0, %s122
      %s126 = sphi 0, %s125
      %s142 = sphi 0, %s126
    $region4: #{_lambda_.19} parent=1 // loop_header_branch
      %12 = sbr.rel (%p10) target = $region8
    $region5: #{_lambda_.19} parent=1 // loop_body
      %s14 = ssub.s32 %s9, 1
      %s15 = ssub.s32 %s9, 2
      %s25 = sadd.s32 1, %s18
      %p26 = scmp.ge.s32.totalorder %s25, 3
      %s27 = scalar_select %p26, 0, %s25
      %s28 = sadd.s32 1, %s17
      %s29 = scalar_select %p26, %s28, %s17
      %p30 = scmp.ge.s32.totalorder %s29, 1
      %s31 = scalar_select %p30, 0, %s29
      %s32 = sadd.s32 1, %s16
      %s33 = scalar_select %p30, %s32, %s16
      %p34 = scmp.ge.s32.totalorder %s33, 1
      %s35 = scalar_select %p34, 0, %s33
      %s36 = ssub.s32 %s16, %s35
      %s37 = ssub.s32 %s18, %s27
      %s38 = sor.u32 %s36, %s37
      %p39 = scmp.eq.s32.totalorder %s38, 0
      %s41 = sadd.s32 %s40, 1
      %s42 = scalar_select %p39, %s40, %s41
      %p45 = pneg %p39
      %p46 = scmp.eq.s32.totalorder %s9, 2
      %p47 = por %p45, %p46
      %p48 = scmp.ne.s32.totalorder %s40, %s43
      %p49 = scmp.eq.s32.totalorder %s9, 0
      %p50 = por %p48, %p49
      %p51 = scmp.ne.s32.totalorder %s40, %s43
      %p52 = scmp.eq.s32.totalorder %s14, 2
      %p53 = por %p51, %p52
      %p54 = scmp.ne.s32.totalorder %s43, %s44
      %p55 = scmp.eq.s32.totalorder %s14, 0
      %p56 = por %p54, %p55
      %p57 = scmp.ne.s32.totalorder %s43, %s44
      %p58 = scmp.eq.s32.totalorder %s15, 2
      %p59 = por %p57, %p58
      %p61 = scmp.ne.s32.totalorder %s44, %s60
      %p62 = scmp.eq.s32.totalorder %s15, 0
      %p63 = por %p61, %p62
      %s64 = ssub.s32 %s18, %s27
      %s65 = ssub.s32 %s17, %s31
      %s66 = sor.u32 %s64, %s65
      %p67 = scmp.eq.s32.totalorder %s66, 0
      %s69 = sadd.s32 %s68, 1
      %s70 = scalar_select %p67, %s68, %s69
      %p73 = pneg %p67
      %p74 = scmp.eq.s32.totalorder %s9, 2
      %p75 = por %p73, %p74
      %p76 = scmp.ne.s32.totalorder %s68, %s71
      %p77 = scmp.eq.s32.totalorder %s9, 0
      %p78 = por %p76, %p77
      %p79 = scmp.ne.s32.totalorder %s68, %s71
      %p80 = scmp.eq.s32.totalorder %s14, 2
      %p81 = por %p79, %p80
      %p82 = scmp.ne.s32.totalorder %s71, %s72
      %p83 = scmp.eq.s32.totalorder %s14, 0
      %p84 = por %p82, %p83
      %p85 = scmp.ne.s32.totalorder %s71, %s72
      %p86 = scmp.eq.s32.totalorder %s15, 2
      %p87 = por %p85, %p86
      %p89 = scmp.ne.s32.totalorder %s72, %s88
      %p90 = scmp.eq.s32.totalorder %s15, 0
      %p91 = por %p89, %p90
      %s92 = ssub.s32 %s17, %s31
      %p93 = scmp.eq.s32.totalorder %s92, 0
      %s95 = sadd.s32 %s94, 1
      %s96 = scalar_select %p93, %s94, %s95
      %p99 = pneg %p93
      %p100 = scmp.eq.s32.totalorder %s9, 2
      %p101 = por %p99, %p100
      %p102 = scmp.ne.s32.totalorder %s94, %s97
      %p103 = scmp.eq.s32.totalorder %s9, 0
      %p104 = por %p102, %p103
      %p105 = scmp.ne.s32.totalorder %s94, %s97
      %p106 = scmp.eq.s32.totalorder %s14, 2
      %p107 = por %p105, %p106
      %p108 = scmp.ne.s32.totalorder %s97, %s98
      %p109 = scmp.eq.s32.totalorder %s14, 0
      %p110 = por %p108, %p109
      %p111 = scmp.ne.s32.totalorder %s97, %s98
      %p112 = scmp.eq.s32.totalorder %s15, 2
      %p113 = por %p111, %p112
      %p115 = scmp.ne.s32.totalorder %s98, %s114
      %p116 = scmp.eq.s32.totalorder %s15, 0
      %p117 = por %p115, %p116
      %s118 = ssub.s32 %s16, %s35
      %s119 = ssub.s32 %s17, %s31
      %s120 = sor.u32 %s118, %s119
      %p121 = scmp.eq.s32.totalorder %s120, 0
      %s123 = sadd.s32 %s122, 1
      %s124 = scalar_select %p121, %s122, %s123
      %p127 = pneg %p121
      %p128 = scmp.eq.s32.totalorder %s9, 2
      %p129 = por %p127, %p128
      %p130 = scmp.ne.s32.totalorder %s122, %s125
      %p131 = scmp.eq.s32.totalorder %s9, 0
      %p132 = por %p130, %p131
      %p133 = scmp.ne.s32.totalorder %s122, %s125
      %p134 = scmp.eq.s32.totalorder %s14, 2
      %p135 = por %p133, %p134
      %p136 = scmp.ne.s32.totalorder %s125, %s126
      %p137 = scmp.eq.s32.totalorder %s14, 0
      %p138 = por %p136, %p137
      %p139 = scmp.ne.s32.totalorder %s125, %s126
      %p140 = scmp.eq.s32.totalorder %s15, 2
      %p141 = por %p139, %p140
      %p143 = scmp.ne.s32.totalorder %s126, %s142
      %p144 = scmp.eq.s32.totalorder %s15, 0
      %p145 = por %p143, %p144
      %p146 = scmp.le.s32.totalorder 1, %s9
      %p147 = scmp.lt.s32.totalorder %s9, 4
      %p148 = pnand %p146, %p147
      %p149 = pneg %p148
      // Predicated region
      $region9: #{_lambda_.19} parent=5 // pred_check
        _
      $region10: #{_lambda_.19} parent=5 // pred_check_branch
        %151 = sbr.rel (%p148) target = $region12
      $region11: #{_lambda_.19} parent=5 // pred_region
        %s152 = ssub.s32 %s9, 1
        // Predicated region
        $region13: #{_lambda_.19} parent=11 // pred_check
          %p153 = pneg %p110
        $region14: #{_lambda_.19} parent=11 // pred_check_branch
          %155 = sbr.rel (%p153) target = $region16
        $region15: #{_lambda_.19} parent=11 // pred_region
          %p156 = scmp.lt.s32.totalorder %s20, 0
          %s157 = scalar_select %p156, %s20, 0
          %s158 = scalar_lea.vmem %s2, %s157
        $region16: #{_lambda_.19} parent=11 // pred_fallthru
          _
      $region12: #{_lambda_.19} parent=5 // pred_fallthru
        _
      %p159 = scmp.lt.s32.totalorder %s9, 3
      // Predicated region
      $region17: #{_lambda_.19} parent=5 // pred_check
        %p160 = pneg %p159
      $region18: #{_lambda_.19} parent=5 // pred_check_branch
        %162 = sbr.rel (%p160) target = $region20
      $region19: #{_lambda_.19} parent=5 // pred_region
        // Predicated region
        $region21: #{_lambda_.19} parent=19 // pred_check
          %p163 = pneg %p50
        $region22: #{_lambda_.19} parent=19 // pred_check_branch
          %165 = sbr.rel (%p163) target = $region24
        $region23: #{_lambda_.19} parent=19 // pred_region
          %s166 = sand.u32 %s40, 1
          %s167 = sand.u32 %s40, 1
          %s168 = smul.addr %s167, 192
          %s169 = scalar_lea.vmem [#allocation3], %s168
          %s170 = smul.u32 16, %s16
          %s171 = smul.u32 3, %s18
          %s172 = smul.addr %s170, 9
          %s173 = sadd.s32 %s171, %s172
          %s174 = smul.addr %s173, 4
          %s175 = scalar_lea.vmem %s0, %s174
          // Predicated region
          $region25: #{_lambda_.19} parent=23 // pred_check
            _
          $region26: #{_lambda_.19} parent=23 // pred_check_branch
            %177 = sbr.rel (0) target = $region28
          $region27: #{_lambda_.19} parent=23 // pred_region
            // Predicated region
            $region29: #{_lambda_.19} parent=27 // pred_check
              _
            $region30: #{_lambda_.19} parent=27 // pred_check_branch
              %179 = sbr.rel (0) target = $region32
            $region31: #{_lambda_.19} parent=27 // pred_region
              %s180 = scalar_lea.vmem %s175, 8
              %s181 = scalar_lea.vmem %s169, 8 [#allocation3]
              loop: start=0, step=1, limit=1
              $region33: #{_lambda_.19} parent=31 // loop_pre_header
                _
              $region34: #{_lambda_.19} parent=31 // loop_header
                %s183 = sphi 0, %s187
                %p184 = scmp.ge.s32.totalorder %s183, 1
                %s188 = sphi %s175, %s175
                %s189 = sphi %s169, %s169
              $region35: #{_lambda_.19} parent=31 // loop_header_branch
                %186 = sbr.rel (%p184) target = $region39
              $region36: #{_lambda_.19} parent=31 // loop_body
                %v190 = vld [vmem:[%s188] sm:$0xff]
                %191 = vst [vmem:[%s189] sm:$0xff] %v190
                %v192 = vld [vmem:[%s188 + $0x24] sm:$0xff]
                %193 = vst [vmem:[%s189 + $0xc] sm:$0xff] %v192
                %v194 = vld [vmem:[%s188 + $0x48] sm:$0xff]
                %195 = vst [vmem:[%s189 + $0x18] sm:$0xff] %v194
                %v196 = vld [vmem:[%s188 + $0x6c] sm:$0xff]
                %197 = vst [vmem:[%s189 + $0x24] sm:$0xff] %v196
                %v198 = vld [vmem:[%s188 + $0x90] sm:$0xff]
                %199 = vst [vmem:[%s189 + $0x30] sm:$0xff] %v198
                %v200 = vld [vmem:[%s188 + $0xb4] sm:$0xff]
                %201 = vst [vmem:[%s189 + $0x3c] sm:$0xff] %v200
                %v202 = vld [vmem:[%s188 + $0xd8] sm:$0xff]
                %203 = vst [vmem:[%s189 + $0x48] sm:$0xff] %v202
                %v204 = vld [vmem:[%s188 + $0xfc] sm:$0xff]
                %205 = vst [vmem:[%s189 + $0x54] sm:$0xff] %v204
                %v206 = vld [vmem:[%s188 + $0x120] sm:$0xff]
                %207 = vst [vmem:[%s189 + $0x60] sm:$0xff] %v206
                %v208 = vld [vmem:[%s188 + $0x144] sm:$0xff]
                %209 = vst [vmem:[%s189 + $0x6c] sm:$0xff] %v208
                %v210 = vld [vmem:[%s188 + $0x168] sm:$0xff]
                %211 = vst [vmem:[%s189 + $0x78] sm:$0xff] %v210
                %v212 = vld [vmem:[%s188 + $0x18c] sm:$0xff]
                %213 = vst [vmem:[%s189 + $0x84] sm:$0xff] %v212
                %v214 = vld [vmem:[%s188 + $0x1b0] sm:$0xff]
                %215 = vst [vmem:[%s189 + $0x90] sm:$0xff] %v214
                %v216 = vld [vmem:[%s188 + $0x1d4] sm:$0xff]
                %217 = vst [vmem:[%s189 + $0x9c] sm:$0xff] %v216
                %v218 = vld [vmem:[%s188 + $0x1f8] sm:$0xff]
                %219 = vst [vmem:[%s189 + $0xa8] sm:$0xff] %v218
                %v220 = vld [vmem:[%s188 + $0x21c] sm:$0xff]
                %221 = vst [vmem:[%s189 + $0xb4] sm:$0xff] %v220
              $region37: #{_lambda_.19} parent=31 // loop_footer
                %s187 = sadd.s32 1, %s183
              $region38: #{_lambda_.19} parent=31 // loop_footer_branch
                %182 = sbr.rel target = $region34
              $region39: #{_lambda_.19} parent=31 // loop_exit
                _
              loop: start=0, step=1, limit=1
              $region40: #{_lambda_.19} parent=31 // loop_pre_header
                _
              $region41: #{_lambda_.19} parent=31 // loop_header
                %s224 = sphi 0, %s228
                %p225 = scmp.ge.s32.totalorder %s224, 1
                %s229 = sphi %s180, %s180
                %s230 = sphi %s181, %s181
              $region42: #{_lambda_.19} parent=31 // loop_header_branch
                %227 = sbr.rel (%p225) target = $region46
              $region43: #{_lambda_.19} parent=31 // loop_body
                %v231 = vld [vmem:[%s229] sm:$0xf]
                %232 = vst [vmem:[%s230] sm:$0xf] %v231
                %v233 = vld [vmem:[%s229 + $0x24] sm:$0xf]
                %234 = vst [vmem:[%s230 + $0xc] sm:$0xf] %v233
                %v235 = vld [vmem:[%s229 + $0x48] sm:$0xf]
                %236 = vst [vmem:[%s230 + $0x18] sm:$0xf] %v235
                %v237 = vld [vmem:[%s229 + $0x6c] sm:$0xf]
                %238 = vst [vmem:[%s230 + $0x24] sm:$0xf] %v237
                %v239 = vld [vmem:[%s229 + $0x90] sm:$0xf]
                %240 = vst [vmem:[%s230 + $0x30] sm:$0xf] %v239
                %v241 = vld [vmem:[%s229 + $0xb4] sm:$0xf]
                %242 = vst [vmem:[%s230 + $0x3c] sm:$0xf] %v241
                %v243 = vld [vmem:[%s229 + $0xd8] sm:$0xf]
                %244 = vst [vmem:[%s230 + $0x48] sm:$0xf] %v243
                %v245 = vld [vmem:[%s229 + $0xfc] sm:$0xf]
                %246 = vst [vmem:[%s230 + $0x54] sm:$0xf] %v245
                %v247 = vld [vmem:[%s229 + $0x120] sm:$0xf]
                %248 = vst [vmem:[%s230 + $0x60] sm:$0xf] %v247
                %v249 = vld [vmem:[%s229 + $0x144] sm:$0xf]
                %250 = vst [vmem:[%s230 + $0x6c] sm:$0xf] %v249
                %v251 = vld [vmem:[%s229 + $0x168] sm:$0xf]
                %252 = vst [vmem:[%s230 + $0x78] sm:$0xf] %v251
                %v253 = vld [vmem:[%s229 + $0x18c] sm:$0xf]
                %254 = vst [vmem:[%s230 + $0x84] sm:$0xf] %v253
                %v255 = vld [vmem:[%s229 + $0x1b0] sm:$0xf]
                %256 = vst [vmem:[%s230 + $0x90] sm:$0xf] %v255
                %v257 = vld [vmem:[%s229 + $0x1d4] sm:$0xf]
                %258 = vst [vmem:[%s230 + $0x9c] sm:$0xf] %v257
                %v259 = vld [vmem:[%s229 + $0x1f8] sm:$0xf]
                %260 = vst [vmem:[%s230 + $0xa8] sm:$0xf] %v259
                %v261 = vld [vmem:[%s229 + $0x21c] sm:$0xf]
                %262 = vst [vmem:[%s230 + $0xb4] sm:$0xf] %v261
              $region44: #{_lambda_.19} parent=31 // loop_footer
                %s228 = sadd.s32 1, %s224
              $region45: #{_lambda_.19} parent=31 // loop_footer_branch
                %223 = sbr.rel target = $region41
              $region46: #{_lambda_.19} parent=31 // loop_exit
                _
            $region32: #{_lambda_.19} parent=27 // pred_fallthru
              _
          $region28: #{_lambda_.19} parent=23 // pred_fallthru
            _
          %263 = vnop
        $region24: #{_lambda_.19} parent=19 // pred_fallthru
          _
        // Predicated region
        $region47: #{_lambda_.19} parent=19 // pred_check
          %p264 = pneg %p78
        $region48: #{_lambda_.19} parent=19 // pred_check_branch
          %266 = sbr.rel (%p264) target = $region50
        $region49: #{_lambda_.19} parent=19 // pred_region
          %s267 = smul.u32 48, %s18
          %p268 = scmp.lt.s32.totalorder %s267, 143
          %s269 = scalar_select %p268, %s267, 143
          %p270 = scmp.lt.s32.totalorder %s17, 0
          %s271 = scalar_select %p270, %s17, 0
          %s272 = sadd.s32 %s271, %s269
          %s273 = smul.addr %s272, 4
          %s274 = scalar_lea.vmem %s1, %s273
          %s275 = smul.u32 48, %s18
        $region50: #{_lambda_.19} parent=19 // pred_fallthru
          _
      $region20: #{_lambda_.19} parent=5 // pred_fallthru
        _
      %p276 = scmp.le.s32.totalorder 1, %s9
      %p277 = scmp.lt.s32.totalorder %s9, 4
      %p278 = pnand %p276, %p277
      %p279 = pneg %p278
      // Predicated region
      $region51: #{_lambda_.19} parent=5 // pred_check
        _
      $region52: #{_lambda_.19} parent=5 // pred_check_branch
        %281 = sbr.rel (%p278) target = $region54
      $region53: #{_lambda_.19} parent=5 // pred_region
        %s282 = ssub.s32 %s9, 1
        %s283 = sand.u32 %s43, 1
        %s284 = sand.u32 %s43, 1
        %s285 = smul.addr %s284, 192
        %s286 = scalar_lea.vmem [#allocation3], %s285
        // Predicated region
        $region55: #{_lambda_.19} parent=53 // pred_check
          %p287 = pneg %p56
        $region56: #{_lambda_.19} parent=53 // pred_check_branch
          %289 = sbr.rel (%p287) target = $region58
        $region57: #{_lambda_.19} parent=53 // pred_region
          _
        $region58: #{_lambda_.19} parent=53 // pred_fallthru
          _
        %s290 = sand.u32 %s43, 1
        %s291 = sand.u32 %s43, 1
        %s292 = smul.addr %s291, 192
        %s293 = scalar_lea.vmem [#allocation3], %s292
        %p294 = pneg %p56
        %p295 = pneg %p53
        %s296 = smul.u32 48, %s21
        %p297 = scmp.lt.s32.totalorder %s296, 143
        %s298 = scalar_select %p297, %s296, 143
        %p299 = scmp.lt.s32.totalorder %s20, 0
        %s300 = scalar_select %p299, %s20, 0
        %s301 = sadd.s32 %s300, %s298
        %s302 = smul.addr %s301, 4
        %s303 = scalar_lea.vmem %s1, %s302
        %p304 = pneg %p84
        %p305 = pneg %p81
        %p306 = scmp.lt.s32.totalorder %s20, 0
        %s307 = scalar_select %p306, %s20, 0
        %s308 = scalar_lea.vmem %s2, %s307
        %p309 = pneg %p110
        %p310 = pneg %p107
        %p311 = pneg %p138
        %p312 = pneg %p135
        %s313 = smul.u32 16, %s19
        %p314 = scmp.lt.s32.totalorder %s313, 15
        %s315 = scalar_select %p314, %s313, 15
        %p316 = scmp.lt.s32.totalorder %s20, 0
        %s317 = scalar_select %p316, %s20, 0
        %s318 = sadd.s32 %s317, %s315
        %s319 = smul.addr %s318, 4
        %s320 = scalar_lea.vmem %s3, %s319
        %s321 = smul.u32 16, %s19
        %s322 = smul.u32 3, %s21
        %s323 = smul.u32 48, %s21
        %p324 = scmp.lt.s32.totalorder %s323, 143
        %s325 = scalar_select %p324, %s323, 143
        %p326 = scmp.lt.s32.totalorder %s20, 0
        %s327 = scalar_select %p326, %s20, 0
        %s328 = sadd.s32 %s327, %s325
        %s329 = smul.addr %s328, 4
        %s330 = scalar_lea.vmem %s1, %s329
        %s331 = smul.u32 48, %s21
        %p332 = scmp.lt.s32.totalorder %s20, 0
        %s333 = scalar_select %p332, %s20, 0
        %s334 = scalar_lea.vmem %s2, %s333
        %s335 = smul.u32 16, %s19
        %p336 = scmp.lt.s32.totalorder %s335, 15
        %s337 = scalar_select %p336, %s335, 15
        %p338 = scmp.lt.s32.totalorder %s20, 0
        %s339 = scalar_select %p338, %s20, 0
        %s340 = sadd.s32 %s339, %s337
        %s341 = smul.addr %s340, 4
        %s342 = scalar_lea.vmem %s3, %s341
        %s343 = smul.u32 16, %s19
        %p345 = scmp.eq.s32.totalorder %s21, 0
        // Predicated region
        $region59: #{_lambda_.19} parent=53 // pred_check
          %p346 = pneg %p345
        $region60: #{_lambda_.19} parent=53 // pred_check_branch
          %348 = sbr.rel (%p346) target = $region62
        $region61: #{_lambda_.19} parent=53 // pred_region
          %349 = vst [vmem:[#allocation2] sm:$0xff] 0.0
          %350 = vst [vmem:[#allocation2 + $0x8] sm:$0xff] 0.0
          %351 = vst [vmem:[#allocation2 + $0x10] sm:$0xff] 0.0
          %352 = vst [vmem:[#allocation2 + $0x18] sm:$0xff] 0.0
          %353 = vst [vmem:[#allocation2 + $0x20] sm:$0xff] 0.0
          %354 = vst [vmem:[#allocation2 + $0x28] sm:$0xff] 0.0
          %355 = vst [vmem:[#allocation2 + $0x30] sm:$0xff] 0.0
          %356 = vst [vmem:[#allocation2 + $0x38] sm:$0xff] 0.0
          %357 = vst [vmem:[#allocation2 + $0x40] sm:$0xff] 0.0
          %358 = vst [vmem:[#allocation2 + $0x48] sm:$0xff] 0.0
          %359 = vst [vmem:[#allocation2 + $0x50] sm:$0xff] 0.0
          %360 = vst [vmem:[#allocation2 + $0x58] sm:$0xff] 0.0
          %361 = vst [vmem:[#allocation2 + $0x60] sm:$0xff] 0.0
          %362 = vst [vmem:[#allocation2 + $0x68] sm:$0xff] 0.0
          %363 = vst [vmem:[#allocation2 + $0x70] sm:$0xff] 0.0
          %364 = vst [vmem:[#allocation2 + $0x78] sm:$0xff] 0.0
        $region62: #{_lambda_.19} parent=53 // pred_fallthru
          _
        %v365 = vld [vmem:[#allocation2] sm:$0xff]
        %v366 = vld [vmem:[#allocation2 + $0x8] sm:$0xff]
        %v367 = vld [vmem:[#allocation2 + $0x10] sm:$0xff]
        %v368 = vld [vmem:[#allocation2 + $0x18] sm:$0xff]
        %v369 = vld [vmem:[#allocation2 + $0x20] sm:$0xff]
        %v370 = vld [vmem:[#allocation2 + $0x28] sm:$0xff]
        %v371 = vld [vmem:[#allocation2 + $0x30] sm:$0xff]
        %v372 = vld [vmem:[#allocation2 + $0x38] sm:$0xff]
        %v373 = vld [vmem:[#allocation2 + $0x40] sm:$0xff]
        %v374 = vld [vmem:[#allocation2 + $0x48] sm:$0xff]
        %v375 = vld [vmem:[#allocation2 + $0x50] sm:$0xff]
        %v376 = vld [vmem:[#allocation2 + $0x58] sm:$0xff]
        %v377 = vld [vmem:[#allocation2 + $0x60] sm:$0xff]
        %v378 = vld [vmem:[#allocation2 + $0x68] sm:$0xff]
        %v379 = vld [vmem:[#allocation2 + $0x70] sm:$0xff]
        %v380 = vld [vmem:[#allocation2 + $0x78] sm:$0xff]
        %v381 = vld [vmem:[%s286] sm:$0xff]
        %v382 = vld [vmem:[%s286 + $0x8] sm:$0xf]
        %v383 = vld [vmem:[%s286 + $0xc] sm:$0xff]
        %v384 = vld [vmem:[%s286 + $0x14] sm:$0xf]
        %v385 = vld [vmem:[%s286 + $0x18] sm:$0xff]
        %v386 = vld [vmem:[%s286 + $0x20] sm:$0xf]
        %v387 = vld [vmem:[%s286 + $0x24] sm:$0xff]
        %v388 = vld [vmem:[%s286 + $0x2c] sm:$0xf]
        %v389 = vld [vmem:[%s286 + $0x30] sm:$0xff]
        %v390 = vld [vmem:[%s286 + $0x38] sm:$0xf]
        %v391 = vld [vmem:[%s286 + $0x3c] sm:$0xff]
        %v392 = vld [vmem:[%s286 + $0x44] sm:$0xf]
        %v393 = vld [vmem:[%s286 + $0x48] sm:$0xff]
        %v394 = vld [vmem:[%s286 + $0x50] sm:$0xf]
        %v395 = vld [vmem:[%s286 + $0x54] sm:$0xff]
        %v396 = vld [vmem:[%s286 + $0x5c] sm:$0xf]
        %v397 = vld [vmem:[%s286 + $0x60] sm:$0xff]
        %v398 = vld [vmem:[%s286 + $0x68] sm:$0xf]
        %v399 = vld [vmem:[%s286 + $0x6c] sm:$0xff]
        %v400 = vld [vmem:[%s286 + $0x74] sm:$0xf]
        %v401 = vld [vmem:[%s286 + $0x78] sm:$0xff]
        %v402 = vld [vmem:[%s286 + $0x80] sm:$0xf]
        %v403 = vld [vmem:[%s286 + $0x84] sm:$0xff]
        %v404 = vld [vmem:[%s286 + $0x8c] sm:$0xf]
        %v405 = vld [vmem:[%s286 + $0x90] sm:$0xff]
        %v406 = vld [vmem:[%s286 + $0x98] sm:$0xf]
        %v407 = vld [vmem:[%s286 + $0x9c] sm:$0xff]
        %v408 = vld [vmem:[%s286 + $0xa4] sm:$0xf]
        %v409 = vld [vmem:[%s286 + $0xa8] sm:$0xff]
        %v410 = vld [vmem:[%s286 + $0xb0] sm:$0xf]
        %v411 = vld [vmem:[%s286 + $0xb4] sm:$0xff]
        %v412 = vld [vmem:[%s286 + $0xbc] sm:$0xf]
        %v413 = vld [vmem:[%s330] sm:$0xf]
        %v414 = vld [vmem:[%s330 + $0x4] sm:$0xf]
        %v415 = vld [vmem:[%s330 + $0x8] sm:$0xf]
        %v416 = vld [vmem:[%s330 + $0xc] sm:$0xf]
        %v417 = vld [vmem:[%s330 + $0x10] sm:$0xf]
        %v418 = vld [vmem:[%s330 + $0x14] sm:$0xf]
        %v419 = vld [vmem:[%s330 + $0x18] sm:$0xf]
        %v420 = vld [vmem:[%s330 + $0x1c] sm:$0xf]
        %v421 = vld [vmem:[%s330 + $0x20] sm:$0xf]
        %v422 = vld [vmem:[%s330 + $0x24] sm:$0xf]
        %v423 = vld [vmem:[%s330 + $0x28] sm:$0xf]
        %v424 = vld [vmem:[%s330 + $0x2c] sm:$0xf]
        %v425 = vld [vmem:[%s330 + $0x30] sm:$0xf]
        %v426 = vld [vmem:[%s330 + $0x34] sm:$0xf]
        %v427 = vld [vmem:[%s330 + $0x38] sm:$0xf]
        %v428 = vld [vmem:[%s330 + $0x3c] sm:$0xf]
        %v429 = vld [vmem:[%s330 + $0x40] sm:$0xf]
        %v430 = vld [vmem:[%s330 + $0x44] sm:$0xf]
        %v431 = vld [vmem:[%s330 + $0x48] sm:$0xf]
        %v432 = vld [vmem:[%s330 + $0x4c] sm:$0xf]
        %v433 = vld [vmem:[%s330 + $0x50] sm:$0xf]
        %v434 = vld [vmem:[%s330 + $0x54] sm:$0xf]
        %v435 = vld [vmem:[%s330 + $0x58] sm:$0xf]
        %v436 = vld [vmem:[%s330 + $0x5c] sm:$0xf]
        %v437 = vld [vmem:[%s330 + $0x60] sm:$0xf]
        %v438 = vld [vmem:[%s330 + $0x64] sm:$0xf]
        %v439 = vld [vmem:[%s330 + $0x68] sm:$0xf]
        %v440 = vld [vmem:[%s330 + $0x6c] sm:$0xf]
        %v441 = vld [vmem:[%s330 + $0x70] sm:$0xf]
        %v442 = vld [vmem:[%s330 + $0x74] sm:$0xf]
        %v443 = vld [vmem:[%s330 + $0x78] sm:$0xf]
        %v444 = vld [vmem:[%s330 + $0x7c] sm:$0xf]
        %v445 = vld [vmem:[%s330 + $0x80] sm:$0xf]
        %v446 = vld [vmem:[%s330 + $0x84] sm:$0xf]
        %v447 = vld [vmem:[%s330 + $0x88] sm:$0xf]
        %v448 = vld [vmem:[%s330 + $0x8c] sm:$0xf]
        %v449 = vld [vmem:[%s330 + $0x90] sm:$0xf]
        %v450 = vld [vmem:[%s330 + $0x94] sm:$0xf]
        %v451 = vld [vmem:[%s330 + $0x98] sm:$0xf]
        %v452 = vld [vmem:[%s330 + $0x9c] sm:$0xf]
        %v453 = vld [vmem:[%s330 + $0xa0] sm:$0xf]
        %v454 = vld [vmem:[%s330 + $0xa4] sm:$0xf]
        %v455 = vld [vmem:[%s330 + $0xa8] sm:$0xf]
        %v456 = vld [vmem:[%s330 + $0xac] sm:$0xf]
        %v457 = vld [vmem:[%s330 + $0xb0] sm:$0xf]
        %v458 = vld [vmem:[%s330 + $0xb4] sm:$0xf]
        %v459 = vld [vmem:[%s330 + $0xb8] sm:$0xf]
        %v460 = vld [vmem:[%s330 + $0xbc] sm:$0xf]
        %v493 = vunpack.c.l.b16 %v381
        %v494 = vunpack.c.h.b16 %v381
        %v495 = vunpack.c.l.b16 %v382
        %v496 = vunpack.c.l.b16 %v383
        %v497 = vunpack.c.h.b16 %v383
        %v498 = vunpack.c.l.b16 %v384
        %v499 = vunpack.c.l.b16 %v385
        %v500 = vunpack.c.h.b16 %v385
        %v501 = vunpack.c.l.b16 %v386
        %v502 = vunpack.c.l.b16 %v387
        %v503 = vunpack.c.h.b16 %v387
        %v504 = vunpack.c.l.b16 %v388
        %v505 = vunpack.c.l.b16 %v389
        %v506 = vunpack.c.h.b16 %v389
        %v507 = vunpack.c.l.b16 %v390
        %v508 = vunpack.c.l.b16 %v391
        %v509 = vunpack.c.h.b16 %v391
        %v510 = vunpack.c.l.b16 %v392
        %v511 = vunpack.c.l.b16 %v393
        %v512 = vunpack.c.h.b16 %v393
        %v513 = vunpack.c.l.b16 %v394
        %v514 = vunpack.c.l.b16 %v395
        %v515 = vunpack.c.h.b16 %v395
        %v516 = vunpack.c.l.b16 %v396
        %v517 = vunpack.c.l.b16 %v397
        %v518 = vunpack.c.h.b16 %v397
        %v519 = vunpack.c.l.b16 %v398
        %v520 = vunpack.c.l.b16 %v399
        %v521 = vunpack.c.h.b16 %v399
        %v522 = vunpack.c.l.b16 %v400
        %v523 = vunpack.c.l.b16 %v401
        %v524 = vunpack.c.h.b16 %v401
        %v525 = vunpack.c.l.b16 %v402
        %v526 = vunpack.c.l.b16 %v403
        %v527 = vunpack.c.h.b16 %v403
        %v528 = vunpack.c.l.b16 %v404
        %v529 = vunpack.c.l.b16 %v405
        %v530 = vunpack.c.h.b16 %v405
        %v531 = vunpack.c.l.b16 %v406
        %v532 = vunpack.c.l.b16 %v407
        %v533 = vunpack.c.h.b16 %v407
        %v534 = vunpack.c.l.b16 %v408
        %v535 = vunpack.c.l.b16 %v409
        %v536 = vunpack.c.h.b16 %v409
        %v537 = vunpack.c.l.b16 %v410
        %v538 = vunpack.c.l.b16 %v411
        %v539 = vunpack.c.h.b16 %v411
        %v540 = vunpack.c.l.b16 %v412
        %v541 = vpack.c.b16 %v496, %v493
        %v542 = vpack.c.b16 %v497, %v494
        %v543 = vpack.c.b16 %v498, %v495
        %v544 = vpack.c.b16 %v502, %v499
        %v545 = vpack.c.b16 %v503, %v500
        %v546 = vpack.c.b16 %v504, %v501
        %v547 = vpack.c.b16 %v508, %v505
        %v548 = vpack.c.b16 %v509, %v506
        %v549 = vpack.c.b16 %v510, %v507
        %v550 = vpack.c.b16 %v514, %v511
        %v551 = vpack.c.b16 %v515, %v512
        %v552 = vpack.c.b16 %v516, %v513
        %v553 = vpack.c.b16 %v520, %v517
        %v554 = vpack.c.b16 %v521, %v518
        %v555 = vpack.c.b16 %v522, %v519
        %v556 = vpack.c.b16 %v526, %v523
        %v557 = vpack.c.b16 %v527, %v524
        %v558 = vpack.c.b16 %v528, %v525
        %v559 = vpack.c.b16 %v532, %v529
        %v560 = vpack.c.b16 %v533, %v530
        %v561 = vpack.c.b16 %v534, %v531
        %v562 = vpack.c.b16 %v538, %v535
        %v563 = vpack.c.b16 %v539, %v536
        %v564 = vpack.c.b16 %v540, %v537
        %v637 = vunpack.c.l.b16 %v413
        %v638 = vunpack.c.l.b16 %v414
        %v639 = vunpack.c.l.b16 %v415
        %v640 = vunpack.c.l.b16 %v416
        %v641 = vunpack.c.l.b16 %v417
        %v642 = vunpack.c.l.b16 %v418
        %v643 = vunpack.c.l.b16 %v419
        %v644 = vunpack.c.l.b16 %v420
        %v645 = vunpack.c.l.b16 %v421
        %v646 = vunpack.c.l.b16 %v422
        %v647 = vunpack.c.l.b16 %v423
        %v648 = vunpack.c.l.b16 %v424
        %v649 = vunpack.c.l.b16 %v425
        %v650 = vunpack.c.l.b16 %v426
        %v651 = vunpack.c.l.b16 %v427
        %v652 = vunpack.c.l.b16 %v428
        %v653 = vunpack.c.l.b16 %v429
        %v654 = vunpack.c.l.b16 %v430
        %v655 = vunpack.c.l.b16 %v431
        %v656 = vunpack.c.l.b16 %v432
        %v657 = vunpack.c.l.b16 %v433
        %v658 = vunpack.c.l.b16 %v434
        %v659 = vunpack.c.l.b16 %v435
        %v660 = vunpack.c.l.b16 %v436
        %v661 = vunpack.c.l.b16 %v437
        %v662 = vunpack.c.l.b16 %v438
        %v663 = vunpack.c.l.b16 %v439
        %v664 = vunpack.c.l.b16 %v440
        %v665 = vunpack.c.l.b16 %v441
        %v666 = vunpack.c.l.b16 %v442
        %v667 = vunpack.c.l.b16 %v443
        %v668 = vunpack.c.l.b16 %v444
        %v669 = vunpack.c.l.b16 %v445
        %v670 = vunpack.c.l.b16 %v446
        %v671 = vunpack.c.l.b16 %v447
        %v672 = vunpack.c.l.b16 %v448
        %v673 = vunpack.c.l.b16 %v449
        %v674 = vunpack.c.l.b16 %v450
        %v675 = vunpack.c.l.b16 %v451
        %v676 = vunpack.c.l.b16 %v452
        %v677 = vunpack.c.l.b16 %v453
        %v678 = vunpack.c.l.b16 %v454
        %v679 = vunpack.c.l.b16 %v455
        %v680 = vunpack.c.l.b16 %v456
        %v681 = vunpack.c.l.b16 %v457
        %v682 = vunpack.c.l.b16 %v458
        %v683 = vunpack.c.l.b16 %v459
        %v684 = vunpack.c.l.b16 %v460
        %v685 = vpack.c.b16 %v638, %v637
        %v686 = vpack.c.b16 %v640, %v639
        %v687 = vpack.c.b16 %v642, %v641
        %v688 = vpack.c.b16 %v644, %v643
        %v689 = vpack.c.b16 %v646, %v645
        %v690 = vpack.c.b16 %v648, %v647
        %v691 = vpack.c.b16 %v650, %v649
        %v692 = vpack.c.b16 %v652, %v651
        %v693 = vpack.c.b16 %v654, %v653
        %v694 = vpack.c.b16 %v656, %v655
        %v695 = vpack.c.b16 %v658, %v657
        %v696 = vpack.c.b16 %v660, %v659
        %v697 = vpack.c.b16 %v662, %v661
        %v698 = vpack.c.b16 %v664, %v663
        %v699 = vpack.c.b16 %v666, %v665
        %v700 = vpack.c.b16 %v668, %v667
        %v701 = vpack.c.b16 %v670, %v669
        %v702 = vpack.c.b16 %v672, %v671
        %v703 = vpack.c.b16 %v674, %v673
        %v704 = vpack.c.b16 %v676, %v675
        %v705 = vpack.c.b16 %v678, %v677
        %v706 = vpack.c.b16 %v680, %v679
        %v707 = vpack.c.b16 %v682, %v681
        %v708 = vpack.c.b16 %v684, %v683
        %733 = vmatprep.subr.bf16.mxu0 0
        %734 = vmatpush1.bf16.msra.mxu0 %v685
        %735 = vmatprep.subr.bf16.mxu0 0
        %736 = vmatpush1.bf16.msra.mxu0 %v686
        %737 = vmatprep.subr.bf16.mxu0 0
        %738 = vmatpush1.bf16.msra.mxu0 %v687
        %739 = vmatprep.subr.bf16.mxu0 0
        %740 = vmatpush1.bf16.msra.mxu0 %v688
        %741 = vmatprep.subr.bf16.mxu0 0
        %742 = vmatpush1.bf16.msra.mxu0 %v689
        %743 = vmatprep.subr.bf16.mxu0 0
        %744 = vmatpush1.bf16.msra.mxu0 %v690
        %745 = vmatprep.subr.bf16.mxu0 0
        %746 = vmatpush1.bf16.msra.mxu0 %v691
        %747 = vmatprep.subr.bf16.mxu0 0
        %748 = vmatpush1.bf16.msra.mxu0 %v692
        %749 = vmatprep.subr.bf16.mxu0 0
        %750 = vmatpush1.bf16.msra.mxu0 %v693
        %751 = vmatprep.subr.bf16.mxu0 0
        %752 = vmatpush1.bf16.msra.mxu0 %v694
        %753 = vmatprep.subr.bf16.mxu0 0
        %754 = vmatpush1.bf16.msra.mxu0 %v695
        %755 = vmatprep.subr.bf16.mxu0 0
        %756 = vmatpush1.bf16.msra.mxu0 %v696
        %757 = vmatprep.subr.bf16.mxu0 0
        %758 = vmatpush1.bf16.msra.mxu0 %v697
        %759 = vmatprep.subr.bf16.mxu0 0
        %760 = vmatpush1.bf16.msra.mxu0 %v698
        %761 = vmatprep.subr.bf16.mxu0 0
        %762 = vmatpush1.bf16.msra.mxu0 %v699
        %763 = vmatprep.subr.bf16.mxu0 0
        %764 = vmatpush1.bf16.msra.mxu0 %v700
        %765 = vmatprep.mubr.bf16.mxu0 %v542
        %766 = vmatmul.mubr.bf16.gmra.mrb[0].mxu0 %v541
        %v767 = vpop.f32.mrb[0].mxu0
        %v768 = vadd.f32 0.0, %v767
        %v769 = vpop.f32.mrb[0].mxu0
        %v770 = vpop.f32.mrb[0].mxu0
        %v771 = vadd.f32 0.0, %v770
        %v772 = vpop.f32.mrb[0].mxu0
        %773 = vmatprep.mubr.bf16.mxu0 %v545
        %774 = vmatmul.mubr.bf16.gmra.mrb[0].mxu0 %v544
        %v775 = vpop.f32.mrb[0].mxu0
        %v776 = vadd.f32 0.0, %v775
        %v777 = vpop.f32.mrb[0].mxu0
        %v778 = vpop.f32.mrb[0].mxu0
        %v779 = vadd.f32 0.0, %v778
        %v780 = vpop.f32.mrb[0].mxu0
        %781 = vmatprep.mubr.bf16.mxu0 %v548
        %782 = vmatmul.mubr.bf16.gmra.mrb[0].mxu0 %v547
        %v783 = vpop.f32.mrb[0].mxu0
        %v784 = vadd.f32 0.0, %v783
        %v785 = vpop.f32.mrb[0].mxu0
        %v786 = vpop.f32.mrb[0].mxu0
        %v787 = vadd.f32 0.0, %v786
        %v788 = vpop.f32.mrb[0].mxu0
        %789 = vmatprep.mubr.bf16.mxu0 %v551
        %790 = vmatmul.mubr.bf16.gmra.mrb[0].mxu0 %v550
        %v791 = vpop.f32.mrb[0].mxu0
        %v792 = vadd.f32 0.0, %v791
        %v793 = vpop.f32.mrb[0].mxu0
        %v794 = vpop.f32.mrb[0].mxu0
        %v795 = vadd.f32 0.0, %v794
        %v796 = vpop.f32.mrb[0].mxu0
        %797 = vmatprep.mubr.bf16.mxu0 %v554
        %798 = vmatmul.mubr.bf16.gmra.mrb[0].mxu0 %v553
        %v799 = vpop.f32.mrb[0].mxu0
        %v800 = vadd.f32 0.0, %v799
        %v801 = vpop.f32.mrb[0].mxu0
        %v802 = vpop.f32.mrb[0].mxu0
        %v803 = vadd.f32 0.0, %v802
        %v804 = vpop.f32.mrb[0].mxu0
        %805 = vmatprep.mubr.bf16.mxu0 %v557
        %806 = vmatmul.mubr.bf16.gmra.mrb[0].mxu0 %v556
        %v807 = vpop.f32.mrb[0].mxu0
        %v808 = vadd.f32 0.0, %v807
        %v809 = vpop.f32.mrb[0].mxu0
        %v810 = vpop.f32.mrb[0].mxu0
        %v811 = vadd.f32 0.0, %v810
        %v812 = vpop.f32.mrb[0].mxu0
        %813 = vmatprep.mubr.bf16.mxu0 %v560
        %814 = vmatmul.mubr.bf16.gmra.mrb[0].mxu0 %v559
        %v815 = vpop.f32.mrb[0].mxu0
        %v816 = vadd.f32 0.0, %v815
        %v817 = vpop.f32.mrb[0].mxu0
        %v818 = vpop.f32.mrb[0].mxu0
        %v819 = vadd.f32 0.0, %v818
        %v820 = vpop.f32.mrb[0].mxu0
        %821 = vmatprep.mubr.bf16.mxu0 %v563
        %822 = vmatmul.mubr.bf16.gmra.mrb[0].mxu0 %v562
        %v823 = vpop.f32.mrb[0].mxu0
        %v824 = vadd.f32 0.0, %v823
        %v825 = vpop.f32.mrb[0].mxu0
        %v826 = vpop.f32.mrb[0].mxu0
        %v827 = vadd.f32 0.0, %v826
        %v828 = vpop.f32.mrb[0].mxu0
        %829 = vdwg.mxu0
        %830 = vmatprep.subr.bf16.mxu0 0
        %831 = vmatpush1.bf16.msra.mxu0 %v701
        %832 = vmatprep.subr.bf16.mxu0 0
        %833 = vmatpush1.bf16.msra.mxu0 %v702
        %834 = vmatprep.subr.bf16.mxu0 0
        %835 = vmatpush1.bf16.msra.mxu0 %v703
        %836 = vmatprep.subr.bf16.mxu0 0
        %837 = vmatpush1.bf16.msra.mxu0 %v704
        %838 = vmatprep.subr.bf16.mxu0 0
        %839 = vmatpush1.bf16.msra.mxu0 %v705
        %840 = vmatprep.subr.bf16.mxu0 0
        %841 = vmatpush1.bf16.msra.mxu0 %v706
        %842 = vmatprep.subr.bf16.mxu0 0
        %843 = vmatpush1.bf16.msra.mxu0 %v707
        %844 = vmatprep.subr.bf16.mxu0 0
        %845 = vmatpush1.bf16.msra.mxu0 %v708
        %846 = vmatprep.subr.bf16.mxu0 0
        %847 = vmatpush1.bf16.msra.mxu0 0
        %848 = vmatprep.subr.bf16.mxu0 0
        %849 = vmatpush1.bf16.msra.mxu0 0
        %850 = vmatprep.subr.bf16.mxu0 0
        %851 = vmatpush1.bf16.msra.mxu0 0
        %852 = vmatprep.subr.bf16.mxu0 0
        %853 = vmatpush1.bf16.msra.mxu0 0
        %854 = vmatprep.subr.bf16.mxu0 0
        %855 = vmatpush1.bf16.msra.mxu0 0
        %856 = vmatprep.subr.bf16.mxu0 0
        %857 = vmatpush1.bf16.msra.mxu0 0
        %858 = vmatprep.subr.bf16.mxu0 0
        %859 = vmatpush1.bf16.msra.mxu0 0
        %860 = vmatprep.subr.bf16.mxu0 0
        %861 = vmatpush1.bf16.msra.mxu0 0
        %862 = vmatprep.mubr.bf16.mxu0 0
        %863 = vmatmul.mubr.bf16.gmra.mrb[0].mxu0 %v543
        %v864 = vpop.f32.mrb[0].mxu0
        %v865 = vadd.f32 %v768, %v864
        %v866 = vpop.f32.mrb[0].mxu0
        %v867 = vpop.f32.mrb[0].mxu0
        %v868 = vadd.f32 %v771, %v867
        %v869 = vpop.f32.mrb[0].mxu0
        %870 = vmatprep.mubr.bf16.mxu0 0
        %871 = vmatmul.mubr.bf16.gmra.mrb[0].mxu0 %v546
        %v872 = vpop.f32.mrb[0].mxu0
        %v873 = vadd.f32 %v776, %v872
        %v874 = vpop.f32.mrb[0].mxu0
        %v875 = vpop.f32.mrb[0].mxu0
        %v876 = vadd.f32 %v779, %v875
        %v877 = vpop.f32.mrb[0].mxu0
        %878 = vmatprep.mubr.bf16.mxu0 0
        %879 = vmatmul.mubr.bf16.gmra.mrb[0].mxu0 %v549
        %v880 = vpop.f32.mrb[0].mxu0
        %v881 = vadd.f32 %v784, %v880
        %v882 = vpop.f32.mrb[0].mxu0
        %v883 = vpop.f32.mrb[0].mxu0
        %v884 = vadd.f32 %v787, %v883
        %v885 = vpop.f32.mrb[0].mxu0
        %886 = vmatprep.mubr.bf16.mxu0 0
        %887 = vmatmul.mubr.bf16.gmra.mrb[0].mxu0 %v552
        %v888 = vpop.f32.mrb[0].mxu0
        %v889 = vadd.f32 %v792, %v888
        %v890 = vpop.f32.mrb[0].mxu0
        %v891 = vpop.f32.mrb[0].mxu0
        %v892 = vadd.f32 %v795, %v891
        %v893 = vpop.f32.mrb[0].mxu0
        %894 = vmatprep.mubr.bf16.mxu0 0
        %895 = vmatmul.mubr.bf16.gmra.mrb[0].mxu0 %v555
        %v896 = vpop.f32.mrb[0].mxu0
        %v897 = vadd.f32 %v800, %v896
        %v898 = vpop.f32.mrb[0].mxu0
        %v899 = vpop.f32.mrb[0].mxu0
        %v900 = vadd.f32 %v803, %v899
        %v901 = vpop.f32.mrb[0].mxu0
        %902 = vmatprep.mubr.bf16.mxu0 0
        %903 = vmatmul.mubr.bf16.gmra.mrb[0].mxu0 %v558
        %v904 = vpop.f32.mrb[0].mxu0
        %v905 = vadd.f32 %v808, %v904
        %v906 = vpop.f32.mrb[0].mxu0
        %v907 = vpop.f32.mrb[0].mxu0
        %v908 = vadd.f32 %v811, %v907
        %v909 = vpop.f32.mrb[0].mxu0
        %910 = vmatprep.mubr.bf16.mxu0 0
        %911 = vmatmul.mubr.bf16.gmra.mrb[0].mxu0 %v561
        %v912 = vpop.f32.mrb[0].mxu0
        %v913 = vadd.f32 %v816, %v912
        %v914 = vpop.f32.mrb[0].mxu0
        %v915 = vpop.f32.mrb[0].mxu0
        %v916 = vadd.f32 %v819, %v915
        %v917 = vpop.f32.mrb[0].mxu0
        %918 = vmatprep.mubr.bf16.mxu0 0
        %919 = vmatmul.mubr.bf16.gmra.mrb[0].mxu0 %v564
        %v920 = vpop.f32.mrb[0].mxu0
        %v921 = vadd.f32 %v824, %v920
        %v922 = vpop.f32.mrb[0].mxu0
        %v923 = vpop.f32.mrb[0].mxu0
        %v924 = vadd.f32 %v827, %v923
        %v925 = vpop.f32.mrb[0].mxu0
        %926 = vdwg.mxu0
        %v927 = vadd.f32 %v365, %v865
        %v928 = vadd.f32 %v366, %v868
        %v929 = vadd.f32 %v367, %v873
        %v930 = vadd.f32 %v368, %v876
        %v931 = vadd.f32 %v369, %v881
        %v932 = vadd.f32 %v370, %v884
        %v933 = vadd.f32 %v371, %v889
        %v934 = vadd.f32 %v372, %v892
        %v935 = vadd.f32 %v373, %v897
        %v936 = vadd.f32 %v374, %v900
        %v937 = vadd.f32 %v375, %v905
        %v938 = vadd.f32 %v376, %v908
        %v939 = vadd.f32 %v377, %v913
        %v940 = vadd.f32 %v378, %v916
        %v941 = vadd.f32 %v379, %v921
        %v942 = vadd.f32 %v380, %v924
        %943 = vst [vmem:[#allocation2] sm:$0xff] %v927
        %944 = vst [vmem:[#allocation2 + $0x8] sm:$0xff] %v928
        %945 = vst [vmem:[#allocation2 + $0x10] sm:$0xff] %v929
        %946 = vst [vmem:[#allocation2 + $0x18] sm:$0xff] %v930
        %947 = vst [vmem:[#allocation2 + $0x20] sm:$0xff] %v931
        %948 = vst [vmem:[#allocation2 + $0x28] sm:$0xff] %v932
        %949 = vst [vmem:[#allocation2 + $0x30] sm:$0xff] %v933
        %950 = vst [vmem:[#allocation2 + $0x38] sm:$0xff] %v934
        %951 = vst [vmem:[#allocation2 + $0x40] sm:$0xff] %v935
        %952 = vst [vmem:[#allocation2 + $0x48] sm:$0xff] %v936
        %953 = vst [vmem:[#allocation2 + $0x50] sm:$0xff] %v937
        %954 = vst [vmem:[#allocation2 + $0x58] sm:$0xff] %v938
        %955 = vst [vmem:[#allocation2 + $0x60] sm:$0xff] %v939
        %956 = vst [vmem:[#allocation2 + $0x68] sm:$0xff] %v940
        %957 = vst [vmem:[#allocation2 + $0x70] sm:$0xff] %v941
        %958 = vst [vmem:[#allocation2 + $0x78] sm:$0xff] %v942
        %p959 = scmp.eq.s32.totalorder %s21, 2
        // Predicated region
        $region63: #{_lambda_.19} parent=53 // pred_check
          %p960 = pneg %p959
        $region64: #{_lambda_.19} parent=53 // pred_check_branch
          %962 = sbr.rel (%p960) target = $region66
        $region65: #{_lambda_.19} parent=53 // pred_region
          %v963 = vld [vmem:[#allocation2] sm:$0xff]
          %v964 = vld [vmem:[#allocation2 + $0x8] sm:$0xff]
          %v965 = vld [vmem:[#allocation2 + $0x10] sm:$0xff]
          %v966 = vld [vmem:[#allocation2 + $0x18] sm:$0xff]
          %v967 = vld [vmem:[#allocation2 + $0x20] sm:$0xff]
          %v968 = vld [vmem:[#allocation2 + $0x28] sm:$0xff]
          %v969 = vld [vmem:[#allocation2 + $0x30] sm:$0xff]
          %v970 = vld [vmem:[#allocation2 + $0x38] sm:$0xff]
          %v971 = vld [vmem:[#allocation2 + $0x40] sm:$0xff]
          %v972 = vld [vmem:[#allocation2 + $0x48] sm:$0xff]
          %v973 = vld [vmem:[#allocation2 + $0x50] sm:$0xff]
          %v974 = vld [vmem:[#allocation2 + $0x58] sm:$0xff]
          %v975 = vld [vmem:[#allocation2 + $0x60] sm:$0xff]
          %v976 = vld [vmem:[#allocation2 + $0x68] sm:$0xff]
          %v977 = vld [vmem:[#allocation2 + $0x70] sm:$0xff]
          %v978 = vld [vmem:[#allocation2 + $0x78] sm:$0xff]
          %v979 = vld [vmem:[%s334] sm:$0x1]
          %v981 = vlaneseq
          %v982 = vshrl.u32 %v981, 7
          %v983 = vsub.s32 0, %v982
          %v984 = vrot.slane %v979, %v983
          %v986 = vadd.f32 %v963, %v984
          %v987 = vadd.f32 %v964, %v984
          %v988 = vadd.f32 %v965, %v984
          %v989 = vadd.f32 %v966, %v984
          %v990 = vadd.f32 %v967, %v984
          %v991 = vadd.f32 %v968, %v984
          %v992 = vadd.f32 %v969, %v984
          %v993 = vadd.f32 %v970, %v984
          %v994 = vadd.f32 %v971, %v984
          %v995 = vadd.f32 %v972, %v984
          %v996 = vadd.f32 %v973, %v984
          %v997 = vadd.f32 %v974, %v984
          %v998 = vadd.f32 %v975, %v984
          %v999 = vadd.f32 %v976, %v984
          %v1000 = vadd.f32 %v977, %v984
          %v1001 = vadd.f32 %v978, %v984
          %v1002 = vmax.f32 %v986, 0.0
          %v1003 = vmax.f32 %v987, 0.0
          %v1004 = vmax.f32 %v988, 0.0
          %v1005 = vmax.f32 %v989, 0.0
          %v1006 = vmax.f32 %v990, 0.0
          %v1007 = vmax.f32 %v991, 0.0
          %v1008 = vmax.f32 %v992, 0.0
          %v1009 = vmax.f32 %v993, 0.0
          %v1010 = vmax.f32 %v994, 0.0
          %v1011 = vmax.f32 %v995, 0.0
          %v1012 = vmax.f32 %v996, 0.0
          %v1013 = vmax.f32 %v997, 0.0
          %v1014 = vmax.f32 %v998, 0.0
          %v1015 = vmax.f32 %v999, 0.0
          %v1016 = vmax.f32 %v1000, 0.0
          %v1017 = vmax.f32 %v1001, 0.0
          %v1018 = vpack.c.bf16 %v1003, %v1002
          %v1019 = vpack.c.bf16 %v1005, %v1004
          %v1020 = vpack.c.bf16 %v1007, %v1006
          %v1021 = vpack.c.bf16 %v1009, %v1008
          %v1022 = vpack.c.bf16 %v1011, %v1010
          %v1023 = vpack.c.bf16 %v1013, %v1012
          %v1024 = vpack.c.bf16 %v1015, %v1014
          %v1025 = vpack.c.bf16 %v1017, %v1016
          %v1034 = vunpack.c.l.b16 %v1018
          %v1035 = vunpack.c.h.b16 %v1018
          %v1036 = vunpack.c.l.b16 %v1019
          %v1037 = vunpack.c.h.b16 %v1019
          %v1038 = vunpack.c.l.b16 %v1020
          %v1039 = vunpack.c.h.b16 %v1020
          %v1040 = vunpack.c.l.b16 %v1021
          %v1041 = vunpack.c.h.b16 %v1021
          %v1042 = vunpack.c.l.b16 %v1022
          %v1043 = vunpack.c.h.b16 %v1022
          %v1044 = vunpack.c.l.b16 %v1023
          %v1045 = vunpack.c.h.b16 %v1023
          %v1046 = vunpack.c.l.b16 %v1024
          %v1047 = vunpack.c.h.b16 %v1024
          %v1048 = vunpack.c.l.b16 %v1025
          %v1049 = vunpack.c.h.b16 %v1025
          %v1050 = vpack.c.b16 %v1034, %v1034
          %v1051 = vpack.c.b16 %v1035, %v1035
          %v1052 = vpack.c.b16 %v1036, %v1036
          %v1053 = vpack.c.b16 %v1037, %v1037
          %v1054 = vpack.c.b16 %v1038, %v1038
          %v1055 = vpack.c.b16 %v1039, %v1039
          %v1056 = vpack.c.b16 %v1040, %v1040
          %v1057 = vpack.c.b16 %v1041, %v1041
          %v1058 = vpack.c.b16 %v1042, %v1042
          %v1059 = vpack.c.b16 %v1043, %v1043
          %v1060 = vpack.c.b16 %v1044, %v1044
          %v1061 = vpack.c.b16 %v1045, %v1045
          %v1062 = vpack.c.b16 %v1046, %v1046
          %v1063 = vpack.c.b16 %v1047, %v1047
          %v1064 = vpack.c.b16 %v1048, %v1048
          %v1065 = vpack.c.b16 %v1049, %v1049
          %1082 = vst [vmem:[%s342] sm:$0xf] %v1050
          %1083 = vst [vmem:[%s342 + $0x4] sm:$0xf] %v1051
          %1084 = vst [vmem:[%s342 + $0x8] sm:$0xf] %v1052
          %1085 = vst [vmem:[%s342 + $0xc] sm:$0xf] %v1053
          %1086 = vst [vmem:[%s342 + $0x10] sm:$0xf] %v1054
          %1087 = vst [vmem:[%s342 + $0x14] sm:$0xf] %v1055
          %1088 = vst [vmem:[%s342 + $0x18] sm:$0xf] %v1056
          %1089 = vst [vmem:[%s342 + $0x1c] sm:$0xf] %v1057
          %1090 = vst [vmem:[%s342 + $0x20] sm:$0xf] %v1058
          %1091 = vst [vmem:[%s342 + $0x24] sm:$0xf] %v1059
          %1092 = vst [vmem:[%s342 + $0x28] sm:$0xf] %v1060
          %1093 = vst [vmem:[%s342 + $0x2c] sm:$0xf] %v1061
          %1094 = vst [vmem:[%s342 + $0x30] sm:$0xf] %v1062
          %1095 = vst [vmem:[%s342 + $0x34] sm:$0xf] %v1063
          %1096 = vst [vmem:[%s342 + $0x38] sm:$0xf] %v1064
          %1097 = vst [vmem:[%s342 + $0x3c] sm:$0xf] %v1065
        $region66: #{_lambda_.19} parent=53 // pred_fallthru
          _
        %s1098 = smul.u32 16, %s19
        %p1099 = scmp.lt.s32.totalorder %s1098, 15
        %s1100 = scalar_select %p1099, %s1098, 15
        %p1101 = scmp.lt.s32.totalorder %s20, 0
        %s1102 = scalar_select %p1101, %s20, 0
        %s1103 = sadd.s32 %s1102, %s1100
        %s1104 = smul.addr %s1103, 4
        %s1105 = scalar_lea.vmem %s3, %s1104
        // Predicated region
        $region67: #{_lambda_.19} parent=53 // pred_check
          %p1106 = pneg %p135
        $region68: #{_lambda_.19} parent=53 // pred_check_branch
          %1108 = sbr.rel (%p1106) target = $region70
        $region69: #{_lambda_.19} parent=53 // pred_region
          %s1109 = smul.u32 16, %s19
        $region70: #{_lambda_.19} parent=53 // pred_fallthru
          _
        // Predicated region
        $region71: #{_lambda_.19} parent=53 // pred_check
          %p1110 = pneg %p135
        $region72: #{_lambda_.19} parent=53 // pred_check_branch
          %1112 = sbr.rel (%p1110) target = $region74
        $region73: #{_lambda_.19} parent=53 // pred_region
          %s1113 = smul.u32 16, %s19
          %p1114 = scmp.lt.s32.totalorder %s1113, 15
          %s1115 = scalar_select %p1114, %s1113, 15
          %p1116 = scmp.lt.s32.totalorder %s20, 0
          %s1117 = scalar_select %p1116, %s20, 0
          %s1118 = sadd.s32 %s1117, %s1115
          %s1119 = smul.addr %s1118, 4
          %s1120 = scalar_lea.vmem %s3, %s1119
        $region74: #{_lambda_.19} parent=53 // pred_fallthru
          _
      $region54: #{_lambda_.19} parent=5 // pred_fallthru
        _
      %p1121 = scmp.le.s32.totalorder 2, %s9
      // Predicated region
      $region75: #{_lambda_.19} parent=5 // pred_check
        %p1122 = pneg %p1121
      $region76: #{_lambda_.19} parent=5 // pred_check_branch
        %1124 = sbr.rel (%p1122) target = $region78
      $region77: #{_lambda_.19} parent=5 // pred_region
        %s1125 = ssub.s32 %s9, 2
      $region78: #{_lambda_.19} parent=5 // pred_fallthru
        _
    $region6: #{_lambda_.19} parent=1 // loop_footer
      %s13 = sadd.s32 1, %s9
    $region7: #{_lambda_.19} parent=1 // loop_footer_branch
      %8 = sbr.rel target = $region3
    $region8: #{_lambda_.19} parent=1 // loop_exit
      _

// kernel: _lambda_.20
$region0: #{_lambda_.20}
  #allocation0 [shape = 'u32[]', space=smem, size = 0x4, offset = 0x4, fixed_abs, tag = 'smem constant byte address 0x4 - core index']
  #allocation1 [shape = 'u32[144,128]{1,0:T(1,128)}', space=vmem, size = 0x12000, scoped, tag = 'internal scratch']
  #allocation2 [shape = 'f32[128,128]{1,0:T(8,128)}', space=vmem, size = 0x10000, scoped, tag = 'scratch operand']
  %s0 = inlined_call_operand.vmem [shape: bf16[128,1152], index: 0, kind: input, shape index: {}]
  %s1 = inlined_call_operand.vmem [shape: bf16[1152,128], index: 1, kind: input, shape index: {}]
  %s2 = inlined_call_operand.vmem [shape: f32[1,128], index: 2, kind: input, shape index: {}]
  %s3 = inlined_call_operand.vmem [shape: bf16[128,128], index: 3, kind: input, shape index: {}]
  %s4 = inlined_call_operand.vmem [shape: bf16[128,128], index: 4, kind: output, shape index: {}]
  %s5 = sld [smem:[#allocation0]]
  $region83: #{_lambda_.20} parent=0
    _
  %s7 = ssub.s32 1, %s5
  %s8 = scalar_select 0, %s7, %s5
  $region1: #{_lambda_.20} parent=0
    #allocation3 [shape = 'u8[196608]{0}', space=vmem, size = 0x30000, scoped, tag = 'input window, operand 0']
    loop: start=0, step=1, limit=5
    $region2: #{_lambda_.20} parent=1 // loop_pre_header
      _
    $region3: #{_lambda_.20} parent=1 // loop_header
      %s10 = sphi 0, %s14
      %p11 = scmp.ge.s32.totalorder %s10, 5
      %s17 = sphi 0, %s36
      %s18 = sphi 0, %s32
      %s19 = sphi 0, %s28
      %s20 = sphi 0, %s17
      %s21 = sphi 0, %s18
      %s22 = sphi 0, %s19
      %s23 = sphi 0, %s20
      %s24 = sphi 0, %s21
      %s25 = sphi 0, %s22
      %s41 = sphi 0, %s43
      %s44 = sphi 0, %s41
      %s45 = sphi 0, %s44
      %s61 = sphi 0, %s45
      %s69 = sphi 0, %s71
      %s72 = sphi 0, %s69
      %s73 = sphi 0, %s72
      %s89 = sphi 0, %s73
      %s95 = sphi 0, %s97
      %s98 = sphi 0, %s95
      %s99 = sphi 0, %s98
      %s115 = sphi 0, %s99
      %s123 = sphi 0, %s125
      %s126 = sphi 0, %s123
      %s127 = sphi 0, %s126
      %s143 = sphi 0, %s127
      %s151 = sphi 0, %s153
      %s154 = sphi 0, %s151
      %s155 = sphi 0, %s154
      %s171 = sphi 0, %s155
    $region4: #{_lambda_.20} parent=1 // loop_header_branch
      %13 = sbr.rel (%p11) target = $region8
    $region5: #{_lambda_.20} parent=1 // loop_body
      %s15 = ssub.s32 %s10, 1
      %s16 = ssub.s32 %s10, 2
      %s26 = sadd.s32 1, %s19
      %p27 = scmp.ge.s32.totalorder %s26, 3
      %s28 = scalar_select %p27, 0, %s26
      %s29 = sadd.s32 1, %s18
      %s30 = scalar_select %p27, %s29, %s18
      %p31 = scmp.ge.s32.totalorder %s30, 1
      %s32 = scalar_select %p31, 0, %s30
      %s33 = sadd.s32 1, %s17
      %s34 = scalar_select %p31, %s33, %s17
      %p35 = scmp.ge.s32.totalorder %s34, 1
      %s36 = scalar_select %p35, 0, %s34
      %s37 = ssub.s32 %s17, %s36
      %s38 = ssub.s32 %s19, %s28
      %s39 = sor.u32 %s37, %s38
      %p40 = scmp.eq.s32.totalorder %s39, 0
      %s42 = sadd.s32 %s41, 1
      %s43 = scalar_select %p40, %s41, %s42
      %p46 = pneg %p40
      %p47 = scmp.eq.s32.totalorder %s10, 2
      %p48 = por %p46, %p47
      %p49 = scmp.ne.s32.totalorder %s41, %s44
      %p50 = scmp.eq.s32.totalorder %s10, 0
      %p51 = por %p49, %p50
      %p52 = scmp.ne.s32.totalorder %s41, %s44
      %p53 = scmp.eq.s32.totalorder %s15, 2
      %p54 = por %p52, %p53
      %p55 = scmp.ne.s32.totalorder %s44, %s45
      %p56 = scmp.eq.s32.totalorder %s15, 0
      %p57 = por %p55, %p56
      %p58 = scmp.ne.s32.totalorder %s44, %s45
      %p59 = scmp.eq.s32.totalorder %s16, 2
      %p60 = por %p58, %p59
      %p62 = scmp.ne.s32.totalorder %s45, %s61
      %p63 = scmp.eq.s32.totalorder %s16, 0
      %p64 = por %p62, %p63
      %s65 = ssub.s32 %s19, %s28
      %s66 = ssub.s32 %s18, %s32
      %s67 = sor.u32 %s65, %s66
      %p68 = scmp.eq.s32.totalorder %s67, 0
      %s70 = sadd.s32 %s69, 1
      %s71 = scalar_select %p68, %s69, %s70
      %p74 = pneg %p68
      %p75 = scmp.eq.s32.totalorder %s10, 2
      %p76 = por %p74, %p75
      %p77 = scmp.ne.s32.totalorder %s69, %s72
      %p78 = scmp.eq.s32.totalorder %s10, 0
      %p79 = por %p77, %p78
      %p80 = scmp.ne.s32.totalorder %s69, %s72
      %p81 = scmp.eq.s32.totalorder %s15, 2
      %p82 = por %p80, %p81
      %p83 = scmp.ne.s32.totalorder %s72, %s73
      %p84 = scmp.eq.s32.totalorder %s15, 0
      %p85 = por %p83, %p84
      %p86 = scmp.ne.s32.totalorder %s72, %s73
      %p87 = scmp.eq.s32.totalorder %s16, 2
      %p88 = por %p86, %p87
      %p90 = scmp.ne.s32.totalorder %s73, %s89
      %p91 = scmp.eq.s32.totalorder %s16, 0
      %p92 = por %p90, %p91
      %s93 = ssub.s32 %s18, %s32
      %p94 = scmp.eq.s32.totalorder %s93, 0
      %s96 = sadd.s32 %s95, 1
      %s97 = scalar_select %p94, %s95, %s96
      %p100 = pneg %p94
      %p101 = scmp.eq.s32.totalorder %s10, 2
      %p102 = por %p100, %p101
      %p103 = scmp.ne.s32.totalorder %s95, %s98
      %p104 = scmp.eq.s32.totalorder %s10, 0
      %p105 = por %p103, %p104
      %p106 = scmp.ne.s32.totalorder %s95, %s98
      %p107 = scmp.eq.s32.totalorder %s15, 2
      %p108 = por %p106, %p107
      %p109 = scmp.ne.s32.totalorder %s98, %s99
      %p110 = scmp.eq.s32.totalorder %s15, 0
      %p111 = por %p109, %p110
      %p112 = scmp.ne.s32.totalorder %s98, %s99
      %p113 = scmp.eq.s32.totalorder %s16, 2
      %p114 = por %p112, %p113
      %p116 = scmp.ne.s32.totalorder %s99, %s115
      %p117 = scmp.eq.s32.totalorder %s16, 0
      %p118 = por %p116, %p117
      %s119 = ssub.s32 %s17, %s36
      %s120 = ssub.s32 %s18, %s32
      %s121 = sor.u32 %s119, %s120
      %p122 = scmp.eq.s32.totalorder %s121, 0
      %s124 = sadd.s32 %s123, 1
      %s125 = scalar_select %p122, %s123, %s124
      %p128 = pneg %p122
      %p129 = scmp.eq.s32.totalorder %s10, 2
      %p130 = por %p128, %p129
      %p131 = scmp.ne.s32.totalorder %s123, %s126
      %p132 = scmp.eq.s32.totalorder %s10, 0
      %p133 = por %p131, %p132
      %p134 = scmp.ne.s32.totalorder %s123, %s126
      %p135 = scmp.eq.s32.totalorder %s15, 2
      %p136 = por %p134, %p135
      %p137 = scmp.ne.s32.totalorder %s126, %s127
      %p138 = scmp.eq.s32.totalorder %s15, 0
      %p139 = por %p137, %p138
      %p140 = scmp.ne.s32.totalorder %s126, %s127
      %p141 = scmp.eq.s32.totalorder %s16, 2
      %p142 = por %p140, %p141
      %p144 = scmp.ne.s32.totalorder %s127, %s143
      %p145 = scmp.eq.s32.totalorder %s16, 0
      %p146 = por %p144, %p145
      %s147 = ssub.s32 %s17, %s36
      %s148 = ssub.s32 %s18, %s32
      %s149 = sor.u32 %s147, %s148
      %p150 = scmp.eq.s32.totalorder %s149, 0
      %s152 = sadd.s32 %s151, 1
      %s153 = scalar_select %p150, %s151, %s152
      %p156 = pneg %p150
      %p157 = scmp.eq.s32.totalorder %s10, 2
      %p158 = por %p156, %p157
      %p159 = scmp.ne.s32.totalorder %s151, %s154
      %p160 = scmp.eq.s32.totalorder %s10, 0
      %p161 = por %p159, %p160
      %p162 = scmp.ne.s32.totalorder %s151, %s154
      %p163 = scmp.eq.s32.totalorder %s15, 2
      %p164 = por %p162, %p163
      %p165 = scmp.ne.s32.totalorder %s154, %s155
      %p166 = scmp.eq.s32.totalorder %s15, 0
      %p167 = por %p165, %p166
      %p168 = scmp.ne.s32.totalorder %s154, %s155
      %p169 = scmp.eq.s32.totalorder %s16, 2
      %p170 = por %p168, %p169
      %p172 = scmp.ne.s32.totalorder %s155, %s171
      %p173 = scmp.eq.s32.totalorder %s16, 0
      %p174 = por %p172, %p173
      %p175 = scmp.le.s32.totalorder 1, %s10
      %p176 = scmp.lt.s32.totalorder %s10, 4
      %p177 = pnand %p175, %p176
      %p178 = pneg %p177
      // Predicated region
      $region9: #{_lambda_.20} parent=5 // pred_check
        _
      $region10: #{_lambda_.20} parent=5 // pred_check_branch
        %180 = sbr.rel (%p177) target = $region12
      $region11: #{_lambda_.20} parent=5 // pred_region
        %s181 = ssub.s32 %s10, 1
        // Predicated region
        $region13: #{_lambda_.20} parent=11 // pred_check
          %p182 = pneg %p111
        $region14: #{_lambda_.20} parent=11 // pred_check_branch
          %184 = sbr.rel (%p182) target = $region16
        $region15: #{_lambda_.20} parent=11 // pred_region
          %p185 = scmp.lt.s32.totalorder %s21, 0
          %s186 = scalar_select %p185, %s21, 0
          %s187 = scalar_lea.vmem %s2, %s186
        $region16: #{_lambda_.20} parent=11 // pred_fallthru
          _
        // Predicated region
        $region17: #{_lambda_.20} parent=11 // pred_check
          %p188 = pneg %p139
        $region18: #{_lambda_.20} parent=11 // pred_check_branch
          %190 = sbr.rel (%p188) target = $region20
        $region19: #{_lambda_.20} parent=11 // pred_region
          %s191 = smul.u32 16, %s20
          %p192 = scmp.lt.s32.totalorder %s191, 15
          %s193 = scalar_select %p192, %s191, 15
          %p194 = scmp.lt.s32.totalorder %s21, 0
          %s195 = scalar_select %p194, %s21, 0
          %s196 = sadd.s32 %s195, %s193
          %s197 = smul.addr %s196, 4
          %s198 = scalar_lea.vmem %s3, %s197
          %s199 = smul.u32 16, %s20
        $region20: #{_lambda_.20} parent=11 // pred_fallthru
          _
      $region12: #{_lambda_.20} parent=5 // pred_fallthru
        _
      %p200 = scmp.lt.s32.totalorder %s10, 3
      // Predicated region
      $region21: #{_lambda_.20} parent=5 // pred_check
        %p201 = pneg %p200
      $region22: #{_lambda_.20} parent=5 // pred_check_branch
        %203 = sbr.rel (%p201) target = $region24
      $region23: #{_lambda_.20} parent=5 // pred_region
        // Predicated region
        $region25: #{_lambda_.20} parent=23 // pred_check
          %p204 = pneg %p51
        $region26: #{_lambda_.20} parent=23 // pred_check_branch
          %206 = sbr.rel (%p204) target = $region28
        $region27: #{_lambda_.20} parent=23 // pred_region
          %s207 = sand.u32 %s41, 1
          %s208 = sand.u32 %s41, 1
          %s209 = smul.addr %s208, 192
          %s210 = scalar_lea.vmem [#allocation3], %s209
          %s211 = smul.u32 16, %s17
          %s212 = smul.u32 3, %s19
          %s213 = smul.addr %s211, 9
          %s214 = sadd.s32 %s212, %s213
          %s215 = smul.addr %s214, 4
          %s216 = scalar_lea.vmem %s0, %s215
          // Predicated region
          $region29: #{_lambda_.20} parent=27 // pred_check
            _
          $region30: #{_lambda_.20} parent=27 // pred_check_branch
            %218 = sbr.rel (0) target = $region32
          $region31: #{_lambda_.20} parent=27 // pred_region
            // Predicated region
            $region33: #{_lambda_.20} parent=31 // pred_check
              _
            $region34: #{_lambda_.20} parent=31 // pred_check_branch
              %220 = sbr.rel (0) target = $region36
            $region35: #{_lambda_.20} parent=31 // pred_region
              %s221 = scalar_lea.vmem %s216, 8
              %s222 = scalar_lea.vmem %s210, 8 [#allocation3]
              loop: start=0, step=1, limit=1
              $region37: #{_lambda_.20} parent=35 // loop_pre_header
                _
              $region38: #{_lambda_.20} parent=35 // loop_header
                %s224 = sphi 0, %s228
                %p225 = scmp.ge.s32.totalorder %s224, 1
                %s229 = sphi %s216, %s216
                %s230 = sphi %s210, %s210
              $region39: #{_lambda_.20} parent=35 // loop_header_branch
                %227 = sbr.rel (%p225) target = $region43
              $region40: #{_lambda_.20} parent=35 // loop_body
                %v231 = vld [vmem:[%s229] sm:$0xff]
                %232 = vst [vmem:[%s230] sm:$0xff] %v231
                %v233 = vld [vmem:[%s229 + $0x24] sm:$0xff]
                %234 = vst [vmem:[%s230 + $0xc] sm:$0xff] %v233
                %v235 = vld [vmem:[%s229 + $0x48] sm:$0xff]
                %236 = vst [vmem:[%s230 + $0x18] sm:$0xff] %v235
                %v237 = vld [vmem:[%s229 + $0x6c] sm:$0xff]
                %238 = vst [vmem:[%s230 + $0x24] sm:$0xff] %v237
                %v239 = vld [vmem:[%s229 + $0x90] sm:$0xff]
                %240 = vst [vmem:[%s230 + $0x30] sm:$0xff] %v239
                %v241 = vld [vmem:[%s229 + $0xb4] sm:$0xff]
                %242 = vst [vmem:[%s230 + $0x3c] sm:$0xff] %v241
                %v243 = vld [vmem:[%s229 + $0xd8] sm:$0xff]
                %244 = vst [vmem:[%s230 + $0x48] sm:$0xff] %v243
                %v245 = vld [vmem:[%s229 + $0xfc] sm:$0xff]
                %246 = vst [vmem:[%s230 + $0x54] sm:$0xff] %v245
                %v247 = vld [vmem:[%s229 + $0x120] sm:$0xff]
                %248 = vst [vmem:[%s230 + $0x60] sm:$0xff] %v247
                %v249 = vld [vmem:[%s229 + $0x144] sm:$0xff]
                %250 = vst [vmem:[%s230 + $0x6c] sm:$0xff] %v249
                %v251 = vld [vmem:[%s229 + $0x168] sm:$0xff]
                %252 = vst [vmem:[%s230 + $0x78] sm:$0xff] %v251
                %v253 = vld [vmem:[%s229 + $0x18c] sm:$0xff]
                %254 = vst [vmem:[%s230 + $0x84] sm:$0xff] %v253
                %v255 = vld [vmem:[%s229 + $0x1b0] sm:$0xff]
                %256 = vst [vmem:[%s230 + $0x90] sm:$0xff] %v255
                %v257 = vld [vmem:[%s229 + $0x1d4] sm:$0xff]
                %258 = vst [vmem:[%s230 + $0x9c] sm:$0xff] %v257
                %v259 = vld [vmem:[%s229 + $0x1f8] sm:$0xff]
                %260 = vst [vmem:[%s230 + $0xa8] sm:$0xff] %v259
                %v261 = vld [vmem:[%s229 + $0x21c] sm:$0xff]
                %262 = vst [vmem:[%s230 + $0xb4] sm:$0xff] %v261
              $region41: #{_lambda_.20} parent=35 // loop_footer
                %s228 = sadd.s32 1, %s224
              $region42: #{_lambda_.20} parent=35 // loop_footer_branch
                %223 = sbr.rel target = $region38
              $region43: #{_lambda_.20} parent=35 // loop_exit
                _
              loop: start=0, step=1, limit=1
              $region44: #{_lambda_.20} parent=35 // loop_pre_header
                _
              $region45: #{_lambda_.20} parent=35 // loop_header
                %s265 = sphi 0, %s269
                %p266 = scmp.ge.s32.totalorder %s265, 1
                %s270 = sphi %s221, %s221
                %s271 = sphi %s222, %s222
              $region46: #{_lambda_.20} parent=35 // loop_header_branch
                %268 = sbr.rel (%p266) target = $region50
              $region47: #{_lambda_.20} parent=35 // loop_body
                %v272 = vld [vmem:[%s270] sm:$0xf]
                %273 = vst [vmem:[%s271] sm:$0xf] %v272
                %v274 = vld [vmem:[%s270 + $0x24] sm:$0xf]
                %275 = vst [vmem:[%s271 + $0xc] sm:$0xf] %v274
                %v276 = vld [vmem:[%s270 + $0x48] sm:$0xf]
                %277 = vst [vmem:[%s271 + $0x18] sm:$0xf] %v276
                %v278 = vld [vmem:[%s270 + $0x6c] sm:$0xf]
                %279 = vst [vmem:[%s271 + $0x24] sm:$0xf] %v278
                %v280 = vld [vmem:[%s270 + $0x90] sm:$0xf]
                %281 = vst [vmem:[%s271 + $0x30] sm:$0xf] %v280
                %v282 = vld [vmem:[%s270 + $0xb4] sm:$0xf]
                %283 = vst [vmem:[%s271 + $0x3c] sm:$0xf] %v282
                %v284 = vld [vmem:[%s270 + $0xd8] sm:$0xf]
                %285 = vst [vmem:[%s271 + $0x48] sm:$0xf] %v284
                %v286 = vld [vmem:[%s270 + $0xfc] sm:$0xf]
                %287 = vst [vmem:[%s271 + $0x54] sm:$0xf] %v286
                %v288 = vld [vmem:[%s270 + $0x120] sm:$0xf]
                %289 = vst [vmem:[%s271 + $0x60] sm:$0xf] %v288
                %v290 = vld [vmem:[%s270 + $0x144] sm:$0xf]
                %291 = vst [vmem:[%s271 + $0x6c] sm:$0xf] %v290
                %v292 = vld [vmem:[%s270 + $0x168] sm:$0xf]
                %293 = vst [vmem:[%s271 + $0x78] sm:$0xf] %v292
                %v294 = vld [vmem:[%s270 + $0x18c] sm:$0xf]
                %295 = vst [vmem:[%s271 + $0x84] sm:$0xf] %v294
                %v296 = vld [vmem:[%s270 + $0x1b0] sm:$0xf]
                %297 = vst [vmem:[%s271 + $0x90] sm:$0xf] %v296
                %v298 = vld [vmem:[%s270 + $0x1d4] sm:$0xf]
                %299 = vst [vmem:[%s271 + $0x9c] sm:$0xf] %v298
                %v300 = vld [vmem:[%s270 + $0x1f8] sm:$0xf]
                %301 = vst [vmem:[%s271 + $0xa8] sm:$0xf] %v300
                %v302 = vld [vmem:[%s270 + $0x21c] sm:$0xf]
                %303 = vst [vmem:[%s271 + $0xb4] sm:$0xf] %v302
              $region48: #{_lambda_.20} parent=35 // loop_footer
                %s269 = sadd.s32 1, %s265
              $region49: #{_lambda_.20} parent=35 // loop_footer_branch
                %264 = sbr.rel target = $region45
              $region50: #{_lambda_.20} parent=35 // loop_exit
                _
            $region36: #{_lambda_.20} parent=31 // pred_fallthru
              _
          $region32: #{_lambda_.20} parent=27 // pred_fallthru
            _
          %304 = vnop
        $region28: #{_lambda_.20} parent=23 // pred_fallthru
          _
        // Predicated region
        $region51: #{_lambda_.20} parent=23 // pred_check
          %p305 = pneg %p79
        $region52: #{_lambda_.20} parent=23 // pred_check_branch
          %307 = sbr.rel (%p305) target = $region54
        $region53: #{_lambda_.20} parent=23 // pred_region
          %s308 = smul.u32 48, %s19
          %p309 = scmp.lt.s32.totalorder %s308, 143
          %s310 = scalar_select %p309, %s308, 143
          %p311 = scmp.lt.s32.totalorder %s18, 0
          %s312 = scalar_select %p311, %s18, 0
          %s313 = sadd.s32 %s312, %s310
          %s314 = smul.addr %s313, 4
          %s315 = scalar_lea.vmem %s1, %s314
          %s316 = smul.u32 48, %s19
        $region54: #{_lambda_.20} parent=23 // pred_fallthru
          _
      $region24: #{_lambda_.20} parent=5 // pred_fallthru
        _
      %p317 = scmp.le.s32.totalorder 1, %s10
      %p318 = scmp.lt.s32.totalorder %s10, 4
      %p319 = pnand %p317, %p318
      %p320 = pneg %p319
      // Predicated region
      $region55: #{_lambda_.20} parent=5 // pred_check
        _
      $region56: #{_lambda_.20} parent=5 // pred_check_branch
        %322 = sbr.rel (%p319) target = $region58
      $region57: #{_lambda_.20} parent=5 // pred_region
        %s323 = ssub.s32 %s10, 1
        %s324 = sand.u32 %s44, 1
        %s325 = sand.u32 %s44, 1
        %s326 = smul.addr %s325, 192
        %s327 = scalar_lea.vmem [#allocation3], %s326
        // Predicated region
        $region59: #{_lambda_.20} parent=57 // pred_check
          %p328 = pneg %p57
        $region60: #{_lambda_.20} parent=57 // pred_check_branch
          %330 = sbr.rel (%p328) target = $region62
        $region61: #{_lambda_.20} parent=57 // pred_region
          _
        $region62: #{_lambda_.20} parent=57 // pred_fallthru
          _
        %s331 = sand.u32 %s44, 1
        %s332 = sand.u32 %s44, 1
        %s333 = smul.addr %s332, 192
        %s334 = scalar_lea.vmem [#allocation3], %s333
        %p335 = pneg %p57
        %p336 = pneg %p54
        %s337 = smul.u32 48, %s22
        %p338 = scmp.lt.s32.totalorder %s337, 143
        %s339 = scalar_select %p338, %s337, 143
        %p340 = scmp.lt.s32.totalorder %s21, 0
        %s341 = scalar_select %p340, %s21, 0
        %s342 = sadd.s32 %s341, %s339
        %s343 = smul.addr %s342, 4
        %s344 = scalar_lea.vmem %s1, %s343
        %p345 = pneg %p85
        %p346 = pneg %p82
        %p347 = scmp.lt.s32.totalorder %s21, 0
        %s348 = scalar_select %p347, %s21, 0
        %s349 = scalar_lea.vmem %s2, %s348
        %p350 = pneg %p111
        %p351 = pneg %p108
        %s352 = smul.u32 16, %s20
        %p353 = scmp.lt.s32.totalorder %s352, 15
        %s354 = scalar_select %p353, %s352, 15
        %p355 = scmp.lt.s32.totalorder %s21, 0
        %s356 = scalar_select %p355, %s21, 0
        %s357 = sadd.s32 %s356, %s354
        %s358 = smul.addr %s357, 4
        %s359 = scalar_lea.vmem %s3, %s358
        %p360 = pneg %p139
        %p361 = pneg %p136
        %p362 = pneg %p167
        %p363 = pneg %p164
        %s364 = smul.u32 16, %s20
        %p365 = scmp.lt.s32.totalorder %s364, 15
        %s366 = scalar_select %p365, %s364, 15
        %p367 = scmp.lt.s32.totalorder %s21, 0
        %s368 = scalar_select %p367, %s21, 0
        %s369 = sadd.s32 %s368, %s366
        %s370 = smul.addr %s369, 4
        %s371 = scalar_lea.vmem %s4, %s370
        %s372 = smul.u32 16, %s20
        %s373 = smul.u32 3, %s22
        %s374 = smul.u32 48, %s22
        %p375 = scmp.lt.s32.totalorder %s374, 143
        %s376 = scalar_select %p375, %s374, 143
        %p377 = scmp.lt.s32.totalorder %s21, 0
        %s378 = scalar_select %p377, %s21, 0
        %s379 = sadd.s32 %s378, %s376
        %s380 = smul.addr %s379, 4
        %s381 = scalar_lea.vmem %s1, %s380
        %s382 = smul.u32 48, %s22
        %p383 = scmp.lt.s32.totalorder %s21, 0
        %s384 = scalar_select %p383, %s21, 0
        %s385 = scalar_lea.vmem %s2, %s384
        %s386 = smul.u32 16, %s20
        %p387 = scmp.lt.s32.totalorder %s386, 15
        %s388 = scalar_select %p387, %s386, 15
        %p389 = scmp.lt.s32.totalorder %s21, 0
        %s390 = scalar_select %p389, %s21, 0
        %s391 = sadd.s32 %s390, %s388
        %s392 = smul.addr %s391, 4
        %s393 = scalar_lea.vmem %s3, %s392
        %s394 = smul.u32 16, %s20
        %s395 = smul.u32 16, %s20
        %p396 = scmp.lt.s32.totalorder %s395, 15
        %s397 = scalar_select %p396, %s395, 15
        %p398 = scmp.lt.s32.totalorder %s21, 0
        %s399 = scalar_select %p398, %s21, 0
        %s400 = sadd.s32 %s399, %s397
        %s401 = smul.addr %s400, 4
        %s402 = scalar_lea.vmem %s4, %s401
        %s403 = smul.u32 16, %s20
        %p405 = scmp.eq.s32.totalorder %s22, 0
        // Predicated region
        $region63: #{_lambda_.20} parent=57 // pred_check
          %p406 = pneg %p405
        $region64: #{_lambda_.20} parent=57 // pred_check_branch
          %408 = sbr.rel (%p406) target = $region66
        $region65: #{_lambda_.20} parent=57 // pred_region
          %409 = vst [vmem:[#allocation2] sm:$0xff] 0.0
          %410 = vst [vmem:[#allocation2 + $0x8] sm:$0xff] 0.0
          %411 = vst [vmem:[#allocation2 + $0x10] sm:$0xff] 0.0
          %412 = vst [vmem:[#allocation2 + $0x18] sm:$0xff] 0.0
          %413 = vst [vmem:[#allocation2 + $0x20] sm:$0xff] 0.0
          %414 = vst [vmem:[#allocation2 + $0x28] sm:$0xff] 0.0
          %415 = vst [vmem:[#allocation2 + $0x30] sm:$0xff] 0.0
          %416 = vst [vmem:[#allocation2 + $0x38] sm:$0xff] 0.0
          %417 = vst [vmem:[#allocation2 + $0x40] sm:$0xff] 0.0
          %418 = vst [vmem:[#allocation2 + $0x48] sm:$0xff] 0.0
          %419 = vst [vmem:[#allocation2 + $0x50] sm:$0xff] 0.0
          %420 = vst [vmem:[#allocation2 + $0x58] sm:$0xff] 0.0
          %421 = vst [vmem:[#allocation2 + $0x60] sm:$0xff] 0.0
          %422 = vst [vmem:[#allocation2 + $0x68] sm:$0xff] 0.0
          %423 = vst [vmem:[#allocation2 + $0x70] sm:$0xff] 0.0
          %424 = vst [vmem:[#allocation2 + $0x78] sm:$0xff] 0.0
        $region66: #{_lambda_.20} parent=57 // pred_fallthru
          _
        %v425 = vld [vmem:[#allocation2] sm:$0xff]
        %v426 = vld [vmem:[#allocation2 + $0x8] sm:$0xff]
        %v427 = vld [vmem:[#allocation2 + $0x10] sm:$0xff]
        %v428 = vld [vmem:[#allocation2 + $0x18] sm:$0xff]
        %v429 = vld [vmem:[#allocation2 + $0x20] sm:$0xff]
        %v430 = vld [vmem:[#allocation2 + $0x28] sm:$0xff]
        %v431 = vld [vmem:[#allocation2 + $0x30] sm:$0xff]
        %v432 = vld [vmem:[#allocation2 + $0x38] sm:$0xff]
        %v433 = vld [vmem:[#allocation2 + $0x40] sm:$0xff]
        %v434 = vld [vmem:[#allocation2 + $0x48] sm:$0xff]
        %v435 = vld [vmem:[#allocation2 + $0x50] sm:$0xff]
        %v436 = vld [vmem:[#allocation2 + $0x58] sm:$0xff]
        %v437 = vld [vmem:[#allocation2 + $0x60] sm:$0xff]
        %v438 = vld [vmem:[#allocation2 + $0x68] sm:$0xff]
        %v439 = vld [vmem:[#allocation2 + $0x70] sm:$0xff]
        %v440 = vld [vmem:[#allocation2 + $0x78] sm:$0xff]
        %v441 = vld [vmem:[%s327] sm:$0xff]
        %v442 = vld [vmem:[%s327 + $0x8] sm:$0xf]
        %v443 = vld [vmem:[%s327 + $0xc] sm:$0xff]
        %v444 = vld [vmem:[%s327 + $0x14] sm:$0xf]
        %v445 = vld [vmem:[%s327 + $0x18] sm:$0xff]
        %v446 = vld [vmem:[%s327 + $0x20] sm:$0xf]
        %v447 = vld [vmem:[%s327 + $0x24] sm:$0xff]
        %v448 = vld [vmem:[%s327 + $0x2c] sm:$0xf]
        %v449 = vld [vmem:[%s327 + $0x30] sm:$0xff]
        %v450 = vld [vmem:[%s327 + $0x38] sm:$0xf]
        %v451 = vld [vmem:[%s327 + $0x3c] sm:$0xff]
        %v452 = vld [vmem:[%s327 + $0x44] sm:$0xf]
        %v453 = vld [vmem:[%s327 + $0x48] sm:$0xff]
        %v454 = vld [vmem:[%s327 + $0x50] sm:$0xf]
        %v455 = vld [vmem:[%s327 + $0x54] sm:$0xff]
        %v456 = vld [vmem:[%s327 + $0x5c] sm:$0xf]
        %v457 = vld [vmem:[%s327 + $0x60] sm:$0xff]
        %v458 = vld [vmem:[%s327 + $0x68] sm:$0xf]
        %v459 = vld [vmem:[%s327 + $0x6c] sm:$0xff]
        %v460 = vld [vmem:[%s327 + $0x74] sm:$0xf]
        %v461 = vld [vmem:[%s327 + $0x78] sm:$0xff]
        %v462 = vld [vmem:[%s327 + $0x80] sm:$0xf]
        %v463 = vld [vmem:[%s327 + $0x84] sm:$0xff]
        %v464 = vld [vmem:[%s327 + $0x8c] sm:$0xf]
        %v465 = vld [vmem:[%s327 + $0x90] sm:$0xff]
        %v466 = vld [vmem:[%s327 + $0x98] sm:$0xf]
        %v467 = vld [vmem:[%s327 + $0x9c] sm:$0xff]
        %v468 = vld [vmem:[%s327 + $0xa4] sm:$0xf]
        %v469 = vld [vmem:[%s327 + $0xa8] sm:$0xff]
        %v470 = vld [vmem:[%s327 + $0xb0] sm:$0xf]
        %v471 = vld [vmem:[%s327 + $0xb4] sm:$0xff]
        %v472 = vld [vmem:[%s327 + $0xbc] sm:$0xf]
        %v473 = vld [vmem:[%s381] sm:$0xf]
        %v474 = vld [vmem:[%s381 + $0x4] sm:$0xf]
        %v475 = vld [vmem:[%s381 + $0x8] sm:$0xf]
        %v476 = vld [vmem:[%s381 + $0xc] sm:$0xf]
        %v477 = vld [vmem:[%s381 + $0x10] sm:$0xf]
        %v478 = vld [vmem:[%s381 + $0x14] sm:$0xf]
        %v479 = vld [vmem:[%s381 + $0x18] sm:$0xf]
        %v480 = vld [vmem:[%s381 + $0x1c] sm:$0xf]
        %v481 = vld [vmem:[%s381 + $0x20] sm:$0xf]
        %v482 = vld [vmem:[%s381 + $0x24] sm:$0xf]
        %v483 = vld [vmem:[%s381 + $0x28] sm:$0xf]
        %v484 = vld [vmem:[%s381 + $0x2c] sm:$0xf]
        %v485 = vld [vmem:[%s381 + $0x30] sm:$0xf]
        %v486 = vld [vmem:[%s381 + $0x34] sm:$0xf]
        %v487 = vld [vmem:[%s381 + $0x38] sm:$0xf]
        %v488 = vld [vmem:[%s381 + $0x3c] sm:$0xf]
        %v489 = vld [vmem:[%s381 + $0x40] sm:$0xf]
        %v490 = vld [vmem:[%s381 + $0x44] sm:$0xf]
        %v491 = vld [vmem:[%s381 + $0x48] sm:$0xf]
        %v492 = vld [vmem:[%s381 + $0x4c] sm:$0xf]
        %v493 = vld [vmem:[%s381 + $0x50] sm:$0xf]
        %v494 = vld [vmem:[%s381 + $0x54] sm:$0xf]
        %v495 = vld [vmem:[%s381 + $0x58] sm:$0xf]
        %v496 = vld [vmem:[%s381 + $0x5c] sm:$0xf]
        %v497 = vld [vmem:[%s381 + $0x60] sm:$0xf]
        %v498 = vld [vmem:[%s381 + $0x64] sm:$0xf]
        %v499 = vld [vmem:[%s381 + $0x68] sm:$0xf]
        %v500 = vld [vmem:[%s381 + $0x6c] sm:$0xf]
        %v501 = vld [vmem:[%s381 + $0x70] sm:$0xf]
        %v502 = vld [vmem:[%s381 + $0x74] sm:$0xf]
        %v503 = vld [vmem:[%s381 + $0x78] sm:$0xf]
        %v504 = vld [vmem:[%s381 + $0x7c] sm:$0xf]
        %v505 = vld [vmem:[%s381 + $0x80] sm:$0xf]
        %v506 = vld [vmem:[%s381 + $0x84] sm:$0xf]
        %v507 = vld [vmem:[%s381 + $0x88] sm:$0xf]
        %v508 = vld [vmem:[%s381 + $0x8c] sm:$0xf]
        %v509 = vld [vmem:[%s381 + $0x90] sm:$0xf]
        %v510 = vld [vmem:[%s381 + $0x94] sm:$0xf]
        %v511 = vld [vmem:[%s381 + $0x98] sm:$0xf]
        %v512 = vld [vmem:[%s381 + $0x9c] sm:$0xf]
        %v513 = vld [vmem:[%s381 + $0xa0] sm:$0xf]
        %v514 = vld [vmem:[%s381 + $0xa4] sm:$0xf]
        %v515 = vld [vmem:[%s381 + $0xa8] sm:$0xf]
        %v516 = vld [vmem:[%s381 + $0xac] sm:$0xf]
        %v517 = vld [vmem:[%s381 + $0xb0] sm:$0xf]
        %v518 = vld [vmem:[%s381 + $0xb4] sm:$0xf]
        %v519 = vld [vmem:[%s381 + $0xb8] sm:$0xf]
        %v520 = vld [vmem:[%s381 + $0xbc] sm:$0xf]
        %v553 = vunpack.c.l.b16 %v441
        %v554 = vunpack.c.h.b16 %v441
        %v555 = vunpack.c.l.b16 %v442
        %v556 = vunpack.c.l.b16 %v443
        %v557 = vunpack.c.h.b16 %v443
        %v558 = vunpack.c.l.b16 %v444
        %v559 = vunpack.c.l.b16 %v445
        %v560 = vunpack.c.h.b16 %v445
        %v561 = vunpack.c.l.b16 %v446
        %v562 = vunpack.c.l.b16 %v447
        %v563 = vunpack.c.h.b16 %v447
        %v564 = vunpack.c.l.b16 %v448
        %v565 = vunpack.c.l.b16 %v449
        %v566 = vunpack.c.h.b16 %v449
        %v567 = vunpack.c.l.b16 %v450
        %v568 = vunpack.c.l.b16 %v451
        %v569 = vunpack.c.h.b16 %v451
        %v570 = vunpack.c.l.b16 %v452
        %v571 = vunpack.c.l.b16 %v453
        %v572 = vunpack.c.h.b16 %v453
        %v573 = vunpack.c.l.b16 %v454
        %v574 = vunpack.c.l.b16 %v455
        %v575 = vunpack.c.h.b16 %v455
        %v576 = vunpack.c.l.b16 %v456
        %v577 = vunpack.c.l.b16 %v457
        %v578 = vunpack.c.h.b16 %v457
        %v579 = vunpack.c.l.b16 %v458
        %v580 = vunpack.c.l.b16 %v459
        %v581 = vunpack.c.h.b16 %v459
        %v582 = vunpack.c.l.b16 %v460
        %v583 = vunpack.c.l.b16 %v461
        %v584 = vunpack.c.h.b16 %v461
        %v585 = vunpack.c.l.b16 %v462
        %v586 = vunpack.c.l.b16 %v463
        %v587 = vunpack.c.h.b16 %v463
        %v588 = vunpack.c.l.b16 %v464
        %v589 = vunpack.c.l.b16 %v465
        %v590 = vunpack.c.h.b16 %v465
        %v591 = vunpack.c.l.b16 %v466
        %v592 = vunpack.c.l.b16 %v467
        %v593 = vunpack.c.h.b16 %v467
        %v594 = vunpack.c.l.b16 %v468
        %v595 = vunpack.c.l.b16 %v469
        %v596 = vunpack.c.h.b16 %v469
        %v597 = vunpack.c.l.b16 %v470
        %v598 = vunpack.c.l.b16 %v471
        %v599 = vunpack.c.h.b16 %v471
        %v600 = vunpack.c.l.b16 %v472
        %v601 = vpack.c.b16 %v556, %v553
        %v602 = vpack.c.b16 %v557, %v554
        %v603 = vpack.c.b16 %v558, %v555
        %v604 = vpack.c.b16 %v562, %v559
        %v605 = vpack.c.b16 %v563, %v560
        %v606 = vpack.c.b16 %v564, %v561
        %v607 = vpack.c.b16 %v568, %v565
        %v608 = vpack.c.b16 %v569, %v566
        %v609 = vpack.c.b16 %v570, %v567
        %v610 = vpack.c.b16 %v574, %v571
        %v611 = vpack.c.b16 %v575, %v572
        %v612 = vpack.c.b16 %v576, %v573
        %v613 = vpack.c.b16 %v580, %v577
        %v614 = vpack.c.b16 %v581, %v578
        %v615 = vpack.c.b16 %v582, %v579
        %v616 = vpack.c.b16 %v586, %v583
        %v617 = vpack.c.b16 %v587, %v584
        %v618 = vpack.c.b16 %v588, %v585
        %v619 = vpack.c.b16 %v592, %v589
        %v620 = vpack.c.b16 %v593, %v590
        %v621 = vpack.c.b16 %v594, %v591
        %v622 = vpack.c.b16 %v598, %v595
        %v623 = vpack.c.b16 %v599, %v596
        %v624 = vpack.c.b16 %v600, %v597
        %v697 = vunpack.c.l.b16 %v473
        %v698 = vunpack.c.l.b16 %v474
        %v699 = vunpack.c.l.b16 %v475
        %v700 = vunpack.c.l.b16 %v476
        %v701 = vunpack.c.l.b16 %v477
        %v702 = vunpack.c.l.b16 %v478
        %v703 = vunpack.c.l.b16 %v479
        %v704 = vunpack.c.l.b16 %v480
        %v705 = vunpack.c.l.b16 %v481
        %v706 = vunpack.c.l.b16 %v482
        %v707 = vunpack.c.l.b16 %v483
        %v708 = vunpack.c.l.b16 %v484
        %v709 = vunpack.c.l.b16 %v485
        %v710 = vunpack.c.l.b16 %v486
        %v711 = vunpack.c.l.b16 %v487
        %v712 = vunpack.c.l.b16 %v488
        %v713 = vunpack.c.l.b16 %v489
        %v714 = vunpack.c.l.b16 %v490
        %v715 = vunpack.c.l.b16 %v491
        %v716 = vunpack.c.l.b16 %v492
        %v717 = vunpack.c.l.b16 %v493
        %v718 = vunpack.c.l.b16 %v494
        %v719 = vunpack.c.l.b16 %v495
        %v720 = vunpack.c.l.b16 %v496
        %v721 = vunpack.c.l.b16 %v497
        %v722 = vunpack.c.l.b16 %v498
        %v723 = vunpack.c.l.b16 %v499
        %v724 = vunpack.c.l.b16 %v500
        %v725 = vunpack.c.l.b16 %v501
        %v726 = vunpack.c.l.b16 %v502
        %v727 = vunpack.c.l.b16 %v503
        %v728 = vunpack.c.l.b16 %v504
        %v729 = vunpack.c.l.b16 %v505
        %v730 = vunpack.c.l.b16 %v506
        %v731 = vunpack.c.l.b16 %v507
        %v732 = vunpack.c.l.b16 %v508
        %v733 = vunpack.c.l.b16 %v509
        %v734 = vunpack.c.l.b16 %v510
        %v735 = vunpack.c.l.b16 %v511
        %v736 = vunpack.c.l.b16 %v512
        %v737 = vunpack.c.l.b16 %v513
        %v738 = vunpack.c.l.b16 %v514
        %v739 = vunpack.c.l.b16 %v515
        %v740 = vunpack.c.l.b16 %v516
        %v741 = vunpack.c.l.b16 %v517
        %v742 = vunpack.c.l.b16 %v518
        %v743 = vunpack.c.l.b16 %v519
        %v744 = vunpack.c.l.b16 %v520
        %v745 = vpack.c.b16 %v698, %v697
        %v746 = vpack.c.b16 %v700, %v699
        %v747 = vpack.c.b16 %v702, %v701
        %v748 = vpack.c.b16 %v704, %v703
        %v749 = vpack.c.b16 %v706, %v705
        %v750 = vpack.c.b16 %v708, %v707
        %v751 = vpack.c.b16 %v710, %v709
        %v752 = vpack.c.b16 %v712, %v711
        %v753 = vpack.c.b16 %v714, %v713
        %v754 = vpack.c.b16 %v716, %v715
        %v755 = vpack.c.b16 %v718, %v717
        %v756 = vpack.c.b16 %v720, %v719
        %v757 = vpack.c.b16 %v722, %v721
        %v758 = vpack.c.b16 %v724, %v723
        %v759 = vpack.c.b16 %v726, %v725
        %v760 = vpack.c.b16 %v728, %v727
        %v761 = vpack.c.b16 %v730, %v729
        %v762 = vpack.c.b16 %v732, %v731
        %v763 = vpack.c.b16 %v734, %v733
        %v764 = vpack.c.b16 %v736, %v735
        %v765 = vpack.c.b16 %v738, %v737
        %v766 = vpack.c.b16 %v740, %v739
        %v767 = vpack.c.b16 %v742, %v741
        %v768 = vpack.c.b16 %v744, %v743
        %793 = vmatprep.subr.bf16.mxu0 0
        %794 = vmatpush1.bf16.msra.mxu0 %v745
        %795 = vmatprep.subr.bf16.mxu0 0
        %796 = vmatpush1.bf16.msra.mxu0 %v746
        %797 = vmatprep.subr.bf16.mxu0 0
        %798 = vmatpush1.bf16.msra.mxu0 %v747
        %799 = vmatprep.subr.bf16.mxu0 0
        %800 = vmatpush1.bf16.msra.mxu0 %v748
        %801 = vmatprep.subr.bf16.mxu0 0
        %802 = vmatpush1.bf16.msra.mxu0 %v749
        %803 = vmatprep.subr.bf16.mxu0 0
        %804 = vmatpush1.bf16.msra.mxu0 %v750
        %805 = vmatprep.subr.bf16.mxu0 0
        %806 = vmatpush1.bf16.msra.mxu0 %v751
        %807 = vmatprep.subr.bf16.mxu0 0
        %808 = vmatpush1.bf16.msra.mxu0 %v752
        %809 = vmatprep.subr.bf16.mxu0 0
        %810 = vmatpush1.bf16.msra.mxu0 %v753
        %811 = vmatprep.subr.bf16.mxu0 0
        %812 = vmatpush1.bf16.msra.mxu0 %v754
        %813 = vmatprep.subr.bf16.mxu0 0
        %814 = vmatpush1.bf16.msra.mxu0 %v755
        %815 = vmatprep.subr.bf16.mxu0 0
        %816 = vmatpush1.bf16.msra.mxu0 %v756
        %817 = vmatprep.subr.bf16.mxu0 0
        %818 = vmatpush1.bf16.msra.mxu0 %v757
        %819 = vmatprep.subr.bf16.mxu0 0
        %820 = vmatpush1.bf16.msra.mxu0 %v758
        %821 = vmatprep.subr.bf16.mxu0 0
        %822 = vmatpush1.bf16.msra.mxu0 %v759
        %823 = vmatprep.subr.bf16.mxu0 0
        %824 = vmatpush1.bf16.msra.mxu0 %v760
        %825 = vmatprep.mubr.bf16.mxu0 %v602
        %826 = vmatmul.mubr.bf16.gmra.mrb[0].mxu0 %v601
        %v827 = vpop.f32.mrb[0].mxu0
        %v828 = vadd.f32 0.0, %v827
        %v829 = vpop.f32.mrb[0].mxu0
        %v830 = vpop.f32.mrb[0].mxu0
        %v831 = vadd.f32 0.0, %v830
        %v832 = vpop.f32.mrb[0].mxu0
        %833 = vmatprep.mubr.bf16.mxu0 %v605
        %834 = vmatmul.mubr.bf16.gmra.mrb[0].mxu0 %v604
        %v835 = vpop.f32.mrb[0].mxu0
        %v836 = vadd.f32 0.0, %v835
        %v837 = vpop.f32.mrb[0].mxu0
        %v838 = vpop.f32.mrb[0].mxu0
        %v839 = vadd.f32 0.0, %v838
        %v840 = vpop.f32.mrb[0].mxu0
        %841 = vmatprep.mubr.bf16.mxu0 %v608
        %842 = vmatmul.mubr.bf16.gmra.mrb[0].mxu0 %v607
        %v843 = vpop.f32.mrb[0].mxu0
        %v844 = vadd.f32 0.0, %v843
        %v845 = vpop.f32.mrb[0].mxu0
        %v846 = vpop.f32.mrb[0].mxu0
        %v847 = vadd.f32 0.0, %v846
        %v848 = vpop.f32.mrb[0].mxu0
        %849 = vmatprep.mubr.bf16.mxu0 %v611
        %850 = vmatmul.mubr.bf16.gmra.mrb[0].mxu0 %v610
        %v851 = vpop.f32.mrb[0].mxu0
        %v852 = vadd.f32 0.0, %v851
        %v853 = vpop.f32.mrb[0].mxu0
        %v854 = vpop.f32.mrb[0].mxu0
        %v855 = vadd.f32 0.0, %v854
        %v856 = vpop.f32.mrb[0].mxu0
        %857 = vmatprep.mubr.bf16.mxu0 %v614
        %858 = vmatmul.mubr.bf16.gmra.mrb[0].mxu0 %v613
        %v859 = vpop.f32.mrb[0].mxu0
        %v860 = vadd.f32 0.0, %v859
        %v861 = vpop.f32.mrb[0].mxu0
        %v862 = vpop.f32.mrb[0].mxu0
        %v863 = vadd.f32 0.0, %v862
        %v864 = vpop.f32.mrb[0].mxu0
        %865 = vmatprep.mubr.bf16.mxu0 %v617
        %866 = vmatmul.mubr.bf16.gmra.mrb[0].mxu0 %v616
        %v867 = vpop.f32.mrb[0].mxu0
        %v868 = vadd.f32 0.0, %v867
        %v869 = vpop.f32.mrb[0].mxu0
        %v870 = vpop.f32.mrb[0].mxu0
        %v871 = vadd.f32 0.0, %v870
        %v872 = vpop.f32.mrb[0].mxu0
        %873 = vmatprep.mubr.bf16.mxu0 %v620
        %874 = vmatmul.mubr.bf16.gmra.mrb[0].mxu0 %v619
        %v875 = vpop.f32.mrb[0].mxu0
        %v876 = vadd.f32 0.0, %v875
        %v877 = vpop.f32.mrb[0].mxu0
        %v878 = vpop.f32.mrb[0].mxu0
        %v879 = vadd.f32 0.0, %v878
        %v880 = vpop.f32.mrb[0].mxu0
        %881 = vmatprep.mubr.bf16.mxu0 %v623
        %882 = vmatmul.mubr.bf16.gmra.mrb[0].mxu0 %v622
        %v883 = vpop.f32.mrb[0].mxu0
        %v884 = vadd.f32 0.0, %v883
        %v885 = vpop.f32.mrb[0].mxu0
        %v886 = vpop.f32.mrb[0].mxu0
        %v887 = vadd.f32 0.0, %v886
        %v888 = vpop.f32.mrb[0].mxu0
        %889 = vdwg.mxu0
        %890 = vmatprep.subr.bf16.mxu0 0
        %891 = vmatpush1.bf16.msra.mxu0 %v761
        %892 = vmatprep.subr.bf16.mxu0 0
        %893 = vmatpush1.bf16.msra.mxu0 %v762
        %894 = vmatprep.subr.bf16.mxu0 0
        %895 = vmatpush1.bf16.msra.mxu0 %v763
        %896 = vmatprep.subr.bf16.mxu0 0
        %897 = vmatpush1.bf16.msra.mxu0 %v764
        %898 = vmatprep.subr.bf16.mxu0 0
        %899 = vmatpush1.bf16.msra.mxu0 %v765
        %900 = vmatprep.subr.bf16.mxu0 0
        %901 = vmatpush1.bf16.msra.mxu0 %v766
        %902 = vmatprep.subr.bf16.mxu0 0
        %903 = vmatpush1.bf16.msra.mxu0 %v767
        %904 = vmatprep.subr.bf16.mxu0 0
        %905 = vmatpush1.bf16.msra.mxu0 %v768
        %906 = vmatprep.subr.bf16.mxu0 0
        %907 = vmatpush1.bf16.msra.mxu0 0
        %908 = vmatprep.subr.bf16.mxu0 0
        %909 = vmatpush1.bf16.msra.mxu0 0
        %910 = vmatprep.subr.bf16.mxu0 0
        %911 = vmatpush1.bf16.msra.mxu0 0
        %912 = vmatprep.subr.bf16.mxu0 0
        %913 = vmatpush1.bf16.msra.mxu0 0
        %914 = vmatprep.subr.bf16.mxu0 0
        %915 = vmatpush1.bf16.msra.mxu0 0
        %916 = vmatprep.subr.bf16.mxu0 0
        %917 = vmatpush1.bf16.msra.mxu0 0
        %918 = vmatprep.subr.bf16.mxu0 0
        %919 = vmatpush1.bf16.msra.mxu0 0
        %920 = vmatprep.subr.bf16.mxu0 0
        %921 = vmatpush1.bf16.msra.mxu0 0
        %922 = vmatprep.mubr.bf16.mxu0 0
        %923 = vmatmul.mubr.bf16.gmra.mrb[0].mxu0 %v603
        %v924 = vpop.f32.mrb[0].mxu0
        %v925 = vadd.f32 %v828, %v924
        %v926 = vpop.f32.mrb[0].mxu0
        %v927 = vpop.f32.mrb[0].mxu0
        %v928 = vadd.f32 %v831, %v927
        %v929 = vpop.f32.mrb[0].mxu0
        %930 = vmatprep.mubr.bf16.mxu0 0
        %931 = vmatmul.mubr.bf16.gmra.mrb[0].mxu0 %v606
        %v932 = vpop.f32.mrb[0].mxu0
        %v933 = vadd.f32 %v836, %v932
        %v934 = vpop.f32.mrb[0].mxu0
        %v935 = vpop.f32.mrb[0].mxu0
        %v936 = vadd.f32 %v839, %v935
        %v937 = vpop.f32.mrb[0].mxu0
        %938 = vmatprep.mubr.bf16.mxu0 0
        %939 = vmatmul.mubr.bf16.gmra.mrb[0].mxu0 %v609
        %v940 = vpop.f32.mrb[0].mxu0
        %v941 = vadd.f32 %v844, %v940
        %v942 = vpop.f32.mrb[0].mxu0
        %v943 = vpop.f32.mrb[0].mxu0
        %v944 = vadd.f32 %v847, %v943
        %v945 = vpop.f32.mrb[0].mxu0
        %946 = vmatprep.mubr.bf16.mxu0 0
        %947 = vmatmul.mubr.bf16.gmra.mrb[0].mxu0 %v612
        %v948 = vpop.f32.mrb[0].mxu0
        %v949 = vadd.f32 %v852, %v948
        %v950 = vpop.f32.mrb[0].mxu0
        %v951 = vpop.f32.mrb[0].mxu0
        %v952 = vadd.f32 %v855, %v951
        %v953 = vpop.f32.mrb[0].mxu0
        %954 = vmatprep.mubr.bf16.mxu0 0
        %955 = vmatmul.mubr.bf16.gmra.mrb[0].mxu0 %v615
        %v956 = vpop.f32.mrb[0].mxu0
        %v957 = vadd.f32 %v860, %v956
        %v958 = vpop.f32.mrb[0].mxu0
        %v959 = vpop.f32.mrb[0].mxu0
        %v960 = vadd.f32 %v863, %v959
        %v961 = vpop.f32.mrb[0].mxu0
        %962 = vmatprep.mubr.bf16.mxu0 0
        %963 = vmatmul.mubr.bf16.gmra.mrb[0].mxu0 %v618
        %v964 = vpop.f32.mrb[0].mxu0
        %v965 = vadd.f32 %v868, %v964
        %v966 = vpop.f32.mrb[0].mxu0
        %v967 = vpop.f32.mrb[0].mxu0
        %v968 = vadd.f32 %v871, %v967
        %v969 = vpop.f32.mrb[0].mxu0
        %970 = vmatprep.mubr.bf16.mxu0 0
        %971 = vmatmul.mubr.bf16.gmra.mrb[0].mxu0 %v621
        %v972 = vpop.f32.mrb[0].mxu0
        %v973 = vadd.f32 %v876, %v972
        %v974 = vpop.f32.mrb[0].mxu0
        %v975 = vpop.f32.mrb[0].mxu0
        %v976 = vadd.f32 %v879, %v975
        %v977 = vpop.f32.mrb[0].mxu0
        %978 = vmatprep.mubr.bf16.mxu0 0
        %979 = vmatmul.mubr.bf16.gmra.mrb[0].mxu0 %v624
        %v980 = vpop.f32.mrb[0].mxu0
        %v981 = vadd.f32 %v884, %v980
        %v982 = vpop.f32.mrb[0].mxu0
        %v983 = vpop.f32.mrb[0].mxu0
        %v984 = vadd.f32 %v887, %v983
        %v985 = vpop.f32.mrb[0].mxu0
        %986 = vdwg.mxu0
        %v987 = vadd.f32 %v425, %v925
        %v988 = vadd.f32 %v426, %v928
        %v989 = vadd.f32 %v427, %v933
        %v990 = vadd.f32 %v428, %v936
        %v991 = vadd.f32 %v429, %v941
        %v992 = vadd.f32 %v430, %v944
        %v993 = vadd.f32 %v431, %v949
        %v994 = vadd.f32 %v432, %v952
        %v995 = vadd.f32 %v433, %v957
        %v996 = vadd.f32 %v434, %v960
        %v997 = vadd.f32 %v435, %v965
        %v998 = vadd.f32 %v436, %v968
        %v999 = vadd.f32 %v437, %v973
        %v1000 = vadd.f32 %v438, %v976
        %v1001 = vadd.f32 %v439, %v981
        %v1002 = vadd.f32 %v440, %v984
        %1003 = vst [vmem:[#allocation2] sm:$0xff] %v987
        %1004 = vst [vmem:[#allocation2 + $0x8] sm:$0xff] %v988
        %1005 = vst [vmem:[#allocation2 + $0x10] sm:$0xff] %v989
        %1006 = vst [vmem:[#allocation2 + $0x18] sm:$0xff] %v990
        %1007 = vst [vmem:[#allocation2 + $0x20] sm:$0xff] %v991
        %1008 = vst [vmem:[#allocation2 + $0x28] sm:$0xff] %v992
        %1009 = vst [vmem:[#allocation2 + $0x30] sm:$0xff] %v993
        %1010 = vst [vmem:[#allocation2 + $0x38] sm:$0xff] %v994
        %1011 = vst [vmem:[#allocation2 + $0x40] sm:$0xff] %v995
        %1012 = vst [vmem:[#allocation2 + $0x48] sm:$0xff] %v996
        %1013 = vst [vmem:[#allocation2 + $0x50] sm:$0xff] %v997
        %1014 = vst [vmem:[#allocation2 + $0x58] sm:$0xff] %v998
        %1015 = vst [vmem:[#allocation2 + $0x60] sm:$0xff] %v999
        %1016 = vst [vmem:[#allocation2 + $0x68] sm:$0xff] %v1000
        %1017 = vst [vmem:[#allocation2 + $0x70] sm:$0xff] %v1001
        %1018 = vst [vmem:[#allocation2 + $0x78] sm:$0xff] %v1002
        %p1019 = scmp.eq.s32.totalorder %s22, 2
        // Predicated region
        $region67: #{_lambda_.20} parent=57 // pred_check
          %p1020 = pneg %p1019
        $region68: #{_lambda_.20} parent=57 // pred_check_branch
          %1022 = sbr.rel (%p1020) target = $region70
        $region69: #{_lambda_.20} parent=57 // pred_region
          %v1023 = vld [vmem:[#allocation2] sm:$0xff]
          %v1024 = vld [vmem:[#allocation2 + $0x8] sm:$0xff]
          %v1025 = vld [vmem:[#allocation2 + $0x10] sm:$0xff]
          %v1026 = vld [vmem:[#allocation2 + $0x18] sm:$0xff]
          %v1027 = vld [vmem:[#allocation2 + $0x20] sm:$0xff]
          %v1028 = vld [vmem:[#allocation2 + $0x28] sm:$0xff]
          %v1029 = vld [vmem:[#allocation2 + $0x30] sm:$0xff]
          %v1030 = vld [vmem:[#allocation2 + $0x38] sm:$0xff]
          %v1031 = vld [vmem:[#allocation2 + $0x40] sm:$0xff]
          %v1032 = vld [vmem:[#allocation2 + $0x48] sm:$0xff]
          %v1033 = vld [vmem:[#allocation2 + $0x50] sm:$0xff]
          %v1034 = vld [vmem:[#allocation2 + $0x58] sm:$0xff]
          %v1035 = vld [vmem:[#allocation2 + $0x60] sm:$0xff]
          %v1036 = vld [vmem:[#allocation2 + $0x68] sm:$0xff]
          %v1037 = vld [vmem:[#allocation2 + $0x70] sm:$0xff]
          %v1038 = vld [vmem:[#allocation2 + $0x78] sm:$0xff]
          %v1039 = vld [vmem:[%s385] sm:$0x1]
          %v1041 = vlaneseq
          %v1042 = vshrl.u32 %v1041, 7
          %v1043 = vsub.s32 0, %v1042
          %v1044 = vrot.slane %v1039, %v1043
          %v1046 = vadd.f32 %v1023, %v1044
          %v1047 = vadd.f32 %v1024, %v1044
          %v1048 = vadd.f32 %v1025, %v1044
          %v1049 = vadd.f32 %v1026, %v1044
          %v1050 = vadd.f32 %v1027, %v1044
          %v1051 = vadd.f32 %v1028, %v1044
          %v1052 = vadd.f32 %v1029, %v1044
          %v1053 = vadd.f32 %v1030, %v1044
          %v1054 = vadd.f32 %v1031, %v1044
          %v1055 = vadd.f32 %v1032, %v1044
          %v1056 = vadd.f32 %v1033, %v1044
          %v1057 = vadd.f32 %v1034, %v1044
          %v1058 = vadd.f32 %v1035, %v1044
          %v1059 = vadd.f32 %v1036, %v1044
          %v1060 = vadd.f32 %v1037, %v1044
          %v1061 = vadd.f32 %v1038, %v1044
          %v1062 = vld [vmem:[%s393] sm:$0xf]
          %v1063 = vld [vmem:[%s393 + $0x4] sm:$0xf]
          %v1064 = vld [vmem:[%s393 + $0x8] sm:$0xf]
          %v1065 = vld [vmem:[%s393 + $0xc] sm:$0xf]
          %v1066 = vld [vmem:[%s393 + $0x10] sm:$0xf]
          %v1067 = vld [vmem:[%s393 + $0x14] sm:$0xf]
          %v1068 = vld [vmem:[%s393 + $0x18] sm:$0xf]
          %v1069 = vld [vmem:[%s393 + $0x1c] sm:$0xf]
          %v1070 = vld [vmem:[%s393 + $0x20] sm:$0xf]
          %v1071 = vld [vmem:[%s393 + $0x24] sm:$0xf]
          %v1072 = vld [vmem:[%s393 + $0x28] sm:$0xf]
          %v1073 = vld [vmem:[%s393 + $0x2c] sm:$0xf]
          %v1074 = vld [vmem:[%s393 + $0x30] sm:$0xf]
          %v1075 = vld [vmem:[%s393 + $0x34] sm:$0xf]
          %v1076 = vld [vmem:[%s393 + $0x38] sm:$0xf]
          %v1077 = vld [vmem:[%s393 + $0x3c] sm:$0xf]
          %v1078 = vunpack.c.l.bf16 %v1062
          %v1079 = vunpack.c.l.bf16 %v1063
          %v1080 = vunpack.c.l.bf16 %v1064
          %v1081 = vunpack.c.l.bf16 %v1065
          %v1082 = vunpack.c.l.bf16 %v1066
          %v1083 = vunpack.c.l.bf16 %v1067
          %v1084 = vunpack.c.l.bf16 %v1068
          %v1085 = vunpack.c.l.bf16 %v1069
          %v1086 = vunpack.c.l.bf16 %v1070
          %v1087 = vunpack.c.l.bf16 %v1071
          %v1088 = vunpack.c.l.bf16 %v1072
          %v1089 = vunpack.c.l.bf16 %v1073
          %v1090 = vunpack.c.l.bf16 %v1074
          %v1091 = vunpack.c.l.bf16 %v1075
          %v1092 = vunpack.c.l.bf16 %v1076
          %v1093 = vunpack.c.l.bf16 %v1077
          %v1094 = vadd.f32 %v1046, %v1078
          %v1095 = vadd.f32 %v1047, %v1079
          %v1096 = vadd.f32 %v1048, %v1080
          %v1097 = vadd.f32 %v1049, %v1081
          %v1098 = vadd.f32 %v1050, %v1082
          %v1099 = vadd.f32 %v1051, %v1083
          %v1100 = vadd.f32 %v1052, %v1084
          %v1101 = vadd.f32 %v1053, %v1085
          %v1102 = vadd.f32 %v1054, %v1086
          %v1103 = vadd.f32 %v1055, %v1087
          %v1104 = vadd.f32 %v1056, %v1088
          %v1105 = vadd.f32 %v1057, %v1089
          %v1106 = vadd.f32 %v1058, %v1090
          %v1107 = vadd.f32 %v1059, %v1091
          %v1108 = vadd.f32 %v1060, %v1092
          %v1109 = vadd.f32 %v1061, %v1093
          %v1110 = vmax.f32 %v1094, 0.0
          %v1111 = vmax.f32 %v1095, 0.0
          %v1112 = vmax.f32 %v1096, 0.0
          %v1113 = vmax.f32 %v1097, 0.0
          %v1114 = vmax.f32 %v1098, 0.0
          %v1115 = vmax.f32 %v1099, 0.0
          %v1116 = vmax.f32 %v1100, 0.0
          %v1117 = vmax.f32 %v1101, 0.0
          %v1118 = vmax.f32 %v1102, 0.0
          %v1119 = vmax.f32 %v1103, 0.0
          %v1120 = vmax.f32 %v1104, 0.0
          %v1121 = vmax.f32 %v1105, 0.0
          %v1122 = vmax.f32 %v1106, 0.0
          %v1123 = vmax.f32 %v1107, 0.0
          %v1124 = vmax.f32 %v1108, 0.0
          %v1125 = vmax.f32 %v1109, 0.0
          %v1126 = vpack.c.bf16 %v1111, %v1110
          %v1127 = vpack.c.bf16 %v1113, %v1112
          %v1128 = vpack.c.bf16 %v1115, %v1114
          %v1129 = vpack.c.bf16 %v1117, %v1116
          %v1130 = vpack.c.bf16 %v1119, %v1118
          %v1131 = vpack.c.bf16 %v1121, %v1120
          %v1132 = vpack.c.bf16 %v1123, %v1122
          %v1133 = vpack.c.bf16 %v1125, %v1124
          %v1142 = vunpack.c.l.b16 %v1126
          %v1143 = vunpack.c.h.b16 %v1126
          %v1144 = vunpack.c.l.b16 %v1127
          %v1145 = vunpack.c.h.b16 %v1127
          %v1146 = vunpack.c.l.b16 %v1128
          %v1147 = vunpack.c.h.b16 %v1128
          %v1148 = vunpack.c.l.b16 %v1129
          %v1149 = vunpack.c.h.b16 %v1129
          %v1150 = vunpack.c.l.b16 %v1130
          %v1151 = vunpack.c.h.b16 %v1130
          %v1152 = vunpack.c.l.b16 %v1131
          %v1153 = vunpack.c.h.b16 %v1131
          %v1154 = vunpack.c.l.b16 %v1132
          %v1155 = vunpack.c.h.b16 %v1132
          %v1156 = vunpack.c.l.b16 %v1133
          %v1157 = vunpack.c.h.b16 %v1133
          %v1158 = vpack.c.b16 %v1142, %v1142
          %v1159 = vpack.c.b16 %v1143, %v1143
          %v1160 = vpack.c.b16 %v1144, %v1144
          %v1161 = vpack.c.b16 %v1145, %v1145
          %v1162 = vpack.c.b16 %v1146, %v1146
          %v1163 = vpack.c.b16 %v1147, %v1147
          %v1164 = vpack.c.b16 %v1148, %v1148
          %v1165 = vpack.c.b16 %v1149, %v1149
          %v1166 = vpack.c.b16 %v1150, %v1150
          %v1167 = vpack.c.b16 %v1151, %v1151
          %v1168 = vpack.c.b16 %v1152, %v1152
          %v1169 = vpack.c.b16 %v1153, %v1153
          %v1170 = vpack.c.b16 %v1154, %v1154
          %v1171 = vpack.c.b16 %v1155, %v1155
          %v1172 = vpack.c.b16 %v1156, %v1156
          %v1173 = vpack.c.b16 %v1157, %v1157
          %1190 = vst [vmem:[%s402] sm:$0xf] %v1158
          %1191 = vst [vmem:[%s402 + $0x4] sm:$0xf] %v1159
          %1192 = vst [vmem:[%s402 + $0x8] sm:$0xf] %v1160
          %1193 = vst [vmem:[%s402 + $0xc] sm:$0xf] %v1161
          %1194 = vst [vmem:[%s402 + $0x10] sm:$0xf] %v1162
          %1195 = vst [vmem:[%s402 + $0x14] sm:$0xf] %v1163
          %1196 = vst [vmem:[%s402 + $0x18] sm:$0xf] %v1164
          %1197 = vst [vmem:[%s402 + $0x1c] sm:$0xf] %v1165
          %1198 = vst [vmem:[%s402 + $0x20] sm:$0xf] %v1166
          %1199 = vst [vmem:[%s402 + $0x24] sm:$0xf] %v1167
          %1200 = vst [vmem:[%s402 + $0x28] sm:$0xf] %v1168
          %1201 = vst [vmem:[%s402 + $0x2c] sm:$0xf] %v1169
          %1202 = vst [vmem:[%s402 + $0x30] sm:$0xf] %v1170
          %1203 = vst [vmem:[%s402 + $0x34] sm:$0xf] %v1171
          %1204 = vst [vmem:[%s402 + $0x38] sm:$0xf] %v1172
          %1205 = vst [vmem:[%s402 + $0x3c] sm:$0xf] %v1173
        $region70: #{_lambda_.20} parent=57 // pred_fallthru
          _
        %s1206 = smul.u32 16, %s20
        %p1207 = scmp.lt.s32.totalorder %s1206, 15
        %s1208 = scalar_select %p1207, %s1206, 15
        %p1209 = scmp.lt.s32.totalorder %s21, 0
        %s1210 = scalar_select %p1209, %s21, 0
        %s1211 = sadd.s32 %s1210, %s1208
        %s1212 = smul.addr %s1211, 4
        %s1213 = scalar_lea.vmem %s4, %s1212
        // Predicated region
        $region71: #{_lambda_.20} parent=57 // pred_check
          %p1214 = pneg %p164
        $region72: #{_lambda_.20} parent=57 // pred_check_branch
          %1216 = sbr.rel (%p1214) target = $region74
        $region73: #{_lambda_.20} parent=57 // pred_region
          %s1217 = smul.u32 16, %s20
        $region74: #{_lambda_.20} parent=57 // pred_fallthru
          _
        // Predicated region
        $region75: #{_lambda_.20} parent=57 // pred_check
          %p1218 = pneg %p164
        $region76: #{_lambda_.20} parent=57 // pred_check_branch
          %1220 = sbr.rel (%p1218) target = $region78
        $region77: #{_lambda_.20} parent=57 // pred_region
          %s1221 = smul.u32 16, %s20
          %p1222 = scmp.lt.s32.totalorder %s1221, 15
          %s1223 = scalar_select %p1222, %s1221, 15
          %p1224 = scmp.lt.s32.totalorder %s21, 0
          %s1225 = scalar_select %p1224, %s21, 0
          %s1226 = sadd.s32 %s1225, %s1223
          %s1227 = smul.addr %s1226, 4
          %s1228 = scalar_lea.vmem %s4, %s1227
        $region78: #{_lambda_.20} parent=57 // pred_fallthru
          _
      $region58: #{_lambda_.20} parent=5 // pred_fallthru
        _
      %p1229 = scmp.le.s32.totalorder 2, %s10
      // Predicated region
      $region79: #{_lambda_.20} parent=5 // pred_check
        %p1230 = pneg %p1229
      $region80: #{_lambda_.20} parent=5 // pred_check_branch
        %1232 = sbr.rel (%p1230) target = $region82
      $region81: #{_lambda_.20} parent=5 // pred_region
        %s1233 = ssub.s32 %s10, 2
      $region82: #{_lambda_.20} parent=5 // pred_fallthru
        _
    $region6: #{_lambda_.20} parent=1 // loop_footer
      %s14 = sadd.s32 1, %s10
    $region7: #{_lambda_.20} parent=1 // loop_footer_branch
      %9 = sbr.rel target = $region3
    $region8: #{_lambda_.20} parent=1 // loop_exit
      _

// kernel: _lambda_.24
$region0: #{_lambda_.24}
  #allocation0 [shape = 'u32[]', space=smem, size = 0x4, offset = 0x4, fixed_abs, tag = 'smem constant byte address 0x4 - core index']
  #allocation1 [shape = 'u32[144,128]{1,0:T(1,128)}', space=vmem, size = 0x12000, scoped, tag = 'internal scratch']
  #allocation2 [shape = 'f32[32,128]{1,0:T(8,128)}', space=vmem, size = 0x4000, scoped, tag = 'scratch operand']
  %s0 = inlined_call_operand.vmem [shape: bf16[32,1152], index: 0, kind: input, shape index: {}]
  %s1 = inlined_call_operand.vmem [shape: bf16[1152,128], index: 1, kind: input, shape index: {}]
  %s2 = inlined_call_operand.vmem [shape: f32[1,128], index: 2, kind: input, shape index: {}]
  %s3 = inlined_call_operand.vmem [shape: bf16[32,128], index: 3, kind: output, shape index: {}]
  %s4 = sld [smem:[#allocation0]]
  $region79: #{_lambda_.24} parent=0
    _
  %s6 = ssub.s32 1, %s4
  %s7 = scalar_select 0, %s6, %s4
  $region1: #{_lambda_.24} parent=0
    #allocation3 [shape = 'u8[49152]{0}', space=vmem, size = 0xc000, scoped, tag = 'input window, operand 0']
    loop: start=0, step=1, limit=5
    $region2: #{_lambda_.24} parent=1 // loop_pre_header
      _
    $region3: #{_lambda_.24} parent=1 // loop_header
      %s9 = sphi 0, %s13
      %p10 = scmp.ge.s32.totalorder %s9, 5
      %s16 = sphi 0, %s35
      %s17 = sphi 0, %s31
      %s18 = sphi 0, %s27
      %s19 = sphi 0, %s16
      %s20 = sphi 0, %s17
      %s21 = sphi 0, %s18
      %s22 = sphi 0, %s19
      %s23 = sphi 0, %s20
      %s24 = sphi 0, %s21
      %s40 = sphi 0, %s42
      %s43 = sphi 0, %s40
      %s44 = sphi 0, %s43
      %s60 = sphi 0, %s44
      %s68 = sphi 0, %s70
      %s71 = sphi 0, %s68
      %s72 = sphi 0, %s71
      %s88 = sphi 0, %s72
      %s94 = sphi 0, %s96
      %s97 = sphi 0, %s94
      %s98 = sphi 0, %s97
      %s114 = sphi 0, %s98
      %s122 = sphi 0, %s124
      %s125 = sphi 0, %s122
      %s126 = sphi 0, %s125
      %s142 = sphi 0, %s126
    $region4: #{_lambda_.24} parent=1 // loop_header_branch
      %12 = sbr.rel (%p10) target = $region8
    $region5: #{_lambda_.24} parent=1 // loop_body
      %s14 = ssub.s32 %s9, 1
      %s15 = ssub.s32 %s9, 2
      %s25 = sadd.s32 1, %s18
      %p26 = scmp.ge.s32.totalorder %s25, 3
      %s27 = scalar_select %p26, 0, %s25
      %s28 = sadd.s32 1, %s17
      %s29 = scalar_select %p26, %s28, %s17
      %p30 = scmp.ge.s32.totalorder %s29, 1
      %s31 = scalar_select %p30, 0, %s29
      %s32 = sadd.s32 1, %s16
      %s33 = scalar_select %p30, %s32, %s16
      %p34 = scmp.ge.s32.totalorder %s33, 1
      %s35 = scalar_select %p34, 0, %s33
      %s36 = ssub.s32 %s16, %s35
      %s37 = ssub.s32 %s18, %s27
      %s38 = sor.u32 %s36, %s37
      %p39 = scmp.eq.s32.totalorder %s38, 0
      %s41 = sadd.s32 %s40, 1
      %s42 = scalar_select %p39, %s40, %s41
      %p45 = pneg %p39
      %p46 = scmp.eq.s32.totalorder %s9, 2
      %p47 = por %p45, %p46
      %p48 = scmp.ne.s32.totalorder %s40, %s43
      %p49 = scmp.eq.s32.totalorder %s9, 0
      %p50 = por %p48, %p49
      %p51 = scmp.ne.s32.totalorder %s40, %s43
      %p52 = scmp.eq.s32.totalorder %s14, 2
      %p53 = por %p51, %p52
      %p54 = scmp.ne.s32.totalorder %s43, %s44
      %p55 = scmp.eq.s32.totalorder %s14, 0
      %p56 = por %p54, %p55
      %p57 = scmp.ne.s32.totalorder %s43, %s44
      %p58 = scmp.eq.s32.totalorder %s15, 2
      %p59 = por %p57, %p58
      %p61 = scmp.ne.s32.totalorder %s44, %s60
      %p62 = scmp.eq.s32.totalorder %s15, 0
      %p63 = por %p61, %p62
      %s64 = ssub.s32 %s18, %s27
      %s65 = ssub.s32 %s17, %s31
      %s66 = sor.u32 %s64, %s65
      %p67 = scmp.eq.s32.totalorder %s66, 0
      %s69 = sadd.s32 %s68, 1
      %s70 = scalar_select %p67, %s68, %s69
      %p73 = pneg %p67
      %p74 = scmp.eq.s32.totalorder %s9, 2
      %p75 = por %p73, %p74
      %p76 = scmp.ne.s32.totalorder %s68, %s71
      %p77 = scmp.eq.s32.totalorder %s9, 0
      %p78 = por %p76, %p77
      %p79 = scmp.ne.s32.totalorder %s68, %s71
      %p80 = scmp.eq.s32.totalorder %s14, 2
      %p81 = por %p79, %p80
      %p82 = scmp.ne.s32.totalorder %s71, %s72
      %p83 = scmp.eq.s32.totalorder %s14, 0
      %p84 = por %p82, %p83
      %p85 = scmp.ne.s32.totalorder %s71, %s72
      %p86 = scmp.eq.s32.totalorder %s15, 2
      %p87 = por %p85, %p86
      %p89 = scmp.ne.s32.totalorder %s72, %s88
      %p90 = scmp.eq.s32.totalorder %s15, 0
      %p91 = por %p89, %p90
      %s92 = ssub.s32 %s17, %s31
      %p93 = scmp.eq.s32.totalorder %s92, 0
      %s95 = sadd.s32 %s94, 1
      %s96 = scalar_select %p93, %s94, %s95
      %p99 = pneg %p93
      %p100 = scmp.eq.s32.totalorder %s9, 2
      %p101 = por %p99, %p100
      %p102 = scmp.ne.s32.totalorder %s94, %s97
      %p103 = scmp.eq.s32.totalorder %s9, 0
      %p104 = por %p102, %p103
      %p105 = scmp.ne.s32.totalorder %s94, %s97
      %p106 = scmp.eq.s32.totalorder %s14, 2
      %p107 = por %p105, %p106
      %p108 = scmp.ne.s32.totalorder %s97, %s98
      %p109 = scmp.eq.s32.totalorder %s14, 0
      %p110 = por %p108, %p109
      %p111 = scmp.ne.s32.totalorder %s97, %s98
      %p112 = scmp.eq.s32.totalorder %s15, 2
      %p113 = por %p111, %p112
      %p115 = scmp.ne.s32.totalorder %s98, %s114
      %p116 = scmp.eq.s32.totalorder %s15, 0
      %p117 = por %p115, %p116
      %s118 = ssub.s32 %s16, %s35
      %s119 = ssub.s32 %s17, %s31
      %s120 = sor.u32 %s118, %s119
      %p121 = scmp.eq.s32.totalorder %s120, 0
      %s123 = sadd.s32 %s122, 1
      %s124 = scalar_select %p121, %s122, %s123
      %p127 = pneg %p121
      %p128 = scmp.eq.s32.totalorder %s9, 2
      %p129 = por %p127, %p128
      %p130 = scmp.ne.s32.totalorder %s122, %s125
      %p131 = scmp.eq.s32.totalorder %s9, 0
      %p132 = por %p130, %p131
      %p133 = scmp.ne.s32.totalorder %s122, %s125
      %p134 = scmp.eq.s32.totalorder %s14, 2
      %p135 = por %p133, %p134
      %p136 = scmp.ne.s32.totalorder %s125, %s126
      %p137 = scmp.eq.s32.totalorder %s14, 0
      %p138 = por %p136, %p137
      %p139 = scmp.ne.s32.totalorder %s125, %s126
      %p140 = scmp.eq.s32.totalorder %s15, 2
      %p141 = por %p139, %p140
      %p143 = scmp.ne.s32.totalorder %s126, %s142
      %p144 = scmp.eq.s32.totalorder %s15, 0
      %p145 = por %p143, %p144
      %p146 = scmp.le.s32.totalorder 1, %s9
      %p147 = scmp.lt.s32.totalorder %s9, 4
      %p148 = pnand %p146, %p147
      %p149 = pneg %p148
      // Predicated region
      $region9: #{_lambda_.24} parent=5 // pred_check
        _
      $region10: #{_lambda_.24} parent=5 // pred_check_branch
        %151 = sbr.rel (%p148) target = $region12
      $region11: #{_lambda_.24} parent=5 // pred_region
        %s152 = ssub.s32 %s9, 1
        // Predicated region
        $region13: #{_lambda_.24} parent=11 // pred_check
          %p153 = pneg %p110
        $region14: #{_lambda_.24} parent=11 // pred_check_branch
          %155 = sbr.rel (%p153) target = $region16
        $region15: #{_lambda_.24} parent=11 // pred_region
          %p156 = scmp.lt.s32.totalorder %s20, 0
          %s157 = scalar_select %p156, %s20, 0
          %s158 = scalar_lea.vmem %s2, %s157
        $region16: #{_lambda_.24} parent=11 // pred_fallthru
          _
      $region12: #{_lambda_.24} parent=5 // pred_fallthru
        _
      %p159 = scmp.lt.s32.totalorder %s9, 3
      // Predicated region
      $region17: #{_lambda_.24} parent=5 // pred_check
        %p160 = pneg %p159
      $region18: #{_lambda_.24} parent=5 // pred_check_branch
        %162 = sbr.rel (%p160) target = $region20
      $region19: #{_lambda_.24} parent=5 // pred_region
        // Predicated region
        $region21: #{_lambda_.24} parent=19 // pred_check
          %p163 = pneg %p50
        $region22: #{_lambda_.24} parent=19 // pred_check_branch
          %165 = sbr.rel (%p163) target = $region24
        $region23: #{_lambda_.24} parent=19 // pred_region
          %s166 = sand.u32 %s40, 1
          %s167 = sand.u32 %s40, 1
          %s168 = smul.addr %s167, 48
          %s169 = scalar_lea.vmem [#allocation3], %s168
          %s170 = smul.u32 4, %s16
          %s171 = smul.u32 3, %s18
          %s172 = smul.addr %s170, 9
          %s173 = sadd.s32 %s171, %s172
          %s174 = smul.addr %s173, 4
          %s175 = scalar_lea.vmem %s0, %s174
          // Predicated region
          $region25: #{_lambda_.24} parent=23 // pred_check
            _
          $region26: #{_lambda_.24} parent=23 // pred_check_branch
            %177 = sbr.rel (0) target = $region28
          $region27: #{_lambda_.24} parent=23 // pred_region
            // Predicated region
            $region29: #{_lambda_.24} parent=27 // pred_check
              _
            $region30: #{_lambda_.24} parent=27 // pred_check_branch
              %179 = sbr.rel (0) target = $region32
            $region31: #{_lambda_.24} parent=27 // pred_region
              %s180 = scalar_lea.vmem %s175, 8
              %s181 = scalar_lea.vmem %s169, 8 [#allocation3]
              loop: start=0, step=1, limit=1
              $region33: #{_lambda_.24} parent=31 // loop_pre_header
                _
              $region34: #{_lambda_.24} parent=31 // loop_header
                %s183 = sphi 0, %s187
                %p184 = scmp.ge.s32.totalorder %s183, 1
                %s188 = sphi %s175, %s175
                %s189 = sphi %s169, %s169
              $region35: #{_lambda_.24} parent=31 // loop_header_branch
                %186 = sbr.rel (%p184) target = $region39
              $region36: #{_lambda_.24} parent=31 // loop_body
                %v190 = vld [vmem:[%s188] sm:$0xff]
                %191 = vst [vmem:[%s189] sm:$0xff] %v190
                %v192 = vld [vmem:[%s188 + $0x24] sm:$0xff]
                %193 = vst [vmem:[%s189 + $0xc] sm:$0xff] %v192
                %v194 = vld [vmem:[%s188 + $0x48] sm:$0xff]
                %195 = vst [vmem:[%s189 + $0x18] sm:$0xff] %v194
                %v196 = vld [vmem:[%s188 + $0x6c] sm:$0xff]
                %197 = vst [vmem:[%s189 + $0x24] sm:$0xff] %v196
              $region37: #{_lambda_.24} parent=31 // loop_footer
                %s187 = sadd.s32 1, %s183
              $region38: #{_lambda_.24} parent=31 // loop_footer_branch
                %182 = sbr.rel target = $region34
              $region39: #{_lambda_.24} parent=31 // loop_exit
                _
              loop: start=0, step=1, limit=1
              $region40: #{_lambda_.24} parent=31 // loop_pre_header
                _
              $region41: #{_lambda_.24} parent=31 // loop_header
                %s200 = sphi 0, %s204
                %p201 = scmp.ge.s32.totalorder %s200, 1
                %s205 = sphi %s180, %s180
                %s206 = sphi %s181, %s181
              $region42: #{_lambda_.24} parent=31 // loop_header_branch
                %203 = sbr.rel (%p201) target = $region46
              $region43: #{_lambda_.24} parent=31 // loop_body
                %v207 = vld [vmem:[%s205] sm:$0xf]
                %208 = vst [vmem:[%s206] sm:$0xf] %v207
                %v209 = vld [vmem:[%s205 + $0x24] sm:$0xf]
                %210 = vst [vmem:[%s206 + $0xc] sm:$0xf] %v209
                %v211 = vld [vmem:[%s205 + $0x48] sm:$0xf]
                %212 = vst [vmem:[%s206 + $0x18] sm:$0xf] %v211
                %v213 = vld [vmem:[%s205 + $0x6c] sm:$0xf]
                %214 = vst [vmem:[%s206 + $0x24] sm:$0xf] %v213
              $region44: #{_lambda_.24} parent=31 // loop_footer
                %s204 = sadd.s32 1, %s200
              $region45: #{_lambda_.24} parent=31 // loop_footer_branch
                %199 = sbr.rel target = $region41
              $region46: #{_lambda_.24} parent=31 // loop_exit
                _
            $region32: #{_lambda_.24} parent=27 // pred_fallthru
              _
          $region28: #{_lambda_.24} parent=23 // pred_fallthru
            _
          %215 = vnop
        $region24: #{_lambda_.24} parent=19 // pred_fallthru
          _
        // Predicated region
        $region47: #{_lambda_.24} parent=19 // pred_check
          %p216 = pneg %p78
        $region48: #{_lambda_.24} parent=19 // pred_check_branch
          %218 = sbr.rel (%p216) target = $region50
        $region49: #{_lambda_.24} parent=19 // pred_region
          %s219 = smul.u32 48, %s18
          %p220 = scmp.lt.s32.totalorder %s219, 143
          %s221 = scalar_select %p220, %s219, 143
          %p222 = scmp.lt.s32.totalorder %s17, 0
          %s223 = scalar_select %p222, %s17, 0
          %s224 = sadd.s32 %s223, %s221
          %s225 = smul.addr %s224, 4
          %s226 = scalar_lea.vmem %s1, %s225
          %s227 = smul.u32 48, %s18
        $region50: #{_lambda_.24} parent=19 // pred_fallthru
          _
      $region20: #{_lambda_.24} parent=5 // pred_fallthru
        _
      %p228 = scmp.le.s32.totalorder 1, %s9
      %p229 = scmp.lt.s32.totalorder %s9, 4
      %p230 = pnand %p228, %p229
      %p231 = pneg %p230
      // Predicated region
      $region51: #{_lambda_.24} parent=5 // pred_check
        _
      $region52: #{_lambda_.24} parent=5 // pred_check_branch
        %233 = sbr.rel (%p230) target = $region54
      $region53: #{_lambda_.24} parent=5 // pred_region
        %s234 = ssub.s32 %s9, 1
        %s235 = sand.u32 %s43, 1
        %s236 = sand.u32 %s43, 1
        %s237 = smul.addr %s236, 48
        %s238 = scalar_lea.vmem [#allocation3], %s237
        // Predicated region
        $region55: #{_lambda_.24} parent=53 // pred_check
          %p239 = pneg %p56
        $region56: #{_lambda_.24} parent=53 // pred_check_branch
          %241 = sbr.rel (%p239) target = $region58
        $region57: #{_lambda_.24} parent=53 // pred_region
          _
        $region58: #{_lambda_.24} parent=53 // pred_fallthru
          _
        %s242 = sand.u32 %s43, 1
        %s243 = sand.u32 %s43, 1
        %s244 = smul.addr %s243, 48
        %s245 = scalar_lea.vmem [#allocation3], %s244
        %p246 = pneg %p56
        %p247 = pneg %p53
        %s248 = smul.u32 48, %s21
        %p249 = scmp.lt.s32.totalorder %s248, 143
        %s250 = scalar_select %p249, %s248, 143
        %p251 = scmp.lt.s32.totalorder %s20, 0
        %s252 = scalar_select %p251, %s20, 0
        %s253 = sadd.s32 %s252, %s250
        %s254 = smul.addr %s253, 4
        %s255 = scalar_lea.vmem %s1, %s254
        %p256 = pneg %p84
        %p257 = pneg %p81
        %p258 = scmp.lt.s32.totalorder %s20, 0
        %s259 = scalar_select %p258, %s20, 0
        %s260 = scalar_lea.vmem %s2, %s259
        %p261 = pneg %p110
        %p262 = pneg %p107
        %p263 = pneg %p138
        %p264 = pneg %p135
        %s265 = smul.u32 4, %s19
        %p266 = scmp.lt.s32.totalorder %s265, 3
        %s267 = scalar_select %p266, %s265, 3
        %p268 = scmp.lt.s32.totalorder %s20, 0
        %s269 = scalar_select %p268, %s20, 0
        %s270 = sadd.s32 %s269, %s267
        %s271 = smul.addr %s270, 4
        %s272 = scalar_lea.vmem %s3, %s271
        %s273 = smul.u32 4, %s19
        %s274 = smul.u32 3, %s21
        %s275 = smul.u32 48, %s21
        %p276 = scmp.lt.s32.totalorder %s275, 143
        %s277 = scalar_select %p276, %s275, 143
        %p278 = scmp.lt.s32.totalorder %s20, 0
        %s279 = scalar_select %p278, %s20, 0
        %s280 = sadd.s32 %s279, %s277
        %s281 = smul.addr %s280, 4
        %s282 = scalar_lea.vmem %s1, %s281
        %s283 = smul.u32 48, %s21
        %p284 = scmp.lt.s32.totalorder %s20, 0
        %s285 = scalar_select %p284, %s20, 0
        %s286 = scalar_lea.vmem %s2, %s285
        %s287 = smul.u32 4, %s19
        %p288 = scmp.lt.s32.totalorder %s287, 3
        %s289 = scalar_select %p288, %s287, 3
        %p290 = scmp.lt.s32.totalorder %s20, 0
        %s291 = scalar_select %p290, %s20, 0
        %s292 = sadd.s32 %s291, %s289
        %s293 = smul.addr %s292, 4
        %s294 = scalar_lea.vmem %s3, %s293
        %s295 = smul.u32 4, %s19
        %p297 = scmp.eq.s32.totalorder %s21, 0
        // Predicated region
        $region59: #{_lambda_.24} parent=53 // pred_check
          %p298 = pneg %p297
        $region60: #{_lambda_.24} parent=53 // pred_check_branch
          %300 = sbr.rel (%p298) target = $region62
        $region61: #{_lambda_.24} parent=53 // pred_region
          %301 = vst [vmem:[#allocation2] sm:$0xff] 0.0
          %302 = vst [vmem:[#allocation2 + $0x8] sm:$0xff] 0.0
          %303 = vst [vmem:[#allocation2 + $0x10] sm:$0xff] 0.0
          %304 = vst [vmem:[#allocation2 + $0x18] sm:$0xff] 0.0
        $region62: #{_lambda_.24} parent=53 // pred_fallthru
          _
        %v305 = vld [vmem:[#allocation2] sm:$0xff]
        %v306 = vld [vmem:[#allocation2 + $0x8] sm:$0xff]
        %v307 = vld [vmem:[#allocation2 + $0x10] sm:$0xff]
        %v308 = vld [vmem:[#allocation2 + $0x18] sm:$0xff]
        %v309 = vld [vmem:[%s238] sm:$0xff]
        %v310 = vld [vmem:[%s238 + $0x8] sm:$0xf]
        %v311 = vld [vmem:[%s238 + $0xc] sm:$0xff]
        %v312 = vld [vmem:[%s238 + $0x14] sm:$0xf]
        %v313 = vld [vmem:[%s238 + $0x18] sm:$0xff]
        %v314 = vld [vmem:[%s238 + $0x20] sm:$0xf]
        %v315 = vld [vmem:[%s238 + $0x24] sm:$0xff]
        %v316 = vld [vmem:[%s238 + $0x2c] sm:$0xf]
        %v317 = vld [vmem:[%s282] sm:$0xf]
        %v318 = vld [vmem:[%s282 + $0x4] sm:$0xf]
        %v319 = vld [vmem:[%s282 + $0x8] sm:$0xf]
        %v320 = vld [vmem:[%s282 + $0xc] sm:$0xf]
        %v321 = vld [vmem:[%s282 + $0x10] sm:$0xf]
        %v322 = vld [vmem:[%s282 + $0x14] sm:$0xf]
        %v323 = vld [vmem:[%s282 + $0x18] sm:$0xf]
        %v324 = vld [vmem:[%s282 + $0x1c] sm:$0xf]
        %v325 = vld [vmem:[%s282 + $0x20] sm:$0xf]
        %v326 = vld [vmem:[%s282 + $0x24] sm:$0xf]
        %v327 = vld [vmem:[%s282 + $0x28] sm:$0xf]
        %v328 = vld [vmem:[%s282 + $0x2c] sm:$0xf]
        %v329 = vld [vmem:[%s282 + $0x30] sm:$0xf]
        %v330 = vld [vmem:[%s282 + $0x34] sm:$0xf]
        %v331 = vld [vmem:[%s282 + $0x38] sm:$0xf]
        %v332 = vld [vmem:[%s282 + $0x3c] sm:$0xf]
        %v333 = vld [vmem:[%s282 + $0x40] sm:$0xf]
        %v334 = vld [vmem:[%s282 + $0x44] sm:$0xf]
        %v335 = vld [vmem:[%s282 + $0x48] sm:$0xf]
        %v336 = vld [vmem:[%s282 + $0x4c] sm:$0xf]
        %v337 = vld [vmem:[%s282 + $0x50] sm:$0xf]
        %v338 = vld [vmem:[%s282 + $0x54] sm:$0xf]
        %v339 = vld [vmem:[%s282 + $0x58] sm:$0xf]
        %v340 = vld [vmem:[%s282 + $0x5c] sm:$0xf]
        %v341 = vld [vmem:[%s282 + $0x60] sm:$0xf]
        %v342 = vld [vmem:[%s282 + $0x64] sm:$0xf]
        %v343 = vld [vmem:[%s282 + $0x68] sm:$0xf]
        %v344 = vld [vmem:[%s282 + $0x6c] sm:$0xf]
        %v345 = vld [vmem:[%s282 + $0x70] sm:$0xf]
        %v346 = vld [vmem:[%s282 + $0x74] sm:$0xf]
        %v347 = vld [vmem:[%s282 + $0x78] sm:$0xf]
        %v348 = vld [vmem:[%s282 + $0x7c] sm:$0xf]
        %v349 = vld [vmem:[%s282 + $0x80] sm:$0xf]
        %v350 = vld [vmem:[%s282 + $0x84] sm:$0xf]
        %v351 = vld [vmem:[%s282 + $0x88] sm:$0xf]
        %v352 = vld [vmem:[%s282 + $0x8c] sm:$0xf]
        %v353 = vld [vmem:[%s282 + $0x90] sm:$0xf]
        %v354 = vld [vmem:[%s282 + $0x94] sm:$0xf]
        %v355 = vld [vmem:[%s282 + $0x98] sm:$0xf]
        %v356 = vld [vmem:[%s282 + $0x9c] sm:$0xf]
        %v357 = vld [vmem:[%s282 + $0xa0] sm:$0xf]
        %v358 = vld [vmem:[%s282 + $0xa4] sm:$0xf]
        %v359 = vld [vmem:[%s282 + $0xa8] sm:$0xf]
        %v360 = vld [vmem:[%s282 + $0xac] sm:$0xf]
        %v361 = vld [vmem:[%s282 + $0xb0] sm:$0xf]
        %v362 = vld [vmem:[%s282 + $0xb4] sm:$0xf]
        %v363 = vld [vmem:[%s282 + $0xb8] sm:$0xf]
        %v364 = vld [vmem:[%s282 + $0xbc] sm:$0xf]
        %v373 = vunpack.c.l.b16 %v309
        %v374 = vunpack.c.h.b16 %v309
        %v375 = vunpack.c.l.b16 %v310
        %v376 = vunpack.c.l.b16 %v311
        %v377 = vunpack.c.h.b16 %v311
        %v378 = vunpack.c.l.b16 %v312
        %v379 = vunpack.c.l.b16 %v313
        %v380 = vunpack.c.h.b16 %v313
        %v381 = vunpack.c.l.b16 %v314
        %v382 = vunpack.c.l.b16 %v315
        %v383 = vunpack.c.h.b16 %v315
        %v384 = vunpack.c.l.b16 %v316
        %v385 = vpack.c.b16 %v376, %v373
        %v386 = vpack.c.b16 %v377, %v374
        %v387 = vpack.c.b16 %v378, %v375
        %v388 = vpack.c.b16 %v382, %v379
        %v389 = vpack.c.b16 %v383, %v380
        %v390 = vpack.c.b16 %v384, %v381
        %v445 = vunpack.c.l.b16 %v317
        %v446 = vunpack.c.l.b16 %v318
        %v447 = vunpack.c.l.b16 %v319
        %v448 = vunpack.c.l.b16 %v320
        %v449 = vunpack.c.l.b16 %v321
        %v450 = vunpack.c.l.b16 %v322
        %v451 = vunpack.c.l.b16 %v323
        %v452 = vunpack.c.l.b16 %v324
        %v453 = vunpack.c.l.b16 %v325
        %v454 = vunpack.c.l.b16 %v326
        %v455 = vunpack.c.l.b16 %v327
        %v456 = vunpack.c.l.b16 %v328
        %v457 = vunpack.c.l.b16 %v329
        %v458 = vunpack.c.l.b16 %v330
        %v459 = vunpack.c.l.b16 %v331
        %v460 = vunpack.c.l.b16 %v332
        %v461 = vunpack.c.l.b16 %v333
        %v462 = vunpack.c.l.b16 %v334
        %v463 = vunpack.c.l.b16 %v335
        %v464 = vunpack.c.l.b16 %v336
        %v465 = vunpack.c.l.b16 %v337
        %v466 = vunpack.c.l.b16 %v338
        %v467 = vunpack.c.l.b16 %v339
        %v468 = vunpack.c.l.b16 %v340
        %v469 = vunpack.c.l.b16 %v341
        %v470 = vunpack.c.l.b16 %v342
        %v471 = vunpack.c.l.b16 %v343
        %v472 = vunpack.c.l.b16 %v344
        %v473 = vunpack.c.l.b16 %v345
        %v474 = vunpack.c.l.b16 %v346
        %v475 = vunpack.c.l.b16 %v347
        %v476 = vunpack.c.l.b16 %v348
        %v477 = vunpack.c.l.b16 %v349
        %v478 = vunpack.c.l.b16 %v350
        %v479 = vunpack.c.l.b16 %v351
        %v480 = vunpack.c.l.b16 %v352
        %v481 = vunpack.c.l.b16 %v353
        %v482 = vunpack.c.l.b16 %v354
        %v483 = vunpack.c.l.b16 %v355
        %v484 = vunpack.c.l.b16 %v356
        %v485 = vunpack.c.l.b16 %v357
        %v486 = vunpack.c.l.b16 %v358
        %v487 = vunpack.c.l.b16 %v359
        %v488 = vunpack.c.l.b16 %v360
        %v489 = vunpack.c.l.b16 %v361
        %v490 = vunpack.c.l.b16 %v362
        %v491 = vunpack.c.l.b16 %v363
        %v492 = vunpack.c.l.b16 %v364
        %v493 = vpack.c.b16 %v446, %v445
        %v494 = vpack.c.b16 %v448, %v447
        %v495 = vpack.c.b16 %v450, %v449
        %v496 = vpack.c.b16 %v452, %v451
        %v497 = vpack.c.b16 %v454, %v453
        %v498 = vpack.c.b16 %v456, %v455
        %v499 = vpack.c.b16 %v458, %v457
        %v500 = vpack.c.b16 %v460, %v459
        %v501 = vpack.c.b16 %v462, %v461
        %v502 = vpack.c.b16 %v464, %v463
        %v503 = vpack.c.b16 %v466, %v465
        %v504 = vpack.c.b16 %v468, %v467
        %v505 = vpack.c.b16 %v470, %v469
        %v506 = vpack.c.b16 %v472, %v471
        %v507 = vpack.c.b16 %v474, %v473
        %v508 = vpack.c.b16 %v476, %v475
        %v509 = vpack.c.b16 %v478, %v477
        %v510 = vpack.c.b16 %v480, %v479
        %v511 = vpack.c.b16 %v482, %v481
        %v512 = vpack.c.b16 %v484, %v483
        %v513 = vpack.c.b16 %v486, %v485
        %v514 = vpack.c.b16 %v488, %v487
        %v515 = vpack.c.b16 %v490, %v489
        %v516 = vpack.c.b16 %v492, %v491
        %541 = vmatprep.subr.bf16.mxu0 0
        %542 = vmatpush1.bf16.msra.mxu0 %v493
        %543 = vmatprep.subr.bf16.mxu0 0
        %544 = vmatpush1.bf16.msra.mxu0 %v494
        %545 = vmatprep.subr.bf16.mxu0 0
        %546 = vmatpush1.bf16.msra.mxu0 %v495
        %547 = vmatprep.subr.bf16.mxu0 0
        %548 = vmatpush1.bf16.msra.mxu0 %v496
        %549 = vmatprep.subr.bf16.mxu0 0
        %550 = vmatpush1.bf16.msra.mxu0 %v497
        %551 = vmatprep.subr.bf16.mxu0 0
        %552 = vmatpush1.bf16.msra.mxu0 %v498
        %553 = vmatprep.subr.bf16.mxu0 0
        %554 = vmatpush1.bf16.msra.mxu0 %v499
        %555 = vmatprep.subr.bf16.mxu0 0
        %556 = vmatpush1.bf16.msra.mxu0 %v500
        %557 = vmatprep.subr.bf16.mxu0 0
        %558 = vmatpush1.bf16.msra.mxu0 %v501
        %559 = vmatprep.subr.bf16.mxu0 0
        %560 = vmatpush1.bf16.msra.mxu0 %v502
        %561 = vmatprep.subr.bf16.mxu0 0
        %562 = vmatpush1.bf16.msra.mxu0 %v503
        %563 = vmatprep.subr.bf16.mxu0 0
        %564 = vmatpush1.bf16.msra.mxu0 %v504
        %565 = vmatprep.subr.bf16.mxu0 0
        %566 = vmatpush1.bf16.msra.mxu0 %v505
        %567 = vmatprep.subr.bf16.mxu0 0
        %568 = vmatpush1.bf16.msra.mxu0 %v506
        %569 = vmatprep.subr.bf16.mxu0 0
        %570 = vmatpush1.bf16.msra.mxu0 %v507
        %571 = vmatprep.subr.bf16.mxu0 0
        %572 = vmatpush1.bf16.msra.mxu0 %v508
        %573 = vmatprep.mubr.bf16.mxu0 %v386
        %574 = vmatmul.mubr.bf16.gmra.mrb[0].mxu0 %v385
        %v575 = vpop.f32.mrb[0].mxu0
        %v576 = vadd.f32 0.0, %v575
        %v577 = vpop.f32.mrb[0].mxu0
        %v578 = vpop.f32.mrb[0].mxu0
        %v579 = vadd.f32 0.0, %v578
        %v580 = vpop.f32.mrb[0].mxu0
        %581 = vmatprep.mubr.bf16.mxu0 %v389
        %582 = vmatmul.mubr.bf16.gmra.mrb[0].mxu0 %v388
        %v583 = vpop.f32.mrb[0].mxu0
        %v584 = vadd.f32 0.0, %v583
        %v585 = vpop.f32.mrb[0].mxu0
        %v586 = vpop.f32.mrb[0].mxu0
        %v587 = vadd.f32 0.0, %v586
        %v588 = vpop.f32.mrb[0].mxu0
        %589 = vdwg.mxu0
        %590 = vmatprep.subr.bf16.mxu0 0
        %591 = vmatpush1.bf16.msra.mxu0 %v509
        %592 = vmatprep.subr.bf16.mxu0 0
        %593 = vmatpush1.bf16.msra.mxu0 %v510
        %594 = vmatprep.subr.bf16.mxu0 0
        %595 = vmatpush1.bf16.msra.mxu0 %v511
        %596 = vmatprep.subr.bf16.mxu0 0
        %597 = vmatpush1.bf16.msra.mxu0 %v512
        %598 = vmatprep.subr.bf16.mxu0 0
        %599 = vmatpush1.bf16.msra.mxu0 %v513
        %600 = vmatprep.subr.bf16.mxu0 0
        %601 = vmatpush1.bf16.msra.mxu0 %v514
        %602 = vmatprep.subr.bf16.mxu0 0
        %603 = vmatpush1.bf16.msra.mxu0 %v515
        %604 = vmatprep.subr.bf16.mxu0 0
        %605 = vmatpush1.bf16.msra.mxu0 %v516
        %606 = vmatprep.subr.bf16.mxu0 0
        %607 = vmatpush1.bf16.msra.mxu0 0
        %608 = vmatprep.subr.bf16.mxu0 0
        %609 = vmatpush1.bf16.msra.mxu0 0
        %610 = vmatprep.subr.bf16.mxu0 0
        %611 = vmatpush1.bf16.msra.mxu0 0
        %612 = vmatprep.subr.bf16.mxu0 0
        %613 = vmatpush1.bf16.msra.mxu0 0
        %614 = vmatprep.subr.bf16.mxu0 0
        %615 = vmatpush1.bf16.msra.mxu0 0
        %616 = vmatprep.subr.bf16.mxu0 0
        %617 = vmatpush1.bf16.msra.mxu0 0
        %618 = vmatprep.subr.bf16.mxu0 0
        %619 = vmatpush1.bf16.msra.mxu0 0
        %620 = vmatprep.subr.bf16.mxu0 0
        %621 = vmatpush1.bf16.msra.mxu0 0
        %622 = vmatprep.mubr.bf16.mxu0 0
        %623 = vmatmul.mubr.bf16.gmra.mrb[0].mxu0 %v387
        %v624 = vpop.f32.mrb[0].mxu0
        %v625 = vadd.f32 %v576, %v624
        %v626 = vpop.f32.mrb[0].mxu0
        %v627 = vpop.f32.mrb[0].mxu0
        %v628 = vadd.f32 %v579, %v627
        %v629 = vpop.f32.mrb[0].mxu0
        %630 = vmatprep.mubr.bf16.mxu0 0
        %631 = vmatmul.mubr.bf16.gmra.mrb[0].mxu0 %v390
        %v632 = vpop.f32.mrb[0].mxu0
        %v633 = vadd.f32 %v584, %v632
        %v634 = vpop.f32.mrb[0].mxu0
        %v635 = vpop.f32.mrb[0].mxu0
        %v636 = vadd.f32 %v587, %v635
        %v637 = vpop.f32.mrb[0].mxu0
        %638 = vdwg.mxu0
        %v639 = vadd.f32 %v305, %v625
        %v640 = vadd.f32 %v306, %v628
        %v641 = vadd.f32 %v307, %v633
        %v642 = vadd.f32 %v308, %v636
        %643 = vst [vmem:[#allocation2] sm:$0xff] %v639
        %644 = vst [vmem:[#allocation2 + $0x8] sm:$0xff] %v640
        %645 = vst [vmem:[#allocation2 + $0x10] sm:$0xff] %v641
        %646 = vst [vmem:[#allocation2 + $0x18] sm:$0xff] %v642
        %p647 = scmp.eq.s32.totalorder %s21, 2
        // Predicated region
        $region63: #{_lambda_.24} parent=53 // pred_check
          %p648 = pneg %p647
        $region64: #{_lambda_.24} parent=53 // pred_check_branch
          %650 = sbr.rel (%p648) target = $region66
        $region65: #{_lambda_.24} parent=53 // pred_region
          %v651 = vld [vmem:[#allocation2] sm:$0xff]
          %v652 = vld [vmem:[#allocation2 + $0x8] sm:$0xff]
          %v653 = vld [vmem:[#allocation2 + $0x10] sm:$0xff]
          %v654 = vld [vmem:[#allocation2 + $0x18] sm:$0xff]
          %v655 = vld [vmem:[%s286] sm:$0x1]
          %v657 = vlaneseq
          %v658 = vshrl.u32 %v657, 7
          %v659 = vsub.s32 0, %v658
          %v660 = vrot.slane %v655, %v659
          %v662 = vadd.f32 %v651, %v660
          %v663 = vadd.f32 %v652, %v660
          %v664 = vadd.f32 %v653, %v660
          %v665 = vadd.f32 %v654, %v660
          %v666 = vmax.f32 %v662, 0.0
          %v667 = vmax.f32 %v663, 0.0
          %v668 = vmax.f32 %v664, 0.0
          %v669 = vmax.f32 %v665, 0.0
          %v670 = vpack.c.bf16 %v667, %v666
          %v671 = vpack.c.bf16 %v669, %v668
          %v674 = vunpack.c.l.b16 %v670
          %v675 = vunpack.c.h.b16 %v670
          %v676 = vunpack.c.l.b16 %v671
          %v677 = vunpack.c.h.b16 %v671
          %v678 = vpack.c.b16 %v674, %v674
          %v679 = vpack.c.b16 %v675, %v675
          %v680 = vpack.c.b16 %v676, %v676
          %v681 = vpack.c.b16 %v677, %v677
          %686 = vst [vmem:[%s294] sm:$0xf] %v678
          %687 = vst [vmem:[%s294 + $0x4] sm:$0xf] %v679
          %688 = vst [vmem:[%s294 + $0x8] sm:$0xf] %v680
          %689 = vst [vmem:[%s294 + $0xc] sm:$0xf] %v681
        $region66: #{_lambda_.24} parent=53 // pred_fallthru
          _
        %s690 = smul.u32 4, %s19
        %p691 = scmp.lt.s32.totalorder %s690, 3
        %s692 = scalar_select %p691, %s690, 3
        %p693 = scmp.lt.s32.totalorder %s20, 0
        %s694 = scalar_select %p693, %s20, 0
        %s695 = sadd.s32 %s694, %s692
        %s696 = smul.addr %s695, 4
        %s697 = scalar_lea.vmem %s3, %s696
        // Predicated region
        $region67: #{_lambda_.24} parent=53 // pred_check
          %p698 = pneg %p135
        $region68: #{_lambda_.24} parent=53 // pred_check_branch
          %700 = sbr.rel (%p698) target = $region70
        $region69: #{_lambda_.24} parent=53 // pred_region
          %s701 = smul.u32 4, %s19
        $region70: #{_lambda_.24} parent=53 // pred_fallthru
          _
        // Predicated region
        $region71: #{_lambda_.24} parent=53 // pred_check
          %p702 = pneg %p135
        $region72: #{_lambda_.24} parent=53 // pred_check_branch
          %704 = sbr.rel (%p702) target = $region74
        $region73: #{_lambda_.24} parent=53 // pred_region
          %s705 = smul.u32 4, %s19
          %p706 = scmp.lt.s32.totalorder %s705, 3
          %s707 = scalar_select %p706, %s705, 3
          %p708 = scmp.lt.s32.totalorder %s20, 0
          %s709 = scalar_select %p708, %s20, 0
          %s710 = sadd.s32 %s709, %s707
          %s711 = smul.addr %s710, 4
          %s712 = scalar_lea.vmem %s3, %s711
        $region74: #{_lambda_.24} parent=53 // pred_fallthru
          _
      $region54: #{_lambda_.24} parent=5 // pred_fallthru
        _
      %p713 = scmp.le.s32.totalorder 2, %s9
      // Predicated region
      $region75: #{_lambda_.24} parent=5 // pred_check
        %p714 = pneg %p713
      $region76: #{_lambda_.24} parent=5 // pred_check_branch
        %716 = sbr.rel (%p714) target = $region78
      $region77: #{_lambda_.24} parent=5 // pred_region
        %s717 = ssub.s32 %s9, 2
      $region78: #{_lambda_.24} parent=5 // pred_fallthru
        _
    $region6: #{_lambda_.24} parent=1 // loop_footer
      %s13 = sadd.s32 1, %s9
    $region7: #{_lambda_.24} parent=1 // loop_footer_branch
      %8 = sbr.rel target = $region3
    $region8: #{_lambda_.24} parent=1 // loop_exit
      _

// kernel: _lambda_.25
$region0: #{_lambda_.25}
  #allocation0 [shape = 'u32[]', space=smem, size = 0x4, offset = 0x4, fixed_abs, tag = 'smem constant byte address 0x4 - core index']
  #allocation1 [shape = 'u32[144,128]{1,0:T(1,128)}', space=vmem, size = 0x12000, scoped, tag = 'internal scratch']
  #allocation2 [shape = 'f32[32,128]{1,0:T(8,128)}', space=vmem, size = 0x4000, scoped, tag = 'scratch operand']
  %s0 = inlined_call_operand.vmem [shape: bf16[32,1152], index: 0, kind: input, shape index: {}]
  %s1 = inlined_call_operand.vmem [shape: bf16[1152,128], index: 1, kind: input, shape index: {}]
  %s2 = inlined_call_operand.vmem [shape: f32[1,128], index: 2, kind: input, shape index: {}]
  %s3 = inlined_call_operand.vmem [shape: bf16[32,128], index: 3, kind: input, shape index: {}]
  %s4 = inlined_call_operand.vmem [shape: bf16[32,128], index: 4, kind: output, shape index: {}]
  %s5 = sld [smem:[#allocation0]]
  $region83: #{_lambda_.25} parent=0
    _
  %s7 = ssub.s32 1, %s5
  %s8 = scalar_select 0, %s7, %s5
  $region1: #{_lambda_.25} parent=0
    #allocation3 [shape = 'u8[49152]{0}', space=vmem, size = 0xc000, scoped, tag = 'input window, operand 0']
    loop: start=0, step=1, limit=5
    $region2: #{_lambda_.25} parent=1 // loop_pre_header
      _
    $region3: #{_lambda_.25} parent=1 // loop_header
      %s10 = sphi 0, %s14
      %p11 = scmp.ge.s32.totalorder %s10, 5
      %s17 = sphi 0, %s36
      %s18 = sphi 0, %s32
      %s19 = sphi 0, %s28
      %s20 = sphi 0, %s17
      %s21 = sphi 0, %s18
      %s22 = sphi 0, %s19
      %s23 = sphi 0, %s20
      %s24 = sphi 0, %s21
      %s25 = sphi 0, %s22
      %s41 = sphi 0, %s43
      %s44 = sphi 0, %s41
      %s45 = sphi 0, %s44
      %s61 = sphi 0, %s45
      %s69 = sphi 0, %s71
      %s72 = sphi 0, %s69
      %s73 = sphi 0, %s72
      %s89 = sphi 0, %s73
      %s95 = sphi 0, %s97
      %s98 = sphi 0, %s95
      %s99 = sphi 0, %s98
      %s115 = sphi 0, %s99
      %s123 = sphi 0, %s125
      %s126 = sphi 0, %s123
      %s127 = sphi 0, %s126
      %s143 = sphi 0, %s127
      %s151 = sphi 0, %s153
      %s154 = sphi 0, %s151
      %s155 = sphi 0, %s154
      %s171 = sphi 0, %s155
    $region4: #{_lambda_.25} parent=1 // loop_header_branch
      %13 = sbr.rel (%p11) target = $region8
    $region5: #{_lambda_.25} parent=1 // loop_body
      %s15 = ssub.s32 %s10, 1
      %s16 = ssub.s32 %s10, 2
      %s26 = sadd.s32 1, %s19
      %p27 = scmp.ge.s32.totalorder %s26, 3
      %s28 = scalar_select %p27, 0, %s26
      %s29 = sadd.s32 1, %s18
      %s30 = scalar_select %p27, %s29, %s18
      %p31 = scmp.ge.s32.totalorder %s30, 1
      %s32 = scalar_select %p31, 0, %s30
      %s33 = sadd.s32 1, %s17
      %s34 = scalar_select %p31, %s33, %s17
      %p35 = scmp.ge.s32.totalorder %s34, 1
      %s36 = scalar_select %p35, 0, %s34
      %s37 = ssub.s32 %s17, %s36
      %s38 = ssub.s32 %s19, %s28
      %s39 = sor.u32 %s37, %s38
      %p40 = scmp.eq.s32.totalorder %s39, 0
      %s42 = sadd.s32 %s41, 1
      %s43 = scalar_select %p40, %s41, %s42
      %p46 = pneg %p40
      %p47 = scmp.eq.s32.totalorder %s10, 2
      %p48 = por %p46, %p47
      %p49 = scmp.ne.s32.totalorder %s41, %s44
      %p50 = scmp.eq.s32.totalorder %s10, 0
      %p51 = por %p49, %p50
      %p52 = scmp.ne.s32.totalorder %s41, %s44
      %p53 = scmp.eq.s32.totalorder %s15, 2
      %p54 = por %p52, %p53
      %p55 = scmp.ne.s32.totalorder %s44, %s45
      %p56 = scmp.eq.s32.totalorder %s15, 0
      %p57 = por %p55, %p56
      %p58 = scmp.ne.s32.totalorder %s44, %s45
      %p59 = scmp.eq.s32.totalorder %s16, 2
      %p60 = por %p58, %p59
      %p62 = scmp.ne.s32.totalorder %s45, %s61
      %p63 = scmp.eq.s32.totalorder %s16, 0
      %p64 = por %p62, %p63
      %s65 = ssub.s32 %s19, %s28
      %s66 = ssub.s32 %s18, %s32
      %s67 = sor.u32 %s65, %s66
      %p68 = scmp.eq.s32.totalorder %s67, 0
      %s70 = sadd.s32 %s69, 1
      %s71 = scalar_select %p68, %s69, %s70
      %p74 = pneg %p68
      %p75 = scmp.eq.s32.totalorder %s10, 2
      %p76 = por %p74, %p75
      %p77 = scmp.ne.s32.totalorder %s69, %s72
      %p78 = scmp.eq.s32.totalorder %s10, 0
      %p79 = por %p77, %p78
      %p80 = scmp.ne.s32.totalorder %s69, %s72
      %p81 = scmp.eq.s32.totalorder %s15, 2
      %p82 = por %p80, %p81
      %p83 = scmp.ne.s32.totalorder %s72, %s73
      %p84 = scmp.eq.s32.totalorder %s15, 0
      %p85 = por %p83, %p84
      %p86 = scmp.ne.s32.totalorder %s72, %s73
      %p87 = scmp.eq.s32.totalorder %s16, 2
      %p88 = por %p86, %p87
      %p90 = scmp.ne.s32.totalorder %s73, %s89
      %p91 = scmp.eq.s32.totalorder %s16, 0
      %p92 = por %p90, %p91
      %s93 = ssub.s32 %s18, %s32
      %p94 = scmp.eq.s32.totalorder %s93, 0
      %s96 = sadd.s32 %s95, 1
      %s97 = scalar_select %p94, %s95, %s96
      %p100 = pneg %p94
      %p101 = scmp.eq.s32.totalorder %s10, 2
      %p102 = por %p100, %p101
      %p103 = scmp.ne.s32.totalorder %s95, %s98
      %p104 = scmp.eq.s32.totalorder %s10, 0
      %p105 = por %p103, %p104
      %p106 = scmp.ne.s32.totalorder %s95, %s98
      %p107 = scmp.eq.s32.totalorder %s15, 2
      %p108 = por %p106, %p107
      %p109 = scmp.ne.s32.totalorder %s98, %s99
      %p110 = scmp.eq.s32.totalorder %s15, 0
      %p111 = por %p109, %p110
      %p112 = scmp.ne.s32.totalorder %s98, %s99
      %p113 = scmp.eq.s32.totalorder %s16, 2
      %p114 = por %p112, %p113
      %p116 = scmp.ne.s32.totalorder %s99, %s115
      %p117 = scmp.eq.s32.totalorder %s16, 0
      %p118 = por %p116, %p117
      %s119 = ssub.s32 %s17, %s36
      %s120 = ssub.s32 %s18, %s32
      %s121 = sor.u32 %s119, %s120
      %p122 = scmp.eq.s32.totalorder %s121, 0
      %s124 = sadd.s32 %s123, 1
      %s125 = scalar_select %p122, %s123, %s124
      %p128 = pneg %p122
      %p129 = scmp.eq.s32.totalorder %s10, 2
      %p130 = por %p128, %p129
      %p131 = scmp.ne.s32.totalorder %s123, %s126
      %p132 = scmp.eq.s32.totalorder %s10, 0
      %p133 = por %p131, %p132
      %p134 = scmp.ne.s32.totalorder %s123, %s126
      %p135 = scmp.eq.s32.totalorder %s15, 2
      %p136 = por %p134, %p135
      %p137 = scmp.ne.s32.totalorder %s126, %s127
      %p138 = scmp.eq.s32.totalorder %s15, 0
      %p139 = por %p137, %p138
      %p140 = scmp.ne.s32.totalorder %s126, %s127
      %p141 = scmp.eq.s32.totalorder %s16, 2
      %p142 = por %p140, %p141
      %p144 = scmp.ne.s32.totalorder %s127, %s143
      %p145 = scmp.eq.s32.totalorder %s16, 0
      %p146 = por %p144, %p145
      %s147 = ssub.s32 %s17, %s36
      %s148 = ssub.s32 %s18, %s32
      %s149 = sor.u32 %s147, %s148
      %p150 = scmp.eq.s32.totalorder %s149, 0
      %s152 = sadd.s32 %s151, 1
      %s153 = scalar_select %p150, %s151, %s152
      %p156 = pneg %p150
      %p157 = scmp.eq.s32.totalorder %s10, 2
      %p158 = por %p156, %p157
      %p159 = scmp.ne.s32.totalorder %s151, %s154
      %p160 = scmp.eq.s32.totalorder %s10, 0
      %p161 = por %p159, %p160
      %p162 = scmp.ne.s32.totalorder %s151, %s154
      %p163 = scmp.eq.s32.totalorder %s15, 2
      %p164 = por %p162, %p163
      %p165 = scmp.ne.s32.totalorder %s154, %s155
      %p166 = scmp.eq.s32.totalorder %s15, 0
      %p167 = por %p165, %p166
      %p168 = scmp.ne.s32.totalorder %s154, %s155
      %p169 = scmp.eq.s32.totalorder %s16, 2
      %p170 = por %p168, %p169
      %p172 = scmp.ne.s32.totalorder %s155, %s171
      %p173 = scmp.eq.s32.totalorder %s16, 0
      %p174 = por %p172, %p173
      %p175 = scmp.le.s32.totalorder 1, %s10
      %p176 = scmp.lt.s32.totalorder %s10, 4
      %p177 = pnand %p175, %p176
      %p178 = pneg %p177
      // Predicated region
      $region9: #{_lambda_.25} parent=5 // pred_check
        _
      $region10: #{_lambda_.25} parent=5 // pred_check_branch
        %180 = sbr.rel (%p177) target = $region12
      $region11: #{_lambda_.25} parent=5 // pred_region
        %s181 = ssub.s32 %s10, 1
        // Predicated region
        $region13: #{_lambda_.25} parent=11 // pred_check
          %p182 = pneg %p111
        $region14: #{_lambda_.25} parent=11 // pred_check_branch
          %184 = sbr.rel (%p182) target = $region16
        $region15: #{_lambda_.25} parent=11 // pred_region
          %p185 = scmp.lt.s32.totalorder %s21, 0
          %s186 = scalar_select %p185, %s21, 0
          %s187 = scalar_lea.vmem %s2, %s186
        $region16: #{_lambda_.25} parent=11 // pred_fallthru
          _
        // Predicated region
        $region17: #{_lambda_.25} parent=11 // pred_check
          %p188 = pneg %p139
        $region18: #{_lambda_.25} parent=11 // pred_check_branch
          %190 = sbr.rel (%p188) target = $region20
        $region19: #{_lambda_.25} parent=11 // pred_region
          %s191 = smul.u32 4, %s20
          %p192 = scmp.lt.s32.totalorder %s191, 3
          %s193 = scalar_select %p192, %s191, 3
          %p194 = scmp.lt.s32.totalorder %s21, 0
          %s195 = scalar_select %p194, %s21, 0
          %s196 = sadd.s32 %s195, %s193
          %s197 = smul.addr %s196, 4
          %s198 = scalar_lea.vmem %s3, %s197
          %s199 = smul.u32 4, %s20
        $region20: #{_lambda_.25} parent=11 // pred_fallthru
          _
      $region12: #{_lambda_.25} parent=5 // pred_fallthru
        _
      %p200 = scmp.lt.s32.totalorder %s10, 3
      // Predicated region
      $region21: #{_lambda_.25} parent=5 // pred_check
        %p201 = pneg %p200
      $region22: #{_lambda_.25} parent=5 // pred_check_branch
        %203 = sbr.rel (%p201) target = $region24
      $region23: #{_lambda_.25} parent=5 // pred_region
        // Predicated region
        $region25: #{_lambda_.25} parent=23 // pred_check
          %p204 = pneg %p51
        $region26: #{_lambda_.25} parent=23 // pred_check_branch
          %206 = sbr.rel (%p204) target = $region28
        $region27: #{_lambda_.25} parent=23 // pred_region
          %s207 = sand.u32 %s41, 1
          %s208 = sand.u32 %s41, 1
          %s209 = smul.addr %s208, 48
          %s210 = scalar_lea.vmem [#allocation3], %s209
          %s211 = smul.u32 4, %s17
          %s212 = smul.u32 3, %s19
          %s213 = smul.addr %s211, 9
          %s214 = sadd.s32 %s212, %s213
          %s215 = smul.addr %s214, 4
          %s216 = scalar_lea.vmem %s0, %s215
          // Predicated region
          $region29: #{_lambda_.25} parent=27 // pred_check
            _
          $region30: #{_lambda_.25} parent=27 // pred_check_branch
            %218 = sbr.rel (0) target = $region32
          $region31: #{_lambda_.25} parent=27 // pred_region
            // Predicated region
            $region33: #{_lambda_.25} parent=31 // pred_check
              _
            $region34: #{_lambda_.25} parent=31 // pred_check_branch
              %220 = sbr.rel (0) target = $region36
            $region35: #{_lambda_.25} parent=31 // pred_region
              %s221 = scalar_lea.vmem %s216, 8
              %s222 = scalar_lea.vmem %s210, 8 [#allocation3]
              loop: start=0, step=1, limit=1
              $region37: #{_lambda_.25} parent=35 // loop_pre_header
                _
              $region38: #{_lambda_.25} parent=35 // loop_header
                %s224 = sphi 0, %s228
                %p225 = scmp.ge.s32.totalorder %s224, 1
                %s229 = sphi %s216, %s216
                %s230 = sphi %s210, %s210
              $region39: #{_lambda_.25} parent=35 // loop_header_branch
                %227 = sbr.rel (%p225) target = $region43
              $region40: #{_lambda_.25} parent=35 // loop_body
                %v231 = vld [vmem:[%s229] sm:$0xff]
                %232 = vst [vmem:[%s230] sm:$0xff] %v231
                %v233 = vld [vmem:[%s229 + $0x24] sm:$0xff]
                %234 = vst [vmem:[%s230 + $0xc] sm:$0xff] %v233
                %v235 = vld [vmem:[%s229 + $0x48] sm:$0xff]
                %236 = vst [vmem:[%s230 + $0x18] sm:$0xff] %v235
                %v237 = vld [vmem:[%s229 + $0x6c] sm:$0xff]
                %238 = vst [vmem:[%s230 + $0x24] sm:$0xff] %v237
              $region41: #{_lambda_.25} parent=35 // loop_footer
                %s228 = sadd.s32 1, %s224
              $region42: #{_lambda_.25} parent=35 // loop_footer_branch
                %223 = sbr.rel target = $region38
              $region43: #{_lambda_.25} parent=35 // loop_exit
                _
              loop: start=0, step=1, limit=1
              $region44: #{_lambda_.25} parent=35 // loop_pre_header
                _
              $region45: #{_lambda_.25} parent=35 // loop_header
                %s241 = sphi 0, %s245
                %p242 = scmp.ge.s32.totalorder %s241, 1
                %s246 = sphi %s221, %s221
                %s247 = sphi %s222, %s222
              $region46: #{_lambda_.25} parent=35 // loop_header_branch
                %244 = sbr.rel (%p242) target = $region50
              $region47: #{_lambda_.25} parent=35 // loop_body
                %v248 = vld [vmem:[%s246] sm:$0xf]
                %249 = vst [vmem:[%s247] sm:$0xf] %v248
                %v250 = vld [vmem:[%s246 + $0x24] sm:$0xf]
                %251 = vst [vmem:[%s247 + $0xc] sm:$0xf] %v250
                %v252 = vld [vmem:[%s246 + $0x48] sm:$0xf]
                %253 = vst [vmem:[%s247 + $0x18] sm:$0xf] %v252
                %v254 = vld [vmem:[%s246 + $0x6c] sm:$0xf]
                %255 = vst [vmem:[%s247 + $0x24] sm:$0xf] %v254
              $region48: #{_lambda_.25} parent=35 // loop_footer
                %s245 = sadd.s32 1, %s241
              $region49: #{_lambda_.25} parent=35 // loop_footer_branch
                %240 = sbr.rel target = $region45
              $region50: #{_lambda_.25} parent=35 // loop_exit
                _
            $region36: #{_lambda_.25} parent=31 // pred_fallthru
              _
          $region32: #{_lambda_.25} parent=27 // pred_fallthru
            _
          %256 = vnop
        $region28: #{_lambda_.25} parent=23 // pred_fallthru
          _
        // Predicated region
        $region51: #{_lambda_.25} parent=23 // pred_check
          %p257 = pneg %p79
        $region52: #{_lambda_.25} parent=23 // pred_check_branch
          %259 = sbr.rel (%p257) target = $region54
        $region53: #{_lambda_.25} parent=23 // pred_region
          %s260 = smul.u32 48, %s19
          %p261 = scmp.lt.s32.totalorder %s260, 143
          %s262 = scalar_select %p261, %s260, 143
          %p263 = scmp.lt.s32.totalorder %s18, 0
          %s264 = scalar_select %p263, %s18, 0
          %s265 = sadd.s32 %s264, %s262
          %s266 = smul.addr %s265, 4
          %s267 = scalar_lea.vmem %s1, %s266
          %s268 = smul.u32 48, %s19
        $region54: #{_lambda_.25} parent=23 // pred_fallthru
          _
      $region24: #{_lambda_.25} parent=5 // pred_fallthru
        _
      %p269 = scmp.le.s32.totalorder 1, %s10
      %p270 = scmp.lt.s32.totalorder %s10, 4
      %p271 = pnand %p269, %p270
      %p272 = pneg %p271
      // Predicated region
      $region55: #{_lambda_.25} parent=5 // pred_check
        _
      $region56: #{_lambda_.25} parent=5 // pred_check_branch
        %274 = sbr.rel (%p271) target = $region58
      $region57: #{_lambda_.25} parent=5 // pred_region
        %s275 = ssub.s32 %s10, 1
        %s276 = sand.u32 %s44, 1
        %s277 = sand.u32 %s44, 1
        %s278 = smul.addr %s277, 48
        %s279 = scalar_lea.vmem [#allocation3], %s278
        // Predicated region
        $region59: #{_lambda_.25} parent=57 // pred_check
          %p280 = pneg %p57
        $region60: #{_lambda_.25} parent=57 // pred_check_branch
          %282 = sbr.rel (%p280) target = $region62
        $region61: #{_lambda_.25} parent=57 // pred_region
          _
        $region62: #{_lambda_.25} parent=57 // pred_fallthru
          _
        %s283 = sand.u32 %s44, 1
        %s284 = sand.u32 %s44, 1
        %s285 = smul.addr %s284, 48
        %s286 = scalar_lea.vmem [#allocation3], %s285
        %p287 = pneg %p57
        %p288 = pneg %p54
        %s289 = smul.u32 48, %s22
        %p290 = scmp.lt.s32.totalorder %s289, 143
        %s291 = scalar_select %p290, %s289, 143
        %p292 = scmp.lt.s32.totalorder %s21, 0
        %s293 = scalar_select %p292, %s21, 0
        %s294 = sadd.s32 %s293, %s291
        %s295 = smul.addr %s294, 4
        %s296 = scalar_lea.vmem %s1, %s295
        %p297 = pneg %p85
        %p298 = pneg %p82
        %p299 = scmp.lt.s32.totalorder %s21, 0
        %s300 = scalar_select %p299, %s21, 0
        %s301 = scalar_lea.vmem %s2, %s300
        %p302 = pneg %p111
        %p303 = pneg %p108
        %s304 = smul.u32 4, %s20
        %p305 = scmp.lt.s32.totalorder %s304, 3
        %s306 = scalar_select %p305, %s304, 3
        %p307 = scmp.lt.s32.totalorder %s21, 0
        %s308 = scalar_select %p307, %s21, 0
        %s309 = sadd.s32 %s308, %s306
        %s310 = smul.addr %s309, 4
        %s311 = scalar_lea.vmem %s3, %s310
        %p312 = pneg %p139
        %p313 = pneg %p136
        %p314 = pneg %p167
        %p315 = pneg %p164
        %s316 = smul.u32 4, %s20
        %p317 = scmp.lt.s32.totalorder %s316, 3
        %s318 = scalar_select %p317, %s316, 3
        %p319 = scmp.lt.s32.totalorder %s21, 0
        %s320 = scalar_select %p319, %s21, 0
        %s321 = sadd.s32 %s320, %s318
        %s322 = smul.addr %s321, 4
        %s323 = scalar_lea.vmem %s4, %s322
        %s324 = smul.u32 4, %s20
        %s325 = smul.u32 3, %s22
        %s326 = smul.u32 48, %s22
        %p327 = scmp.lt.s32.totalorder %s326, 143
        %s328 = scalar_select %p327, %s326, 143
        %p329 = scmp.lt.s32.totalorder %s21, 0
        %s330 = scalar_select %p329, %s21, 0
        %s331 = sadd.s32 %s330, %s328
        %s332 = smul.addr %s331, 4
        %s333 = scalar_lea.vmem %s1, %s332
        %s334 = smul.u32 48, %s22
        %p335 = scmp.lt.s32.totalorder %s21, 0
        %s336 = scalar_select %p335, %s21, 0
        %s337 = scalar_lea.vmem %s2, %s336
        %s338 = smul.u32 4, %s20
        %p339 = scmp.lt.s32.totalorder %s338, 3
        %s340 = scalar_select %p339, %s338, 3
        %p341 = scmp.lt.s32.totalorder %s21, 0
        %s342 = scalar_select %p341, %s21, 0
        %s343 = sadd.s32 %s342, %s340
        %s344 = smul.addr %s343, 4
        %s345 = scalar_lea.vmem %s3, %s344
        %s346 = smul.u32 4, %s20
        %s347 = smul.u32 4, %s20
        %p348 = scmp.lt.s32.totalorder %s347, 3
        %s349 = scalar_select %p348, %s347, 3
        %p350 = scmp.lt.s32.totalorder %s21, 0
        %s351 = scalar_select %p350, %s21, 0
        %s352 = sadd.s32 %s351, %s349
        %s353 = smul.addr %s352, 4
        %s354 = scalar_lea.vmem %s4, %s353
        %s355 = smul.u32 4, %s20
        %p357 = scmp.eq.s32.totalorder %s22, 0
        // Predicated region
        $region63: #{_lambda_.25} parent=57 // pred_check
          %p358 = pneg %p357
        $region64: #{_lambda_.25} parent=57 // pred_check_branch
          %360 = sbr.rel (%p358) target = $region66
        $region65: #{_lambda_.25} parent=57 // pred_region
          %361 = vst [vmem:[#allocation2] sm:$0xff] 0.0
          %362 = vst [vmem:[#allocation2 + $0x8] sm:$0xff] 0.0
          %363 = vst [vmem:[#allocation2 + $0x10] sm:$0xff] 0.0
          %364 = vst [vmem:[#allocation2 + $0x18] sm:$0xff] 0.0
        $region66: #{_lambda_.25} parent=57 // pred_fallthru
          _
        %v365 = vld [vmem:[#allocation2] sm:$0xff]
        %v366 = vld [vmem:[#allocation2 + $0x8] sm:$0xff]
        %v367 = vld [vmem:[#allocation2 + $0x10] sm:$0xff]
        %v368 = vld [vmem:[#allocation2 + $0x18] sm:$0xff]
        %v369 = vld [vmem:[%s279] sm:$0xff]
        %v370 = vld [vmem:[%s279 + $0x8] sm:$0xf]
        %v371 = vld [vmem:[%s279 + $0xc] sm:$0xff]
        %v372 = vld [vmem:[%s279 + $0x14] sm:$0xf]
        %v373 = vld [vmem:[%s279 + $0x18] sm:$0xff]
        %v374 = vld [vmem:[%s279 + $0x20] sm:$0xf]
        %v375 = vld [vmem:[%s279 + $0x24] sm:$0xff]
        %v376 = vld [vmem:[%s279 + $0x2c] sm:$0xf]
        %v377 = vld [vmem:[%s333] sm:$0xf]
        %v378 = vld [vmem:[%s333 + $0x4] sm:$0xf]
        %v379 = vld [vmem:[%s333 + $0x8] sm:$0xf]
        %v380 = vld [vmem:[%s333 + $0xc] sm:$0xf]
        %v381 = vld [vmem:[%s333 + $0x10] sm:$0xf]
        %v382 = vld [vmem:[%s333 + $0x14] sm:$0xf]
        %v383 = vld [vmem:[%s333 + $0x18] sm:$0xf]
        %v384 = vld [vmem:[%s333 + $0x1c] sm:$0xf]
        %v385 = vld [vmem:[%s333 + $0x20] sm:$0xf]
        %v386 = vld [vmem:[%s333 + $0x24] sm:$0xf]
        %v387 = vld [vmem:[%s333 + $0x28] sm:$0xf]
        %v388 = vld [vmem:[%s333 + $0x2c] sm:$0xf]
        %v389 = vld [vmem:[%s333 + $0x30] sm:$0xf]
        %v390 = vld [vmem:[%s333 + $0x34] sm:$0xf]
        %v391 = vld [vmem:[%s333 + $0x38] sm:$0xf]
        %v392 = vld [vmem:[%s333 + $0x3c] sm:$0xf]
        %v393 = vld [vmem:[%s333 + $0x40] sm:$0xf]
        %v394 = vld [vmem:[%s333 + $0x44] sm:$0xf]
        %v395 = vld [vmem:[%s333 + $0x48] sm:$0xf]
        %v396 = vld [vmem:[%s333 + $0x4c] sm:$0xf]
        %v397 = vld [vmem:[%s333 + $0x50] sm:$0xf]
        %v398 = vld [vmem:[%s333 + $0x54] sm:$0xf]
        %v399 = vld [vmem:[%s333 + $0x58] sm:$0xf]
        %v400 = vld [vmem:[%s333 + $0x5c] sm:$0xf]
        %v401 = vld [vmem:[%s333 + $0x60] sm:$0xf]
        %v402 = vld [vmem:[%s333 + $0x64] sm:$0xf]
        %v403 = vld [vmem:[%s333 + $0x68] sm:$0xf]
        %v404 = vld [vmem:[%s333 + $0x6c] sm:$0xf]
        %v405 = vld [vmem:[%s333 + $0x70] sm:$0xf]
        %v406 = vld [vmem:[%s333 + $0x74] sm:$0xf]
        %v407 = vld [vmem:[%s333 + $0x78] sm:$0xf]
        %v408 = vld [vmem:[%s333 + $0x7c] sm:$0xf]
        %v409 = vld [vmem:[%s333 + $0x80] sm:$0xf]
        %v410 = vld [vmem:[%s333 + $0x84] sm:$0xf]
        %v411 = vld [vmem:[%s333 + $0x88] sm:$0xf]
        %v412 = vld [vmem:[%s333 + $0x8c] sm:$0xf]
        %v413 = vld [vmem:[%s333 + $0x90] sm:$0xf]
        %v414 = vld [vmem:[%s333 + $0x94] sm:$0xf]
        %v415 = vld [vmem:[%s333 + $0x98] sm:$0xf]
        %v416 = vld [vmem:[%s333 + $0x9c] sm:$0xf]
        %v417 = vld [vmem:[%s333 + $0xa0] sm:$0xf]
        %v418 = vld [vmem:[%s333 + $0xa4] sm:$0xf]
        %v419 = vld [vmem:[%s333 + $0xa8] sm:$0xf]
        %v420 = vld [vmem:[%s333 + $0xac] sm:$0xf]
        %v421 = vld [vmem:[%s333 + $0xb0] sm:$0xf]
        %v422 = vld [vmem:[%s333 + $0xb4] sm:$0xf]
        %v423 = vld [vmem:[%s333 + $0xb8] sm:$0xf]
        %v424 = vld [vmem:[%s333 + $0xbc] sm:$0xf]
        %v433 = vunpack.c.l.b16 %v369
        %v434 = vunpack.c.h.b16 %v369
        %v435 = vunpack.c.l.b16 %v370
        %v436 = vunpack.c.l.b16 %v371
        %v437 = vunpack.c.h.b16 %v371
        %v438 = vunpack.c.l.b16 %v372
        %v439 = vunpack.c.l.b16 %v373
        %v440 = vunpack.c.h.b16 %v373
        %v441 = vunpack.c.l.b16 %v374
        %v442 = vunpack.c.l.b16 %v375
        %v443 = vunpack.c.h.b16 %v375
        %v444 = vunpack.c.l.b16 %v376
        %v445 = vpack.c.b16 %v436, %v433
        %v446 = vpack.c.b16 %v437, %v434
        %v447 = vpack.c.b16 %v438, %v435
        %v448 = vpack.c.b16 %v442, %v439
        %v449 = vpack.c.b16 %v443, %v440
        %v450 = vpack.c.b16 %v444, %v441
        %v505 = vunpack.c.l.b16 %v377
        %v506 = vunpack.c.l.b16 %v378
        %v507 = vunpack.c.l.b16 %v379
        %v508 = vunpack.c.l.b16 %v380
        %v509 = vunpack.c.l.b16 %v381
        %v510 = vunpack.c.l.b16 %v382
        %v511 = vunpack.c.l.b16 %v383
        %v512 = vunpack.c.l.b16 %v384
        %v513 = vunpack.c.l.b16 %v385
        %v514 = vunpack.c.l.b16 %v386
        %v515 = vunpack.c.l.b16 %v387
        %v516 = vunpack.c.l.b16 %v388
        %v517 = vunpack.c.l.b16 %v389
        %v518 = vunpack.c.l.b16 %v390
        %v519 = vunpack.c.l.b16 %v391
        %v520 = vunpack.c.l.b16 %v392
        %v521 = vunpack.c.l.b16 %v393
        %v522 = vunpack.c.l.b16 %v394
        %v523 = vunpack.c.l.b16 %v395
        %v524 = vunpack.c.l.b16 %v396
        %v525 = vunpack.c.l.b16 %v397
        %v526 = vunpack.c.l.b16 %v398
        %v527 = vunpack.c.l.b16 %v399
        %v528 = vunpack.c.l.b16 %v400
        %v529 = vunpack.c.l.b16 %v401
        %v530 = vunpack.c.l.b16 %v402
        %v531 = vunpack.c.l.b16 %v403
        %v532 = vunpack.c.l.b16 %v404
        %v533 = vunpack.c.l.b16 %v405
        %v534 = vunpack.c.l.b16 %v406
        %v535 = vunpack.c.l.b16 %v407
        %v536 = vunpack.c.l.b16 %v408
        %v537 = vunpack.c.l.b16 %v409
        %v538 = vunpack.c.l.b16 %v410
        %v539 = vunpack.c.l.b16 %v411
        %v540 = vunpack.c.l.b16 %v412
        %v541 = vunpack.c.l.b16 %v413
        %v542 = vunpack.c.l.b16 %v414
        %v543 = vunpack.c.l.b16 %v415
        %v544 = vunpack.c.l.b16 %v416
        %v545 = vunpack.c.l.b16 %v417
        %v546 = vunpack.c.l.b16 %v418
        %v547 = vunpack.c.l.b16 %v419
        %v548 = vunpack.c.l.b16 %v420
        %v549 = vunpack.c.l.b16 %v421
        %v550 = vunpack.c.l.b16 %v422
        %v551 = vunpack.c.l.b16 %v423
        %v552 = vunpack.c.l.b16 %v424
        %v553 = vpack.c.b16 %v506, %v505
        %v554 = vpack.c.b16 %v508, %v507
        %v555 = vpack.c.b16 %v510, %v509
        %v556 = vpack.c.b16 %v512, %v511
        %v557 = vpack.c.b16 %v514, %v513
        %v558 = vpack.c.b16 %v516, %v515
        %v559 = vpack.c.b16 %v518, %v517
        %v560 = vpack.c.b16 %v520, %v519
        %v561 = vpack.c.b16 %v522, %v521
        %v562 = vpack.c.b16 %v524, %v523
        %v563 = vpack.c.b16 %v526, %v525
        %v564 = vpack.c.b16 %v528, %v527
        %v565 = vpack.c.b16 %v530, %v529
        %v566 = vpack.c.b16 %v532, %v531
        %v567 = vpack.c.b16 %v534, %v533
        %v568 = vpack.c.b16 %v536, %v535
        %v569 = vpack.c.b16 %v538, %v537
        %v570 = vpack.c.b16 %v540, %v539
        %v571 = vpack.c.b16 %v542, %v541
        %v572 = vpack.c.b16 %v544, %v543
        %v573 = vpack.c.b16 %v546, %v545
        %v574 = vpack.c.b16 %v548, %v547
        %v575 = vpack.c.b16 %v550, %v549
        %v576 = vpack.c.b16 %v552, %v551
        %601 = vmatprep.subr.bf16.mxu0 0
        %602 = vmatpush1.bf16.msra.mxu0 %v553
        %603 = vmatprep.subr.bf16.mxu0 0
        %604 = vmatpush1.bf16.msra.mxu0 %v554
        %605 = vmatprep.subr.bf16.mxu0 0
        %606 = vmatpush1.bf16.msra.mxu0 %v555
        %607 = vmatprep.subr.bf16.mxu0 0
        %608 = vmatpush1.bf16.msra.mxu0 %v556
        %609 = vmatprep.subr.bf16.mxu0 0
        %610 = vmatpush1.bf16.msra.mxu0 %v557
        %611 = vmatprep.subr.bf16.mxu0 0
        %612 = vmatpush1.bf16.msra.mxu0 %v558
        %613 = vmatprep.subr.bf16.mxu0 0
        %614 = vmatpush1.bf16.msra.mxu0 %v559
        %615 = vmatprep.subr.bf16.mxu0 0
        %616 = vmatpush1.bf16.msra.mxu0 %v560
        %617 = vmatprep.subr.bf16.mxu0 0
        %618 = vmatpush1.bf16.msra.mxu0 %v561
        %619 = vmatprep.subr.bf16.mxu0 0
        %620 = vmatpush1.bf16.msra.mxu0 %v562
        %621 = vmatprep.subr.bf16.mxu0 0
        %622 = vmatpush1.bf16.msra.mxu0 %v563
        %623 = vmatprep.subr.bf16.mxu0 0
        %624 = vmatpush1.bf16.msra.mxu0 %v564
        %625 = vmatprep.subr.bf16.mxu0 0
        %626 = vmatpush1.bf16.msra.mxu0 %v565
        %627 = vmatprep.subr.bf16.mxu0 0
        %628 = vmatpush1.bf16.msra.mxu0 %v566
        %629 = vmatprep.subr.bf16.mxu0 0
        %630 = vmatpush1.bf16.msra.mxu0 %v567
        %631 = vmatprep.subr.bf16.mxu0 0
        %632 = vmatpush1.bf16.msra.mxu0 %v568
        %633 = vmatprep.mubr.bf16.mxu0 %v446
        %634 = vmatmul.mubr.bf16.gmra.mrb[0].mxu0 %v445
        %v635 = vpop.f32.mrb[0].mxu0
        %v636 = vadd.f32 0.0, %v635
        %v637 = vpop.f32.mrb[0].mxu0
        %v638 = vpop.f32.mrb[0].mxu0
        %v639 = vadd.f32 0.0, %v638
        %v640 = vpop.f32.mrb[0].mxu0
        %641 = vmatprep.mubr.bf16.mxu0 %v449
        %642 = vmatmul.mubr.bf16.gmra.mrb[0].mxu0 %v448
        %v643 = vpop.f32.mrb[0].mxu0
        %v644 = vadd.f32 0.0, %v643
        %v645 = vpop.f32.mrb[0].mxu0
        %v646 = vpop.f32.mrb[0].mxu0
        %v647 = vadd.f32 0.0, %v646
        %v648 = vpop.f32.mrb[0].mxu0
        %649 = vdwg.mxu0
        %650 = vmatprep.subr.bf16.mxu0 0
        %651 = vmatpush1.bf16.msra.mxu0 %v569
        %652 = vmatprep.subr.bf16.mxu0 0
        %653 = vmatpush1.bf16.msra.mxu0 %v570
        %654 = vmatprep.subr.bf16.mxu0 0
        %655 = vmatpush1.bf16.msra.mxu0 %v571
        %656 = vmatprep.subr.bf16.mxu0 0
        %657 = vmatpush1.bf16.msra.mxu0 %v572
        %658 = vmatprep.subr.bf16.mxu0 0
        %659 = vmatpush1.bf16.msra.mxu0 %v573
        %660 = vmatprep.subr.bf16.mxu0 0
        %661 = vmatpush1.bf16.msra.mxu0 %v574
        %662 = vmatprep.subr.bf16.mxu0 0
        %663 = vmatpush1.bf16.msra.mxu0 %v575
        %664 = vmatprep.subr.bf16.mxu0 0
        %665 = vmatpush1.bf16.msra.mxu0 %v576
        %666 = vmatprep.subr.bf16.mxu0 0
        %667 = vmatpush1.bf16.msra.mxu0 0
        %668 = vmatprep.subr.bf16.mxu0 0
        %669 = vmatpush1.bf16.msra.mxu0 0
        %670 = vmatprep.subr.bf16.mxu0 0
        %671 = vmatpush1.bf16.msra.mxu0 0
        %672 = vmatprep.subr.bf16.mxu0 0
        %673 = vmatpush1.bf16.msra.mxu0 0
        %674 = vmatprep.subr.bf16.mxu0 0
        %675 = vmatpush1.bf16.msra.mxu0 0
        %676 = vmatprep.subr.bf16.mxu0 0
        %677 = vmatpush1.bf16.msra.mxu0 0
        %678 = vmatprep.subr.bf16.mxu0 0
        %679 = vmatpush1.bf16.msra.mxu0 0
        %680 = vmatprep.subr.bf16.mxu0 0
        %681 = vmatpush1.bf16.msra.mxu0 0
        %682 = vmatprep.mubr.bf16.mxu0 0
        %683 = vmatmul.mubr.bf16.gmra.mrb[0].mxu0 %v447
        %v684 = vpop.f32.mrb[0].mxu0
        %v685 = vadd.f32 %v636, %v684
        %v686 = vpop.f32.mrb[0].mxu0
        %v687 = vpop.f32.mrb[0].mxu0
        %v688 = vadd.f32 %v639, %v687
        %v689 = vpop.f32.mrb[0].mxu0
        %690 = vmatprep.mubr.bf16.mxu0 0
        %691 = vmatmul.mubr.bf16.gmra.mrb[0].mxu0 %v450
        %v692 = vpop.f32.mrb[0].mxu0
        %v693 = vadd.f32 %v644, %v692
        %v694 = vpop.f32.mrb[0].mxu0
        %v695 = vpop.f32.mrb[0].mxu0
        %v696 = vadd.f32 %v647, %v695
        %v697 = vpop.f32.mrb[0].mxu0
        %698 = vdwg.mxu0
        %v699 = vadd.f32 %v365, %v685
        %v700 = vadd.f32 %v366, %v688
        %v701 = vadd.f32 %v367, %v693
        %v702 = vadd.f32 %v368, %v696
        %703 = vst [vmem:[#allocation2] sm:$0xff] %v699
        %704 = vst [vmem:[#allocation2 + $0x8] sm:$0xff] %v700
        %705 = vst [vmem:[#allocation2 + $0x10] sm:$0xff] %v701
        %706 = vst [vmem:[#allocation2 + $0x18] sm:$0xff] %v702
        %p707 = scmp.eq.s32.totalorder %s22, 2
        // Predicated region
        $region67: #{_lambda_.25} parent=57 // pred_check
          %p708 = pneg %p707
        $region68: #{_lambda_.25} parent=57 // pred_check_branch
          %710 = sbr.rel (%p708) target = $region70
        $region69: #{_lambda_.25} parent=57 // pred_region
          %v711 = vld [vmem:[#allocation2] sm:$0xff]
          %v712 = vld [vmem:[#allocation2 + $0x8] sm:$0xff]
          %v713 = vld [vmem:[#allocation2 + $0x10] sm:$0xff]
          %v714 = vld [vmem:[#allocation2 + $0x18] sm:$0xff]
          %v715 = vld [vmem:[%s337] sm:$0x1]
          %v717 = vlaneseq
          %v718 = vshrl.u32 %v717, 7
          %v719 = vsub.s32 0, %v718
          %v720 = vrot.slane %v715, %v719
          %v722 = vadd.f32 %v711, %v720
          %v723 = vadd.f32 %v712, %v720
          %v724 = vadd.f32 %v713, %v720
          %v725 = vadd.f32 %v714, %v720
          %v726 = vld [vmem:[%s345] sm:$0xf]
          %v727 = vld [vmem:[%s345 + $0x4] sm:$0xf]
          %v728 = vld [vmem:[%s345 + $0x8] sm:$0xf]
          %v729 = vld [vmem:[%s345 + $0xc] sm:$0xf]
          %v730 = vunpack.c.l.bf16 %v726
          %v731 = vunpack.c.l.bf16 %v727
          %v732 = vunpack.c.l.bf16 %v728
          %v733 = vunpack.c.l.bf16 %v729
          %v734 = vadd.f32 %v722, %v730
          %v735 = vadd.f32 %v723, %v731
          %v736 = vadd.f32 %v724, %v732
          %v737 = vadd.f32 %v725, %v733
          %v738 = vmax.f32 %v734, 0.0
          %v739 = vmax.f32 %v735, 0.0
          %v740 = vmax.f32 %v736, 0.0
          %v741 = vmax.f32 %v737, 0.0
          %v742 = vpack.c.bf16 %v739, %v738
          %v743 = vpack.c.bf16 %v741, %v740
          %v746 = vunpack.c.l.b16 %v742
          %v747 = vunpack.c.h.b16 %v742
          %v748 = vunpack.c.l.b16 %v743
          %v749 = vunpack.c.h.b16 %v743
          %v750 = vpack.c.b16 %v746, %v746
          %v751 = vpack.c.b16 %v747, %v747
          %v752 = vpack.c.b16 %v748, %v748
          %v753 = vpack.c.b16 %v749, %v749
          %758 = vst [vmem:[%s354] sm:$0xf] %v750
          %759 = vst [vmem:[%s354 + $0x4] sm:$0xf] %v751
          %760 = vst [vmem:[%s354 + $0x8] sm:$0xf] %v752
          %761 = vst [vmem:[%s354 + $0xc] sm:$0xf] %v753
        $region70: #{_lambda_.25} parent=57 // pred_fallthru
          _
        %s762 = smul.u32 4, %s20
        %p763 = scmp.lt.s32.totalorder %s762, 3
        %s764 = scalar_select %p763, %s762, 3
        %p765 = scmp.lt.s32.totalorder %s21, 0
        %s766 = scalar_select %p765, %s21, 0
        %s767 = sadd.s32 %s766, %s764
        %s768 = smul.addr %s767, 4
        %s769 = scalar_lea.vmem %s4, %s768
        // Predicated region
        $region71: #{_lambda_.25} parent=57 // pred_check
          %p770 = pneg %p164
        $region72: #{_lambda_.25} parent=57 // pred_check_branch
          %772 = sbr.rel (%p770) target = $region74
        $region73: #{_lambda_.25} parent=57 // pred_region
          %s773 = smul.u32 4, %s20
        $region74: #{_lambda_.25} parent=57 // pred_fallthru
          _
        // Predicated region
        $region75: #{_lambda_.25} parent=57 // pred_check
          %p774 = pneg %p164
        $region76: #{_lambda_.25} parent=57 // pred_check_branch
          %776 = sbr.rel (%p774) target = $region78
        $region77: #{_lambda_.25} parent=57 // pred_region
          %s777 = smul.u32 4, %s20
          %p778 = scmp.lt.s32.totalorder %s777, 3
          %s779 = scalar_select %p778, %s777, 3
          %p780 = scmp.lt.s32.totalorder %s21, 0
          %s781 = scalar_select %p780, %s21, 0
          %s782 = sadd.s32 %s781, %s779
          %s783 = smul.addr %s782, 4
          %s784 = scalar_lea.vmem %s4, %s783
        $region78: #{_lambda_.25} parent=57 // pred_fallthru
          _
      $region58: #{_lambda_.25} parent=5 // pred_fallthru
        _
      %p785 = scmp.le.s32.totalorder 2, %s10
      // Predicated region
      $region79: #{_lambda_.25} parent=5 // pred_check
        %p786 = pneg %p785
      $region80: #{_lambda_.25} parent=5 // pred_check_branch
        %788 = sbr.rel (%p786) target = $region82
      $region81: #{_lambda_.25} parent=5 // pred_region
        %s789 = ssub.s32 %s10, 2
      $region82: #{_lambda_.25} parent=5 // pred_fallthru
        _
    $region6: #{_lambda_.25} parent=1 // loop_footer
      %s14 = sadd.s32 1, %s10
    $region7: #{_lambda_.25} parent=1 // loop_footer_branch
      %9 = sbr.rel target = $region3
    $region8: #{_lambda_.25} parent=1 // loop_exit
      _

// kernel: _lambda_.23
$region0: #{_lambda_.23}
  #allocation0 [shape = 'u32[]', space=smem, size = 0x4, offset = 0x4, fixed_abs, tag = 'smem constant byte address 0x4 - core index']
  #allocation1 [shape = 'u32[144,128]{1,0:T(1,128)}', space=vmem, size = 0x12000, scoped, tag = 'internal scratch']
  #allocation2 [shape = 'f32[32,128]{1,0:T(8,128)}', space=vmem, size = 0x4000, scoped, tag = 'scratch operand']
  %s0 = inlined_call_operand.vmem [shape: bf16[32,128], index: 0, kind: input, shape index: {}]
  %s1 = inlined_call_operand.vmem [shape: bf16[128,128], index: 1, kind: input, shape index: {}]
  %s2 = inlined_call_operand.vmem [shape: f32[1,128], index: 2, kind: input, shape index: {}]
  %s3 = inlined_call_operand.vmem [shape: bf16[32,128], index: 3, kind: output, shape index: {}]
  %s4 = sld [smem:[#allocation0]]
  $region30: #{_lambda_.23} parent=0
    _
  %s6 = ssub.s32 1, %s4
  %s7 = scalar_select 0, %s6, %s4
  // Predicated region
  $region2: #{_lambda_.23} parent=0 // pred_check
    _
  $region3: #{_lambda_.23} parent=0 // pred_check_branch
    %9 = sbr.rel (0) target = $region5
  $region4: #{_lambda_.23} parent=0 // pred_region
    _
  $region5: #{_lambda_.23} parent=0 // pred_fallthru
    _
  // Predicated region
  $region6: #{_lambda_.23} parent=0 // pred_check
    _
  $region7: #{_lambda_.23} parent=0 // pred_check_branch
    %11 = sbr.rel (0) target = $region9
  $region8: #{_lambda_.23} parent=0 // pred_region
    _
  $region9: #{_lambda_.23} parent=0 // pred_fallthru
    _
  // Predicated region
  $region10: #{_lambda_.23} parent=0 // pred_check
    _
  $region11: #{_lambda_.23} parent=0 // pred_check_branch
    %13 = sbr.rel (0) target = $region13
  $region12: #{_lambda_.23} parent=0 // pred_region
    _
  $region13: #{_lambda_.23} parent=0 // pred_fallthru
    _
  %p15 = scmp.eq.s32.totalorder 0, 0
  // Predicated region
  $region14: #{_lambda_.23} parent=0 // pred_check
    %p16 = pneg %p15
  $region15: #{_lambda_.23} parent=0 // pred_check_branch
    %18 = sbr.rel (%p16) target = $region17
  $region16: #{_lambda_.23} parent=0 // pred_region
    %19 = vst [vmem:[#allocation2] sm:$0xff] 0.0
    %20 = vst [vmem:[#allocation2 + $0x8] sm:$0xff] 0.0
    %21 = vst [vmem:[#allocation2 + $0x10] sm:$0xff] 0.0
    %22 = vst [vmem:[#allocation2 + $0x18] sm:$0xff] 0.0
  $region17: #{_lambda_.23} parent=0 // pred_fallthru
    _
  %v23 = vld [vmem:[#allocation2] sm:$0xff]
  %v24 = vld [vmem:[#allocation2 + $0x8] sm:$0xff]
  %v25 = vld [vmem:[#allocation2 + $0x10] sm:$0xff]
  %v26 = vld [vmem:[#allocation2 + $0x18] sm:$0xff]
  %v27 = vld [vmem:[%s0] sm:$0xf]
  %v28 = vld [vmem:[%s0 + $0x4] sm:$0xf]
  %v29 = vld [vmem:[%s0 + $0x8] sm:$0xf]
  %v30 = vld [vmem:[%s0 + $0xc] sm:$0xf]
  %v31 = vld [vmem:[%s1] sm:$0xf]
  %v32 = vld [vmem:[%s1 + $0x4] sm:$0xf]
  %v33 = vld [vmem:[%s1 + $0x8] sm:$0xf]
  %v34 = vld [vmem:[%s1 + $0xc] sm:$0xf]
  %v35 = vld [vmem:[%s1 + $0x10] sm:$0xf]
  %v36 = vld [vmem:[%s1 + $0x14] sm:$0xf]
  %v37 = vld [vmem:[%s1 + $0x18] sm:$0xf]
  %v38 = vld [vmem:[%s1 + $0x1c] sm:$0xf]
  %v39 = vld [vmem:[%s1 + $0x20] sm:$0xf]
  %v40 = vld [vmem:[%s1 + $0x24] sm:$0xf]
  %v41 = vld [vmem:[%s1 + $0x28] sm:$0xf]
  %v42 = vld [vmem:[%s1 + $0x2c] sm:$0xf]
  %v43 = vld [vmem:[%s1 + $0x30] sm:$0xf]
  %v44 = vld [vmem:[%s1 + $0x34] sm:$0xf]
  %v45 = vld [vmem:[%s1 + $0x38] sm:$0xf]
  %v46 = vld [vmem:[%s1 + $0x3c] sm:$0xf]
  %v51 = vunpack.c.l.b16 %v27
  %v52 = vunpack.c.l.b16 %v28
  %v53 = vunpack.c.l.b16 %v29
  %v54 = vunpack.c.l.b16 %v30
  %v55 = vpack.c.b16 %v52, %v51
  %v56 = vpack.c.b16 %v54, %v53
  %v75 = vunpack.c.l.b16 %v31
  %v76 = vunpack.c.l.b16 %v32
  %v77 = vunpack.c.l.b16 %v33
  %v78 = vunpack.c.l.b16 %v34
  %v79 = vunpack.c.l.b16 %v35
  %v80 = vunpack.c.l.b16 %v36
  %v81 = vunpack.c.l.b16 %v37
  %v82 = vunpack.c.l.b16 %v38
  %v83 = vunpack.c.l.b16 %v39
  %v84 = vunpack.c.l.b16 %v40
  %v85 = vunpack.c.l.b16 %v41
  %v86 = vunpack.c.l.b16 %v42
  %v87 = vunpack.c.l.b16 %v43
  %v88 = vunpack.c.l.b16 %v44
  %v89 = vunpack.c.l.b16 %v45
  %v90 = vunpack.c.l.b16 %v46
  %v91 = vpack.c.b16 %v76, %v75
  %v92 = vpack.c.b16 %v78, %v77
  %v93 = vpack.c.b16 %v80, %v79
  %v94 = vpack.c.b16 %v82, %v81
  %v95 = vpack.c.b16 %v84, %v83
  %v96 = vpack.c.b16 %v86, %v85
  %v97 = vpack.c.b16 %v88, %v87
  %v98 = vpack.c.b16 %v90, %v89
  %107 = vmatprep.subr.bf16.mxu0 0
  %108 = vmatpush1.bf16.msra.mxu0 %v91
  %109 = vmatprep.subr.bf16.mxu0 0
  %110 = vmatpush1.bf16.msra.mxu0 %v92
  %111 = vmatprep.subr.bf16.mxu0 0
  %112 = vmatpush1.bf16.msra.mxu0 %v93
  %113 = vmatprep.subr.bf16.mxu0 0
  %114 = vmatpush1.bf16.msra.mxu0 %v94
  %115 = vmatprep.subr.bf16.mxu0 0
  %116 = vmatpush1.bf16.msra.mxu0 %v95
  %117 = vmatprep.subr.bf16.mxu0 0
  %118 = vmatpush1.bf16.msra.mxu0 %v96
  %119 = vmatprep.subr.bf16.mxu0 0
  %120 = vmatpush1.bf16.msra.mxu0 %v97
  %121 = vmatprep.subr.bf16.mxu0 0
  %122 = vmatpush1.bf16.msra.mxu0 %v98
  %123 = vmatprep.subr.bf16.mxu0 0
  %124 = vmatpush1.bf16.msra.mxu0 0
  %125 = vmatprep.subr.bf16.mxu0 0
  %126 = vmatpush1.bf16.msra.mxu0 0
  %127 = vmatprep.subr.bf16.mxu0 0
  %128 = vmatpush1.bf16.msra.mxu0 0
  %129 = vmatprep.subr.bf16.mxu0 0
  %130 = vmatpush1.bf16.msra.mxu0 0
  %131 = vmatprep.subr.bf16.mxu0 0
  %132 = vmatpush1.bf16.msra.mxu0 0
  %133 = vmatprep.subr.bf16.mxu0 0
  %134 = vmatpush1.bf16.msra.mxu0 0
  %135 = vmatprep.subr.bf16.mxu0 0
  %136 = vmatpush1.bf16.msra.mxu0 0
  %137 = vmatprep.subr.bf16.mxu0 0
  %138 = vmatpush1.bf16.msra.mxu0 0
  %139 = vmatprep.mubr.bf16.mxu0 0
  %140 = vmatmul.mubr.bf16.gmra.mrb[0].mxu0 %v55
  %v141 = vpop.f32.mrb[0].mxu0
  %v142 = vadd.f32 0.0, %v141
  %v143 = vpop.f32.mrb[0].mxu0
  %v144 = vpop.f32.mrb[0].mxu0
  %v145 = vadd.f32 0.0, %v144
  %v146 = vpop.f32.mrb[0].mxu0
  %147 = vmatprep.mubr.bf16.mxu0 0
  %148 = vmatmul.mubr.bf16.gmra.mrb[0].mxu0 %v56
  %v149 = vpop.f32.mrb[0].mxu0
  %v150 = vadd.f32 0.0, %v149
  %v151 = vpop.f32.mrb[0].mxu0
  %v152 = vpop.f32.mrb[0].mxu0
  %v153 = vadd.f32 0.0, %v152
  %v154 = vpop.f32.mrb[0].mxu0
  %155 = vdwg.mxu0
  %v156 = vadd.f32 %v23, %v142
  %v157 = vadd.f32 %v24, %v145
  %v158 = vadd.f32 %v25, %v150
  %v159 = vadd.f32 %v26, %v153
  %160 = vst [vmem:[#allocation2] sm:$0xff] %v156
  %161 = vst [vmem:[#allocation2 + $0x8] sm:$0xff] %v157
  %162 = vst [vmem:[#allocation2 + $0x10] sm:$0xff] %v158
  %163 = vst [vmem:[#allocation2 + $0x18] sm:$0xff] %v159
  // Predicated region
  $region18: #{_lambda_.23} parent=0 // pred_check
    %p164 = pneg %p15
  $region19: #{_lambda_.23} parent=0 // pred_check_branch
    %166 = sbr.rel (%p164) target = $region21
  $region20: #{_lambda_.23} parent=0 // pred_region
    %v167 = vld [vmem:[#allocation2] sm:$0xff]
    %v168 = vld [vmem:[#allocation2 + $0x8] sm:$0xff]
    %v169 = vld [vmem:[#allocation2 + $0x10] sm:$0xff]
    %v170 = vld [vmem:[#allocation2 + $0x18] sm:$0xff]
    %v171 = vld [vmem:[%s2] sm:$0x1]
    %v173 = vlaneseq
    %v174 = vshrl.u32 %v173, 7
    %v175 = vsub.s32 0, %v174
    %v176 = vrot.slane %v171, %v175
    %v178 = vadd.f32 %v167, %v176
    %v179 = vadd.f32 %v168, %v176
    %v180 = vadd.f32 %v169, %v176
    %v181 = vadd.f32 %v170, %v176
    %v182 = vpack.c.bf16 %v179, %v178
    %v183 = vpack.c.bf16 %v181, %v180
    %v186 = vunpack.c.l.b16 %v182
    %v187 = vunpack.c.h.b16 %v182
    %v188 = vunpack.c.l.b16 %v183
    %v189 = vunpack.c.h.b16 %v183
    %v190 = vpack.c.b16 %v186, %v186
    %v191 = vpack.c.b16 %v187, %v187
    %v192 = vpack.c.b16 %v188, %v188
    %v193 = vpack.c.b16 %v189, %v189
    %198 = vst [vmem:[%s3] sm:$0xf] %v190
    %199 = vst [vmem:[%s3 + $0x4] sm:$0xf] %v191
    %200 = vst [vmem:[%s3 + $0x8] sm:$0xf] %v192
    %201 = vst [vmem:[%s3 + $0xc] sm:$0xf] %v193
  $region21: #{_lambda_.23} parent=0 // pred_fallthru
    _
  // Predicated region
  $region22: #{_lambda_.23} parent=0 // pred_check
    _
  $region23: #{_lambda_.23} parent=0 // pred_check_branch
    %203 = sbr.rel (0) target = $region25
  $region24: #{_lambda_.23} parent=0 // pred_region
    _
  $region25: #{_lambda_.23} parent=0 // pred_fallthru
    _
  // Predicated region
  $region26: #{_lambda_.23} parent=0 // pred_check
    _
  $region27: #{_lambda_.23} parent=0 // pred_check_branch
    %205 = sbr.rel (0) target = $region29
  $region28: #{_lambda_.23} parent=0 // pred_region
    _
  $region29: #{_lambda_.23} parent=0 // pred_fallthru
    _

// kernel: _lambda_.29
$region0: #{_lambda_.29}
  #allocation0 [shape = 'u32[]', space=smem, size = 0x4, offset = 0x4, fixed_abs, tag = 'smem constant byte address 0x4 - core index']
  #allocation1 [shape = 'u32[144,128]{1,0:T(1,128)}', space=vmem, size = 0x12000, scoped, tag = 'internal scratch']
  #allocation2 [shape = 'f32[16,256]{1,0:T(8,128)}', space=vmem, size = 0x4000, scoped, tag = 'scratch operand']
  %s0 = inlined_call_operand.vmem [shape: bf16[16,1152], index: 0, kind: input, shape index: {}]
  %s1 = inlined_call_operand.vmem [shape: bf16[1152,256], index: 1, kind: input, shape index: {}]
  %s2 = inlined_call_operand.vmem [shape: f32[1,256], index: 2, kind: input, shape index: {}]
  %s3 = inlined_call_operand.vmem [shape: bf16[16,256], index: 3, kind: output, shape index: {}]
  %s4 = sld [smem:[#allocation0]]
  $region79: #{_lambda_.29} parent=0
    _
  %s6 = ssub.s32 1, %s4
  %s7 = scalar_select 0, %s6, %s4
  $region1: #{_lambda_.29} parent=0
    #allocation3 [shape = 'u8[24576]{0}', space=vmem, size = 0x6000, scoped, tag = 'input window, operand 0']
    loop: start=0, step=1, limit=5
    $region2: #{_lambda_.29} parent=1 // loop_pre_header
      _
    $region3: #{_lambda_.29} parent=1 // loop_header
      %s9 = sphi 0, %s13
      %p10 = scmp.ge.s32.totalorder %s9, 5
      %s16 = sphi 0, %s35
      %s17 = sphi 0, %s31
      %s18 = sphi 0, %s27
      %s19 = sphi 0, %s16
      %s20 = sphi 0, %s17
      %s21 = sphi 0, %s18
      %s22 = sphi 0, %s19
      %s23 = sphi 0, %s20
      %s24 = sphi 0, %s21
      %s40 = sphi 0, %s42
      %s43 = sphi 0, %s40
      %s44 = sphi 0, %s43
      %s60 = sphi 0, %s44
      %s68 = sphi 0, %s70
      %s71 = sphi 0, %s68
      %s72 = sphi 0, %s71
      %s88 = sphi 0, %s72
      %s94 = sphi 0, %s96
      %s97 = sphi 0, %s94
      %s98 = sphi 0, %s97
      %s114 = sphi 0, %s98
      %s122 = sphi 0, %s124
      %s125 = sphi 0, %s122
      %s126 = sphi 0, %s125
      %s142 = sphi 0, %s126
    $region4: #{_lambda_.29} parent=1 // loop_header_branch
      %12 = sbr.rel (%p10) target = $region8
    $region5: #{_lambda_.29} parent=1 // loop_body
      %s14 = ssub.s32 %s9, 1
      %s15 = ssub.s32 %s9, 2
      %s25 = sadd.s32 1, %s18
      %p26 = scmp.ge.s32.totalorder %s25, 3
      %s27 = scalar_select %p26, 0, %s25
      %s28 = sadd.s32 1, %s17
      %s29 = scalar_select %p26, %s28, %s17
      %p30 = scmp.ge.s32.totalorder %s29, 1
      %s31 = scalar_select %p30, 0, %s29
      %s32 = sadd.s32 1, %s16
      %s33 = scalar_select %p30, %s32, %s16
      %p34 = scmp.ge.s32.totalorder %s33, 1
      %s35 = scalar_select %p34, 0, %s33
      %s36 = ssub.s32 %s16, %s35
      %s37 = ssub.s32 %s18, %s27
      %s38 = sor.u32 %s36, %s37
      %p39 = scmp.eq.s32.totalorder %s38, 0
      %s41 = sadd.s32 %s40, 1
      %s42 = scalar_select %p39, %s40, %s41
      %p45 = pneg %p39
      %p46 = scmp.eq.s32.totalorder %s9, 2
      %p47 = por %p45, %p46
      %p48 = scmp.ne.s32.totalorder %s40, %s43
      %p49 = scmp.eq.s32.totalorder %s9, 0
      %p50 = por %p48, %p49
      %p51 = scmp.ne.s32.totalorder %s40, %s43
      %p52 = scmp.eq.s32.totalorder %s14, 2
      %p53 = por %p51, %p52
      %p54 = scmp.ne.s32.totalorder %s43, %s44
      %p55 = scmp.eq.s32.totalorder %s14, 0
      %p56 = por %p54, %p55
      %p57 = scmp.ne.s32.totalorder %s43, %s44
      %p58 = scmp.eq.s32.totalorder %s15, 2
      %p59 = por %p57, %p58
      %p61 = scmp.ne.s32.totalorder %s44, %s60
      %p62 = scmp.eq.s32.totalorder %s15, 0
      %p63 = por %p61, %p62
      %s64 = ssub.s32 %s18, %s27
      %s65 = ssub.s32 %s17, %s31
      %s66 = sor.u32 %s64, %s65
      %p67 = scmp.eq.s32.totalorder %s66, 0
      %s69 = sadd.s32 %s68, 1
      %s70 = scalar_select %p67, %s68, %s69
      %p73 = pneg %p67
      %p74 = scmp.eq.s32.totalorder %s9, 2
      %p75 = por %p73, %p74
      %p76 = scmp.ne.s32.totalorder %s68, %s71
      %p77 = scmp.eq.s32.totalorder %s9, 0
      %p78 = por %p76, %p77
      %p79 = scmp.ne.s32.totalorder %s68, %s71
      %p80 = scmp.eq.s32.totalorder %s14, 2
      %p81 = por %p79, %p80
      %p82 = scmp.ne.s32.totalorder %s71, %s72
      %p83 = scmp.eq.s32.totalorder %s14, 0
      %p84 = por %p82, %p83
      %p85 = scmp.ne.s32.totalorder %s71, %s72
      %p86 = scmp.eq.s32.totalorder %s15, 2
      %p87 = por %p85, %p86
      %p89 = scmp.ne.s32.totalorder %s72, %s88
      %p90 = scmp.eq.s32.totalorder %s15, 0
      %p91 = por %p89, %p90
      %s92 = ssub.s32 %s17, %s31
      %p93 = scmp.eq.s32.totalorder %s92, 0
      %s95 = sadd.s32 %s94, 1
      %s96 = scalar_select %p93, %s94, %s95
      %p99 = pneg %p93
      %p100 = scmp.eq.s32.totalorder %s9, 2
      %p101 = por %p99, %p100
      %p102 = scmp.ne.s32.totalorder %s94, %s97
      %p103 = scmp.eq.s32.totalorder %s9, 0
      %p104 = por %p102, %p103
      %p105 = scmp.ne.s32.totalorder %s94, %s97
      %p106 = scmp.eq.s32.totalorder %s14, 2
      %p107 = por %p105, %p106
      %p108 = scmp.ne.s32.totalorder %s97, %s98
      %p109 = scmp.eq.s32.totalorder %s14, 0
      %p110 = por %p108, %p109
      %p111 = scmp.ne.s32.totalorder %s97, %s98
      %p112 = scmp.eq.s32.totalorder %s15, 2
      %p113 = por %p111, %p112
      %p115 = scmp.ne.s32.totalorder %s98, %s114
      %p116 = scmp.eq.s32.totalorder %s15, 0
      %p117 = por %p115, %p116
      %s118 = ssub.s32 %s16, %s35
      %s119 = ssub.s32 %s17, %s31
      %s120 = sor.u32 %s118, %s119
      %p121 = scmp.eq.s32.totalorder %s120, 0
      %s123 = sadd.s32 %s122, 1
      %s124 = scalar_select %p121, %s122, %s123
      %p127 = pneg %p121
      %p128 = scmp.eq.s32.totalorder %s9, 2
      %p129 = por %p127, %p128
      %p130 = scmp.ne.s32.totalorder %s122, %s125
      %p131 = scmp.eq.s32.totalorder %s9, 0
      %p132 = por %p130, %p131
      %p133 = scmp.ne.s32.totalorder %s122, %s125
      %p134 = scmp.eq.s32.totalorder %s14, 2
      %p135 = por %p133, %p134
      %p136 = scmp.ne.s32.totalorder %s125, %s126
      %p137 = scmp.eq.s32.totalorder %s14, 0
      %p138 = por %p136, %p137
      %p139 = scmp.ne.s32.totalorder %s125, %s126
      %p140 = scmp.eq.s32.totalorder %s15, 2
      %p141 = por %p139, %p140
      %p143 = scmp.ne.s32.totalorder %s126, %s142
      %p144 = scmp.eq.s32.totalorder %s15, 0
      %p145 = por %p143, %p144
      %p146 = scmp.le.s32.totalorder 1, %s9
      %p147 = scmp.lt.s32.totalorder %s9, 4
      %p148 = pnand %p146, %p147
      %p149 = pneg %p148
      // Predicated region
      $region9: #{_lambda_.29} parent=5 // pred_check
        _
      $region10: #{_lambda_.29} parent=5 // pred_check_branch
        %151 = sbr.rel (%p148) target = $region12
      $region11: #{_lambda_.29} parent=5 // pred_region
        %s152 = ssub.s32 %s9, 1
        // Predicated region
        $region13: #{_lambda_.29} parent=11 // pred_check
          %p153 = pneg %p110
        $region14: #{_lambda_.29} parent=11 // pred_check_branch
          %155 = sbr.rel (%p153) target = $region16
        $region15: #{_lambda_.29} parent=11 // pred_region
          %s156 = smul.u32 2, %s20
          %p157 = scmp.lt.s32.totalorder %s156, 1
          %s158 = scalar_select %p157, %s156, 1
          %s159 = scalar_lea.vmem %s2, %s158
          %s160 = smul.u32 2, %s20
        $region16: #{_lambda_.29} parent=11 // pred_fallthru
          _
      $region12: #{_lambda_.29} parent=5 // pred_fallthru
        _
      %p161 = scmp.lt.s32.totalorder %s9, 3
      // Predicated region
      $region17: #{_lambda_.29} parent=5 // pred_check
        %p162 = pneg %p161
      $region18: #{_lambda_.29} parent=5 // pred_check_branch
        %164 = sbr.rel (%p162) target = $region20
      $region19: #{_lambda_.29} parent=5 // pred_region
        // Predicated region
        $region21: #{_lambda_.29} parent=19 // pred_check
          %p165 = pneg %p50
        $region22: #{_lambda_.29} parent=19 // pred_check_branch
          %167 = sbr.rel (%p165) target = $region24
        $region23: #{_lambda_.29} parent=19 // pred_region
          %s168 = sand.u32 %s40, 1
          %s169 = sand.u32 %s40, 1
          %s170 = smul.addr %s169, 24
          %s171 = scalar_lea.vmem [#allocation3], %s170
          %s172 = smul.u32 2, %s16
          %s173 = smul.u32 3, %s18
          %s174 = smul.addr %s172, 9
          %s175 = sadd.s32 %s173, %s174
          %s176 = smul.addr %s175, 4
          %s177 = scalar_lea.vmem %s0, %s176
          // Predicated region
          $region25: #{_lambda_.29} parent=23 // pred_check
            _
          $region26: #{_lambda_.29} parent=23 // pred_check_branch
            %179 = sbr.rel (0) target = $region28
          $region27: #{_lambda_.29} parent=23 // pred_region
            // Predicated region
            $region29: #{_lambda_.29} parent=27 // pred_check
              _
            $region30: #{_lambda_.29} parent=27 // pred_check_branch
              %181 = sbr.rel (0) target = $region32
            $region31: #{_lambda_.29} parent=27 // pred_region
              %s182 = scalar_lea.vmem %s177, 8
              %s183 = scalar_lea.vmem %s171, 8 [#allocation3]
              loop: start=0, step=1, limit=1
              $region33: #{_lambda_.29} parent=31 // loop_pre_header
                _
              $region34: #{_lambda_.29} parent=31 // loop_header
                %s185 = sphi 0, %s189
                %p186 = scmp.ge.s32.totalorder %s185, 1
                %s190 = sphi %s177, %s177
                %s191 = sphi %s171, %s171
              $region35: #{_lambda_.29} parent=31 // loop_header_branch
                %188 = sbr.rel (%p186) target = $region39
              $region36: #{_lambda_.29} parent=31 // loop_body
                %v192 = vld [vmem:[%s190] sm:$0xff]
                %193 = vst [vmem:[%s191] sm:$0xff] %v192
                %v194 = vld [vmem:[%s190 + $0x24] sm:$0xff]
                %195 = vst [vmem:[%s191 + $0xc] sm:$0xff] %v194
              $region37: #{_lambda_.29} parent=31 // loop_footer
                %s189 = sadd.s32 1, %s185
              $region38: #{_lambda_.29} parent=31 // loop_footer_branch
                %184 = sbr.rel target = $region34
              $region39: #{_lambda_.29} parent=31 // loop_exit
                _
              loop: start=0, step=1, limit=1
              $region40: #{_lambda_.29} parent=31 // loop_pre_header
                _
              $region41: #{_lambda_.29} parent=31 // loop_header
                %s198 = sphi 0, %s202
                %p199 = scmp.ge.s32.totalorder %s198, 1
                %s203 = sphi %s182, %s182
                %s204 = sphi %s183, %s183
              $region42: #{_lambda_.29} parent=31 // loop_header_branch
                %201 = sbr.rel (%p199) target = $region46
              $region43: #{_lambda_.29} parent=31 // loop_body
                %v205 = vld [vmem:[%s203] sm:$0xf]
                %206 = vst [vmem:[%s204] sm:$0xf] %v205
                %v207 = vld [vmem:[%s203 + $0x24] sm:$0xf]
                %208 = vst [vmem:[%s204 + $0xc] sm:$0xf] %v207
              $region44: #{_lambda_.29} parent=31 // loop_footer
                %s202 = sadd.s32 1, %s198
              $region45: #{_lambda_.29} parent=31 // loop_footer_branch
                %197 = sbr.rel target = $region41
              $region46: #{_lambda_.29} parent=31 // loop_exit
                _
            $region32: #{_lambda_.29} parent=27 // pred_fallthru
              _
          $region28: #{_lambda_.29} parent=23 // pred_fallthru
            _
          %209 = vnop
        $region24: #{_lambda_.29} parent=19 // pred_fallthru
          _
        // Predicated region
        $region47: #{_lambda_.29} parent=19 // pred_check
          %p210 = pneg %p78
        $region48: #{_lambda_.29} parent=19 // pred_check_branch
          %212 = sbr.rel (%p210) target = $region50
        $region49: #{_lambda_.29} parent=19 // pred_region
          %s213 = smul.u32 48, %s18
          %s214 = smul.u32 2, %s17
          %p215 = scmp.lt.s32.totalorder %s213, 143
          %s216 = scalar_select %p215, %s213, 143
          %p217 = scmp.lt.s32.totalorder %s214, 1
          %s218 = scalar_select %p217, %s214, 1
          %s219 = smul.addr %s216, 2
          %s220 = sadd.s32 %s218, %s219
          %s221 = smul.addr %s220, 4
          %s222 = scalar_lea.vmem %s1, %s221
          %s223 = smul.u32 48, %s18
          %s224 = smul.u32 2, %s17
        $region50: #{_lambda_.29} parent=19 // pred_fallthru
          _
      $region20: #{_lambda_.29} parent=5 // pred_fallthru
        _
      %p225 = scmp.le.s32.totalorder 1, %s9
      %p226 = scmp.lt.s32.totalorder %s9, 4
      %p227 = pnand %p225, %p226
      %p228 = pneg %p227
      // Predicated region
      $region51: #{_lambda_.29} parent=5 // pred_check
        _
      $region52: #{_lambda_.29} parent=5 // pred_check_branch
        %230 = sbr.rel (%p227) target = $region54
      $region53: #{_lambda_.29} parent=5 // pred_region
        %s231 = ssub.s32 %s9, 1
        %s232 = sand.u32 %s43, 1
        %s233 = sand.u32 %s43, 1
        %s234 = smul.addr %s233, 24
        %s235 = scalar_lea.vmem [#allocation3], %s234
        // Predicated region
        $region55: #{_lambda_.29} parent=53 // pred_check
          %p236 = pneg %p56
        $region56: #{_lambda_.29} parent=53 // pred_check_branch
          %238 = sbr.rel (%p236) target = $region58
        $region57: #{_lambda_.29} parent=53 // pred_region
          _
        $region58: #{_lambda_.29} parent=53 // pred_fallthru
          _
        %s239 = sand.u32 %s43, 1
        %s240 = sand.u32 %s43, 1
        %s241 = smul.addr %s240, 24
        %s242 = scalar_lea.vmem [#allocation3], %s241
        %p243 = pneg %p56
        %p244 = pneg %p53
        %s245 = smul.u32 48, %s21
        %s246 = smul.u32 2, %s20
        %p247 = scmp.lt.s32.totalorder %s245, 143
        %s248 = scalar_select %p247, %s245, 143
        %p249 = scmp.lt.s32.totalorder %s246, 1
        %s250 = scalar_select %p249, %s246, 1
        %s251 = smul.addr %s248, 2
        %s252 = sadd.s32 %s250, %s251
        %s253 = smul.addr %s252, 4
        %s254 = scalar_lea.vmem %s1, %s253
        %p255 = pneg %p84
        %p256 = pneg %p81
        %s257 = smul.u32 2, %s20
        %p258 = scmp.lt.s32.totalorder %s257, 1
        %s259 = scalar_select %p258, %s257, 1
        %s260 = scalar_lea.vmem %s2, %s259
        %p261 = pneg %p110
        %p262 = pneg %p107
        %p263 = pneg %p138
        %p264 = pneg %p135
        %s265 = smul.u32 2, %s19
        %s266 = smul.u32 2, %s20
        %p267 = scmp.lt.s32.totalorder %s265, 1
        %s268 = scalar_select %p267, %s265, 1
        %p269 = scmp.lt.s32.totalorder %s266, 1
        %s270 = scalar_select %p269, %s266, 1
        %s271 = smul.addr %s268, 2
        %s272 = sadd.s32 %s270, %s271
        %s273 = smul.addr %s272, 4
        %s274 = scalar_lea.vmem %s3, %s273
        %s275 = smul.u32 2, %s19
        %s276 = smul.u32 3, %s21
        %s277 = smul.u32 48, %s21
        %s278 = smul.u32 2, %s20
        %p279 = scmp.lt.s32.totalorder %s277, 143
        %s280 = scalar_select %p279, %s277, 143
        %p281 = scmp.lt.s32.totalorder %s278, 1
        %s282 = scalar_select %p281, %s278, 1
        %s283 = smul.addr %s280, 2
        %s284 = sadd.s32 %s282, %s283
        %s285 = smul.addr %s284, 4
        %s286 = scalar_lea.vmem %s1, %s285
        %s287 = smul.u32 48, %s21
        %s288 = smul.u32 2, %s20
        %s289 = smul.u32 2, %s20
        %p290 = scmp.lt.s32.totalorder %s289, 1
        %s291 = scalar_select %p290, %s289, 1
        %s292 = scalar_lea.vmem %s2, %s291
        %s293 = smul.u32 2, %s20
        %s294 = smul.u32 2, %s19
        %s295 = smul.u32 2, %s20
        %p296 = scmp.lt.s32.totalorder %s294, 1
        %s297 = scalar_select %p296, %s294, 1
        %p298 = scmp.lt.s32.totalorder %s295, 1
        %s299 = scalar_select %p298, %s295, 1
        %s300 = smul.addr %s297, 2
        %s301 = sadd.s32 %s299, %s300
        %s302 = smul.addr %s301, 4
        %s303 = scalar_lea.vmem %s3, %s302
        %s304 = smul.u32 2, %s19
        %s305 = smul.u32 2, %s20
        %p307 = scmp.eq.s32.totalorder %s21, 0
        // Predicated region
        $region59: #{_lambda_.29} parent=53 // pred_check
          %p308 = pneg %p307
        $region60: #{_lambda_.29} parent=53 // pred_check_branch
          %310 = sbr.rel (%p308) target = $region62
        $region61: #{_lambda_.29} parent=53 // pred_region
          %311 = vst [vmem:[#allocation2] sm:$0xff] 0.0
          %312 = vst [vmem:[#allocation2 + $0x8] sm:$0xff] 0.0
          %313 = vst [vmem:[#allocation2 + $0x10] sm:$0xff] 0.0
          %314 = vst [vmem:[#allocation2 + $0x18] sm:$0xff] 0.0
        $region62: #{_lambda_.29} parent=53 // pred_fallthru
          _
        %v315 = vld [vmem:[#allocation2] sm:$0xff]
        %v316 = vld [vmem:[#allocation2 + $0x8] sm:$0xff]
        %v317 = vld [vmem:[#allocation2 + $0x10] sm:$0xff]
        %v318 = vld [vmem:[#allocation2 + $0x18] sm:$0xff]
        %v319 = vld [vmem:[%s235] sm:$0xff]
        %v320 = vld [vmem:[%s235 + $0x8] sm:$0xf]
        %v321 = vld [vmem:[%s235 + $0xc] sm:$0xff]
        %v322 = vld [vmem:[%s235 + $0x14] sm:$0xf]
        %v323 = vld [vmem:[%s286] sm:$0xff]
        %v324 = vld [vmem:[%s286 + $0x8] sm:$0xff]
        %v325 = vld [vmem:[%s286 + $0x10] sm:$0xff]
        %v326 = vld [vmem:[%s286 + $0x18] sm:$0xff]
        %v327 = vld [vmem:[%s286 + $0x20] sm:$0xff]
        %v328 = vld [vmem:[%s286 + $0x28] sm:$0xff]
        %v329 = vld [vmem:[%s286 + $0x30] sm:$0xff]
        %v330 = vld [vmem:[%s286 + $0x38] sm:$0xff]
        %v331 = vld [vmem:[%s286 + $0x40] sm:$0xff]
        %v332 = vld [vmem:[%s286 + $0x48] sm:$0xff]
        %v333 = vld [vmem:[%s286 + $0x50] sm:$0xff]
        %v334 = vld [vmem:[%s286 + $0x58] sm:$0xff]
        %v335 = vld [vmem:[%s286 + $0x60] sm:$0xff]
        %v336 = vld [vmem:[%s286 + $0x68] sm:$0xff]
        %v337 = vld [vmem:[%s286 + $0x70] sm:$0xff]
        %v338 = vld [vmem:[%s286 + $0x78] sm:$0xff]
        %v339 = vld [vmem:[%s286 + $0x80] sm:$0xff]
        %v340 = vld [vmem:[%s286 + $0x88] sm:$0xff]
        %v341 = vld [vmem:[%s286 + $0x90] sm:$0xff]
        %v342 = vld [vmem:[%s286 + $0x98] sm:$0xff]
        %v343 = vld [vmem:[%s286 + $0xa0] sm:$0xff]
        %v344 = vld [vmem:[%s286 + $0xa8] sm:$0xff]
        %v345 = vld [vmem:[%s286 + $0xb0] sm:$0xff]
        %v346 = vld [vmem:[%s286 + $0xb8] sm:$0xff]
        %v347 = vld [vmem:[%s286 + $0xc0] sm:$0xff]
        %v348 = vld [vmem:[%s286 + $0xc8] sm:$0xff]
        %v349 = vld [vmem:[%s286 + $0xd0] sm:$0xff]
        %v350 = vld [vmem:[%s286 + $0xd8] sm:$0xff]
        %v351 = vld [vmem:[%s286 + $0xe0] sm:$0xff]
        %v352 = vld [vmem:[%s286 + $0xe8] sm:$0xff]
        %v353 = vld [vmem:[%s286 + $0xf0] sm:$0xff]
        %v354 = vld [vmem:[%s286 + $0xf8] sm:$0xff]
        %v355 = vld [vmem:[%s286 + $0x100] sm:$0xff]
        %v356 = vld [vmem:[%s286 + $0x108] sm:$0xff]
        %v357 = vld [vmem:[%s286 + $0x110] sm:$0xff]
        %v358 = vld [vmem:[%s286 + $0x118] sm:$0xff]
        %v359 = vld [vmem:[%s286 + $0x120] sm:$0xff]
        %v360 = vld [vmem:[%s286 + $0x128] sm:$0xff]
        %v361 = vld [vmem:[%s286 + $0x130] sm:$0xff]
        %v362 = vld [vmem:[%s286 + $0x138] sm:$0xff]
        %v363 = vld [vmem:[%s286 + $0x140] sm:$0xff]
        %v364 = vld [vmem:[%s286 + $0x148] sm:$0xff]
        %v365 = vld [vmem:[%s286 + $0x150] sm:$0xff]
        %v366 = vld [vmem:[%s286 + $0x158] sm:$0xff]
        %v367 = vld [vmem:[%s286 + $0x160] sm:$0xff]
        %v368 = vld [vmem:[%s286 + $0x168] sm:$0xff]
        %v369 = vld [vmem:[%s286 + $0x170] sm:$0xff]
        %v370 = vld [vmem:[%s286 + $0x178] sm:$0xff]
        %v375 = vunpack.c.l.b16 %v319
        %v376 = vunpack.c.h.b16 %v319
        %v377 = vunpack.c.l.b16 %v320
        %v378 = vunpack.c.l.b16 %v321
        %v379 = vunpack.c.h.b16 %v321
        %v380 = vunpack.c.l.b16 %v322
        %v381 = vpack.c.b16 %v378, %v375
        %v382 = vpack.c.b16 %v379, %v376
        %v383 = vpack.c.b16 %v380, %v377
        %v435 = vunpack.c.l.b16 %v323
        %v436 = vunpack.c.h.b16 %v323
        %v437 = vunpack.c.l.b16 %v324
        %v438 = vunpack.c.h.b16 %v324
        %v439 = vunpack.c.l.b16 %v325
        %v440 = vunpack.c.h.b16 %v325
        %v441 = vunpack.c.l.b16 %v326
        %v442 = vunpack.c.h.b16 %v326
        %v443 = vunpack.c.l.b16 %v327
        %v444 = vunpack.c.h.b16 %v327
        %v445 = vunpack.c.l.b16 %v328
        %v446 = vunpack.c.h.b16 %v328
        %v447 = vunpack.c.l.b16 %v329
        %v448 = vunpack.c.h.b16 %v329
        %v449 = vunpack.c.l.b16 %v330
        %v450 = vunpack.c.h.b16 %v330
        %v451 = vunpack.c.l.b16 %v331
        %v452 = vunpack.c.h.b16 %v331
        %v453 = vunpack.c.l.b16 %v332
        %v454 = vunpack.c.h.b16 %v332
        %v455 = vunpack.c.l.b16 %v333
        %v456 = vunpack.c.h.b16 %v333
        %v457 = vunpack.c.l.b16 %v334
        %v458 = vunpack.c.h.b16 %v334
        %v459 = vunpack.c.l.b16 %v335
        %v460 = vunpack.c.h.b16 %v335
        %v461 = vunpack.c.l.b16 %v336
        %v462 = vunpack.c.h.b16 %v336
        %v463 = vunpack.c.l.b16 %v337
        %v464 = vunpack.c.h.b16 %v337
        %v465 = vunpack.c.l.b16 %v338
        %v466 = vunpack.c.h.b16 %v338
        %v467 = vunpack.c.l.b16 %v339
        %v468 = vunpack.c.h.b16 %v339
        %v469 = vunpack.c.l.b16 %v340
        %v470 = vunpack.c.h.b16 %v340
        %v471 = vunpack.c.l.b16 %v341
        %v472 = vunpack.c.h.b16 %v341
        %v473 = vunpack.c.l.b16 %v342
        %v474 = vunpack.c.h.b16 %v342
        %v475 = vunpack.c.l.b16 %v343
        %v476 = vunpack.c.h.b16 %v343
        %v477 = vunpack.c.l.b16 %v344
        %v478 = vunpack.c.h.b16 %v344
        %v479 = vunpack.c.l.b16 %v345
        %v480 = vunpack.c.h.b16 %v345
        %v481 = vunpack.c.l.b16 %v346
        %v482 = vunpack.c.h.b16 %v346
        %v483 = vunpack.c.l.b16 %v347
        %v484 = vunpack.c.h.b16 %v347
        %v485 = vunpack.c.l.b16 %v348
        %v486 = vunpack.c.h.b16 %v348
        %v487 = vunpack.c.l.b16 %v349
        %v488 = vunpack.c.h.b16 %v349
        %v489 = vunpack.c.l.b16 %v350
        %v490 = vunpack.c.h.b16 %v350
        %v491 = vunpack.c.l.b16 %v351
        %v492 = vunpack.c.h.b16 %v351
        %v493 = vunpack.c.l.b16 %v352
        %v494 = vunpack.c.h.b16 %v352
        %v495 = vunpack.c.l.b16 %v353
        %v496 = vunpack.c.h.b16 %v353
        %v497 = vunpack.c.l.b16 %v354
        %v498 = vunpack.c.h.b16 %v354
        %v499 = vunpack.c.l.b16 %v355
        %v500 = vunpack.c.h.b16 %v355
        %v501 = vunpack.c.l.b16 %v356
        %v502 = vunpack.c.h.b16 %v356
        %v503 = vunpack.c.l.b16 %v357
        %v504 = vunpack.c.h.b16 %v357
        %v505 = vunpack.c.l.b16 %v358
        %v506 = vunpack.c.h.b16 %v358
        %v507 = vunpack.c.l.b16 %v359
        %v508 = vunpack.c.h.b16 %v359
        %v509 = vunpack.c.l.b16 %v360
        %v510 = vunpack.c.h.b16 %v360
        %v511 = vunpack.c.l.b16 %v361
        %v512 = vunpack.c.h.b16 %v361
        %v513 = vunpack.c.l.b16 %v362
        %v514 = vunpack.c.h.b16 %v362
        %v515 = vunpack.c.l.b16 %v363
        %v516 = vunpack.c.h.b16 %v363
        %v517 = vunpack.c.l.b16 %v364
        %v518 = vunpack.c.h.b16 %v364
        %v519 = vunpack.c.l.b16 %v365
        %v520 = vunpack.c.h.b16 %v365
        %v521 = vunpack.c.l.b16 %v366
        %v522 = vunpack.c.h.b16 %v366
        %v523 = vunpack.c.l.b16 %v367
        %v524 = vunpack.c.h.b16 %v367
        %v525 = vunpack.c.l.b16 %v368
        %v526 = vunpack.c.h.b16 %v368
        %v527 = vunpack.c.l.b16 %v369
        %v528 = vunpack.c.h.b16 %v369
        %v529 = vunpack.c.l.b16 %v370
        %v530 = vunpack.c.h.b16 %v370
        %v531 = vpack.c.b16 %v437, %v435
        %v532 = vpack.c.b16 %v438, %v436
        %v533 = vpack.c.b16 %v441, %v439
        %v534 = vpack.c.b16 %v442, %v440
        %v535 = vpack.c.b16 %v445, %v443
        %v536 = vpack.c.b16 %v446, %v444
        %v537 = vpack.c.b16 %v449, %v447
        %v538 = vpack.c.b16 %v450, %v448
        %v539 = vpack.c.b16 %v453, %v451
        %v540 = vpack.c.b16 %v454, %v452
        %v541 = vpack.c.b16 %v457, %v455
        %v542 = vpack.c.b16 %v458, %v456
        %v543 = vpack.c.b16 %v461, %v459
        %v544 = vpack.c.b16 %v462, %v460
        %v545 = vpack.c.b16 %v465, %v463
        %v546 = vpack.c.b16 %v466, %v464
        %v547 = vpack.c.b16 %v469, %v467
        %v548 = vpack.c.b16 %v470, %v468
        %v549 = vpack.c.b16 %v473, %v471
        %v550 = vpack.c.b16 %v474, %v472
        %v551 = vpack.c.b16 %v477, %v475
        %v552 = vpack.c.b16 %v478, %v476
        %v553 = vpack.c.b16 %v481, %v479
        %v554 = vpack.c.b16 %v482, %v480
        %v555 = vpack.c.b16 %v485, %v483
        %v556 = vpack.c.b16 %v486, %v484
        %v557 = vpack.c.b16 %v489, %v487
        %v558 = vpack.c.b16 %v490, %v488
        %v559 = vpack.c.b16 %v493, %v491
        %v560 = vpack.c.b16 %v494, %v492
        %v561 = vpack.c.b16 %v497, %v495
        %v562 = vpack.c.b16 %v498, %v496
        %v563 = vpack.c.b16 %v501, %v499
        %v564 = vpack.c.b16 %v502, %v500
        %v565 = vpack.c.b16 %v505, %v503
        %v566 = vpack.c.b16 %v506, %v504
        %v567 = vpack.c.b16 %v509, %v507
        %v568 = vpack.c.b16 %v510, %v508
        %v569 = vpack.c.b16 %v513, %v511
        %v570 = vpack.c.b16 %v514, %v512
        %v571 = vpack.c.b16 %v517, %v515
        %v572 = vpack.c.b16 %v518, %v516
        %v573 = vpack.c.b16 %v521, %v519
        %v574 = vpack.c.b16 %v522, %v520
        %v575 = vpack.c.b16 %v525, %v523
        %v576 = vpack.c.b16 %v526, %v524
        %v577 = vpack.c.b16 %v529, %v527
        %v578 = vpack.c.b16 %v530, %v528
        %627 = vmatprep.subr.bf16.mxu0 %v532
        %628 = vmatpush1.bf16.msra.mxu0 %v531
        %629 = vmatprep.subr.bf16.mxu0 %v534
        %630 = vmatpush1.bf16.msra.mxu0 %v533
        %631 = vmatprep.subr.bf16.mxu0 %v536
        %632 = vmatpush1.bf16.msra.mxu0 %v535
        %633 = vmatprep.subr.bf16.mxu0 %v538
        %634 = vmatpush1.bf16.msra.mxu0 %v537
        %635 = vmatprep.subr.bf16.mxu0 %v540
        %636 = vmatpush1.bf16.msra.mxu0 %v539
        %637 = vmatprep.subr.bf16.mxu0 %v542
        %638 = vmatpush1.bf16.msra.mxu0 %v541
        %639 = vmatprep.subr.bf16.mxu0 %v544
        %640 = vmatpush1.bf16.msra.mxu0 %v543
        %641 = vmatprep.subr.bf16.mxu0 %v546
        %642 = vmatpush1.bf16.msra.mxu0 %v545
        %643 = vmatprep.subr.bf16.mxu0 %v548
        %644 = vmatpush1.bf16.msra.mxu0 %v547
        %645 = vmatprep.subr.bf16.mxu0 %v550
        %646 = vmatpush1.bf16.msra.mxu0 %v549
        %647 = vmatprep.subr.bf16.mxu0 %v552
        %648 = vmatpush1.bf16.msra.mxu0 %v551
        %649 = vmatprep.subr.bf16.mxu0 %v554
        %650 = vmatpush1.bf16.msra.mxu0 %v553
        %651 = vmatprep.subr.bf16.mxu0 %v556
        %652 = vmatpush1.bf16.msra.mxu0 %v555
        %653 = vmatprep.subr.bf16.mxu0 %v558
        %654 = vmatpush1.bf16.msra.mxu0 %v557
        %655 = vmatprep.subr.bf16.mxu0 %v560
        %656 = vmatpush1.bf16.msra.mxu0 %v559
        %657 = vmatprep.subr.bf16.mxu0 %v562
        %658 = vmatpush1.bf16.msra.mxu0 %v561
        %659 = vmatprep.mubr.bf16.mxu0 %v382
        %660 = vmatmul.mubr.bf16.gmra.mrb[0].mxu0 %v381
        %v661 = vpop.f32.mrb[0].mxu0
        %v662 = vadd.f32 0.0, %v661
        %v663 = vpop.f32.mrb[0].mxu0
        %v664 = vadd.f32 0.0, %v663
        %v665 = vpop.f32.mrb[0].mxu0
        %v666 = vadd.f32 0.0, %v665
        %v667 = vpop.f32.mrb[0].mxu0
        %v668 = vadd.f32 0.0, %v667
        %669 = vdwg.mxu0
        %670 = vmatprep.subr.bf16.mxu0 %v564
        %671 = vmatpush1.bf16.msra.mxu0 %v563
        %672 = vmatprep.subr.bf16.mxu0 %v566
        %673 = vmatpush1.bf16.msra.mxu0 %v565
        %674 = vmatprep.subr.bf16.mxu0 %v568
        %675 = vmatpush1.bf16.msra.mxu0 %v567
        %676 = vmatprep.subr.bf16.mxu0 %v570
        %677 = vmatpush1.bf16.msra.mxu0 %v569
        %678 = vmatprep.subr.bf16.mxu0 %v572
        %679 = vmatpush1.bf16.msra.mxu0 %v571
        %680 = vmatprep.subr.bf16.mxu0 %v574
        %681 = vmatpush1.bf16.msra.mxu0 %v573
        %682 = vmatprep.subr.bf16.mxu0 %v576
        %683 = vmatpush1.bf16.msra.mxu0 %v575
        %684 = vmatprep.subr.bf16.mxu0 %v578
        %685 = vmatpush1.bf16.msra.mxu0 %v577
        %686 = vmatprep.subr.bf16.mxu0 0
        %687 = vmatpush1.bf16.msra.mxu0 0
        %688 = vmatprep.subr.bf16.mxu0 0
        %689 = vmatpush1.bf16.msra.mxu0 0
        %690 = vmatprep.subr.bf16.mxu0 0
        %691 = vmatpush1.bf16.msra.mxu0 0
        %692 = vmatprep.subr.bf16.mxu0 0
        %693 = vmatpush1.bf16.msra.mxu0 0
        %694 = vmatprep.subr.bf16.mxu0 0
        %695 = vmatpush1.bf16.msra.mxu0 0
        %696 = vmatprep.subr.bf16.mxu0 0
        %697 = vmatpush1.bf16.msra.mxu0 0
        %698 = vmatprep.subr.bf16.mxu0 0
        %699 = vmatpush1.bf16.msra.mxu0 0
        %700 = vmatprep.subr.bf16.mxu0 0
        %701 = vmatpush1.bf16.msra.mxu0 0
        %702 = vmatprep.mubr.bf16.mxu0 0
        %703 = vmatmul.mubr.bf16.gmra.mrb[0].mxu0 %v383
        %v704 = vpop.f32.mrb[0].mxu0
        %v705 = vadd.f32 %v662, %v704
        %v706 = vpop.f32.mrb[0].mxu0
        %v707 = vadd.f32 %v664, %v706
        %v708 = vpop.f32.mrb[0].mxu0
        %v709 = vadd.f32 %v666, %v708
        %v710 = vpop.f32.mrb[0].mxu0
        %v711 = vadd.f32 %v668, %v710
        %712 = vdwg.mxu0
        %v713 = vadd.f32 %v315, %v705
        %v714 = vadd.f32 %v316, %v707
        %v715 = vadd.f32 %v317, %v709
        %v716 = vadd.f32 %v318, %v711
        %717 = vst [vmem:[#allocation2] sm:$0xff] %v713
        %718 = vst [vmem:[#allocation2 + $0x8] sm:$0xff] %v714
        %719 = vst [vmem:[#allocation2 + $0x10] sm:$0xff] %v715
        %720 = vst [vmem:[#allocation2 + $0x18] sm:$0xff] %v716
        %p721 = scmp.eq.s32.totalorder %s21, 2
        // Predicated region
        $region63: #{_lambda_.29} parent=53 // pred_check
          %p722 = pneg %p721
        $region64: #{_lambda_.29} parent=53 // pred_check_branch
          %724 = sbr.rel (%p722) target = $region66
        $region65: #{_lambda_.29} parent=53 // pred_region
          %v725 = vld [vmem:[#allocation2] sm:$0xff]
          %v726 = vld [vmem:[#allocation2 + $0x8] sm:$0xff]
          %v727 = vld [vmem:[#allocation2 + $0x10] sm:$0xff]
          %v728 = vld [vmem:[#allocation2 + $0x18] sm:$0xff]
          %v729 = vld [vmem:[%s292] sm:$0x3]
          %v731 = vlaneseq
          %v732 = vshrl.u32 %v731, 7
          %v733 = vsub.s32 0, %v732
          %v734 = vrot.slane %v729, %v733
          %v735 = vlaneseq
          %v736 = vshrl.u32 %v735, 7
          %v737 = vsub.s32 1, %v736
          %v738 = vrot.slane %v729, %v737
          %v741 = vadd.f32 %v725, %v734
          %v742 = vadd.f32 %v726, %v738
          %v743 = vadd.f32 %v727, %v734
          %v744 = vadd.f32 %v728, %v738
          %v745 = vmax.f32 %v741, 0.0
          %v746 = vmax.f32 %v742, 0.0
          %v747 = vmax.f32 %v743, 0.0
          %v748 = vmax.f32 %v744, 0.0
          %v749 = vpack.c.bf16 %v747, %v745
          %v750 = vpack.c.bf16 %v748, %v746
          %v753 = vunpack.c.l.b16 %v749
          %v754 = vunpack.c.l.b16 %v750
          %v755 = vunpack.c.h.b16 %v749
          %v756 = vunpack.c.h.b16 %v750
          %v757 = vpack.c.b16 %v754, %v753
          %v758 = vpack.c.b16 %v756, %v755
          %761 = vst [vmem:[%s303] sm:$0xff] %v757
          %762 = vst [vmem:[%s303 + $0x8] sm:$0xff] %v758
        $region66: #{_lambda_.29} parent=53 // pred_fallthru
          _
        %s763 = smul.u32 2, %s19
        %s764 = smul.u32 2, %s20
        %p765 = scmp.lt.s32.totalorder %s763, 1
        %s766 = scalar_select %p765, %s763, 1
        %p767 = scmp.lt.s32.totalorder %s764, 1
        %s768 = scalar_select %p767, %s764, 1
        %s769 = smul.addr %s766, 2
        %s770 = sadd.s32 %s768, %s769
        %s771 = smul.addr %s770, 4
        %s772 = scalar_lea.vmem %s3, %s771
        // Predicated region
        $region67: #{_lambda_.29} parent=53 // pred_check
          %p773 = pneg %p135
        $region68: #{_lambda_.29} parent=53 // pred_check_branch
          %775 = sbr.rel (%p773) target = $region70
        $region69: #{_lambda_.29} parent=53 // pred_region
          %s776 = smul.u32 2, %s19
          %s777 = smul.u32 2, %s20
        $region70: #{_lambda_.29} parent=53 // pred_fallthru
          _
        // Predicated region
        $region71: #{_lambda_.29} parent=53 // pred_check
          %p778 = pneg %p135
        $region72: #{_lambda_.29} parent=53 // pred_check_branch
          %780 = sbr.rel (%p778) target = $region74
        $region73: #{_lambda_.29} parent=53 // pred_region
          %s781 = smul.u32 2, %s19
          %s782 = smul.u32 2, %s20
          %p783 = scmp.lt.s32.totalorder %s781, 1
          %s784 = scalar_select %p783, %s781, 1
          %p785 = scmp.lt.s32.totalorder %s782, 1
          %s786 = scalar_select %p785, %s782, 1
          %s787 = smul.addr %s784, 2
          %s788 = sadd.s32 %s786, %s787
          %s789 = smul.addr %s788, 4
          %s790 = scalar_lea.vmem %s3, %s789
        $region74: #{_lambda_.29} parent=53 // pred_fallthru
          _
      $region54: #{_lambda_.29} parent=5 // pred_fallthru
        _
      %p791 = scmp.le.s32.totalorder 2, %s9
      // Predicated region
      $region75: #{_lambda_.29} parent=5 // pred_check
        %p792 = pneg %p791
      $region76: #{_lambda_.29} parent=5 // pred_check_branch
        %794 = sbr.rel (%p792) target = $region78
      $region77: #{_lambda_.29} parent=5 // pred_region
        %s795 = ssub.s32 %s9, 2
      $region78: #{_lambda_.29} parent=5 // pred_fallthru
        _
    $region6: #{_lambda_.29} parent=1 // loop_footer
      %s13 = sadd.s32 1, %s9
    $region7: #{_lambda_.29} parent=1 // loop_footer_branch
      %8 = sbr.rel target = $region3
    $region8: #{_lambda_.29} parent=1 // loop_exit
      _

// kernel: _lambda_.28
$region0: #{_lambda_.28}
  #allocation0 [shape = 'u32[]', space=smem, size = 0x4, offset = 0x4, fixed_abs, tag = 'smem constant byte address 0x4 - core index']
  #allocation1 [shape = 'u32[144,128]{1,0:T(1,128)}', space=vmem, size = 0x12000, scoped, tag = 'internal scratch']
  #allocation2 [shape = 'f32[16,256]{1,0:T(8,128)}', space=vmem, size = 0x4000, scoped, tag = 'scratch operand']
  %s0 = inlined_call_operand.vmem [shape: bf16[16,128], index: 0, kind: input, shape index: {}]
  %s1 = inlined_call_operand.vmem [shape: bf16[128,256], index: 1, kind: input, shape index: {}]
  %s2 = inlined_call_operand.vmem [shape: f32[1,256], index: 2, kind: input, shape index: {}]
  %s3 = inlined_call_operand.vmem [shape: bf16[16,256], index: 3, kind: output, shape index: {}]
  %s4 = sld [smem:[#allocation0]]
  $region30: #{_lambda_.28} parent=0
    _
  %s6 = ssub.s32 1, %s4
  %s7 = scalar_select 0, %s6, %s4
  // Predicated region
  $region2: #{_lambda_.28} parent=0 // pred_check
    _
  $region3: #{_lambda_.28} parent=0 // pred_check_branch
    %9 = sbr.rel (0) target = $region5
  $region4: #{_lambda_.28} parent=0 // pred_region
    _
  $region5: #{_lambda_.28} parent=0 // pred_fallthru
    _
  // Predicated region
  $region6: #{_lambda_.28} parent=0 // pred_check
    _
  $region7: #{_lambda_.28} parent=0 // pred_check_branch
    %11 = sbr.rel (0) target = $region9
  $region8: #{_lambda_.28} parent=0 // pred_region
    _
  $region9: #{_lambda_.28} parent=0 // pred_fallthru
    _
  // Predicated region
  $region10: #{_lambda_.28} parent=0 // pred_check
    _
  $region11: #{_lambda_.28} parent=0 // pred_check_branch
    %13 = sbr.rel (0) target = $region13
  $region12: #{_lambda_.28} parent=0 // pred_region
    _
  $region13: #{_lambda_.28} parent=0 // pred_fallthru
    _
  %p15 = scmp.eq.s32.totalorder 0, 0
  // Predicated region
  $region14: #{_lambda_.28} parent=0 // pred_check
    %p16 = pneg %p15
  $region15: #{_lambda_.28} parent=0 // pred_check_branch
    %18 = sbr.rel (%p16) target = $region17
  $region16: #{_lambda_.28} parent=0 // pred_region
    %19 = vst [vmem:[#allocation2] sm:$0xff] 0.0
    %20 = vst [vmem:[#allocation2 + $0x8] sm:$0xff] 0.0
    %21 = vst [vmem:[#allocation2 + $0x10] sm:$0xff] 0.0
    %22 = vst [vmem:[#allocation2 + $0x18] sm:$0xff] 0.0
  $region17: #{_lambda_.28} parent=0 // pred_fallthru
    _
  %v23 = vld [vmem:[#allocation2] sm:$0xff]
  %v24 = vld [vmem:[#allocation2 + $0x8] sm:$0xff]
  %v25 = vld [vmem:[#allocation2 + $0x10] sm:$0xff]
  %v26 = vld [vmem:[#allocation2 + $0x18] sm:$0xff]
  %v27 = vld [vmem:[%s0] sm:$0xf]
  %v28 = vld [vmem:[%s0 + $0x4] sm:$0xf]
  %v29 = vld [vmem:[%s1] sm:$0xff]
  %v30 = vld [vmem:[%s1 + $0x8] sm:$0xff]
  %v31 = vld [vmem:[%s1 + $0x10] sm:$0xff]
  %v32 = vld [vmem:[%s1 + $0x18] sm:$0xff]
  %v33 = vld [vmem:[%s1 + $0x20] sm:$0xff]
  %v34 = vld [vmem:[%s1 + $0x28] sm:$0xff]
  %v35 = vld [vmem:[%s1 + $0x30] sm:$0xff]
  %v36 = vld [vmem:[%s1 + $0x38] sm:$0xff]
  %v37 = vld [vmem:[%s1 + $0x40] sm:$0xff]
  %v38 = vld [vmem:[%s1 + $0x48] sm:$0xff]
  %v39 = vld [vmem:[%s1 + $0x50] sm:$0xff]
  %v40 = vld [vmem:[%s1 + $0x58] sm:$0xff]
  %v41 = vld [vmem:[%s1 + $0x60] sm:$0xff]
  %v42 = vld [vmem:[%s1 + $0x68] sm:$0xff]
  %v43 = vld [vmem:[%s1 + $0x70] sm:$0xff]
  %v44 = vld [vmem:[%s1 + $0x78] sm:$0xff]
  %v47 = vunpack.c.l.b16 %v27
  %v48 = vunpack.c.l.b16 %v28
  %v49 = vpack.c.b16 %v48, %v47
  %v67 = vunpack.c.l.b16 %v29
  %v68 = vunpack.c.h.b16 %v29
  %v69 = vunpack.c.l.b16 %v30
  %v70 = vunpack.c.h.b16 %v30
  %v71 = vunpack.c.l.b16 %v31
  %v72 = vunpack.c.h.b16 %v31
  %v73 = vunpack.c.l.b16 %v32
  %v74 = vunpack.c.h.b16 %v32
  %v75 = vunpack.c.l.b16 %v33
  %v76 = vunpack.c.h.b16 %v33
  %v77 = vunpack.c.l.b16 %v34
  %v78 = vunpack.c.h.b16 %v34
  %v79 = vunpack.c.l.b16 %v35
  %v80 = vunpack.c.h.b16 %v35
  %v81 = vunpack.c.l.b16 %v36
  %v82 = vunpack.c.h.b16 %v36
  %v83 = vunpack.c.l.b16 %v37
  %v84 = vunpack.c.h.b16 %v37
  %v85 = vunpack.c.l.b16 %v38
  %v86 = vunpack.c.h.b16 %v38
  %v87 = vunpack.c.l.b16 %v39
  %v88 = vunpack.c.h.b16 %v39
  %v89 = vunpack.c.l.b16 %v40
  %v90 = vunpack.c.h.b16 %v40
  %v91 = vunpack.c.l.b16 %v41
  %v92 = vunpack.c.h.b16 %v41
  %v93 = vunpack.c.l.b16 %v42
  %v94 = vunpack.c.h.b16 %v42
  %v95 = vunpack.c.l.b16 %v43
  %v96 = vunpack.c.h.b16 %v43
  %v97 = vunpack.c.l.b16 %v44
  %v98 = vunpack.c.h.b16 %v44
  %v99 = vpack.c.b16 %v69, %v67
  %v100 = vpack.c.b16 %v70, %v68
  %v101 = vpack.c.b16 %v73, %v71
  %v102 = vpack.c.b16 %v74, %v72
  %v103 = vpack.c.b16 %v77, %v75
  %v104 = vpack.c.b16 %v78, %v76
  %v105 = vpack.c.b16 %v81, %v79
  %v106 = vpack.c.b16 %v82, %v80
  %v107 = vpack.c.b16 %v85, %v83
  %v108 = vpack.c.b16 %v86, %v84
  %v109 = vpack.c.b16 %v89, %v87
  %v110 = vpack.c.b16 %v90, %v88
  %v111 = vpack.c.b16 %v93, %v91
  %v112 = vpack.c.b16 %v94, %v92
  %v113 = vpack.c.b16 %v97, %v95
  %v114 = vpack.c.b16 %v98, %v96
  %131 = vmatprep.subr.bf16.mxu0 %v100
  %132 = vmatpush1.bf16.msra.mxu0 %v99
  %133 = vmatprep.subr.bf16.mxu0 %v102
  %134 = vmatpush1.bf16.msra.mxu0 %v101
  %135 = vmatprep.subr.bf16.mxu0 %v104
  %136 = vmatpush1.bf16.msra.mxu0 %v103
  %137 = vmatprep.subr.bf16.mxu0 %v106
  %138 = vmatpush1.bf16.msra.mxu0 %v105
  %139 = vmatprep.subr.bf16.mxu0 %v108
  %140 = vmatpush1.bf16.msra.mxu0 %v107
  %141 = vmatprep.subr.bf16.mxu0 %v110
  %142 = vmatpush1.bf16.msra.mxu0 %v109
  %143 = vmatprep.subr.bf16.mxu0 %v112
  %144 = vmatpush1.bf16.msra.mxu0 %v111
  %145 = vmatprep.subr.bf16.mxu0 %v114
  %146 = vmatpush1.bf16.msra.mxu0 %v113
  %147 = vmatprep.subr.bf16.mxu0 0
  %148 = vmatpush1.bf16.msra.mxu0 0
  %149 = vmatprep.subr.bf16.mxu0 0
  %150 = vmatpush1.bf16.msra.mxu0 0
  %151 = vmatprep.subr.bf16.mxu0 0
  %152 = vmatpush1.bf16.msra.mxu0 0
  %153 = vmatprep.subr.bf16.mxu0 0
  %154 = vmatpush1.bf16.msra.mxu0 0
  %155 = vmatprep.subr.bf16.mxu0 0
  %156 = vmatpush1.bf16.msra.mxu0 0
  %157 = vmatprep.subr.bf16.mxu0 0
  %158 = vmatpush1.bf16.msra.mxu0 0
  %159 = vmatprep.subr.bf16.mxu0 0
  %160 = vmatpush1.bf16.msra.mxu0 0
  %161 = vmatprep.subr.bf16.mxu0 0
  %162 = vmatpush1.bf16.msra.mxu0 0
  %163 = vmatprep.mubr.bf16.mxu0 0
  %164 = vmatmul.mubr.bf16.gmra.mrb[0].mxu0 %v49
  %v165 = vpop.f32.mrb[0].mxu0
  %v166 = vadd.f32 0.0, %v165
  %v167 = vpop.f32.mrb[0].mxu0
  %v168 = vadd.f32 0.0, %v167
  %v169 = vpop.f32.mrb[0].mxu0
  %v170 = vadd.f32 0.0, %v169
  %v171 = vpop.f32.mrb[0].mxu0
  %v172 = vadd.f32 0.0, %v171
  %173 = vdwg.mxu0
  %v174 = vadd.f32 %v23, %v166
  %v175 = vadd.f32 %v24, %v168
  %v176 = vadd.f32 %v25, %v170
  %v177 = vadd.f32 %v26, %v172
  %178 = vst [vmem:[#allocation2] sm:$0xff] %v174
  %179 = vst [vmem:[#allocation2 + $0x8] sm:$0xff] %v175
  %180 = vst [vmem:[#allocation2 + $0x10] sm:$0xff] %v176
  %181 = vst [vmem:[#allocation2 + $0x18] sm:$0xff] %v177
  // Predicated region
  $region18: #{_lambda_.28} parent=0 // pred_check
    %p182 = pneg %p15
  $region19: #{_lambda_.28} parent=0 // pred_check_branch
    %184 = sbr.rel (%p182) target = $region21
  $region20: #{_lambda_.28} parent=0 // pred_region
    %v185 = vld [vmem:[#allocation2] sm:$0xff]
    %v186 = vld [vmem:[#allocation2 + $0x8] sm:$0xff]
    %v187 = vld [vmem:[#allocation2 + $0x10] sm:$0xff]
    %v188 = vld [vmem:[#allocation2 + $0x18] sm:$0xff]
    %v189 = vld [vmem:[%s2] sm:$0x3]
    %v191 = vlaneseq
    %v192 = vshrl.u32 %v191, 7
    %v193 = vsub.s32 0, %v192
    %v194 = vrot.slane %v189, %v193
    %v195 = vlaneseq
    %v196 = vshrl.u32 %v195, 7
    %v197 = vsub.s32 1, %v196
    %v198 = vrot.slane %v189, %v197
    %v201 = vadd.f32 %v185, %v194
    %v202 = vadd.f32 %v186, %v198
    %v203 = vadd.f32 %v187, %v194
    %v204 = vadd.f32 %v188, %v198
    %v205 = vpack.c.bf16 %v203, %v201
    %v206 = vpack.c.bf16 %v204, %v202
    %v209 = vunpack.c.l.b16 %v205
    %v210 = vunpack.c.l.b16 %v206
    %v211 = vunpack.c.h.b16 %v205
    %v212 = vunpack.c.h.b16 %v206
    %v213 = vpack.c.b16 %v210, %v209
    %v214 = vpack.c.b16 %v212, %v211
    %217 = vst [vmem:[%s3] sm:$0xff] %v213
    %218 = vst [vmem:[%s3 + $0x8] sm:$0xff] %v214
  $region21: #{_lambda_.28} parent=0 // pred_fallthru
    _
  // Predicated region
  $region22: #{_lambda_.28} parent=0 // pred_check
    _
  $region23: #{_lambda_.28} parent=0 // pred_check_branch
    %220 = sbr.rel (0) target = $region25
  $region24: #{_lambda_.28} parent=0 // pred_region
    _
  $region25: #{_lambda_.28} parent=0 // pred_fallthru
    _
  // Predicated region
  $region26: #{_lambda_.28} parent=0 // pred_check
    _
  $region27: #{_lambda_.28} parent=0 // pred_check_branch
    %222 = sbr.rel (0) target = $region29
  $region28: #{_lambda_.28} parent=0 // pred_region
    _
  $region29: #{_lambda_.28} parent=0 // pred_fallthru
    _

// kernel: _lambda_.30
$region0: #{_lambda_.30}
  #allocation0 [shape = 'u32[]', space=smem, size = 0x4, offset = 0x4, fixed_abs, tag = 'smem constant byte address 0x4 - core index']
  #allocation1 [shape = 'u32[144,128]{1,0:T(1,128)}', space=vmem, size = 0x12000, scoped, tag = 'internal scratch']
  #allocation2 [shape = 'f32[16,256]{1,0:T(8,128)}', space=vmem, size = 0x4000, scoped, tag = 'scratch operand']
  %s0 = inlined_call_operand.vmem [shape: bf16[16,2304], index: 0, kind: input, shape index: {}]
  %s1 = inlined_call_operand.vmem [shape: bf16[2304,256], index: 1, kind: input, shape index: {}]
  %s2 = inlined_call_operand.vmem [shape: f32[1,256], index: 2, kind: input, shape index: {}]
  %s3 = inlined_call_operand.vmem [shape: bf16[16,256], index: 3, kind: input, shape index: {}]
  %s4 = inlined_call_operand.vmem [shape: bf16[16,256], index: 4, kind: output, shape index: {}]
  %s5 = sld [smem:[#allocation0]]
  $region83: #{_lambda_.30} parent=0
    _
  %s7 = ssub.s32 1, %s5
  %s8 = scalar_select 0, %s7, %s5
  $region1: #{_lambda_.30} parent=0
    #allocation3 [shape = 'u8[24576]{0}', space=vmem, size = 0x6000, scoped, tag = 'input window, operand 0']
    loop: start=0, step=1, limit=8
    $region2: #{_lambda_.30} parent=1 // loop_pre_header
      _
    $region3: #{_lambda_.30} parent=1 // loop_header
      %s10 = sphi 0, %s14
      %p11 = scmp.ge.s32.totalorder %s10, 8
      %s17 = sphi 0, %s36
      %s18 = sphi 0, %s32
      %s19 = sphi 0, %s28
      %s20 = sphi 0, %s17
      %s21 = sphi 0, %s18
      %s22 = sphi 0, %s19
      %s23 = sphi 0, %s20
      %s24 = sphi 0, %s21
      %s25 = sphi 0, %s22
      %s41 = sphi 0, %s43
      %s44 = sphi 0, %s41
      %s45 = sphi 0, %s44
      %s61 = sphi 0, %s45
      %s69 = sphi 0, %s71
      %s72 = sphi 0, %s69
      %s73 = sphi 0, %s72
      %s89 = sphi 0, %s73
      %s95 = sphi 0, %s97
      %s98 = sphi 0, %s95
      %s99 = sphi 0, %s98
      %s115 = sphi 0, %s99
      %s123 = sphi 0, %s125
      %s126 = sphi 0, %s123
      %s127 = sphi 0, %s126
      %s143 = sphi 0, %s127
      %s151 = sphi 0, %s153
      %s154 = sphi 0, %s151
      %s155 = sphi 0, %s154
      %s171 = sphi 0, %s155
    $region4: #{_lambda_.30} parent=1 // loop_header_branch
      %13 = sbr.rel (%p11) target = $region8
    $region5: #{_lambda_.30} parent=1 // loop_body
      %s15 = ssub.s32 %s10, 1
      %s16 = ssub.s32 %s10, 2
      %s26 = sadd.s32 1, %s19
      %p27 = scmp.ge.s32.totalorder %s26, 6
      %s28 = scalar_select %p27, 0, %s26
      %s29 = sadd.s32 1, %s18
      %s30 = scalar_select %p27, %s29, %s18
      %p31 = scmp.ge.s32.totalorder %s30, 1
      %s32 = scalar_select %p31, 0, %s30
      %s33 = sadd.s32 1, %s17
      %s34 = scalar_select %p31, %s33, %s17
      %p35 = scmp.ge.s32.totalorder %s34, 1
      %s36 = scalar_select %p35, 0, %s34
      %s37 = ssub.s32 %s17, %s36
      %s38 = ssub.s32 %s19, %s28
      %s39 = sor.u32 %s37, %s38
      %p40 = scmp.eq.s32.totalorder %s39, 0
      %s42 = sadd.s32 %s41, 1
      %s43 = scalar_select %p40, %s41, %s42
      %p46 = pneg %p40
      %p47 = scmp.eq.s32.totalorder %s10, 5
      %p48 = por %p46, %p47
      %p49 = scmp.ne.s32.totalorder %s41, %s44
      %p50 = scmp.eq.s32.totalorder %s10, 0
      %p51 = por %p49, %p50
      %p52 = scmp.ne.s32.totalorder %s41, %s44
      %p53 = scmp.eq.s32.totalorder %s15, 5
      %p54 = por %p52, %p53
      %p55 = scmp.ne.s32.totalorder %s44, %s45
      %p56 = scmp.eq.s32.totalorder %s15, 0
      %p57 = por %p55, %p56
      %p58 = scmp.ne.s32.totalorder %s44, %s45
      %p59 = scmp.eq.s32.totalorder %s16, 5
      %p60 = por %p58, %p59
      %p62 = scmp.ne.s32.totalorder %s45, %s61
      %p63 = scmp.eq.s32.totalorder %s16, 0
      %p64 = por %p62, %p63
      %s65 = ssub.s32 %s19, %s28
      %s66 = ssub.s32 %s18, %s32
      %s67 = sor.u32 %s65, %s66
      %p68 = scmp.eq.s32.totalorder %s67, 0
      %s70 = sadd.s32 %s69, 1
      %s71 = scalar_select %p68, %s69, %s70
      %p74 = pneg %p68
      %p75 = scmp.eq.s32.totalorder %s10, 5
      %p76 = por %p74, %p75
      %p77 = scmp.ne.s32.totalorder %s69, %s72
      %p78 = scmp.eq.s32.totalorder %s10, 0
      %p79 = por %p77, %p78
      %p80 = scmp.ne.s32.totalorder %s69, %s72
      %p81 = scmp.eq.s32.totalorder %s15, 5
      %p82 = por %p80, %p81
      %p83 = scmp.ne.s32.totalorder %s72, %s73
      %p84 = scmp.eq.s32.totalorder %s15, 0
      %p85 = por %p83, %p84
      %p86 = scmp.ne.s32.totalorder %s72, %s73
      %p87 = scmp.eq.s32.totalorder %s16, 5
      %p88 = por %p86, %p87
      %p90 = scmp.ne.s32.totalorder %s73, %s89
      %p91 = scmp.eq.s32.totalorder %s16, 0
      %p92 = por %p90, %p91
      %s93 = ssub.s32 %s18, %s32
      %p94 = scmp.eq.s32.totalorder %s93, 0
      %s96 = sadd.s32 %s95, 1
      %s97 = scalar_select %p94, %s95, %s96
      %p100 = pneg %p94
      %p101 = scmp.eq.s32.totalorder %s10, 5
      %p102 = por %p100, %p101
      %p103 = scmp.ne.s32.totalorder %s95, %s98
      %p104 = scmp.eq.s32.totalorder %s10, 0
      %p105 = por %p103, %p104
      %p106 = scmp.ne.s32.totalorder %s95, %s98
      %p107 = scmp.eq.s32.totalorder %s15, 5
      %p108 = por %p106, %p107
      %p109 = scmp.ne.s32.totalorder %s98, %s99
      %p110 = scmp.eq.s32.totalorder %s15, 0
      %p111 = por %p109, %p110
      %p112 = scmp.ne.s32.totalorder %s98, %s99
      %p113 = scmp.eq.s32.totalorder %s16, 5
      %p114 = por %p112, %p113
      %p116 = scmp.ne.s32.totalorder %s99, %s115
      %p117 = scmp.eq.s32.totalorder %s16, 0
      %p118 = por %p116, %p117
      %s119 = ssub.s32 %s17, %s36
      %s120 = ssub.s32 %s18, %s32
      %s121 = sor.u32 %s119, %s120
      %p122 = scmp.eq.s32.totalorder %s121, 0
      %s124 = sadd.s32 %s123, 1
      %s125 = scalar_select %p122, %s123, %s124
      %p128 = pneg %p122
      %p129 = scmp.eq.s32.totalorder %s10, 5
      %p130 = por %p128, %p129
      %p131 = scmp.ne.s32.totalorder %s123, %s126
      %p132 = scmp.eq.s32.totalorder %s10, 0
      %p133 = por %p131, %p132
      %p134 = scmp.ne.s32.totalorder %s123, %s126
      %p135 = scmp.eq.s32.totalorder %s15, 5
      %p136 = por %p134, %p135
      %p137 = scmp.ne.s32.totalorder %s126, %s127
      %p138 = scmp.eq.s32.totalorder %s15, 0
      %p139 = por %p137, %p138
      %p140 = scmp.ne.s32.totalorder %s126, %s127
      %p141 = scmp.eq.s32.totalorder %s16, 5
      %p142 = por %p140, %p141
      %p144 = scmp.ne.s32.totalorder %s127, %s143
      %p145 = scmp.eq.s32.totalorder %s16, 0
      %p146 = por %p144, %p145
      %s147 = ssub.s32 %s17, %s36
      %s148 = ssub.s32 %s18, %s32
      %s149 = sor.u32 %s147, %s148
      %p150 = scmp.eq.s32.totalorder %s149, 0
      %s152 = sadd.s32 %s151, 1
      %s153 = scalar_select %p150, %s151, %s152
      %p156 = pneg %p150
      %p157 = scmp.eq.s32.totalorder %s10, 5
      %p158 = por %p156, %p157
      %p159 = scmp.ne.s32.totalorder %s151, %s154
      %p160 = scmp.eq.s32.totalorder %s10, 0
      %p161 = por %p159, %p160
      %p162 = scmp.ne.s32.totalorder %s151, %s154
      %p163 = scmp.eq.s32.totalorder %s15, 5
      %p164 = por %p162, %p163
      %p165 = scmp.ne.s32.totalorder %s154, %s155
      %p166 = scmp.eq.s32.totalorder %s15, 0
      %p167 = por %p165, %p166
      %p168 = scmp.ne.s32.totalorder %s154, %s155
      %p169 = scmp.eq.s32.totalorder %s16, 5
      %p170 = por %p168, %p169
      %p172 = scmp.ne.s32.totalorder %s155, %s171
      %p173 = scmp.eq.s32.totalorder %s16, 0
      %p174 = por %p172, %p173
      %p175 = scmp.le.s32.totalorder 1, %s10
      %p176 = scmp.lt.s32.totalorder %s10, 7
      %p177 = pnand %p175, %p176
      %p178 = pneg %p177
      // Predicated region
      $region9: #{_lambda_.30} parent=5 // pred_check
        _
      $region10: #{_lambda_.30} parent=5 // pred_check_branch
        %180 = sbr.rel (%p177) target = $region12
      $region11: #{_lambda_.30} parent=5 // pred_region
        %s181 = ssub.s32 %s10, 1
        // Predicated region
        $region13: #{_lambda_.30} parent=11 // pred_check
          %p182 = pneg %p111
        $region14: #{_lambda_.30} parent=11 // pred_check_branch
          %184 = sbr.rel (%p182) target = $region16
        $region15: #{_lambda_.30} parent=11 // pred_region
          %s185 = smul.u32 2, %s21
          %p186 = scmp.lt.s32.totalorder %s185, 1
          %s187 = scalar_select %p186, %s185, 1
          %s188 = scalar_lea.vmem %s2, %s187
          %s189 = smul.u32 2, %s21
        $region16: #{_lambda_.30} parent=11 // pred_fallthru
          _
        // Predicated region
        $region17: #{_lambda_.30} parent=11 // pred_check
          %p190 = pneg %p139
        $region18: #{_lambda_.30} parent=11 // pred_check_branch
          %192 = sbr.rel (%p190) target = $region20
        $region19: #{_lambda_.30} parent=11 // pred_region
          %s193 = smul.u32 2, %s20
          %s194 = smul.u32 2, %s21
          %p195 = scmp.lt.s32.totalorder %s193, 1
          %s196 = scalar_select %p195, %s193, 1
          %p197 = scmp.lt.s32.totalorder %s194, 1
          %s198 = scalar_select %p197, %s194, 1
          %s199 = smul.addr %s196, 2
          %s200 = sadd.s32 %s198, %s199
          %s201 = smul.addr %s200, 4
          %s202 = scalar_lea.vmem %s3, %s201
          %s203 = smul.u32 2, %s20
          %s204 = smul.u32 2, %s21
        $region20: #{_lambda_.30} parent=11 // pred_fallthru
          _
      $region12: #{_lambda_.30} parent=5 // pred_fallthru
        _
      %p205 = scmp.lt.s32.totalorder %s10, 6
      // Predicated region
      $region21: #{_lambda_.30} parent=5 // pred_check
        %p206 = pneg %p205
      $region22: #{_lambda_.30} parent=5 // pred_check_branch
        %208 = sbr.rel (%p206) target = $region24
      $region23: #{_lambda_.30} parent=5 // pred_region
        // Predicated region
        $region25: #{_lambda_.30} parent=23 // pred_check
          %p209 = pneg %p51
        $region26: #{_lambda_.30} parent=23 // pred_check_branch
          %211 = sbr.rel (%p209) target = $region28
        $region27: #{_lambda_.30} parent=23 // pred_region
          %s212 = sand.u32 %s41, 1
          %s213 = sand.u32 %s41, 1
          %s214 = smul.addr %s213, 24
          %s215 = scalar_lea.vmem [#allocation3], %s214
          %s216 = smul.u32 2, %s17
          %s217 = smul.u32 3, %s19
          %s218 = smul.addr %s216, 18
          %s219 = sadd.s32 %s217, %s218
          %s220 = smul.addr %s219, 4
          %s221 = scalar_lea.vmem %s0, %s220
          // Predicated region
          $region29: #{_lambda_.30} parent=27 // pred_check
            _
          $region30: #{_lambda_.30} parent=27 // pred_check_branch
            %223 = sbr.rel (0) target = $region32
          $region31: #{_lambda_.30} parent=27 // pred_region
            // Predicated region
            $region33: #{_lambda_.30} parent=31 // pred_check
              _
            $region34: #{_lambda_.30} parent=31 // pred_check_branch
              %225 = sbr.rel (0) target = $region36
            $region35: #{_lambda_.30} parent=31 // pred_region
              %s226 = scalar_lea.vmem %s221, 8
              %s227 = scalar_lea.vmem %s215, 8 [#allocation3]
              loop: start=0, step=1, limit=1
              $region37: #{_lambda_.30} parent=35 // loop_pre_header
                _
              $region38: #{_lambda_.30} parent=35 // loop_header
                %s229 = sphi 0, %s233
                %p230 = scmp.ge.s32.totalorder %s229, 1
                %s234 = sphi %s221, %s221
                %s235 = sphi %s215, %s215
              $region39: #{_lambda_.30} parent=35 // loop_header_branch
                %232 = sbr.rel (%p230) target = $region43
              $region40: #{_lambda_.30} parent=35 // loop_body
                %v236 = vld [vmem:[%s234] sm:$0xff]
                %237 = vst [vmem:[%s235] sm:$0xff] %v236
                %v238 = vld [vmem:[%s234 + $0x48] sm:$0xff]
                %239 = vst [vmem:[%s235 + $0xc] sm:$0xff] %v238
              $region41: #{_lambda_.30} parent=35 // loop_footer
                %s233 = sadd.s32 1, %s229
              $region42: #{_lambda_.30} parent=35 // loop_footer_branch
                %228 = sbr.rel target = $region38
              $region43: #{_lambda_.30} parent=35 // loop_exit
                _
              loop: start=0, step=1, limit=1
              $region44: #{_lambda_.30} parent=35 // loop_pre_header
                _
              $region45: #{_lambda_.30} parent=35 // loop_header
                %s242 = sphi 0, %s246
                %p243 = scmp.ge.s32.totalorder %s242, 1
                %s247 = sphi %s226, %s226
                %s248 = sphi %s227, %s227
              $region46: #{_lambda_.30} parent=35 // loop_header_branch
                %245 = sbr.rel (%p243) target = $region50
              $region47: #{_lambda_.30} parent=35 // loop_body
                %v249 = vld [vmem:[%s247] sm:$0xf]
                %250 = vst [vmem:[%s248] sm:$0xf] %v249
                %v251 = vld [vmem:[%s247 + $0x48] sm:$0xf]
                %252 = vst [vmem:[%s248 + $0xc] sm:$0xf] %v251
              $region48: #{_lambda_.30} parent=35 // loop_footer
                %s246 = sadd.s32 1, %s242
              $region49: #{_lambda_.30} parent=35 // loop_footer_branch
                %241 = sbr.rel target = $region45
              $region50: #{_lambda_.30} parent=35 // loop_exit
                _
            $region36: #{_lambda_.30} parent=31 // pred_fallthru
              _
          $region32: #{_lambda_.30} parent=27 // pred_fallthru
            _
          %253 = vnop
        $region28: #{_lambda_.30} parent=23 // pred_fallthru
          _
        // Predicated region
        $region51: #{_lambda_.30} parent=23 // pred_check
          %p254 = pneg %p79
        $region52: #{_lambda_.30} parent=23 // pred_check_branch
          %256 = sbr.rel (%p254) target = $region54
        $region53: #{_lambda_.30} parent=23 // pred_region
          %s257 = smul.u32 48, %s19
          %s258 = smul.u32 2, %s18
          %p259 = scmp.lt.s32.totalorder %s257, 287
          %s260 = scalar_select %p259, %s257, 287
          %p261 = scmp.lt.s32.totalorder %s258, 1
          %s262 = scalar_select %p261, %s258, 1
          %s263 = smul.addr %s260, 2
          %s264 = sadd.s32 %s262, %s263
          %s265 = smul.addr %s264, 4
          %s266 = scalar_lea.vmem %s1, %s265
          %s267 = smul.u32 48, %s19
          %s268 = smul.u32 2, %s18
        $region54: #{_lambda_.30} parent=23 // pred_fallthru
          _
      $region24: #{_lambda_.30} parent=5 // pred_fallthru
        _
      %p269 = scmp.le.s32.totalorder 1, %s10
      %p270 = scmp.lt.s32.totalorder %s10, 7
      %p271 = pnand %p269, %p270
      %p272 = pneg %p271
      // Predicated region
      $region55: #{_lambda_.30} parent=5 // pred_check
        _
      $region56: #{_lambda_.30} parent=5 // pred_check_branch
        %274 = sbr.rel (%p271) target = $region58
      $region57: #{_lambda_.30} parent=5 // pred_region
        %s275 = ssub.s32 %s10, 1
        %s276 = sand.u32 %s44, 1
        %s277 = sand.u32 %s44, 1
        %s278 = smul.addr %s277, 24
        %s279 = scalar_lea.vmem [#allocation3], %s278
        // Predicated region
        $region59: #{_lambda_.30} parent=57 // pred_check
          %p280 = pneg %p57
        $region60: #{_lambda_.30} parent=57 // pred_check_branch
          %282 = sbr.rel (%p280) target = $region62
        $region61: #{_lambda_.30} parent=57 // pred_region
          _
        $region62: #{_lambda_.30} parent=57 // pred_fallthru
          _
        %s283 = sand.u32 %s44, 1
        %s284 = sand.u32 %s44, 1
        %s285 = smul.addr %s284, 24
        %s286 = scalar_lea.vmem [#allocation3], %s285
        %p287 = pneg %p57
        %p288 = pneg %p54
        %s289 = smul.u32 48, %s22
        %s290 = smul.u32 2, %s21
        %p291 = scmp.lt.s32.totalorder %s289, 287
        %s292 = scalar_select %p291, %s289, 287
        %p293 = scmp.lt.s32.totalorder %s290, 1
        %s294 = scalar_select %p293, %s290, 1
        %s295 = smul.addr %s292, 2
        %s296 = sadd.s32 %s294, %s295
        %s297 = smul.addr %s296, 4
        %s298 = scalar_lea.vmem %s1, %s297
        %p299 = pneg %p85
        %p300 = pneg %p82
        %s301 = smul.u32 2, %s21
        %p302 = scmp.lt.s32.totalorder %s301, 1
        %s303 = scalar_select %p302, %s301, 1
        %s304 = scalar_lea.vmem %s2, %s303
        %p305 = pneg %p111
        %p306 = pneg %p108
        %s307 = smul.u32 2, %s20
        %s308 = smul.u32 2, %s21
        %p309 = scmp.lt.s32.totalorder %s307, 1
        %s310 = scalar_select %p309, %s307, 1
        %p311 = scmp.lt.s32.totalorder %s308, 1
        %s312 = scalar_select %p311, %s308, 1
        %s313 = smul.addr %s310, 2
        %s314 = sadd.s32 %s312, %s313
        %s315 = smul.addr %s314, 4
        %s316 = scalar_lea.vmem %s3, %s315
        %p317 = pneg %p139
        %p318 = pneg %p136
        %p319 = pneg %p167
        %p320 = pneg %p164
        %s321 = smul.u32 2, %s20
        %s322 = smul.u32 2, %s21
        %p323 = scmp.lt.s32.totalorder %s321, 1
        %s324 = scalar_select %p323, %s321, 1
        %p325 = scmp.lt.s32.totalorder %s322, 1
        %s326 = scalar_select %p325, %s322, 1
        %s327 = smul.addr %s324, 2
        %s328 = sadd.s32 %s326, %s327
        %s329 = smul.addr %s328, 4
        %s330 = scalar_lea.vmem %s4, %s329
        %s331 = smul.u32 2, %s20
        %s332 = smul.u32 3, %s22
        %s333 = smul.u32 48, %s22
        %s334 = smul.u32 2, %s21
        %p335 = scmp.lt.s32.totalorder %s333, 287
        %s336 = scalar_select %p335, %s333, 287
        %p337 = scmp.lt.s32.totalorder %s334, 1
        %s338 = scalar_select %p337, %s334, 1
        %s339 = smul.addr %s336, 2
        %s340 = sadd.s32 %s338, %s339
        %s341 = smul.addr %s340, 4
        %s342 = scalar_lea.vmem %s1, %s341
        %s343 = smul.u32 48, %s22
        %s344 = smul.u32 2, %s21
        %s345 = smul.u32 2, %s21
        %p346 = scmp.lt.s32.totalorder %s345, 1
        %s347 = scalar_select %p346, %s345, 1
        %s348 = scalar_lea.vmem %s2, %s347
        %s349 = smul.u32 2, %s21
        %s350 = smul.u32 2, %s20
        %s351 = smul.u32 2, %s21
        %p352 = scmp.lt.s32.totalorder %s350, 1
        %s353 = scalar_select %p352, %s350, 1
        %p354 = scmp.lt.s32.totalorder %s351, 1
        %s355 = scalar_select %p354, %s351, 1
        %s356 = smul.addr %s353, 2
        %s357 = sadd.s32 %s355, %s356
        %s358 = smul.addr %s357, 4
        %s359 = scalar_lea.vmem %s3, %s358
        %s360 = smul.u32 2, %s20
        %s361 = smul.u32 2, %s21
        %s362 = smul.u32 2, %s20
        %s363 = smul.u32 2, %s21
        %p364 = scmp.lt.s32.totalorder %s362, 1
        %s365 = scalar_select %p364, %s362, 1
        %p366 = scmp.lt.s32.totalorder %s363, 1
        %s367 = scalar_select %p366, %s363, 1
        %s368 = smul.addr %s365, 2
        %s369 = sadd.s32 %s367, %s368
        %s370 = smul.addr %s369, 4
        %s371 = scalar_lea.vmem %s4, %s370
        %s372 = smul.u32 2, %s20
        %s373 = smul.u32 2, %s21
        %p375 = scmp.eq.s32.totalorder %s22, 0
        // Predicated region
        $region63: #{_lambda_.30} parent=57 // pred_check
          %p376 = pneg %p375
        $region64: #{_lambda_.30} parent=57 // pred_check_branch
          %378 = sbr.rel (%p376) target = $region66
        $region65: #{_lambda_.30} parent=57 // pred_region
          %379 = vst [vmem:[#allocation2] sm:$0xff] 0.0
          %380 = vst [vmem:[#allocation2 + $0x8] sm:$0xff] 0.0
          %381 = vst [vmem:[#allocation2 + $0x10] sm:$0xff] 0.0
          %382 = vst [vmem:[#allocation2 + $0x18] sm:$0xff] 0.0
        $region66: #{_lambda_.30} parent=57 // pred_fallthru
          _
        %v383 = vld [vmem:[#allocation2] sm:$0xff]
        %v384 = vld [vmem:[#allocation2 + $0x8] sm:$0xff]
        %v385 = vld [vmem:[#allocation2 + $0x10] sm:$0xff]
        %v386 = vld [vmem:[#allocation2 + $0x18] sm:$0xff]
        %v387 = vld [vmem:[%s279] sm:$0xff]
        %v388 = vld [vmem:[%s279 + $0x8] sm:$0xf]
        %v389 = vld [vmem:[%s279 + $0xc] sm:$0xff]
        %v390 = vld [vmem:[%s279 + $0x14] sm:$0xf]
        %v391 = vld [vmem:[%s342] sm:$0xff]
        %v392 = vld [vmem:[%s342 + $0x8] sm:$0xff]
        %v393 = vld [vmem:[%s342 + $0x10] sm:$0xff]
        %v394 = vld [vmem:[%s342 + $0x18] sm:$0xff]
        %v395 = vld [vmem:[%s342 + $0x20] sm:$0xff]
        %v396 = vld [vmem:[%s342 + $0x28] sm:$0xff]
        %v397 = vld [vmem:[%s342 + $0x30] sm:$0xff]
        %v398 = vld [vmem:[%s342 + $0x38] sm:$0xff]
        %v399 = vld [vmem:[%s342 + $0x40] sm:$0xff]
        %v400 = vld [vmem:[%s342 + $0x48] sm:$0xff]
        %v401 = vld [vmem:[%s342 + $0x50] sm:$0xff]
        %v402 = vld [vmem:[%s342 + $0x58] sm:$0xff]
        %v403 = vld [vmem:[%s342 + $0x60] sm:$0xff]
        %v404 = vld [vmem:[%s342 + $0x68] sm:$0xff]
        %v405 = vld [vmem:[%s342 + $0x70] sm:$0xff]
        %v406 = vld [vmem:[%s342 + $0x78] sm:$0xff]
        %v407 = vld [vmem:[%s342 + $0x80] sm:$0xff]
        %v408 = vld [vmem:[%s342 + $0x88] sm:$0xff]
        %v409 = vld [vmem:[%s342 + $0x90] sm:$0xff]
        %v410 = vld [vmem:[%s342 + $0x98] sm:$0xff]
        %v411 = vld [vmem:[%s342 + $0xa0] sm:$0xff]
        %v412 = vld [vmem:[%s342 + $0xa8] sm:$0xff]
        %v413 = vld [vmem:[%s342 + $0xb0] sm:$0xff]
        %v414 = vld [vmem:[%s342 + $0xb8] sm:$0xff]
        %v415 = vld [vmem:[%s342 + $0xc0] sm:$0xff]
        %v416 = vld [vmem:[%s342 + $0xc8] sm:$0xff]
        %v417 = vld [vmem:[%s342 + $0xd0] sm:$0xff]
        %v418 = vld [vmem:[%s342 + $0xd8] sm:$0xff]
        %v419 = vld [vmem:[%s342 + $0xe0] sm:$0xff]
        %v420 = vld [vmem:[%s342 + $0xe8] sm:$0xff]
        %v421 = vld [vmem:[%s342 + $0xf0] sm:$0xff]
        %v422 = vld [vmem:[%s342 + $0xf8] sm:$0xff]
        %v423 = vld [vmem:[%s342 + $0x100] sm:$0xff]
        %v424 = vld [vmem:[%s342 + $0x108] sm:$0xff]
        %v425 = vld [vmem:[%s342 + $0x110] sm:$0xff]
        %v426 = vld [vmem:[%s342 + $0x118] sm:$0xff]
        %v427 = vld [vmem:[%s342 + $0x120] sm:$0xff]
        %v428 = vld [vmem:[%s342 + $0x128] sm:$0xff]
        %v429 = vld [vmem:[%s342 + $0x130] sm:$0xff]
        %v430 = vld [vmem:[%s342 + $0x138] sm:$0xff]
        %v431 = vld [vmem:[%s342 + $0x140] sm:$0xff]
        %v432 = vld [vmem:[%s342 + $0x148] sm:$0xff]
        %v433 = vld [vmem:[%s342 + $0x150] sm:$0xff]
        %v434 = vld [vmem:[%s342 + $0x158] sm:$0xff]
        %v435 = vld [vmem:[%s342 + $0x160] sm:$0xff]
        %v436 = vld [vmem:[%s342 + $0x168] sm:$0xff]
        %v437 = vld [vmem:[%s342 + $0x170] sm:$0xff]
        %v438 = vld [vmem:[%s342 + $0x178] sm:$0xff]
        %v443 = vunpack.c.l.b16 %v387
        %v444 = vunpack.c.h.b16 %v387
        %v445 = vunpack.c.l.b16 %v388
        %v446 = vunpack.c.l.b16 %v389
        %v447 = vunpack.c.h.b16 %v389
        %v448 = vunpack.c.l.b16 %v390
        %v449 = vpack.c.b16 %v446, %v443
        %v450 = vpack.c.b16 %v447, %v444
        %v451 = vpack.c.b16 %v448, %v445
        %v503 = vunpack.c.l.b16 %v391
        %v504 = vunpack.c.h.b16 %v391
        %v505 = vunpack.c.l.b16 %v392
        %v506 = vunpack.c.h.b16 %v392
        %v507 = vunpack.c.l.b16 %v393
        %v508 = vunpack.c.h.b16 %v393
        %v509 = vunpack.c.l.b16 %v394
        %v510 = vunpack.c.h.b16 %v394
        %v511 = vunpack.c.l.b16 %v395
        %v512 = vunpack.c.h.b16 %v395
        %v513 = vunpack.c.l.b16 %v396
        %v514 = vunpack.c.h.b16 %v396
        %v515 = vunpack.c.l.b16 %v397
        %v516 = vunpack.c.h.b16 %v397
        %v517 = vunpack.c.l.b16 %v398
        %v518 = vunpack.c.h.b16 %v398
        %v519 = vunpack.c.l.b16 %v399
        %v520 = vunpack.c.h.b16 %v399
        %v521 = vunpack.c.l.b16 %v400
        %v522 = vunpack.c.h.b16 %v400
        %v523 = vunpack.c.l.b16 %v401
        %v524 = vunpack.c.h.b16 %v401
        %v525 = vunpack.c.l.b16 %v402
        %v526 = vunpack.c.h.b16 %v402
        %v527 = vunpack.c.l.b16 %v403
        %v528 = vunpack.c.h.b16 %v403
        %v529 = vunpack.c.l.b16 %v404
        %v530 = vunpack.c.h.b16 %v404
        %v531 = vunpack.c.l.b16 %v405
        %v532 = vunpack.c.h.b16 %v405
        %v533 = vunpack.c.l.b16 %v406
        %v534 = vunpack.c.h.b16 %v406
        %v535 = vunpack.c.l.b16 %v407
        %v536 = vunpack.c.h.b16 %v407
        %v537 = vunpack.c.l.b16 %v408
        %v538 = vunpack.c.h.b16 %v408
        %v539 = vunpack.c.l.b16 %v409
        %v540 = vunpack.c.h.b16 %v409
        %v541 = vunpack.c.l.b16 %v410
        %v542 = vunpack.c.h.b16 %v410
        %v543 = vunpack.c.l.b16 %v411
        %v544 = vunpack.c.h.b16 %v411
        %v545 = vunpack.c.l.b16 %v412
        %v546 = vunpack.c.h.b16 %v412
        %v547 = vunpack.c.l.b16 %v413
        %v548 = vunpack.c.h.b16 %v413
        %v549 = vunpack.c.l.b16 %v414
        %v550 = vunpack.c.h.b16 %v414
        %v551 = vunpack.c.l.b16 %v415
        %v552 = vunpack.c.h.b16 %v415
        %v553 = vunpack.c.l.b16 %v416
        %v554 = vunpack.c.h.b16 %v416
        %v555 = vunpack.c.l.b16 %v417
        %v556 = vunpack.c.h.b16 %v417
        %v557 = vunpack.c.l.b16 %v418
        %v558 = vunpack.c.h.b16 %v418
        %v559 = vunpack.c.l.b16 %v419
        %v560 = vunpack.c.h.b16 %v419
        %v561 = vunpack.c.l.b16 %v420
        %v562 = vunpack.c.h.b16 %v420
        %v563 = vunpack.c.l.b16 %v421
        %v564 = vunpack.c.h.b16 %v421
        %v565 = vunpack.c.l.b16 %v422
        %v566 = vunpack.c.h.b16 %v422
        %v567 = vunpack.c.l.b16 %v423
        %v568 = vunpack.c.h.b16 %v423
        %v569 = vunpack.c.l.b16 %v424
        %v570 = vunpack.c.h.b16 %v424
        %v571 = vunpack.c.l.b16 %v425
        %v572 = vunpack.c.h.b16 %v425
        %v573 = vunpack.c.l.b16 %v426
        %v574 = vunpack.c.h.b16 %v426
        %v575 = vunpack.c.l.b16 %v427
        %v576 = vunpack.c.h.b16 %v427
        %v577 = vunpack.c.l.b16 %v428
        %v578 = vunpack.c.h.b16 %v428
        %v579 = vunpack.c.l.b16 %v429
        %v580 = vunpack.c.h.b16 %v429
        %v581 = vunpack.c.l.b16 %v430
        %v582 = vunpack.c.h.b16 %v430
        %v583 = vunpack.c.l.b16 %v431
        %v584 = vunpack.c.h.b16 %v431
        %v585 = vunpack.c.l.b16 %v432
        %v586 = vunpack.c.h.b16 %v432
        %v587 = vunpack.c.l.b16 %v433
        %v588 = vunpack.c.h.b16 %v433
        %v589 = vunpack.c.l.b16 %v434
        %v590 = vunpack.c.h.b16 %v434
        %v591 = vunpack.c.l.b16 %v435
        %v592 = vunpack.c.h.b16 %v435
        %v593 = vunpack.c.l.b16 %v436
        %v594 = vunpack.c.h.b16 %v436
        %v595 = vunpack.c.l.b16 %v437
        %v596 = vunpack.c.h.b16 %v437
        %v597 = vunpack.c.l.b16 %v438
        %v598 = vunpack.c.h.b16 %v438
        %v599 = vpack.c.b16 %v505, %v503
        %v600 = vpack.c.b16 %v506, %v504
        %v601 = vpack.c.b16 %v509, %v507
        %v602 = vpack.c.b16 %v510, %v508
        %v603 = vpack.c.b16 %v513, %v511
        %v604 = vpack.c.b16 %v514, %v512
        %v605 = vpack.c.b16 %v517, %v515
        %v606 = vpack.c.b16 %v518, %v516
        %v607 = vpack.c.b16 %v521, %v519
        %v608 = vpack.c.b16 %v522, %v520
        %v609 = vpack.c.b16 %v525, %v523
        %v610 = vpack.c.b16 %v526, %v524
        %v611 = vpack.c.b16 %v529, %v527
        %v612 = vpack.c.b16 %v530, %v528
        %v613 = vpack.c.b16 %v533, %v531
        %v614 = vpack.c.b16 %v534, %v532
        %v615 = vpack.c.b16 %v537, %v535
        %v616 = vpack.c.b16 %v538, %v536
        %v617 = vpack.c.b16 %v541, %v539
        %v618 = vpack.c.b16 %v542, %v540
        %v619 = vpack.c.b16 %v545, %v543
        %v620 = vpack.c.b16 %v546, %v544
        %v621 = vpack.c.b16 %v549, %v547
        %v622 = vpack.c.b16 %v550, %v548
        %v623 = vpack.c.b16 %v553, %v551
        %v624 = vpack.c.b16 %v554, %v552
        %v625 = vpack.c.b16 %v557, %v555
        %v626 = vpack.c.b16 %v558, %v556
        %v627 = vpack.c.b16 %v561, %v559
        %v628 = vpack.c.b16 %v562, %v560
        %v629 = vpack.c.b16 %v565, %v563
        %v630 = vpack.c.b16 %v566, %v564
        %v631 = vpack.c.b16 %v569, %v567
        %v632 = vpack.c.b16 %v570, %v568
        %v633 = vpack.c.b16 %v573, %v571
        %v634 = vpack.c.b16 %v574, %v572
        %v635 = vpack.c.b16 %v577, %v575
        %v636 = vpack.c.b16 %v578, %v576
        %v637 = vpack.c.b16 %v581, %v579
        %v638 = vpack.c.b16 %v582, %v580
        %v639 = vpack.c.b16 %v585, %v583
        %v640 = vpack.c.b16 %v586, %v584
        %v641 = vpack.c.b16 %v589, %v587
        %v642 = vpack.c.b16 %v590, %v588
        %v643 = vpack.c.b16 %v593, %v591
        %v644 = vpack.c.b16 %v594, %v592
        %v645 = vpack.c.b16 %v597, %v595
        %v646 = vpack.c.b16 %v598, %v596
        %695 = vmatprep.subr.bf16.mxu0 %v600
        %696 = vmatpush1.bf16.msra.mxu0 %v599
        %697 = vmatprep.subr.bf16.mxu0 %v602
        %698 = vmatpush1.bf16.msra.mxu0 %v601
        %699 = vmatprep.subr.bf16.mxu0 %v604
        %700 = vmatpush1.bf16.msra.mxu0 %v603
        %701 = vmatprep.subr.bf16.mxu0 %v606
        %702 = vmatpush1.bf16.msra.mxu0 %v605
        %703 = vmatprep.subr.bf16.mxu0 %v608
        %704 = vmatpush1.bf16.msra.mxu0 %v607
        %705 = vmatprep.subr.bf16.mxu0 %v610
        %706 = vmatpush1.bf16.msra.mxu0 %v609
        %707 = vmatprep.subr.bf16.mxu0 %v612
        %708 = vmatpush1.bf16.msra.mxu0 %v611
        %709 = vmatprep.subr.bf16.mxu0 %v614
        %710 = vmatpush1.bf16.msra.mxu0 %v613
        %711 = vmatprep.subr.bf16.mxu0 %v616
        %712 = vmatpush1.bf16.msra.mxu0 %v615
        %713 = vmatprep.subr.bf16.mxu0 %v618
        %714 = vmatpush1.bf16.msra.mxu0 %v617
        %715 = vmatprep.subr.bf16.mxu0 %v620
        %716 = vmatpush1.bf16.msra.mxu0 %v619
        %717 = vmatprep.subr.bf16.mxu0 %v622
        %718 = vmatpush1.bf16.msra.mxu0 %v621
        %719 = vmatprep.subr.bf16.mxu0 %v624
        %720 = vmatpush1.bf16.msra.mxu0 %v623
        %721 = vmatprep.subr.bf16.mxu0 %v626
        %722 = vmatpush1.bf16.msra.mxu0 %v625
        %723 = vmatprep.subr.bf16.mxu0 %v628
        %724 = vmatpush1.bf16.msra.mxu0 %v627
        %725 = vmatprep.subr.bf16.mxu0 %v630
        %726 = vmatpush1.bf16.msra.mxu0 %v629
        %727 = vmatprep.mubr.bf16.mxu0 %v450
        %728 = vmatmul.mubr.bf16.gmra.mrb[0].mxu0 %v449
        %v729 = vpop.f32.mrb[0].mxu0
        %v730 = vadd.f32 0.0, %v729
        %v731 = vpop.f32.mrb[0].mxu0
        %v732 = vadd.f32 0.0, %v731
        %v733 = vpop.f32.mrb[0].mxu0
        %v734 = vadd.f32 0.0, %v733
        %v735 = vpop.f32.mrb[0].mxu0
        %v736 = vadd.f32 0.0, %v735
        %737 = vdwg.mxu0
        %738 = vmatprep.subr.bf16.mxu0 %v632
        %739 = vmatpush1.bf16.msra.mxu0 %v631
        %740 = vmatprep.subr.bf16.mxu0 %v634
        %741 = vmatpush1.bf16.msra.mxu0 %v633
        %742 = vmatprep.subr.bf16.mxu0 %v636
        %743 = vmatpush1.bf16.msra.mxu0 %v635
        %744 = vmatprep.subr.bf16.mxu0 %v638
        %745 = vmatpush1.bf16.msra.mxu0 %v637
        %746 = vmatprep.subr.bf16.mxu0 %v640
        %747 = vmatpush1.bf16.msra.mxu0 %v639
        %748 = vmatprep.subr.bf16.mxu0 %v642
        %749 = vmatpush1.bf16.msra.mxu0 %v641
        %750 = vmatprep.subr.bf16.mxu0 %v644
        %751 = vmatpush1.bf16.msra.mxu0 %v643
        %752 = vmatprep.subr.bf16.mxu0 %v646
        %753 = vmatpush1.bf16.msra.mxu0 %v645
        %754 = vmatprep.subr.bf16.mxu0 0
        %755 = vmatpush1.bf16.msra.mxu0 0
        %756 = vmatprep.subr.bf16.mxu0 0
        %757 = vmatpush1.bf16.msra.mxu0 0
        %758 = vmatprep.subr.bf16.mxu0 0
        %759 = vmatpush1.bf16.msra.mxu0 0
        %760 = vmatprep.subr.bf16.mxu0 0
        %761 = vmatpush1.bf16.msra.mxu0 0
        %762 = vmatprep.subr.bf16.mxu0 0
        %763 = vmatpush1.bf16.msra.mxu0 0
        %764 = vmatprep.subr.bf16.mxu0 0
        %765 = vmatpush1.bf16.msra.mxu0 0
        %766 = vmatprep.subr.bf16.mxu0 0
        %767 = vmatpush1.bf16.msra.mxu0 0
        %768 = vmatprep.subr.bf16.mxu0 0
        %769 = vmatpush1.bf16.msra.mxu0 0
        %770 = vmatprep.mubr.bf16.mxu0 0
        %771 = vmatmul.mubr.bf16.gmra.mrb[0].mxu0 %v451
        %v772 = vpop.f32.mrb[0].mxu0
        %v773 = vadd.f32 %v730, %v772
        %v774 = vpop.f32.mrb[0].mxu0
        %v775 = vadd.f32 %v732, %v774
        %v776 = vpop.f32.mrb[0].mxu0
        %v777 = vadd.f32 %v734, %v776
        %v778 = vpop.f32.mrb[0].mxu0
        %v779 = vadd.f32 %v736, %v778
        %780 = vdwg.mxu0
        %v781 = vadd.f32 %v383, %v773
        %v782 = vadd.f32 %v384, %v775
        %v783 = vadd.f32 %v385, %v777
        %v784 = vadd.f32 %v386, %v779
        %785 = vst [vmem:[#allocation2] sm:$0xff] %v781
        %786 = vst [vmem:[#allocation2 + $0x8] sm:$0xff] %v782
        %787 = vst [vmem:[#allocation2 + $0x10] sm:$0xff] %v783
        %788 = vst [vmem:[#allocation2 + $0x18] sm:$0xff] %v784
        %p789 = scmp.eq.s32.totalorder %s22, 5
        // Predicated region
        $region67: #{_lambda_.30} parent=57 // pred_check
          %p790 = pneg %p789
        $region68: #{_lambda_.30} parent=57 // pred_check_branch
          %792 = sbr.rel (%p790) target = $region70
        $region69: #{_lambda_.30} parent=57 // pred_region
          %v793 = vld [vmem:[#allocation2] sm:$0xff]
          %v794 = vld [vmem:[#allocation2 + $0x8] sm:$0xff]
          %v795 = vld [vmem:[#allocation2 + $0x10] sm:$0xff]
          %v796 = vld [vmem:[#allocation2 + $0x18] sm:$0xff]
          %v797 = vld [vmem:[%s348] sm:$0x3]
          %v799 = vlaneseq
          %v800 = vshrl.u32 %v799, 7
          %v801 = vsub.s32 0, %v800
          %v802 = vrot.slane %v797, %v801
          %v803 = vlaneseq
          %v804 = vshrl.u32 %v803, 7
          %v805 = vsub.s32 1, %v804
          %v806 = vrot.slane %v797, %v805
          %v809 = vadd.f32 %v793, %v802
          %v810 = vadd.f32 %v794, %v806
          %v811 = vadd.f32 %v795, %v802
          %v812 = vadd.f32 %v796, %v806
          %v813 = vld [vmem:[%s359] sm:$0xff]
          %v814 = vld [vmem:[%s359 + $0x8] sm:$0xff]
          %v815 = vunpack.c.l.bf16 %v813
          %v816 = vunpack.c.h.bf16 %v813
          %v817 = vunpack.c.l.bf16 %v814
          %v818 = vunpack.c.h.bf16 %v814
          %v819 = vadd.f32 %v809, %v815
          %v820 = vadd.f32 %v810, %v816
          %v821 = vadd.f32 %v811, %v817
          %v822 = vadd.f32 %v812, %v818
          %v823 = vmax.f32 %v819, 0.0
          %v824 = vmax.f32 %v820, 0.0
          %v825 = vmax.f32 %v821, 0.0
          %v826 = vmax.f32 %v822, 0.0
          %v827 = vpack.c.bf16 %v825, %v823
          %v828 = vpack.c.bf16 %v826, %v824
          %v831 = vunpack.c.l.b16 %v827
          %v832 = vunpack.c.l.b16 %v828
          %v833 = vunpack.c.h.b16 %v827
          %v834 = vunpack.c.h.b16 %v828
          %v835 = vpack.c.b16 %v832, %v831
          %v836 = vpack.c.b16 %v834, %v833
          %839 = vst [vmem:[%s371] sm:$0xff] %v835
          %840 = vst [vmem:[%s371 + $0x8] sm:$0xff] %v836
        $region70: #{_lambda_.30} parent=57 // pred_fallthru
          _
        %s841 = smul.u32 2, %s20
        %s842 = smul.u32 2, %s21
        %p843 = scmp.lt.s32.totalorder %s841, 1
        %s844 = scalar_select %p843, %s841, 1
        %p845 = scmp.lt.s32.totalorder %s842, 1
        %s846 = scalar_select %p845, %s842, 1
        %s847 = smul.addr %s844, 2
        %s848 = sadd.s32 %s846, %s847
        %s849 = smul.addr %s848, 4
        %s850 = scalar_lea.vmem %s4, %s849
        // Predicated region
        $region71: #{_lambda_.30} parent=57 // pred_check
          %p851 = pneg %p164
        $region72: #{_lambda_.30} parent=57 // pred_check_branch
          %853 = sbr.rel (%p851) target = $region74
        $region73: #{_lambda_.30} parent=57 // pred_region
          %s854 = smul.u32 2, %s20
          %s855 = smul.u32 2, %s21
        $region74: #{_lambda_.30} parent=57 // pred_fallthru
          _
        // Predicated region
        $region75: #{_lambda_.30} parent=57 // pred_check
          %p856 = pneg %p164
        $region76: #{_lambda_.30} parent=57 // pred_check_branch
          %858 = sbr.rel (%p856) target = $region78
        $region77: #{_lambda_.30} parent=57 // pred_region
          %s859 = smul.u32 2, %s20
          %s860 = smul.u32 2, %s21
          %p861 = scmp.lt.s32.totalorder %s859, 1
          %s862 = scalar_select %p861, %s859, 1
          %p863 = scmp.lt.s32.totalorder %s860, 1
          %s864 = scalar_select %p863, %s860, 1
          %s865 = smul.addr %s862, 2
          %s866 = sadd.s32 %s864, %s865
          %s867 = smul.addr %s866, 4
          %s868 = scalar_lea.vmem %s4, %s867
        $region78: #{_lambda_.30} parent=57 // pred_fallthru
          _
      $region58: #{_lambda_.30} parent=5 // pred_fallthru
        _
      %p869 = scmp.le.s32.totalorder 2, %s10
      // Predicated region
      $region79: #{_lambda_.30} parent=5 // pred_check
        %p870 = pneg %p869
      $region80: #{_lambda_.30} parent=5 // pred_check_branch
        %872 = sbr.rel (%p870) target = $region82
      $region81: #{_lambda_.30} parent=5 // pred_region
        %s873 = ssub.s32 %s10, 2
      $region82: #{_lambda_.30} parent=5 // pred_fallthru
        _
    $region6: #{_lambda_.30} parent=1 // loop_footer
      %s14 = sadd.s32 1, %s10
    $region7: #{_lambda_.30} parent=1 // loop_footer_branch
      %9 = sbr.rel target = $region3
    $region8: #{_lambda_.30} parent=1 // loop_exit
      _

// kernel: _lambda_.33
$region0: #{_lambda_.33}
  #allocation0 [shape = 'u32[]', space=smem, size = 0x4, offset = 0x4, fixed_abs, tag = 'smem constant byte address 0x4 - core index']
  #allocation1 [shape = 'u32[144,128]{1,0:T(1,128)}', space=vmem, size = 0x12000, scoped, tag = 'internal scratch']
  %s0 = inlined_call_operand.vmem [shape: bf16[2,4,256], index: 0, kind: input, shape index: {}]
  %s1 = inlined_call_operand.hbm [shape: f32[2,256], index: 1, kind: output, shape index: {}]
  %s2 = sld [smem:[#allocation0]]
  $region14: #{_lambda_.33} parent=0
    _
  %s4 = ssub.s32 1, %s2
  %s5 = scalar_select 0, %s4, %s2
  $region1: #{_lambda_.33} parent=0
    #allocation2 [shape = 'u8[2048]{0}', space=vmem, size = 0x800, scoped, tag = 'output window, operand 0, single buffered']
    #allocation3 [shape = 's32[1]{0}', space=sflag, size = 0x4, scoped, tag = 'scoped memory for _lambda_.33']
    %6 = vsyncpa [#allocation3], 0
    // Predicated region
    $region2: #{_lambda_.33} parent=1 // pred_check
      _
    $region3: #{_lambda_.33} parent=1 // pred_check_branch
      %8 = sbr.rel (0) target = $region5
    $region4: #{_lambda_.33} parent=1 // pred_region
      _
    $region5: #{_lambda_.33} parent=1 // pred_fallthru
      _
    %v9 = vld [vmem:[%s0] sm:$0xf]
    %v10 = vld [vmem:[%s0 + $0x4] sm:$0xf]
    %v11 = vunpack.c.l.bf16 %v9
    %v12 = vunpack.c.l.bf16 %v10
    %v15 = vcombine.high %v11, %v11
    %v16 = vcombine.high %v12, %v12
    %vm19 = vcmask 1043456
    %v20 = vsel %vm19, %v11, 0.0
    %v21 = vrot.slane %v20, 4
    %v22 = vadd.f32 %v20, %v21
    %v23 = vrot.slane %v22, 2
    %v24 = vadd.f32 %v22, %v23
    %v25 = vrot.slane %v24, 1
    %v26 = vadd.f32 %v24, %v25
    %v27 = vsel %vm19, %v15, 0.0
    %v28 = vrot.slane %v27, 4
    %v29 = vadd.f32 %v27, %v28
    %v30 = vrot.slane %v29, 2
    %v31 = vadd.f32 %v29, %v30
    %v32 = vrot.slane %v31, 1
    %v33 = vadd.f32 %v31, %v32
    %v34 = vsel %vm19, %v12, 0.0
    %v35 = vrot.slane %v34, 4
    %v36 = vadd.f32 %v34, %v35
    %v37 = vrot.slane %v36, 2
    %v38 = vadd.f32 %v36, %v37
    %v39 = vrot.slane %v38, 1
    %v40 = vadd.f32 %v38, %v39
    %v41 = vsel %vm19, %v16, 0.0
    %v42 = vrot.slane %v41, 4
    %v43 = vadd.f32 %v41, %v42
    %v44 = vrot.slane %v43, 2
    %v45 = vadd.f32 %v43, %v44
    %v46 = vrot.slane %v45, 1
    %v47 = vadd.f32 %v45, %v46
    %v48 = vrcp.pop 4.0
    %v49 = vmul.f32 %v26, %v48
    %v50 = vmul.f32 %v33, %v48
    %v51 = vmul.f32 %v40, %v48
    %v52 = vmul.f32 %v47, %v48
    %v57 = vcombine.low %v49, %v50
    %v59 = vunpack.c.l.s4 1983009808
    %v60 = vunpack.c.0.s8 %v59
    %v61 = vlaneseq
    %v62 = vshrl.u32 %v61, 7
    %v63 = vsub.s32 %v60, %v62
    %v64 = vrot.slane %v57, %v63
    %v65 = vcombine.low %v51, %v52
    %v67 = vunpack.c.l.s4 1983009808
    %v68 = vunpack.c.0.s8 %v67
    %v69 = vlaneseq
    %v70 = vshrl.u32 %v69, 7
    %v71 = vsub.s32 %v68, %v70
    %v72 = vrot.slane %v65, %v71
    %vm73 = vcmask 1044484
    %v74 = vsel %vm73, %v64, %v64
    %vm75 = vcmask 1046534
    %v76 = vsel %vm75, %v64, %v74
    %v77 = vrot.slane %v72, 7
    %vm78 = vcmask 1041409
    %v79 = vsel %vm78, %v77, %v76
    %vm80 = vcmask 1043459
    %v81 = vsel %vm80, %v77, %v79
    %vm82 = vcmask 1045509
    %v83 = vsel %vm82, %v77, %v81
    %vm84 = vcmask 1047559
    %v85 = vsel %vm84, %v77, %v83
    %87 = vst [vmem:[#allocation2] sm:$0xf] %v85
    // Predicated region
    $region6: #{_lambda_.33} parent=1 // pred_check
      _
    $region7: #{_lambda_.33} parent=1 // pred_check_branch
      %89 = sbr.rel (0) target = $region9
    $region8: #{_lambda_.33} parent=1 // pred_region
      %s91 = ssub.s32 64, 64
      %92 = vsyncadd [#allocation3], %s91
      %s94 = sshll.u32 [#allocation2], 4
      %s95 = int_to_ptr.vmem [resolvable:$true] %s94
      %97 = dma.vmem_to_hbm [thread:$0]  %s95, 64, %s1, [#allocation3]
    $region9: #{_lambda_.33} parent=1 // pred_fallthru
      _
    // Predicated region
    $region10: #{_lambda_.33} parent=1 // pred_check
      _
    $region11: #{_lambda_.33} parent=1 // pred_check_branch
      %99 = sbr.rel (0) target = $region13
    $region12: #{_lambda_.33} parent=1 // pred_region
      %100 = dma.done [#allocation3], 64
    $region13: #{_lambda_.33} parent=1 // pred_fallthru
      _
    %101 = vsyncpa [#allocation3], 1

// kernel: _lambda_.31
$region0: #{_lambda_.31}
  #allocation0 [shape = 'u32[]', space=smem, size = 0x4, offset = 0x4, fixed_abs, tag = 'smem constant byte address 0x4 - core index']
  #allocation1 [shape = 'u32[144,128]{1,0:T(1,128)}', space=vmem, size = 0x12000, scoped, tag = 'internal scratch']
  #allocation2 [shape = 'f32[16,256]{1,0:T(8,128)}', space=vmem, size = 0x4000, scoped, tag = 'scratch operand']
  %s0 = inlined_call_operand.vmem [shape: bf16[16,2304], index: 0, kind: input, shape index: {}]
  %s1 = inlined_call_operand.vmem [shape: bf16[2304,256], index: 1, kind: input, shape index: {}]
  %s2 = inlined_call_operand.vmem [shape: f32[1,256], index: 2, kind: input, shape index: {}]
  %s3 = inlined_call_operand.vmem [shape: bf16[16,256], index: 3, kind: output, shape index: {}]
  %s4 = sld [smem:[#allocation0]]
  $region79: #{_lambda_.31} parent=0
    _
  %s6 = ssub.s32 1, %s4
  %s7 = scalar_select 0, %s6, %s4
  $region1: #{_lambda_.31} parent=0
    #allocation3 [shape = 'u8[24576]{0}', space=vmem, size = 0x6000, scoped, tag = 'input window, operand 0']
    loop: start=0, step=1, limit=8
    $region2: #{_lambda_.31} parent=1 // loop_pre_header
      _
    $region3: #{_lambda_.31} parent=1 // loop_header
      %s9 = sphi 0, %s13
      %p10 = scmp.ge.s32.totalorder %s9, 8
      %s16 = sphi 0, %s35
      %s17 = sphi 0, %s31
      %s18 = sphi 0, %s27
      %s19 = sphi 0, %s16
      %s20 = sphi 0, %s17
      %s21 = sphi 0, %s18
      %s22 = sphi 0, %s19
      %s23 = sphi 0, %s20
      %s24 = sphi 0, %s21
      %s40 = sphi 0, %s42
      %s43 = sphi 0, %s40
      %s44 = sphi 0, %s43
      %s60 = sphi 0, %s44
      %s68 = sphi 0, %s70
      %s71 = sphi 0, %s68
      %s72 = sphi 0, %s71
      %s88 = sphi 0, %s72
      %s94 = sphi 0, %s96
      %s97 = sphi 0, %s94
      %s98 = sphi 0, %s97
      %s114 = sphi 0, %s98
      %s122 = sphi 0, %s124
      %s125 = sphi 0, %s122
      %s126 = sphi 0, %s125
      %s142 = sphi 0, %s126
    $region4: #{_lambda_.31} parent=1 // loop_header_branch
      %12 = sbr.rel (%p10) target = $region8
    $region5: #{_lambda_.31} parent=1 // loop_body
      %s14 = ssub.s32 %s9, 1
      %s15 = ssub.s32 %s9, 2
      %s25 = sadd.s32 1, %s18
      %p26 = scmp.ge.s32.totalorder %s25, 6
      %s27 = scalar_select %p26, 0, %s25
      %s28 = sadd.s32 1, %s17
      %s29 = scalar_select %p26, %s28, %s17
      %p30 = scmp.ge.s32.totalorder %s29, 1
      %s31 = scalar_select %p30, 0, %s29
      %s32 = sadd.s32 1, %s16
      %s33 = scalar_select %p30, %s32, %s16
      %p34 = scmp.ge.s32.totalorder %s33, 1
      %s35 = scalar_select %p34, 0, %s33
      %s36 = ssub.s32 %s16, %s35
      %s37 = ssub.s32 %s18, %s27
      %s38 = sor.u32 %s36, %s37
      %p39 = scmp.eq.s32.totalorder %s38, 0
      %s41 = sadd.s32 %s40, 1
      %s42 = scalar_select %p39, %s40, %s41
      %p45 = pneg %p39
      %p46 = scmp.eq.s32.totalorder %s9, 5
      %p47 = por %p45, %p46
      %p48 = scmp.ne.s32.totalorder %s40, %s43
      %p49 = scmp.eq.s32.totalorder %s9, 0
      %p50 = por %p48, %p49
      %p51 = scmp.ne.s32.totalorder %s40, %s43
      %p52 = scmp.eq.s32.totalorder %s14, 5
      %p53 = por %p51, %p52
      %p54 = scmp.ne.s32.totalorder %s43, %s44
      %p55 = scmp.eq.s32.totalorder %s14, 0
      %p56 = por %p54, %p55
      %p57 = scmp.ne.s32.totalorder %s43, %s44
      %p58 = scmp.eq.s32.totalorder %s15, 5
      %p59 = por %p57, %p58
      %p61 = scmp.ne.s32.totalorder %s44, %s60
      %p62 = scmp.eq.s32.totalorder %s15, 0
      %p63 = por %p61, %p62
      %s64 = ssub.s32 %s18, %s27
      %s65 = ssub.s32 %s17, %s31
      %s66 = sor.u32 %s64, %s65
      %p67 = scmp.eq.s32.totalorder %s66, 0
      %s69 = sadd.s32 %s68, 1
      %s70 = scalar_select %p67, %s68, %s69
      %p73 = pneg %p67
      %p74 = scmp.eq.s32.totalorder %s9, 5
      %p75 = por %p73, %p74
      %p76 = scmp.ne.s32.totalorder %s68, %s71
      %p77 = scmp.eq.s32.totalorder %s9, 0
      %p78 = por %p76, %p77
      %p79 = scmp.ne.s32.totalorder %s68, %s71
      %p80 = scmp.eq.s32.totalorder %s14, 5
      %p81 = por %p79, %p80
      %p82 = scmp.ne.s32.totalorder %s71, %s72
      %p83 = scmp.eq.s32.totalorder %s14, 0
      %p84 = por %p82, %p83
      %p85 = scmp.ne.s32.totalorder %s71, %s72
      %p86 = scmp.eq.s32.totalorder %s15, 5
      %p87 = por %p85, %p86
      %p89 = scmp.ne.s32.totalorder %s72, %s88
      %p90 = scmp.eq.s32.totalorder %s15, 0
      %p91 = por %p89, %p90
      %s92 = ssub.s32 %s17, %s31
      %p93 = scmp.eq.s32.totalorder %s92, 0
      %s95 = sadd.s32 %s94, 1
      %s96 = scalar_select %p93, %s94, %s95
      %p99 = pneg %p93
      %p100 = scmp.eq.s32.totalorder %s9, 5
      %p101 = por %p99, %p100
      %p102 = scmp.ne.s32.totalorder %s94, %s97
      %p103 = scmp.eq.s32.totalorder %s9, 0
      %p104 = por %p102, %p103
      %p105 = scmp.ne.s32.totalorder %s94, %s97
      %p106 = scmp.eq.s32.totalorder %s14, 5
      %p107 = por %p105, %p106
      %p108 = scmp.ne.s32.totalorder %s97, %s98
      %p109 = scmp.eq.s32.totalorder %s14, 0
      %p110 = por %p108, %p109
      %p111 = scmp.ne.s32.totalorder %s97, %s98
      %p112 = scmp.eq.s32.totalorder %s15, 5
      %p113 = por %p111, %p112
      %p115 = scmp.ne.s32.totalorder %s98, %s114
      %p116 = scmp.eq.s32.totalorder %s15, 0
      %p117 = por %p115, %p116
      %s118 = ssub.s32 %s16, %s35
      %s119 = ssub.s32 %s17, %s31
      %s120 = sor.u32 %s118, %s119
      %p121 = scmp.eq.s32.totalorder %s120, 0
      %s123 = sadd.s32 %s122, 1
      %s124 = scalar_select %p121, %s122, %s123
      %p127 = pneg %p121
      %p128 = scmp.eq.s32.totalorder %s9, 5
      %p129 = por %p127, %p128
      %p130 = scmp.ne.s32.totalorder %s122, %s125
      %p131 = scmp.eq.s32.totalorder %s9, 0
      %p132 = por %p130, %p131
      %p133 = scmp.ne.s32.totalorder %s122, %s125
      %p134 = scmp.eq.s32.totalorder %s14, 5
      %p135 = por %p133, %p134
      %p136 = scmp.ne.s32.totalorder %s125, %s126
      %p137 = scmp.eq.s32.totalorder %s14, 0
      %p138 = por %p136, %p137
      %p139 = scmp.ne.s32.totalorder %s125, %s126
      %p140 = scmp.eq.s32.totalorder %s15, 5
      %p141 = por %p139, %p140
      %p143 = scmp.ne.s32.totalorder %s126, %s142
      %p144 = scmp.eq.s32.totalorder %s15, 0
      %p145 = por %p143, %p144
      %p146 = scmp.le.s32.totalorder 1, %s9
      %p147 = scmp.lt.s32.totalorder %s9, 7
      %p148 = pnand %p146, %p147
      %p149 = pneg %p148
      // Predicated region
      $region9: #{_lambda_.31} parent=5 // pred_check
        _
      $region10: #{_lambda_.31} parent=5 // pred_check_branch
        %151 = sbr.rel (%p148) target = $region12
      $region11: #{_lambda_.31} parent=5 // pred_region
        %s152 = ssub.s32 %s9, 1
        // Predicated region
        $region13: #{_lambda_.31} parent=11 // pred_check
          %p153 = pneg %p110
        $region14: #{_lambda_.31} parent=11 // pred_check_branch
          %155 = sbr.rel (%p153) target = $region16
        $region15: #{_lambda_.31} parent=11 // pred_region
          %s156 = smul.u32 2, %s20
          %p157 = scmp.lt.s32.totalorder %s156, 1
          %s158 = scalar_select %p157, %s156, 1
          %s159 = scalar_lea.vmem %s2, %s158
          %s160 = smul.u32 2, %s20
        $region16: #{_lambda_.31} parent=11 // pred_fallthru
          _
      $region12: #{_lambda_.31} parent=5 // pred_fallthru
        _
      %p161 = scmp.lt.s32.totalorder %s9, 6
      // Predicated region
      $region17: #{_lambda_.31} parent=5 // pred_check
        %p162 = pneg %p161
      $region18: #{_lambda_.31} parent=5 // pred_check_branch
        %164 = sbr.rel (%p162) target = $region20
      $region19: #{_lambda_.31} parent=5 // pred_region
        // Predicated region
        $region21: #{_lambda_.31} parent=19 // pred_check
          %p165 = pneg %p50
        $region22: #{_lambda_.31} parent=19 // pred_check_branch
          %167 = sbr.rel (%p165) target = $region24
        $region23: #{_lambda_.31} parent=19 // pred_region
          %s168 = sand.u32 %s40, 1
          %s169 = sand.u32 %s40, 1
          %s170 = smul.addr %s169, 24
          %s171 = scalar_lea.vmem [#allocation3], %s170
          %s172 = smul.u32 2, %s16
          %s173 = smul.u32 3, %s18
          %s174 = smul.addr %s172, 18
          %s175 = sadd.s32 %s173, %s174
          %s176 = smul.addr %s175, 4
          %s177 = scalar_lea.vmem %s0, %s176
          // Predicated region
          $region25: #{_lambda_.31} parent=23 // pred_check
            _
          $region26: #{_lambda_.31} parent=23 // pred_check_branch
            %179 = sbr.rel (0) target = $region28
          $region27: #{_lambda_.31} parent=23 // pred_region
            // Predicated region
            $region29: #{_lambda_.31} parent=27 // pred_check
              _
            $region30: #{_lambda_.31} parent=27 // pred_check_branch
              %181 = sbr.rel (0) target = $region32
            $region31: #{_lambda_.31} parent=27 // pred_region
              %s182 = scalar_lea.vmem %s177, 8
              %s183 = scalar_lea.vmem %s171, 8 [#allocation3]
              loop: start=0, step=1, limit=1
              $region33: #{_lambda_.31} parent=31 // loop_pre_header
                _
              $region34: #{_lambda_.31} parent=31 // loop_header
                %s185 = sphi 0, %s189
                %p186 = scmp.ge.s32.totalorder %s185, 1
                %s190 = sphi %s177, %s177
                %s191 = sphi %s171, %s171
              $region35: #{_lambda_.31} parent=31 // loop_header_branch
                %188 = sbr.rel (%p186) target = $region39
              $region36: #{_lambda_.31} parent=31 // loop_body
                %v192 = vld [vmem:[%s190] sm:$0xff]
                %193 = vst [vmem:[%s191] sm:$0xff] %v192
                %v194 = vld [vmem:[%s190 + $0x48] sm:$0xff]
                %195 = vst [vmem:[%s191 + $0xc] sm:$0xff] %v194
              $region37: #{_lambda_.31} parent=31 // loop_footer
                %s189 = sadd.s32 1, %s185
              $region38: #{_lambda_.31} parent=31 // loop_footer_branch
                %184 = sbr.rel target = $region34
              $region39: #{_lambda_.31} parent=31 // loop_exit
                _
              loop: start=0, step=1, limit=1
              $region40: #{_lambda_.31} parent=31 // loop_pre_header
                _
              $region41: #{_lambda_.31} parent=31 // loop_header
                %s198 = sphi 0, %s202
                %p199 = scmp.ge.s32.totalorder %s198, 1
                %s203 = sphi %s182, %s182
                %s204 = sphi %s183, %s183
              $region42: #{_lambda_.31} parent=31 // loop_header_branch
                %201 = sbr.rel (%p199) target = $region46
              $region43: #{_lambda_.31} parent=31 // loop_body
                %v205 = vld [vmem:[%s203] sm:$0xf]
                %206 = vst [vmem:[%s204] sm:$0xf] %v205
                %v207 = vld [vmem:[%s203 + $0x48] sm:$0xf]
                %208 = vst [vmem:[%s204 + $0xc] sm:$0xf] %v207
              $region44: #{_lambda_.31} parent=31 // loop_footer
                %s202 = sadd.s32 1, %s198
              $region45: #{_lambda_.31} parent=31 // loop_footer_branch
                %197 = sbr.rel target = $region41
              $region46: #{_lambda_.31} parent=31 // loop_exit
                _
            $region32: #{_lambda_.31} parent=27 // pred_fallthru
              _
          $region28: #{_lambda_.31} parent=23 // pred_fallthru
            _
          %209 = vnop
        $region24: #{_lambda_.31} parent=19 // pred_fallthru
          _
        // Predicated region
        $region47: #{_lambda_.31} parent=19 // pred_check
          %p210 = pneg %p78
        $region48: #{_lambda_.31} parent=19 // pred_check_branch
          %212 = sbr.rel (%p210) target = $region50
        $region49: #{_lambda_.31} parent=19 // pred_region
          %s213 = smul.u32 48, %s18
          %s214 = smul.u32 2, %s17
          %p215 = scmp.lt.s32.totalorder %s213, 287
          %s216 = scalar_select %p215, %s213, 287
          %p217 = scmp.lt.s32.totalorder %s214, 1
          %s218 = scalar_select %p217, %s214, 1
          %s219 = smul.addr %s216, 2
          %s220 = sadd.s32 %s218, %s219
          %s221 = smul.addr %s220, 4
          %s222 = scalar_lea.vmem %s1, %s221
          %s223 = smul.u32 48, %s18
          %s224 = smul.u32 2, %s17
        $region50: #{_lambda_.31} parent=19 // pred_fallthru
          _
      $region20: #{_lambda_.31} parent=5 // pred_fallthru
        _
      %p225 = scmp.le.s32.totalorder 1, %s9
      %p226 = scmp.lt.s32.totalorder %s9, 7
      %p227 = pnand %p225, %p226
      %p228 = pneg %p227
      // Predicated region
      $region51: #{_lambda_.31} parent=5 // pred_check
        _
      $region52: #{_lambda_.31} parent=5 // pred_check_branch
        %230 = sbr.rel (%p227) target = $region54
      $region53: #{_lambda_.31} parent=5 // pred_region
        %s231 = ssub.s32 %s9, 1
        %s232 = sand.u32 %s43, 1
        %s233 = sand.u32 %s43, 1
        %s234 = smul.addr %s233, 24
        %s235 = scalar_lea.vmem [#allocation3], %s234
        // Predicated region
        $region55: #{_lambda_.31} parent=53 // pred_check
          %p236 = pneg %p56
        $region56: #{_lambda_.31} parent=53 // pred_check_branch
          %238 = sbr.rel (%p236) target = $region58
        $region57: #{_lambda_.31} parent=53 // pred_region
          _
        $region58: #{_lambda_.31} parent=53 // pred_fallthru
          _
        %s239 = sand.u32 %s43, 1
        %s240 = sand.u32 %s43, 1
        %s241 = smul.addr %s240, 24
        %s242 = scalar_lea.vmem [#allocation3], %s241
        %p243 = pneg %p56
        %p244 = pneg %p53
        %s245 = smul.u32 48, %s21
        %s246 = smul.u32 2, %s20
        %p247 = scmp.lt.s32.totalorder %s245, 287
        %s248 = scalar_select %p247, %s245, 287
        %p249 = scmp.lt.s32.totalorder %s246, 1
        %s250 = scalar_select %p249, %s246, 1
        %s251 = smul.addr %s248, 2
        %s252 = sadd.s32 %s250, %s251
        %s253 = smul.addr %s252, 4
        %s254 = scalar_lea.vmem %s1, %s253
        %p255 = pneg %p84
        %p256 = pneg %p81
        %s257 = smul.u32 2, %s20
        %p258 = scmp.lt.s32.totalorder %s257, 1
        %s259 = scalar_select %p258, %s257, 1
        %s260 = scalar_lea.vmem %s2, %s259
        %p261 = pneg %p110
        %p262 = pneg %p107
        %p263 = pneg %p138
        %p264 = pneg %p135
        %s265 = smul.u32 2, %s19
        %s266 = smul.u32 2, %s20
        %p267 = scmp.lt.s32.totalorder %s265, 1
        %s268 = scalar_select %p267, %s265, 1
        %p269 = scmp.lt.s32.totalorder %s266, 1
        %s270 = scalar_select %p269, %s266, 1
        %s271 = smul.addr %s268, 2
        %s272 = sadd.s32 %s270, %s271
        %s273 = smul.addr %s272, 4
        %s274 = scalar_lea.vmem %s3, %s273
        %s275 = smul.u32 2, %s19
        %s276 = smul.u32 3, %s21
        %s277 = smul.u32 48, %s21
        %s278 = smul.u32 2, %s20
        %p279 = scmp.lt.s32.totalorder %s277, 287
        %s280 = scalar_select %p279, %s277, 287
        %p281 = scmp.lt.s32.totalorder %s278, 1
        %s282 = scalar_select %p281, %s278, 1
        %s283 = smul.addr %s280, 2
        %s284 = sadd.s32 %s282, %s283
        %s285 = smul.addr %s284, 4
        %s286 = scalar_lea.vmem %s1, %s285
        %s287 = smul.u32 48, %s21
        %s288 = smul.u32 2, %s20
        %s289 = smul.u32 2, %s20
        %p290 = scmp.lt.s32.totalorder %s289, 1
        %s291 = scalar_select %p290, %s289, 1
        %s292 = scalar_lea.vmem %s2, %s291
        %s293 = smul.u32 2, %s20
        %s294 = smul.u32 2, %s19
        %s295 = smul.u32 2, %s20
        %p296 = scmp.lt.s32.totalorder %s294, 1
        %s297 = scalar_select %p296, %s294, 1
        %p298 = scmp.lt.s32.totalorder %s295, 1
        %s299 = scalar_select %p298, %s295, 1
        %s300 = smul.addr %s297, 2
        %s301 = sadd.s32 %s299, %s300
        %s302 = smul.addr %s301, 4
        %s303 = scalar_lea.vmem %s3, %s302
        %s304 = smul.u32 2, %s19
        %s305 = smul.u32 2, %s20
        %p307 = scmp.eq.s32.totalorder %s21, 0
        // Predicated region
        $region59: #{_lambda_.31} parent=53 // pred_check
          %p308 = pneg %p307
        $region60: #{_lambda_.31} parent=53 // pred_check_branch
          %310 = sbr.rel (%p308) target = $region62
        $region61: #{_lambda_.31} parent=53 // pred_region
          %311 = vst [vmem:[#allocation2] sm:$0xff] 0.0
          %312 = vst [vmem:[#allocation2 + $0x8] sm:$0xff] 0.0
          %313 = vst [vmem:[#allocation2 + $0x10] sm:$0xff] 0.0
          %314 = vst [vmem:[#allocation2 + $0x18] sm:$0xff] 0.0
        $region62: #{_lambda_.31} parent=53 // pred_fallthru
          _
        %v315 = vld [vmem:[#allocation2] sm:$0xff]
        %v316 = vld [vmem:[#allocation2 + $0x8] sm:$0xff]
        %v317 = vld [vmem:[#allocation2 + $0x10] sm:$0xff]
        %v318 = vld [vmem:[#allocation2 + $0x18] sm:$0xff]
        %v319 = vld [vmem:[%s235] sm:$0xff]
        %v320 = vld [vmem:[%s235 + $0x8] sm:$0xf]
        %v321 = vld [vmem:[%s235 + $0xc] sm:$0xff]
        %v322 = vld [vmem:[%s235 + $0x14] sm:$0xf]
        %v323 = vld [vmem:[%s286] sm:$0xff]
        %v324 = vld [vmem:[%s286 + $0x8] sm:$0xff]
        %v325 = vld [vmem:[%s286 + $0x10] sm:$0xff]
        %v326 = vld [vmem:[%s286 + $0x18] sm:$0xff]
        %v327 = vld [vmem:[%s286 + $0x20] sm:$0xff]
        %v328 = vld [vmem:[%s286 + $0x28] sm:$0xff]
        %v329 = vld [vmem:[%s286 + $0x30] sm:$0xff]
        %v330 = vld [vmem:[%s286 + $0x38] sm:$0xff]
        %v331 = vld [vmem:[%s286 + $0x40] sm:$0xff]
        %v332 = vld [vmem:[%s286 + $0x48] sm:$0xff]
        %v333 = vld [vmem:[%s286 + $0x50] sm:$0xff]
        %v334 = vld [vmem:[%s286 + $0x58] sm:$0xff]
        %v335 = vld [vmem:[%s286 + $0x60] sm:$0xff]
        %v336 = vld [vmem:[%s286 + $0x68] sm:$0xff]
        %v337 = vld [vmem:[%s286 + $0x70] sm:$0xff]
        %v338 = vld [vmem:[%s286 + $0x78] sm:$0xff]
        %v339 = vld [vmem:[%s286 + $0x80] sm:$0xff]
        %v340 = vld [vmem:[%s286 + $0x88] sm:$0xff]
        %v341 = vld [vmem:[%s286 + $0x90] sm:$0xff]
        %v342 = vld [vmem:[%s286 + $0x98] sm:$0xff]
        %v343 = vld [vmem:[%s286 + $0xa0] sm:$0xff]
        %v344 = vld [vmem:[%s286 + $0xa8] sm:$0xff]
        %v345 = vld [vmem:[%s286 + $0xb0] sm:$0xff]
        %v346 = vld [vmem:[%s286 + $0xb8] sm:$0xff]
        %v347 = vld [vmem:[%s286 + $0xc0] sm:$0xff]
        %v348 = vld [vmem:[%s286 + $0xc8] sm:$0xff]
        %v349 = vld [vmem:[%s286 + $0xd0] sm:$0xff]
        %v350 = vld [vmem:[%s286 + $0xd8] sm:$0xff]
        %v351 = vld [vmem:[%s286 + $0xe0] sm:$0xff]
        %v352 = vld [vmem:[%s286 + $0xe8] sm:$0xff]
        %v353 = vld [vmem:[%s286 + $0xf0] sm:$0xff]
        %v354 = vld [vmem:[%s286 + $0xf8] sm:$0xff]
        %v355 = vld [vmem:[%s286 + $0x100] sm:$0xff]
        %v356 = vld [vmem:[%s286 + $0x108] sm:$0xff]
        %v357 = vld [vmem:[%s286 + $0x110] sm:$0xff]
        %v358 = vld [vmem:[%s286 + $0x118] sm:$0xff]
        %v359 = vld [vmem:[%s286 + $0x120] sm:$0xff]
        %v360 = vld [vmem:[%s286 + $0x128] sm:$0xff]
        %v361 = vld [vmem:[%s286 + $0x130] sm:$0xff]
        %v362 = vld [vmem:[%s286 + $0x138] sm:$0xff]
        %v363 = vld [vmem:[%s286 + $0x140] sm:$0xff]
        %v364 = vld [vmem:[%s286 + $0x148] sm:$0xff]
        %v365 = vld [vmem:[%s286 + $0x150] sm:$0xff]
        %v366 = vld [vmem:[%s286 + $0x158] sm:$0xff]
        %v367 = vld [vmem:[%s286 + $0x160] sm:$0xff]
        %v368 = vld [vmem:[%s286 + $0x168] sm:$0xff]
        %v369 = vld [vmem:[%s286 + $0x170] sm:$0xff]
        %v370 = vld [vmem:[%s286 + $0x178] sm:$0xff]
        %v375 = vunpack.c.l.b16 %v319
        %v376 = vunpack.c.h.b16 %v319
        %v377 = vunpack.c.l.b16 %v320
        %v378 = vunpack.c.l.b16 %v321
        %v379 = vunpack.c.h.b16 %v321
        %v380 = vunpack.c.l.b16 %v322
        %v381 = vpack.c.b16 %v378, %v375
        %v382 = vpack.c.b16 %v379, %v376
        %v383 = vpack.c.b16 %v380, %v377
        %v435 = vunpack.c.l.b16 %v323
        %v436 = vunpack.c.h.b16 %v323
        %v437 = vunpack.c.l.b16 %v324
        %v438 = vunpack.c.h.b16 %v324
        %v439 = vunpack.c.l.b16 %v325
        %v440 = vunpack.c.h.b16 %v325
        %v441 = vunpack.c.l.b16 %v326
        %v442 = vunpack.c.h.b16 %v326
        %v443 = vunpack.c.l.b16 %v327
        %v444 = vunpack.c.h.b16 %v327
        %v445 = vunpack.c.l.b16 %v328
        %v446 = vunpack.c.h.b16 %v328
        %v447 = vunpack.c.l.b16 %v329
        %v448 = vunpack.c.h.b16 %v329
        %v449 = vunpack.c.l.b16 %v330
        %v450 = vunpack.c.h.b16 %v330
        %v451 = vunpack.c.l.b16 %v331
        %v452 = vunpack.c.h.b16 %v331
        %v453 = vunpack.c.l.b16 %v332
        %v454 = vunpack.c.h.b16 %v332
        %v455 = vunpack.c.l.b16 %v333
        %v456 = vunpack.c.h.b16 %v333
        %v457 = vunpack.c.l.b16 %v334
        %v458 = vunpack.c.h.b16 %v334
        %v459 = vunpack.c.l.b16 %v335
        %v460 = vunpack.c.h.b16 %v335
        %v461 = vunpack.c.l.b16 %v336
        %v462 = vunpack.c.h.b16 %v336
        %v463 = vunpack.c.l.b16 %v337
        %v464 = vunpack.c.h.b16 %v337
        %v465 = vunpack.c.l.b16 %v338
        %v466 = vunpack.c.h.b16 %v338
        %v467 = vunpack.c.l.b16 %v339
        %v468 = vunpack.c.h.b16 %v339
        %v469 = vunpack.c.l.b16 %v340
        %v470 = vunpack.c.h.b16 %v340
        %v471 = vunpack.c.l.b16 %v341
        %v472 = vunpack.c.h.b16 %v341
        %v473 = vunpack.c.l.b16 %v342
        %v474 = vunpack.c.h.b16 %v342
        %v475 = vunpack.c.l.b16 %v343
        %v476 = vunpack.c.h.b16 %v343
        %v477 = vunpack.c.l.b16 %v344
        %v478 = vunpack.c.h.b16 %v344
        %v479 = vunpack.c.l.b16 %v345
        %v480 = vunpack.c.h.b16 %v345
        %v481 = vunpack.c.l.b16 %v346
        %v482 = vunpack.c.h.b16 %v346
        %v483 = vunpack.c.l.b16 %v347
        %v484 = vunpack.c.h.b16 %v347
        %v485 = vunpack.c.l.b16 %v348
        %v486 = vunpack.c.h.b16 %v348
        %v487 = vunpack.c.l.b16 %v349
        %v488 = vunpack.c.h.b16 %v349
        %v489 = vunpack.c.l.b16 %v350
        %v490 = vunpack.c.h.b16 %v350
        %v491 = vunpack.c.l.b16 %v351
        %v492 = vunpack.c.h.b16 %v351
        %v493 = vunpack.c.l.b16 %v352
        %v494 = vunpack.c.h.b16 %v352
        %v495 = vunpack.c.l.b16 %v353
        %v496 = vunpack.c.h.b16 %v353
        %v497 = vunpack.c.l.b16 %v354
        %v498 = vunpack.c.h.b16 %v354
        %v499 = vunpack.c.l.b16 %v355
        %v500 = vunpack.c.h.b16 %v355
        %v501 = vunpack.c.l.b16 %v356
        %v502 = vunpack.c.h.b16 %v356
        %v503 = vunpack.c.l.b16 %v357
        %v504 = vunpack.c.h.b16 %v357
        %v505 = vunpack.c.l.b16 %v358
        %v506 = vunpack.c.h.b16 %v358
        %v507 = vunpack.c.l.b16 %v359
        %v508 = vunpack.c.h.b16 %v359
        %v509 = vunpack.c.l.b16 %v360
        %v510 = vunpack.c.h.b16 %v360
        %v511 = vunpack.c.l.b16 %v361
        %v512 = vunpack.c.h.b16 %v361
        %v513 = vunpack.c.l.b16 %v362
        %v514 = vunpack.c.h.b16 %v362
        %v515 = vunpack.c.l.b16 %v363
        %v516 = vunpack.c.h.b16 %v363
        %v517 = vunpack.c.l.b16 %v364
        %v518 = vunpack.c.h.b16 %v364
        %v519 = vunpack.c.l.b16 %v365
        %v520 = vunpack.c.h.b16 %v365
        %v521 = vunpack.c.l.b16 %v366
        %v522 = vunpack.c.h.b16 %v366
        %v523 = vunpack.c.l.b16 %v367
        %v524 = vunpack.c.h.b16 %v367
        %v525 = vunpack.c.l.b16 %v368
        %v526 = vunpack.c.h.b16 %v368
        %v527 = vunpack.c.l.b16 %v369
        %v528 = vunpack.c.h.b16 %v369
        %v529 = vunpack.c.l.b16 %v370
        %v530 = vunpack.c.h.b16 %v370
        %v531 = vpack.c.b16 %v437, %v435
        %v532 = vpack.c.b16 %v438, %v436
        %v533 = vpack.c.b16 %v441, %v439
        %v534 = vpack.c.b16 %v442, %v440
        %v535 = vpack.c.b16 %v445, %v443
        %v536 = vpack.c.b16 %v446, %v444
        %v537 = vpack.c.b16 %v449, %v447
        %v538 = vpack.c.b16 %v450, %v448
        %v539 = vpack.c.b16 %v453, %v451
        %v540 = vpack.c.b16 %v454, %v452
        %v541 = vpack.c.b16 %v457, %v455
        %v542 = vpack.c.b16 %v458, %v456
        %v543 = vpack.c.b16 %v461, %v459
        %v544 = vpack.c.b16 %v462, %v460
        %v545 = vpack.c.b16 %v465, %v463
        %v546 = vpack.c.b16 %v466, %v464
        %v547 = vpack.c.b16 %v469, %v467
        %v548 = vpack.c.b16 %v470, %v468
        %v549 = vpack.c.b16 %v473, %v471
        %v550 = vpack.c.b16 %v474, %v472
        %v551 = vpack.c.b16 %v477, %v475
        %v552 = vpack.c.b16 %v478, %v476
        %v553 = vpack.c.b16 %v481, %v479
        %v554 = vpack.c.b16 %v482, %v480
        %v555 = vpack.c.b16 %v485, %v483
        %v556 = vpack.c.b16 %v486, %v484
        %v557 = vpack.c.b16 %v489, %v487
        %v558 = vpack.c.b16 %v490, %v488
        %v559 = vpack.c.b16 %v493, %v491
        %v560 = vpack.c.b16 %v494, %v492
        %v561 = vpack.c.b16 %v497, %v495
        %v562 = vpack.c.b16 %v498, %v496
        %v563 = vpack.c.b16 %v501, %v499
        %v564 = vpack.c.b16 %v502, %v500
        %v565 = vpack.c.b16 %v505, %v503
        %v566 = vpack.c.b16 %v506, %v504
        %v567 = vpack.c.b16 %v509, %v507
        %v568 = vpack.c.b16 %v510, %v508
        %v569 = vpack.c.b16 %v513, %v511
        %v570 = vpack.c.b16 %v514, %v512
        %v571 = vpack.c.b16 %v517, %v515
        %v572 = vpack.c.b16 %v518, %v516
        %v573 = vpack.c.b16 %v521, %v519
        %v574 = vpack.c.b16 %v522, %v520
        %v575 = vpack.c.b16 %v525, %v523
        %v576 = vpack.c.b16 %v526, %v524
        %v577 = vpack.c.b16 %v529, %v527
        %v578 = vpack.c.b16 %v530, %v528
        %627 = vmatprep.subr.bf16.mxu0 %v532
        %628 = vmatpush1.bf16.msra.mxu0 %v531
        %629 = vmatprep.subr.bf16.mxu0 %v534
        %630 = vmatpush1.bf16.msra.mxu0 %v533
        %631 = vmatprep.subr.bf16.mxu0 %v536
        %632 = vmatpush1.bf16.msra.mxu0 %v535
        %633 = vmatprep.subr.bf16.mxu0 %v538
        %634 = vmatpush1.bf16.msra.mxu0 %v537
        %635 = vmatprep.subr.bf16.mxu0 %v540
        %636 = vmatpush1.bf16.msra.mxu0 %v539
        %637 = vmatprep.subr.bf16.mxu0 %v542
        %638 = vmatpush1.bf16.msra.mxu0 %v541
        %639 = vmatprep.subr.bf16.mxu0 %v544
        %640 = vmatpush1.bf16.msra.mxu0 %v543
        %641 = vmatprep.subr.bf16.mxu0 %v546
        %642 = vmatpush1.bf16.msra.mxu0 %v545
        %643 = vmatprep.subr.bf16.mxu0 %v548
        %644 = vmatpush1.bf16.msra.mxu0 %v547
        %645 = vmatprep.subr.bf16.mxu0 %v550
        %646 = vmatpush1.bf16.msra.mxu0 %v549
        %647 = vmatprep.subr.bf16.mxu0 %v552
        %648 = vmatpush1.bf16.msra.mxu0 %v551
        %649 = vmatprep.subr.bf16.mxu0 %v554
        %650 = vmatpush1.bf16.msra.mxu0 %v553
        %651 = vmatprep.subr.bf16.mxu0 %v556
        %652 = vmatpush1.bf16.msra.mxu0 %v555
        %653 = vmatprep.subr.bf16.mxu0 %v558
        %654 = vmatpush1.bf16.msra.mxu0 %v557
        %655 = vmatprep.subr.bf16.mxu0 %v560
        %656 = vmatpush1.bf16.msra.mxu0 %v559
        %657 = vmatprep.subr.bf16.mxu0 %v562
        %658 = vmatpush1.bf16.msra.mxu0 %v561
        %659 = vmatprep.mubr.bf16.mxu0 %v382
        %660 = vmatmul.mubr.bf16.gmra.mrb[0].mxu0 %v381
        %v661 = vpop.f32.mrb[0].mxu0
        %v662 = vadd.f32 0.0, %v661
        %v663 = vpop.f32.mrb[0].mxu0
        %v664 = vadd.f32 0.0, %v663
        %v665 = vpop.f32.mrb[0].mxu0
        %v666 = vadd.f32 0.0, %v665
        %v667 = vpop.f32.mrb[0].mxu0
        %v668 = vadd.f32 0.0, %v667
        %669 = vdwg.mxu0
        %670 = vmatprep.subr.bf16.mxu0 %v564
        %671 = vmatpush1.bf16.msra.mxu0 %v563
        %672 = vmatprep.subr.bf16.mxu0 %v566
        %673 = vmatpush1.bf16.msra.mxu0 %v565
        %674 = vmatprep.subr.bf16.mxu0 %v568
        %675 = vmatpush1.bf16.msra.mxu0 %v567
        %676 = vmatprep.subr.bf16.mxu0 %v570
        %677 = vmatpush1.bf16.msra.mxu0 %v569
        %678 = vmatprep.subr.bf16.mxu0 %v572
        %679 = vmatpush1.bf16.msra.mxu0 %v571
        %680 = vmatprep.subr.bf16.mxu0 %v574
        %681 = vmatpush1.bf16.msra.mxu0 %v573
        %682 = vmatprep.subr.bf16.mxu0 %v576
        %683 = vmatpush1.bf16.msra.mxu0 %v575
        %684 = vmatprep.subr.bf16.mxu0 %v578
        %685 = vmatpush1.bf16.msra.mxu0 %v577
        %686 = vmatprep.subr.bf16.mxu0 0
        %687 = vmatpush1.bf16.msra.mxu0 0
        %688 = vmatprep.subr.bf16.mxu0 0
        %689 = vmatpush1.bf16.msra.mxu0 0
        %690 = vmatprep.subr.bf16.mxu0 0
        %691 = vmatpush1.bf16.msra.mxu0 0
        %692 = vmatprep.subr.bf16.mxu0 0
        %693 = vmatpush1.bf16.msra.mxu0 0
        %694 = vmatprep.subr.bf16.mxu0 0
        %695 = vmatpush1.bf16.msra.mxu0 0
        %696 = vmatprep.subr.bf16.mxu0 0
        %697 = vmatpush1.bf16.msra.mxu0 0
        %698 = vmatprep.subr.bf16.mxu0 0
        %699 = vmatpush1.bf16.msra.mxu0 0
        %700 = vmatprep.subr.bf16.mxu0 0
        %701 = vmatpush1.bf16.msra.mxu0 0
        %702 = vmatprep.mubr.bf16.mxu0 0
        %703 = vmatmul.mubr.bf16.gmra.mrb[0].mxu0 %v383
        %v704 = vpop.f32.mrb[0].mxu0
        %v705 = vadd.f32 %v662, %v704
        %v706 = vpop.f32.mrb[0].mxu0
        %v707 = vadd.f32 %v664, %v706
        %v708 = vpop.f32.mrb[0].mxu0
        %v709 = vadd.f32 %v666, %v708
        %v710 = vpop.f32.mrb[0].mxu0
        %v711 = vadd.f32 %v668, %v710
        %712 = vdwg.mxu0
        %v713 = vadd.f32 %v315, %v705
        %v714 = vadd.f32 %v316, %v707
        %v715 = vadd.f32 %v317, %v709
        %v716 = vadd.f32 %v318, %v711
        %717 = vst [vmem:[#allocation2] sm:$0xff] %v713
        %718 = vst [vmem:[#allocation2 + $0x8] sm:$0xff] %v714
        %719 = vst [vmem:[#allocation2 + $0x10] sm:$0xff] %v715
        %720 = vst [vmem:[#allocation2 + $0x18] sm:$0xff] %v716
        %p721 = scmp.eq.s32.totalorder %s21, 5
        // Predicated region
        $region63: #{_lambda_.31} parent=53 // pred_check
          %p722 = pneg %p721
        $region64: #{_lambda_.31} parent=53 // pred_check_branch
          %724 = sbr.rel (%p722) target = $region66
        $region65: #{_lambda_.31} parent=53 // pred_region
          %v725 = vld [vmem:[#allocation2] sm:$0xff]
          %v726 = vld [vmem:[#allocation2 + $0x8] sm:$0xff]
          %v727 = vld [vmem:[#allocation2 + $0x10] sm:$0xff]
          %v728 = vld [vmem:[#allocation2 + $0x18] sm:$0xff]
          %v729 = vld [vmem:[%s292] sm:$0x3]
          %v731 = vlaneseq
          %v732 = vshrl.u32 %v731, 7
          %v733 = vsub.s32 0, %v732
          %v734 = vrot.slane %v729, %v733
          %v735 = vlaneseq
          %v736 = vshrl.u32 %v735, 7
          %v737 = vsub.s32 1, %v736
          %v738 = vrot.slane %v729, %v737
          %v741 = vadd.f32 %v725, %v734
          %v742 = vadd.f32 %v726, %v738
          %v743 = vadd.f32 %v727, %v734
          %v744 = vadd.f32 %v728, %v738
          %v745 = vmax.f32 %v741, 0.0
          %v746 = vmax.f32 %v742, 0.0
          %v747 = vmax.f32 %v743, 0.0
          %v748 = vmax.f32 %v744, 0.0
          %v749 = vpack.c.bf16 %v747, %v745
          %v750 = vpack.c.bf16 %v748, %v746
          %v753 = vunpack.c.l.b16 %v749
          %v754 = vunpack.c.l.b16 %v750
          %v755 = vunpack.c.h.b16 %v749
          %v756 = vunpack.c.h.b16 %v750
          %v757 = vpack.c.b16 %v754, %v753
          %v758 = vpack.c.b16 %v756, %v755
          %761 = vst [vmem:[%s303] sm:$0xff] %v757
          %762 = vst [vmem:[%s303 + $0x8] sm:$0xff] %v758
        $region66: #{_lambda_.31} parent=53 // pred_fallthru
          _
        %s763 = smul.u32 2, %s19
        %s764 = smul.u32 2, %s20
        %p765 = scmp.lt.s32.totalorder %s763, 1
        %s766 = scalar_select %p765, %s763, 1
        %p767 = scmp.lt.s32.totalorder %s764, 1
        %s768 = scalar_select %p767, %s764, 1
        %s769 = smul.addr %s766, 2
        %s770 = sadd.s32 %s768, %s769
        %s771 = smul.addr %s770, 4
        %s772 = scalar_lea.vmem %s3, %s771
        // Predicated region
        $region67: #{_lambda_.31} parent=53 // pred_check
          %p773 = pneg %p135
        $region68: #{_lambda_.31} parent=53 // pred_check_branch
          %775 = sbr.rel (%p773) target = $region70
        $region69: #{_lambda_.31} parent=53 // pred_region
          %s776 = smul.u32 2, %s19
          %s777 = smul.u32 2, %s20
        $region70: #{_lambda_.31} parent=53 // pred_fallthru
          _
        // Predicated region
        $region71: #{_lambda_.31} parent=53 // pred_check
          %p778 = pneg %p135
        $region72: #{_lambda_.31} parent=53 // pred_check_branch
          %780 = sbr.rel (%p778) target = $region74
        $region73: #{_lambda_.31} parent=53 // pred_region
          %s781 = smul.u32 2, %s19
          %s782 = smul.u32 2, %s20
          %p783 = scmp.lt.s32.totalorder %s781, 1
          %s784 = scalar_select %p783, %s781, 1
          %p785 = scmp.lt.s32.totalorder %s782, 1
          %s786 = scalar_select %p785, %s782, 1
          %s787 = smul.addr %s784, 2
          %s788 = sadd.s32 %s786, %s787
          %s789 = smul.addr %s788, 4
          %s790 = scalar_lea.vmem %s3, %s789
        $region74: #{_lambda_.31} parent=53 // pred_fallthru
          _
      $region54: #{_lambda_.31} parent=5 // pred_fallthru
        _
      %p791 = scmp.le.s32.totalorder 2, %s9
      // Predicated region
      $region75: #{_lambda_.31} parent=5 // pred_check
        %p792 = pneg %p791
      $region76: #{_lambda_.31} parent=5 // pred_check_branch
        %794 = sbr.rel (%p792) target = $region78
      $region77: #{_lambda_.31} parent=5 // pred_region
        %s795 = ssub.s32 %s9, 2
      $region78: #{_lambda_.31} parent=5 // pred_fallthru
        _
    $region6: #{_lambda_.31} parent=1 // loop_footer
      %s13 = sadd.s32 1, %s9
    $region7: #{_lambda_.31} parent=1 // loop_footer_branch
      %8 = sbr.rel target = $region3
    $region8: #{_lambda_.31} parent=1 // loop_exit
      _

</llo_original>
